<compile_context>
chip_gen: v6e
topology: v6e:2x2x1
jax: 0.10.0
libtpu: 0.0.40
codegen_flags: <defaults>
</compile_context>

<pallas_src>
import math
import functools

import jax
import jax.numpy as jnp
from jax.experimental import pallas as pl
from jax.experimental.pallas import tpu as pltpu

_LANE = 128
_SUBLANE = 8


def _round_up(x, m):
    return ((x + m - 1) // m) * m


def _lstm_fused_kernel(x_ref, wih0_ref, wihr_ref, whh_ref, b_ref, y_ref,
                       xg_ref, act_ref, h_ref, c_ref, *,
                       seq_len, batch_pad, hidden_pad, num_dirs, num_layers,
                       compute_dtype):
    """All layers + both directions of the LSTM in one kernel invocation.

    x_ref:    (T*Bp, I)             f32  time-major, batch-padded input
    wih0_ref: (I, nd*4*Hp)          bf16 layer-0 input->gate weights
    wihr_ref: (max(L-1,1), nd*Hp, nd*4*Hp) bf16  layer>=1 input->gate weights
    whh_ref:  (L, nd*Hp, nd*4*Hp)   bf16 block-diagonal (per dir) hidden weights
    b_ref:    (L, 1, nd*4*Hp)       f32  combined bias b_ih + b_hh
    y_ref:    (T*Bp, nd*Hp)         f32  final-layer hidden states (pad lanes 0)
    xg_ref:   (T*Bp, nd*4*Hp)       f32  scratch: precomputed input gates
    act_ref:  (T*Bp, nd*Hp)         f32  scratch: inter-layer activations (VMEM)
    h_ref, c_ref: (Bp, nd*Hp)       f32  scratch: recurrent state
    """
    T, Bp, Hp = seq_len, batch_pad, hidden_pad
    nd, L = num_dirs, num_layers
    G = 4 * Hp

    for layer in range(L):
        # ---- Phase 1: input projection for the whole sequence and all
        # directions in one MXU matmul (hoisted out of the recurrence).
        if layer == 0:
            xin = x_ref[...].astype(compute_dtype)
            wih = wih0_ref[...]
        else:
            xin = act_ref[...].astype(compute_dtype)
            wih = wihr_ref[layer - 1]
        xg_ref[...] = (jnp.dot(xin, wih, preferred_element_type=jnp.float32)
                       + b_ref[layer])

        # ---- Phase 2: the (truly serial) recurrence.  Both directions are
        # fused into a single block-diagonal matmul per timestep; the W_hh
        # load is hoisted out of the unrolled time loop.
        h_ref[...] = jnp.zeros_like(h_ref)
        c_ref[...] = jnp.zeros_like(c_ref)
        whh = whh_ref[layer]                      # (nd*Hp, nd*4Hp), bf16
        out_ref = y_ref if layer == L - 1 else act_ref

        # T is small and static here -> fully unrolled; all indices static.
        for t in range(T):
            rec = jnp.dot(h_ref[...].astype(compute_dtype), whh,
                          preferred_element_type=jnp.float32)   # (Bp, nd*4Hp)
            c_prev = c_ref[...]
            for d in range(nd):
                tt = t if d == 0 else T - 1 - t   # reverse dir walks backwards
                gates = (xg_ref[pl.ds(tt * Bp, Bp), pl.ds(d * G, G)]
                         + rec[:, d * G:(d + 1) * G])            # (Bp, 4Hp)
                # PyTorch gate order (i, f, g, o); each block is Hp=128 wide,
                # so every slice below is a whole-vreg, lane-aligned slice.
                i_g = jax.nn.sigmoid(gates[:, 0 * Hp:1 * Hp])
                f_g = jax.nn.sigmoid(gates[:, 1 * Hp:2 * Hp])
                g_g = jnp.tanh(gates[:, 2 * Hp:3 * Hp])
                o_g = jax.nn.sigmoid(gates[:, 3 * Hp:4 * Hp])
                c_new = f_g * c_prev[:, d * Hp:(d + 1) * Hp] + i_g * g_g
                h_new = o_g * jnp.tanh(c_new)
                c_ref[:, d * Hp:(d + 1) * Hp] = c_new
                h_ref[:, d * Hp:(d + 1) * Hp] = h_new
                out_ref[pl.ds(tt * Bp, Bp), pl.ds(d * Hp, Hp)] = (
                    h_new.astype(out_ref.dtype))


def _pad_gate_cols(w, H, Hp):
    """(K, 4H) -> (K, 4Hp): zero-pad each of the 4 gate column blocks H -> Hp."""
    K = w.shape[0]
    out = jnp.zeros((K, 4, Hp), w.dtype)
    out = out.at[:, :, :H].set(w.reshape(K, 4, H))
    return out.reshape(K, 4 * Hp)


def init_lstm_params(key, latent_dim, num_layers, hidden_dim, bidirectional,
                     weight_dtype=jnp.bfloat16):
    """nn.LSTM-style init (U[-1/sqrt(H), 1/sqrt(H)]), pre-packed for the kernel."""
    nd = 2 if bidirectional else 1
    H = hidden_dim
    Hp = _round_up(H, _LANE)
    k = 1.0 / math.sqrt(H)

    wih_layers, whh_layers, b_layers, raw_layers = [], [], [], []
    for layer in range(num_layers):
        in_size = latent_dim if layer == 0 else H * nd
        wih_dirs, b_dirs, raw_dirs = [], [], []
        whh_bd = jnp.zeros((nd * Hp, nd * 4 * Hp), jnp.float32)  # block diag
        for d in range(nd):
            key, k1, k2, k3, k4 = jax.random.split(key, 5)
            w_ih = jax.random.uniform(k1, (4 * H, in_size), jnp.float32, -k, k)
            w_hh = jax.random.uniform(k2, (4 * H, H), jnp.float32, -k, k)
            b_ih = jax.random.uniform(k3, (4 * H,), jnp.float32, -k, k)
            b_hh = jax.random.uniform(k4, (4 * H,), jnp.float32, -k, k)
            raw_dirs.append((w_ih, w_hh, b_ih, b_hh))

            # Input->gate weights: transpose, pad gate columns; for layers > 0
            # remap input rows from compact (nd*H) layout to padded (nd*Hp).
            wih_t = _pad_gate_cols(w_ih.T, H, Hp)                 # (in, 4Hp)
            if layer > 0:
                full = jnp.zeros((nd * Hp, 4 * Hp), jnp.float32)
                for dd in range(nd):
                    full = full.at[dd * Hp: dd * Hp + H].set(
                        wih_t[dd * H:(dd + 1) * H])
                wih_t = full
            wih_dirs.append(wih_t)

            # Hidden->gate weights: pad rows/cols and place on the diagonal
            # block for this direction (zero off-diagonal blocks keep the two
            # directions independent in the fused per-step matmul).
            whh_t = _pad_gate_cols(w_hh.T, H, Hp)                 # (H, 4Hp)
            whh_bd = whh_bd.at[d * Hp: d * Hp + H,
                               d * 4 * Hp:(d + 1) * 4 * Hp].set(whh_t)

            b_dirs.append(_pad_gate_cols((b_ih + b_hh)[None, :], H, Hp))

        wih_layers.append(jnp.concatenate(wih_dirs, axis=1))      # (in, nd*4Hp)
        whh_layers.append(whh_bd)                                 # (nd*Hp, nd*4Hp)
        b_layers.append(jnp.concatenate(b_dirs, axis=1))          # (1, nd*4Hp)
        raw_layers.append(raw_dirs)

    wih0 = wih_layers[0].astype(weight_dtype)
    if num_layers > 1:
        wih_rest = jnp.stack(wih_layers[1:], axis=0).astype(weight_dtype)
    else:
        wih_rest = jnp.zeros((1, nd * Hp, nd * 4 * Hp), weight_dtype)  # unused

    return dict(
        wih0=wih0,                                                 # (I, nd*4Hp)
        wih_rest=wih_rest,                                         # (L-1, nd*Hp, nd*4Hp)
        whh=jnp.stack(whh_layers, axis=0).astype(weight_dtype),    # (L, nd*Hp, nd*4Hp)
        bias=jnp.stack(b_layers, axis=0),                          # (L, 1, nd*4Hp) f32
        raw=raw_layers,
        hidden_dim=H, hidden_pad=Hp, num_dirs=nd, num_layers=num_layers,
        compute_dtype=weight_dtype)


def lstm_forward(params, x_btf):
    """Equivalent of LSTM.forward(x) with zero initial hidden state.

    x_btf: (B, T, latent_dim) -> (B, T, num_directions * hidden_dim)
    """
    H = params["hidden_dim"]
    Hp = params["hidden_pad"]
    nd = params["num_dirs"]
    L = params["num_layers"]
    cdt = params["compute_dtype"]
    B, T, I = x_btf.shape
    Bp = _round_up(B, _SUBLANE)   # pad batch to the 8-row sublane tile

    # time-major, batch-padded, flattened to a lane-dense 2D slab
    xt = jnp.transpose(x_btf, (1, 0, 2))                  # (T, B, I)
    xt = jnp.pad(xt, ((0, 0), (0, Bp - B), (0, 0)))
    x2 = xt.reshape(T * Bp, I)

    kernel = functools.partial(
        _lstm_fused_kernel,
        seq_len=T, batch_pad=Bp, hidden_pad=Hp,
        num_dirs=nd, num_layers=L, compute_dtype=cdt)
    vmem = pl.BlockSpec(memory_space=pltpu.MemorySpace.VMEM)

    y2 = pl.pallas_call(
        kernel,
        out_shape=jax.ShapeDtypeStruct((T * Bp, nd * Hp), jnp.float32),
        in_specs=[vmem, vmem, vmem, vmem, vmem],
        out_specs=vmem,
        scratch_shapes=[
            pltpu.VMEM((T * Bp, nd * 4 * Hp), jnp.float32),  # precomputed x-gates
            pltpu.VMEM((T * Bp, nd * Hp), jnp.float32),      # inter-layer acts
            pltpu.VMEM((Bp, nd * Hp), jnp.float32),          # h state
            pltpu.VMEM((Bp, nd * Hp), jnp.float32),          # c state
        ],
        compiler_params=pltpu.CompilerParams(vmem_limit_bytes=32 * 1024 * 1024),
    )(x2, params["wih0"], params["wih_rest"], params["whh"], params["bias"])

    # strip batch padding + per-direction lane padding, back to batch-first
    y = y2.reshape(T, Bp, nd, Hp)[:, :B, :, :H].reshape(T, B, nd * H)
    return jnp.transpose(y, (1, 0, 2))


def lstm_reference(params, x_btf):
    """Pure-JAX f32 reference matching torch.nn.LSTM (zero initial state)."""
    H = params["hidden_dim"]
    B, T, _ = x_btf.shape
    h_out = x_btf
    for layer_raw in params["raw"]:
        outs = []
        for d, (w_ih, w_hh, b_ih, b_hh) in enumerate(layer_raw):
            xs = h_out if d == 0 else h_out[:, ::-1]
            h = jnp.zeros((B, H), jnp.float32)
            c = jnp.zeros((B, H), jnp.float32)
            ys = []
            for t in range(T):
                g = xs[:, t] @ w_ih.T + h @ w_hh.T + b_ih + b_hh
                i, f, gg, o = jnp.split(g, 4, axis=1)
                i, f, o = jax.nn.sigmoid(i), jax.nn.sigmoid(f), jax.nn.sigmoid(o)
                gg = jnp.tanh(gg)
                c = f * c + i * gg
                h = o * jnp.tanh(c)
                ys.append(h)
            y = jnp.stack(ys, axis=1)              # (B, T, H)
            if d == 1:
                y = y[:, ::-1]
            outs.append(y)
        h_out = jnp.concatenate(outs, axis=-1)
    return h_out


if __name__ == "__main__":
    # Small config consistent with the module's constructor.
    latent_dim = 32
    hidden_dim = 32
    num_layers = 2
    bidirectional = True
    batch, seq = 2, 8

    key = jax.random.PRNGKey(0)
    key, pkey, xkey = jax.random.split(key, 3)

    params = init_lstm_params(pkey, latent_dim, num_layers, hidden_dim,
                              bidirectional)
    x = jax.random.normal(xkey, (batch, seq, latent_dim), jnp.float32)

    fwd = jax.jit(functools.partial(lstm_forward, params))
    y = jax.block_until_ready(fwd(x))

    expected_feat = hidden_dim * (2 if bidirectional else 1)
    assert y.shape == (batch, seq, expected_feat), y.shape
    assert bool(jnp.all(jnp.isfinite(y)))

    # Numerical check vs. pure-JAX f32 reference (kernel uses bf16 weights,
    # f32 accumulation -> expect ~1e-2-level divergence at worst).
    y_ref = lstm_reference(params, x)
    assert bool(jnp.allclose(y, y_ref, rtol=5e-2, atol=3e-2)), (
        float(jnp.max(jnp.abs(y - y_ref))))

    print("KERNEL_OK")
</pallas_src>

<mosaic_0001>
module attributes {stable_mosaic.version = 11 : i64} {
  func.func @_lstm_fused_kernel(%arg0: memref<64x32xf32, #tpu.memory_space<vmem>>, %arg1: memref<32x1024xbf16, #tpu.memory_space<vmem>>, %arg2: memref<1x256x1024xbf16, #tpu.memory_space<vmem>>, %arg3: memref<2x256x1024xbf16, #tpu.memory_space<vmem>>, %arg4: memref<2x1x1024xf32, #tpu.memory_space<vmem>>, %arg5: memref<64x256xf32, #tpu.memory_space<vmem>>, %arg6: memref<64x1024xf32, #tpu.memory_space<vmem>>, %arg7: memref<64x256xf32, #tpu.memory_space<vmem>>, %arg8: memref<8x256xf32, #tpu.memory_space<vmem>>, %arg9: memref<8x256xf32, #tpu.memory_space<vmem>>) attributes {dimension_semantics = [], scalar_prefetch = 0 : i64, scratch_operands = 4 : i64, tpu.core_type = #tpu.core_type<tc>} {
    %c0 = arith.constant 0 : index
    %c0_0 = arith.constant 0 : index
    %0 = vector.load %arg0[%c0, %c0_0] : memref<64x32xf32, #tpu.memory_space<vmem>>, vector<64x32xf32>
    %1 = arith.truncf %0 : vector<64x32xf32> to vector<64x32xbf16>
    %c0_1 = arith.constant 0 : index
    %c0_2 = arith.constant 0 : index
    %2 = vector.load %arg1[%c0_1, %c0_2] : memref<32x1024xbf16, #tpu.memory_space<vmem>>, vector<32x1024xbf16>
    %cst = arith.constant dense<0.000000e+00> : vector<64x1024xf32>
    %3 = tpu.matmul %1, %2, %cst {dimension_numbers = #tpu.dot_dimension_numbers<[1], [0], [0], [1], [0, 0, 1, 1], [], []>} : vector<64x32xbf16>, vector<32x1024xbf16>, vector<64x1024xf32> -> vector<64x1024xf32>
    %c0_3 = arith.constant 0 : index
    %c0_4 = arith.constant 0 : index
    %c0_5 = arith.constant 0 : index
    %4 = vector.load %arg4[%c0_3, %c0_4, %c0_5] : memref<2x1x1024xf32, #tpu.memory_space<vmem>>, vector<1x1x1024xf32>
    %5 = vector.shape_cast %4 : vector<1x1x1024xf32> to vector<1x1024xf32>
    %6 = vector.broadcast %5 : vector<1x1024xf32> to vector<64x1024xf32>
    %7 = arith.addf %3, %6 : vector<64x1024xf32>
    %c0_6 = arith.constant 0 : index
    %c0_7 = arith.constant 0 : index
    %8 = vector.load %arg6[%c0_6, %c0_7] : memref<64x1024xf32, #tpu.memory_space<vmem>>, vector<64x1024xf32>
    tpu.vector_store %arg6[%c0_6, %c0_7], %7 {strides = array<i32>} : memref<64x1024xf32, #tpu.memory_space<vmem>>, vector<64x1024xf32>,
    %cst_8 = arith.constant 0.000000e+00 : f32
    %9 = vector.broadcast %cst_8 : f32 to vector<8x256xf32>
    %c0_9 = arith.constant 0 : index
    %c0_10 = arith.constant 0 : index
    %10 = vector.load %arg8[%c0_9, %c0_10] : memref<8x256xf32, #tpu.memory_space<vmem>>, vector<8x256xf32>
    tpu.vector_store %arg8[%c0_9, %c0_10], %9 {strides = array<i32>} : memref<8x256xf32, #tpu.memory_space<vmem>>, vector<8x256xf32>,
    %cst_11 = arith.constant 0.000000e+00 : f32
    %11 = vector.broadcast %cst_11 : f32 to vector<8x256xf32>
    %c0_12 = arith.constant 0 : index
    %c0_13 = arith.constant 0 : index
    %12 = vector.load %arg9[%c0_12, %c0_13] : memref<8x256xf32, #tpu.memory_space<vmem>>, vector<8x256xf32>
    tpu.vector_store %arg9[%c0_12, %c0_13], %11 {strides = array<i32>} : memref<8x256xf32, #tpu.memory_space<vmem>>, vector<8x256xf32>,
    %c0_14 = arith.constant 0 : index
    %c0_15 = arith.constant 0 : index
    %c0_16 = arith.constant 0 : index
    %13 = vector.load %arg3[%c0_14, %c0_15, %c0_16] : memref<2x256x1024xbf16, #tpu.memory_space<vmem>>, vector<1x256x1024xbf16>
    %14 = vector.shape_cast %13 : vector<1x256x1024xbf16> to vector<256x1024xbf16>
    %c0_17 = arith.constant 0 : index
    %c0_18 = arith.constant 0 : index
    %15 = vector.load %arg8[%c0_17, %c0_18] : memref<8x256xf32, #tpu.memory_space<vmem>>, vector<8x256xf32>
    %16 = arith.truncf %15 : vector<8x256xf32> to vector<8x256xbf16>
    %cst_19 = arith.constant dense<0.000000e+00> : vector<8x1024xf32>
    %17 = tpu.matmul %16, %14, %cst_19 {dimension_numbers = #tpu.dot_dimension_numbers<[1], [0], [0], [1], [0, 0, 1, 1], [], []>} : vector<8x256xbf16>, vector<256x1024xbf16>, vector<8x1024xf32> -> vector<8x1024xf32>
    %c0_20 = arith.constant 0 : index
    %c0_21 = arith.constant 0 : index
    %18 = vector.load %arg9[%c0_20, %c0_21] : memref<8x256xf32, #tpu.memory_space<vmem>>, vector<8x256xf32>
    %c0_22 = arith.constant 0 : index
    %c0_23 = arith.constant 0 : index
    %19 = vector.load %arg6[%c0_22, %c0_23] : memref<64x1024xf32, #tpu.memory_space<vmem>>, vector<8x512xf32>
    %20 = vector.extract_strided_slice %17 {offsets = [0, 0], sizes = [8, 512], strides = [1, 1]} : vector<8x1024xf32> to vector<8x512xf32>
    %21 = arith.addf %19, %20 : vector<8x512xf32>
    %22 = vector.extract_strided_slice %21 {offsets = [0, 0], sizes = [8, 128], strides = [1, 1]} : vector<8x512xf32> to vector<8x128xf32>
    %23 = arith.negf %22 : vector<8x128xf32>
    %24 = math.exp %23 : vector<8x128xf32>
    %cst_24 = arith.constant 1.000000e+00 : f32
    %25 = vector.broadcast %cst_24 : f32 to vector<8x128xf32>
    %26 = arith.addf %25, %24 : vector<8x128xf32>
    %27 = arith.divf %25, %26 : vector<8x128xf32>
    %28 = vector.extract_strided_slice %21 {offsets = [0, 128], sizes = [8, 128], strides = [1, 1]} : vector<8x512xf32> to vector<8x128xf32>
    %29 = arith.negf %28 : vector<8x128xf32>
    %30 = math.exp %29 : vector<8x128xf32>
    %cst_25 = arith.constant 1.000000e+00 : f32
    %31 = vector.broadcast %cst_25 : f32 to vector<8x128xf32>
    %32 = arith.addf %31, %30 : vector<8x128xf32>
    %33 = arith.divf %31, %32 : vector<8x128xf32>
    %34 = vector.extract_strided_slice %21 {offsets = [0, 256], sizes = [8, 128], strides = [1, 1]} : vector<8x512xf32> to vector<8x128xf32>
    %35 = math.tanh %34 : vector<8x128xf32>
    %36 = vector.extract_strided_slice %21 {offsets = [0, 384], sizes = [8, 128], strides = [1, 1]} : vector<8x512xf32> to vector<8x128xf32>
    %37 = arith.negf %36 : vector<8x128xf32>
    %38 = math.exp %37 : vector<8x128xf32>
    %cst_26 = arith.constant 1.000000e+00 : f32
    %39 = vector.broadcast %cst_26 : f32 to vector<8x128xf32>
    %40 = arith.addf %39, %38 : vector<8x128xf32>
    %41 = arith.divf %39, %40 : vector<8x128xf32>
    %42 = vector.extract_strided_slice %18 {offsets = [0, 0], sizes = [8, 128], strides = [1, 1]} : vector<8x256xf32> to vector<8x128xf32>
    %43 = arith.mulf %33, %42 : vector<8x128xf32>
    %44 = arith.mulf %27, %35 : vector<8x128xf32>
    %45 = arith.addf %43, %44 : vector<8x128xf32>
    %46 = math.tanh %45 : vector<8x128xf32>
    %47 = arith.mulf %41, %46 : vector<8x128xf32>
    %c0_27 = arith.constant 0 : index
    %c0_28 = arith.constant 0 : index
    %48 = vector.load %arg9[%c0_27, %c0_28] : memref<8x256xf32, #tpu.memory_space<vmem>>, vector<8x128xf32>
    tpu.vector_store %arg9[%c0_27, %c0_28], %45 {strides = array<i32>} : memref<8x256xf32, #tpu.memory_space<vmem>>, vector<8x128xf32>,
    %c0_29 = arith.constant 0 : index
    %c0_30 = arith.constant 0 : index
    %49 = vector.load %arg8[%c0_29, %c0_30] : memref<8x256xf32, #tpu.memory_space<vmem>>, vector<8x128xf32>
    tpu.vector_store %arg8[%c0_29, %c0_30], %47 {strides = array<i32>} : memref<8x256xf32, #tpu.memory_space<vmem>>, vector<8x128xf32>,
    %c0_31 = arith.constant 0 : index
    %c0_32 = arith.constant 0 : index
    %50 = vector.load %arg7[%c0_31, %c0_32] : memref<64x256xf32, #tpu.memory_space<vmem>>, vector<8x128xf32>
    tpu.vector_store %arg7[%c0_31, %c0_32], %47 {strides = array<i32>} : memref<64x256xf32, #tpu.memory_space<vmem>>, vector<8x128xf32>,
    %c56 = arith.constant 56 : index
    %c512 = arith.constant 512 : index
    %51 = vector.load %arg6[%c56, %c512] : memref<64x1024xf32, #tpu.memory_space<vmem>>, vector<8x512xf32>
    %52 = vector.extract_strided_slice %17 {offsets = [0, 512], sizes = [8, 512], strides = [1, 1]} : vector<8x1024xf32> to vector<8x512xf32>
    %53 = arith.addf %51, %52 : vector<8x512xf32>
    %54 = vector.extract_strided_slice %53 {offsets = [0, 0], sizes = [8, 128], strides = [1, 1]} : vector<8x512xf32> to vector<8x128xf32>
    %55 = arith.negf %54 : vector<8x128xf32>
    %56 = math.exp %55 : vector<8x128xf32>
    %cst_33 = arith.constant 1.000000e+00 : f32
    %57 = vector.broadcast %cst_33 : f32 to vector<8x128xf32>
    %58 = arith.addf %57, %56 : vector<8x128xf32>
    %59 = arith.divf %57, %58 : vector<8x128xf32>
    %60 = vector.extract_strided_slice %53 {offsets = [0, 128], sizes = [8, 128], strides = [1, 1]} : vector<8x512xf32> to vector<8x128xf32>
    %61 = arith.negf %60 : vector<8x128xf32>
    %62 = math.exp %61 : vector<8x128xf32>
    %cst_34 = arith.constant 1.000000e+00 : f32
    %63 = vector.broadcast %cst_34 : f32 to vector<8x128xf32>
    %64 = arith.addf %63, %62 : vector<8x128xf32>
    %65 = arith.divf %63, %64 : vector<8x128xf32>
    %66 = vector.extract_strided_slice %53 {offsets = [0, 256], sizes = [8, 128], strides = [1, 1]} : vector<8x512xf32> to vector<8x128xf32>
    %67 = math.tanh %66 : vector<8x128xf32>
    %68 = vector.extract_strided_slice %53 {offsets = [0, 384], sizes = [8, 128], strides = [1, 1]} : vector<8x512xf32> to vector<8x128xf32>
    %69 = arith.negf %68 : vector<8x128xf32>
    %70 = math.exp %69 : vector<8x128xf32>
    %cst_35 = arith.constant 1.000000e+00 : f32
    %71 = vector.broadcast %cst_35 : f32 to vector<8x128xf32>
    %72 = arith.addf %71, %70 : vector<8x128xf32>
    %73 = arith.divf %71, %72 : vector<8x128xf32>
    %74 = vector.extract_strided_slice %18 {offsets = [0, 128], sizes = [8, 128], strides = [1, 1]} : vector<8x256xf32> to vector<8x128xf32>
    %75 = arith.mulf %65, %74 : vector<8x128xf32>
    %76 = arith.mulf %59, %67 : vector<8x128xf32>
    %77 = arith.addf %75, %76 : vector<8x128xf32>
    %78 = math.tanh %77 : vector<8x128xf32>
    %79 = arith.mulf %73, %78 : vector<8x128xf32>
    %c0_36 = arith.constant 0 : index
    %c128 = arith.constant 128 : index
    %80 = vector.load %arg9[%c0_36, %c128] : memref<8x256xf32, #tpu.memory_space<vmem>>, vector<8x128xf32>
    tpu.vector_store %arg9[%c0_36, %c128], %77 {strides = array<i32>} : memref<8x256xf32, #tpu.memory_space<vmem>>, vector<8x128xf32>,
    %c0_37 = arith.constant 0 : index
    %c128_38 = arith.constant 128 : index
    %81 = vector.load %arg8[%c0_37, %c128_38] : memref<8x256xf32, #tpu.memory_space<vmem>>, vector<8x128xf32>
    tpu.vector_store %arg8[%c0_37, %c128_38], %79 {strides = array<i32>} : memref<8x256xf32, #tpu.memory_space<vmem>>, vector<8x128xf32>,
    %c56_39 = arith.constant 56 : index
    %c128_40 = arith.constant 128 : index
    %82 = vector.load %arg7[%c56_39, %c128_40] : memref<64x256xf32, #tpu.memory_space<vmem>>, vector<8x128xf32>
    tpu.vector_store %arg7[%c56_39, %c128_40], %79 {strides = array<i32>} : memref<64x256xf32, #tpu.memory_space<vmem>>, vector<8x128xf32>,
    %c0_41 = arith.constant 0 : index
    %c0_42 = arith.constant 0 : index
    %83 = vector.load %arg8[%c0_41, %c0_42] : memref<8x256xf32, #tpu.memory_space<vmem>>, vector<8x256xf32>
    %84 = arith.truncf %83 : vector<8x256xf32> to vector<8x256xbf16>
    %cst_43 = arith.constant dense<0.000000e+00> : vector<8x1024xf32>
    %85 = tpu.matmul %84, %14, %cst_43 {dimension_numbers = #tpu.dot_dimension_numbers<[1], [0], [0], [1], [0, 0, 1, 1], [], []>} : vector<8x256xbf16>, vector<256x1024xbf16>, vector<8x1024xf32> -> vector<8x1024xf32>
    %c0_44 = arith.constant 0 : index
    %c0_45 = arith.constant 0 : index
    %86 = vector.load %arg9[%c0_44, %c0_45] : memref<8x256xf32, #tpu.memory_space<vmem>>, vector<8x256xf32>
    %c8 = arith.constant 8 : index
    %c0_46 = arith.constant 0 : index
    %87 = vector.load %arg6[%c8, %c0_46] : memref<64x1024xf32, #tpu.memory_space<vmem>>, vector<8x512xf32>
    %88 = vector.extract_strided_slice %85 {offsets = [0, 0], sizes = [8, 512], strides = [1, 1]} : vector<8x1024xf32> to vector<8x512xf32>
    %89 = arith.addf %87, %88 : vector<8x512xf32>
    %90 = vector.extract_strided_slice %89 {offsets = [0, 0], sizes = [8, 128], strides = [1, 1]} : vector<8x512xf32> to vector<8x128xf32>
    %91 = arith.negf %90 : vector<8x128xf32>
    %92 = math.exp %91 : vector<8x128xf32>
    %cst_47 = arith.constant 1.000000e+00 : f32
    %93 = vector.broadcast %cst_47 : f32 to vector<8x128xf32>
    %94 = arith.addf %93, %92 : vector<8x128xf32>
    %95 = arith.divf %93, %94 : vector<8x128xf32>
    %96 = vector.extract_strided_slice %89 {offsets = [0, 128], sizes = [8, 128], strides = [1, 1]} : vector<8x512xf32> to vector<8x128xf32>
    %97 = arith.negf %96 : vector<8x128xf32>
    %98 = math.exp %97 : vector<8x128xf32>
    %cst_48 = arith.constant 1.000000e+00 : f32
    %99 = vector.broadcast %cst_48 : f32 to vector<8x128xf32>
    %100 = arith.addf %99, %98 : vector<8x128xf32>
    %101 = arith.divf %99, %100 : vector<8x128xf32>
    %102 = vector.extract_strided_slice %89 {offsets = [0, 256], sizes = [8, 128], strides = [1, 1]} : vector<8x512xf32> to vector<8x128xf32>
    %103 = math.tanh %102 : vector<8x128xf32>
    %104 = vector.extract_strided_slice %89 {offsets = [0, 384], sizes = [8, 128], strides = [1, 1]} : vector<8x512xf32> to vector<8x128xf32>
    %105 = arith.negf %104 : vector<8x128xf32>
    %106 = math.exp %105 : vector<8x128xf32>
    %cst_49 = arith.constant 1.000000e+00 : f32
    %107 = vector.broadcast %cst_49 : f32 to vector<8x128xf32>
    %108 = arith.addf %107, %106 : vector<8x128xf32>
    %109 = arith.divf %107, %108 : vector<8x128xf32>
    %110 = vector.extract_strided_slice %86 {offsets = [0, 0], sizes = [8, 128], strides = [1, 1]} : vector<8x256xf32> to vector<8x128xf32>
    %111 = arith.mulf %101, %110 : vector<8x128xf32>
    %112 = arith.mulf %95, %103 : vector<8x128xf32>
    %113 = arith.addf %111, %112 : vector<8x128xf32>
    %114 = math.tanh %113 : vector<8x128xf32>
    %115 = arith.mulf %109, %114 : vector<8x128xf32>
    %c0_50 = arith.constant 0 : index
    %c0_51 = arith.constant 0 : index
    %116 = vector.load %arg9[%c0_50, %c0_51] : memref<8x256xf32, #tpu.memory_space<vmem>>, vector<8x128xf32>
    tpu.vector_store %arg9[%c0_50, %c0_51], %113 {strides = array<i32>} : memref<8x256xf32, #tpu.memory_space<vmem>>, vector<8x128xf32>,
    %c0_52 = arith.constant 0 : index
    %c0_53 = arith.constant 0 : index
    %117 = vector.load %arg8[%c0_52, %c0_53] : memref<8x256xf32, #tpu.memory_space<vmem>>, vector<8x128xf32>
    tpu.vector_store %arg8[%c0_52, %c0_53], %115 {strides = array<i32>} : memref<8x256xf32, #tpu.memory_space<vmem>>, vector<8x128xf32>,
    %c8_54 = arith.constant 8 : index
    %c0_55 = arith.constant 0 : index
    %118 = vector.load %arg7[%c8_54, %c0_55] : memref<64x256xf32, #tpu.memory_space<vmem>>, vector<8x128xf32>
    tpu.vector_store %arg7[%c8_54, %c0_55], %115 {strides = array<i32>} : memref<64x256xf32, #tpu.memory_space<vmem>>, vector<8x128xf32>,
    %c48 = arith.constant 48 : index
    %c512_56 = arith.constant 512 : index
    %119 = vector.load %arg6[%c48, %c512_56] : memref<64x1024xf32, #tpu.memory_space<vmem>>, vector<8x512xf32>
    %120 = vector.extract_strided_slice %85 {offsets = [0, 512], sizes = [8, 512], strides = [1, 1]} : vector<8x1024xf32> to vector<8x512xf32>
    %121 = arith.addf %119, %120 : vector<8x512xf32>
    %122 = vector.extract_strided_slice %121 {offsets = [0, 0], sizes = [8, 128], strides = [1, 1]} : vector<8x512xf32> to vector<8x128xf32>
    %123 = arith.negf %122 : vector<8x128xf32>
    %124 = math.exp %123 : vector<8x128xf32>
    %cst_57 = arith.constant 1.000000e+00 : f32
    %125 = vector.broadcast %cst_57 : f32 to vector<8x128xf32>
    %126 = arith.addf %125, %124 : vector<8x128xf32>
    %127 = arith.divf %125, %126 : vector<8x128xf32>
    %128 = vector.extract_strided_slice %121 {offsets = [0, 128], sizes = [8, 128], strides = [1, 1]} : vector<8x512xf32> to vector<8x128xf32>
    %129 = arith.negf %128 : vector<8x128xf32>
    %130 = math.exp %129 : vector<8x128xf32>
    %cst_58 = arith.constant 1.000000e+00 : f32
    %131 = vector.broadcast %cst_58 : f32 to vector<8x128xf32>
    %132 = arith.addf %131, %130 : vector<8x128xf32>
    %133 = arith.divf %131, %132 : vector<8x128xf32>
    %134 = vector.extract_strided_slice %121 {offsets = [0, 256], sizes = [8, 128], strides = [1, 1]} : vector<8x512xf32> to vector<8x128xf32>
    %135 = math.tanh %134 : vector<8x128xf32>
    %136 = vector.extract_strided_slice %121 {offsets = [0, 384], sizes = [8, 128], strides = [1, 1]} : vector<8x512xf32> to vector<8x128xf32>
    %137 = arith.negf %136 : vector<8x128xf32>
    %138 = math.exp %137 : vector<8x128xf32>
    %cst_59 = arith.constant 1.000000e+00 : f32
    %139 = vector.broadcast %cst_59 : f32 to vector<8x128xf32>
    %140 = arith.addf %139, %138 : vector<8x128xf32>
    %141 = arith.divf %139, %140 : vector<8x128xf32>
    %142 = vector.extract_strided_slice %86 {offsets = [0, 128], sizes = [8, 128], strides = [1, 1]} : vector<8x256xf32> to vector<8x128xf32>
    %143 = arith.mulf %133, %142 : vector<8x128xf32>
    %144 = arith.mulf %127, %135 : vector<8x128xf32>
    %145 = arith.addf %143, %144 : vector<8x128xf32>
    %146 = math.tanh %145 : vector<8x128xf32>
    %147 = arith.mulf %141, %146 : vector<8x128xf32>
    %c0_60 = arith.constant 0 : index
    %c128_61 = arith.constant 128 : index
    %148 = vector.load %arg9[%c0_60, %c128_61] : memref<8x256xf32, #tpu.memory_space<vmem>>, vector<8x128xf32>
    tpu.vector_store %arg9[%c0_60, %c128_61], %145 {strides = array<i32>} : memref<8x256xf32, #tpu.memory_space<vmem>>, vector<8x128xf32>,
    %c0_62 = arith.constant 0 : index
    %c128_63 = arith.constant 128 : index
    %149 = vector.load %arg8[%c0_62, %c128_63] : memref<8x256xf32, #tpu.memory_space<vmem>>, vector<8x128xf32>
    tpu.vector_store %arg8[%c0_62, %c128_63], %147 {strides = array<i32>} : memref<8x256xf32, #tpu.memory_space<vmem>>, vector<8x128xf32>,
    %c48_64 = arith.constant 48 : index
    %c128_65 = arith.constant 128 : index
    %150 = vector.load %arg7[%c48_64, %c128_65] : memref<64x256xf32, #tpu.memory_space<vmem>>, vector<8x128xf32>
    tpu.vector_store %arg7[%c48_64, %c128_65], %147 {strides = array<i32>} : memref<64x256xf32, #tpu.memory_space<vmem>>, vector<8x128xf32>,
    %c0_66 = arith.constant 0 : index
    %c0_67 = arith.constant 0 : index
    %151 = vector.load %arg8[%c0_66, %c0_67] : memref<8x256xf32, #tpu.memory_space<vmem>>, vector<8x256xf32>
    %152 = arith.truncf %151 : vector<8x256xf32> to vector<8x256xbf16>
    %cst_68 = arith.constant dense<0.000000e+00> : vector<8x1024xf32>
    %153 = tpu.matmul %152, %14, %cst_68 {dimension_numbers = #tpu.dot_dimension_numbers<[1], [0], [0], [1], [0, 0, 1, 1], [], []>} : vector<8x256xbf16>, vector<256x1024xbf16>, vector<8x1024xf32> -> vector<8x1024xf32>
    %c0_69 = arith.constant 0 : index
    %c0_70 = arith.constant 0 : index
    %154 = vector.load %arg9[%c0_69, %c0_70] : memref<8x256xf32, #tpu.memory_space<vmem>>, vector<8x256xf32>
    %c16 = arith.constant 16 : index
    %c0_71 = arith.constant 0 : index
    %155 = vector.load %arg6[%c16, %c0_71] : memref<64x1024xf32, #tpu.memory_space<vmem>>, vector<8x512xf32>
    %156 = vector.extract_strided_slice %153 {offsets = [0, 0], sizes = [8, 512], strides = [1, 1]} : vector<8x1024xf32> to vector<8x512xf32>
    %157 = arith.addf %155, %156 : vector<8x512xf32>
    %158 = vector.extract_strided_slice %157 {offsets = [0, 0], sizes = [8, 128], strides = [1, 1]} : vector<8x512xf32> to vector<8x128xf32>
    %159 = arith.negf %158 : vector<8x128xf32>
    %160 = math.exp %159 : vector<8x128xf32>
    %cst_72 = arith.constant 1.000000e+00 : f32
    %161 = vector.broadcast %cst_72 : f32 to vector<8x128xf32>
    %162 = arith.addf %161, %160 : vector<8x128xf32>
    %163 = arith.divf %161, %162 : vector<8x128xf32>
    %164 = vector.extract_strided_slice %157 {offsets = [0, 128], sizes = [8, 128], strides = [1, 1]} : vector<8x512xf32> to vector<8x128xf32>
    %165 = arith.negf %164 : vector<8x128xf32>
    %166 = math.exp %165 : vector<8x128xf32>
    %cst_73 = arith.constant 1.000000e+00 : f32
    %167 = vector.broadcast %cst_73 : f32 to vector<8x128xf32>
    %168 = arith.addf %167, %166 : vector<8x128xf32>
    %169 = arith.divf %167, %168 : vector<8x128xf32>
    %170 = vector.extract_strided_slice %157 {offsets = [0, 256], sizes = [8, 128], strides = [1, 1]} : vector<8x512xf32> to vector<8x128xf32>
    %171 = math.tanh %170 : vector<8x128xf32>
    %172 = vector.extract_strided_slice %157 {offsets = [0, 384], sizes = [8, 128], strides = [1, 1]} : vector<8x512xf32> to vector<8x128xf32>
    %173 = arith.negf %172 : vector<8x128xf32>
    %174 = math.exp %173 : vector<8x128xf32>
    %cst_74 = arith.constant 1.000000e+00 : f32
    %175 = vector.broadcast %cst_74 : f32 to vector<8x128xf32>
    %176 = arith.addf %175, %174 : vector<8x128xf32>
    %177 = arith.divf %175, %176 : vector<8x128xf32>
    %178 = vector.extract_strided_slice %154 {offsets = [0, 0], sizes = [8, 128], strides = [1, 1]} : vector<8x256xf32> to vector<8x128xf32>
    %179 = arith.mulf %169, %178 : vector<8x128xf32>
    %180 = arith.mulf %163, %171 : vector<8x128xf32>
    %181 = arith.addf %179, %180 : vector<8x128xf32>
    %182 = math.tanh %181 : vector<8x128xf32>
    %183 = arith.mulf %177, %182 : vector<8x128xf32>
    %c0_75 = arith.constant 0 : index
    %c0_76 = arith.constant 0 : index
    %184 = vector.load %arg9[%c0_75, %c0_76] : memref<8x256xf32, #tpu.memory_space<vmem>>, vector<8x128xf32>
    tpu.vector_store %arg9[%c0_75, %c0_76], %181 {strides = array<i32>} : memref<8x256xf32, #tpu.memory_space<vmem>>, vector<8x128xf32>,
    %c0_77 = arith.constant 0 : index
    %c0_78 = arith.constant 0 : index
    %185 = vector.load %arg8[%c0_77, %c0_78] : memref<8x256xf32, #tpu.memory_space<vmem>>, vector<8x128xf32>
    tpu.vector_store %arg8[%c0_77, %c0_78], %183 {strides = array<i32>} : memref<8x256xf32, #tpu.memory_space<vmem>>, vector<8x128xf32>,
    %c16_79 = arith.constant 16 : index
    %c0_80 = arith.constant 0 : index
    %186 = vector.load %arg7[%c16_79, %c0_80] : memref<64x256xf32, #tpu.memory_space<vmem>>, vector<8x128xf32>
    tpu.vector_store %arg7[%c16_79, %c0_80], %183 {strides = array<i32>} : memref<64x256xf32, #tpu.memory_space<vmem>>, vector<8x128xf32>,
    %c40 = arith.constant 40 : index
    %c512_81 = arith.constant 512 : index
    %187 = vector.load %arg6[%c40, %c512_81] : memref<64x1024xf32, #tpu.memory_space<vmem>>, vector<8x512xf32>
    %188 = vector.extract_strided_slice %153 {offsets = [0, 512], sizes = [8, 512], strides = [1, 1]} : vector<8x1024xf32> to vector<8x512xf32>
    %189 = arith.addf %187, %188 : vector<8x512xf32>
    %190 = vector.extract_strided_slice %189 {offsets = [0, 0], sizes = [8, 128], strides = [1, 1]} : vector<8x512xf32> to vector<8x128xf32>
    %191 = arith.negf %190 : vector<8x128xf32>
    %192 = math.exp %191 : vector<8x128xf32>
    %cst_82 = arith.constant 1.000000e+00 : f32
    %193 = vector.broadcast %cst_82 : f32 to vector<8x128xf32>
    %194 = arith.addf %193, %192 : vector<8x128xf32>
    %195 = arith.divf %193, %194 : vector<8x128xf32>
    %196 = vector.extract_strided_slice %189 {offsets = [0, 128], sizes = [8, 128], strides = [1, 1]} : vector<8x512xf32> to vector<8x128xf32>
    %197 = arith.negf %196 : vector<8x128xf32>
    %198 = math.exp %197 : vector<8x128xf32>
    %cst_83 = arith.constant 1.000000e+00 : f32
    %199 = vector.broadcast %cst_83 : f32 to vector<8x128xf32>
    %200 = arith.addf %199, %198 : vector<8x128xf32>
    %201 = arith.divf %199, %200 : vector<8x128xf32>
    %202 = vector.extract_strided_slice %189 {offsets = [0, 256], sizes = [8, 128], strides = [1, 1]} : vector<8x512xf32> to vector<8x128xf32>
    %203 = math.tanh %202 : vector<8x128xf32>
    %204 = vector.extract_strided_slice %189 {offsets = [0, 384], sizes = [8, 128], strides = [1, 1]} : vector<8x512xf32> to vector<8x128xf32>
    %205 = arith.negf %204 : vector<8x128xf32>
    %206 = math.exp %205 : vector<8x128xf32>
    %cst_84 = arith.constant 1.000000e+00 : f32
    %207 = vector.broadcast %cst_84 : f32 to vector<8x128xf32>
    %208 = arith.addf %207, %206 : vector<8x128xf32>
    %209 = arith.divf %207, %208 : vector<8x128xf32>
    %210 = vector.extract_strided_slice %154 {offsets = [0, 128], sizes = [8, 128], strides = [1, 1]} : vector<8x256xf32> to vector<8x128xf32>
    %211 = arith.mulf %201, %210 : vector<8x128xf32>
    %212 = arith.mulf %195, %203 : vector<8x128xf32>
    %213 = arith.addf %211, %212 : vector<8x128xf32>
    %214 = math.tanh %213 : vector<8x128xf32>
    %215 = arith.mulf %209, %214 : vector<8x128xf32>
    %c0_85 = arith.constant 0 : index
    %c128_86 = arith.constant 128 : index
    %216 = vector.load %arg9[%c0_85, %c128_86] : memref<8x256xf32, #tpu.memory_space<vmem>>, vector<8x128xf32>
    tpu.vector_store %arg9[%c0_85, %c128_86], %213 {strides = array<i32>} : memref<8x256xf32, #tpu.memory_space<vmem>>, vector<8x128xf32>,
    %c0_87 = arith.constant 0 : index
    %c128_88 = arith.constant 128 : index
    %217 = vector.load %arg8[%c0_87, %c128_88] : memref<8x256xf32, #tpu.memory_space<vmem>>, vector<8x128xf32>
    tpu.vector_store %arg8[%c0_87, %c128_88], %215 {strides = array<i32>} : memref<8x256xf32, #tpu.memory_space<vmem>>, vector<8x128xf32>,
    %c40_89 = arith.constant 40 : index
    %c128_90 = arith.constant 128 : index
    %218 = vector.load %arg7[%c40_89, %c128_90] : memref<64x256xf32, #tpu.memory_space<vmem>>, vector<8x128xf32>
    tpu.vector_store %arg7[%c40_89, %c128_90], %215 {strides = array<i32>} : memref<64x256xf32, #tpu.memory_space<vmem>>, vector<8x128xf32>,
    %c0_91 = arith.constant 0 : index
    %c0_92 = arith.constant 0 : index
    %219 = vector.load %arg8[%c0_91, %c0_92] : memref<8x256xf32, #tpu.memory_space<vmem>>, vector<8x256xf32>
    %220 = arith.truncf %219 : vector<8x256xf32> to vector<8x256xbf16>
    %cst_93 = arith.constant dense<0.000000e+00> : vector<8x1024xf32>
    %221 = tpu.matmul %220, %14, %cst_93 {dimension_numbers = #tpu.dot_dimension_numbers<[1], [0], [0], [1], [0, 0, 1, 1], [], []>} : vector<8x256xbf16>, vector<256x1024xbf16>, vector<8x1024xf32> -> vector<8x1024xf32>
    %c0_94 = arith.constant 0 : index
    %c0_95 = arith.constant 0 : index
    %222 = vector.load %arg9[%c0_94, %c0_95] : memref<8x256xf32, #tpu.memory_space<vmem>>, vector<8x256xf32>
    %c24 = arith.constant 24 : index
    %c0_96 = arith.constant 0 : index
    %223 = vector.load %arg6[%c24, %c0_96] : memref<64x1024xf32, #tpu.memory_space<vmem>>, vector<8x512xf32>
    %224 = vector.extract_strided_slice %221 {offsets = [0, 0], sizes = [8, 512], strides = [1, 1]} : vector<8x1024xf32> to vector<8x512xf32>
    %225 = arith.addf %223, %224 : vector<8x512xf32>
    %226 = vector.extract_strided_slice %225 {offsets = [0, 0], sizes = [8, 128], strides = [1, 1]} : vector<8x512xf32> to vector<8x128xf32>
    %227 = arith.negf %226 : vector<8x128xf32>
    %228 = math.exp %227 : vector<8x128xf32>
    %cst_97 = arith.constant 1.000000e+00 : f32
    %229 = vector.broadcast %cst_97 : f32 to vector<8x128xf32>
    %230 = arith.addf %229, %228 : vector<8x128xf32>
    %231 = arith.divf %229, %230 : vector<8x128xf32>
    %232 = vector.extract_strided_slice %225 {offsets = [0, 128], sizes = [8, 128], strides = [1, 1]} : vector<8x512xf32> to vector<8x128xf32>
    %233 = arith.negf %232 : vector<8x128xf32>
    %234 = math.exp %233 : vector<8x128xf32>
    %cst_98 = arith.constant 1.000000e+00 : f32
    %235 = vector.broadcast %cst_98 : f32 to vector<8x128xf32>
    %236 = arith.addf %235, %234 : vector<8x128xf32>
    %237 = arith.divf %235, %236 : vector<8x128xf32>
    %238 = vector.extract_strided_slice %225 {offsets = [0, 256], sizes = [8, 128], strides = [1, 1]} : vector<8x512xf32> to vector<8x128xf32>
    %239 = math.tanh %238 : vector<8x128xf32>
    %240 = vector.extract_strided_slice %225 {offsets = [0, 384], sizes = [8, 128], strides = [1, 1]} : vector<8x512xf32> to vector<8x128xf32>
    %241 = arith.negf %240 : vector<8x128xf32>
    %242 = math.exp %241 : vector<8x128xf32>
    %cst_99 = arith.constant 1.000000e+00 : f32
    %243 = vector.broadcast %cst_99 : f32 to vector<8x128xf32>
    %244 = arith.addf %243, %242 : vector<8x128xf32>
    %245 = arith.divf %243, %244 : vector<8x128xf32>
    %246 = vector.extract_strided_slice %222 {offsets = [0, 0], sizes = [8, 128], strides = [1, 1]} : vector<8x256xf32> to vector<8x128xf32>
    %247 = arith.mulf %237, %246 : vector<8x128xf32>
    %248 = arith.mulf %231, %239 : vector<8x128xf32>
    %249 = arith.addf %247, %248 : vector<8x128xf32>
    %250 = math.tanh %249 : vector<8x128xf32>
    %251 = arith.mulf %245, %250 : vector<8x128xf32>
    %c0_100 = arith.constant 0 : index
    %c0_101 = arith.constant 0 : index
    %252 = vector.load %arg9[%c0_100, %c0_101] : memref<8x256xf32, #tpu.memory_space<vmem>>, vector<8x128xf32>
    tpu.vector_store %arg9[%c0_100, %c0_101], %249 {strides = array<i32>} : memref<8x256xf32, #tpu.memory_space<vmem>>, vector<8x128xf32>,
    %c0_102 = arith.constant 0 : index
    %c0_103 = arith.constant 0 : index
    %253 = vector.load %arg8[%c0_102, %c0_103] : memref<8x256xf32, #tpu.memory_space<vmem>>, vector<8x128xf32>
    tpu.vector_store %arg8[%c0_102, %c0_103], %251 {strides = array<i32>} : memref<8x256xf32, #tpu.memory_space<vmem>>, vector<8x128xf32>,
    %c24_104 = arith.constant 24 : index
    %c0_105 = arith.constant 0 : index
    %254 = vector.load %arg7[%c24_104, %c0_105] : memref<64x256xf32, #tpu.memory_space<vmem>>, vector<8x128xf32>
    tpu.vector_store %arg7[%c24_104, %c0_105], %251 {strides = array<i32>} : memref<64x256xf32, #tpu.memory_space<vmem>>, vector<8x128xf32>,
    %c32 = arith.constant 32 : index
    %c512_106 = arith.constant 512 : index
    %255 = vector.load %arg6[%c32, %c512_106] : memref<64x1024xf32, #tpu.memory_space<vmem>>, vector<8x512xf32>
    %256 = vector.extract_strided_slice %221 {offsets = [0, 512], sizes = [8, 512], strides = [1, 1]} : vector<8x1024xf32> to vector<8x512xf32>
    %257 = arith.addf %255, %256 : vector<8x512xf32>
    %258 = vector.extract_strided_slice %257 {offsets = [0, 0], sizes = [8, 128], strides = [1, 1]} : vector<8x512xf32> to vector<8x128xf32>
    %259 = arith.negf %258 : vector<8x128xf32>
    %260 = math.exp %259 : vector<8x128xf32>
    %cst_107 = arith.constant 1.000000e+00 : f32
    %261 = vector.broadcast %cst_107 : f32 to vector<8x128xf32>
    %262 = arith.addf %261, %260 : vector<8x128xf32>
    %263 = arith.divf %261, %262 : vector<8x128xf32>
    %264 = vector.extract_strided_slice %257 {offsets = [0, 128], sizes = [8, 128], strides = [1, 1]} : vector<8x512xf32> to vector<8x128xf32>
    %265 = arith.negf %264 : vector<8x128xf32>
    %266 = math.exp %265 : vector<8x128xf32>
    %cst_108 = arith.constant 1.000000e+00 : f32
    %267 = vector.broadcast %cst_108 : f32 to vector<8x128xf32>
    %268 = arith.addf %267, %266 : vector<8x128xf32>
    %269 = arith.divf %267, %268 : vector<8x128xf32>
    %270 = vector.extract_strided_slice %257 {offsets = [0, 256], sizes = [8, 128], strides = [1, 1]} : vector<8x512xf32> to vector<8x128xf32>
    %271 = math.tanh %270 : vector<8x128xf32>
    %272 = vector.extract_strided_slice %257 {offsets = [0, 384], sizes = [8, 128], strides = [1, 1]} : vector<8x512xf32> to vector<8x128xf32>
    %273 = arith.negf %272 : vector<8x128xf32>
    %274 = math.exp %273 : vector<8x128xf32>
    %cst_109 = arith.constant 1.000000e+00 : f32
    %275 = vector.broadcast %cst_109 : f32 to vector<8x128xf32>
    %276 = arith.addf %275, %274 : vector<8x128xf32>
    %277 = arith.divf %275, %276 : vector<8x128xf32>
    %278 = vector.extract_strided_slice %222 {offsets = [0, 128], sizes = [8, 128], strides = [1, 1]} : vector<8x256xf32> to vector<8x128xf32>
    %279 = arith.mulf %269, %278 : vector<8x128xf32>
    %280 = arith.mulf %263, %271 : vector<8x128xf32>
    %281 = arith.addf %279, %280 : vector<8x128xf32>
    %282 = math.tanh %281 : vector<8x128xf32>
    %283 = arith.mulf %277, %282 : vector<8x128xf32>
    %c0_110 = arith.constant 0 : index
    %c128_111 = arith.constant 128 : index
    %284 = vector.load %arg9[%c0_110, %c128_111] : memref<8x256xf32, #tpu.memory_space<vmem>>, vector<8x128xf32>
    tpu.vector_store %arg9[%c0_110, %c128_111], %281 {strides = array<i32>} : memref<8x256xf32, #tpu.memory_space<vmem>>, vector<8x128xf32>,
    %c0_112 = arith.constant 0 : index
    %c128_113 = arith.constant 128 : index
    %285 = vector.load %arg8[%c0_112, %c128_113] : memref<8x256xf32, #tpu.memory_space<vmem>>, vector<8x128xf32>
    tpu.vector_store %arg8[%c0_112, %c128_113], %283 {strides = array<i32>} : memref<8x256xf32, #tpu.memory_space<vmem>>, vector<8x128xf32>,
    %c32_114 = arith.constant 32 : index
    %c128_115 = arith.constant 128 : index
    %286 = vector.load %arg7[%c32_114, %c128_115] : memref<64x256xf32, #tpu.memory_space<vmem>>, vector<8x128xf32>
    tpu.vector_store %arg7[%c32_114, %c128_115], %283 {strides = array<i32>} : memref<64x256xf32, #tpu.memory_space<vmem>>, vector<8x128xf32>,
    %c0_116 = arith.constant 0 : index
    %c0_117 = arith.constant 0 : index
    %287 = vector.load %arg8[%c0_116, %c0_117] : memref<8x256xf32, #tpu.memory_space<vmem>>, vector<8x256xf32>
    %288 = arith.truncf %287 : vector<8x256xf32> to vector<8x256xbf16>
    %cst_118 = arith.constant dense<0.000000e+00> : vector<8x1024xf32>
    %289 = tpu.matmul %288, %14, %cst_118 {dimension_numbers = #tpu.dot_dimension_numbers<[1], [0], [0], [1], [0, 0, 1, 1], [], []>} : vector<8x256xbf16>, vector<256x1024xbf16>, vector<8x1024xf32> -> vector<8x1024xf32>
    %c0_119 = arith.constant 0 : index
    %c0_120 = arith.constant 0 : index
    %290 = vector.load %arg9[%c0_119, %c0_120] : memref<8x256xf32, #tpu.memory_space<vmem>>, vector<8x256xf32>
    %c32_121 = arith.constant 32 : index
    %c0_122 = arith.constant 0 : index
    %291 = vector.load %arg6[%c32_121, %c0_122] : memref<64x1024xf32, #tpu.memory_space<vmem>>, vector<8x512xf32>
    %292 = vector.extract_strided_slice %289 {offsets = [0, 0], sizes = [8, 512], strides = [1, 1]} : vector<8x1024xf32> to vector<8x512xf32>
    %293 = arith.addf %291, %292 : vector<8x512xf32>
    %294 = vector.extract_strided_slice %293 {offsets = [0, 0], sizes = [8, 128], strides = [1, 1]} : vector<8x512xf32> to vector<8x128xf32>
    %295 = arith.negf %294 : vector<8x128xf32>
    %296 = math.exp %295 : vector<8x128xf32>
    %cst_123 = arith.constant 1.000000e+00 : f32
    %297 = vector.broadcast %cst_123 : f32 to vector<8x128xf32>
    %298 = arith.addf %297, %296 : vector<8x128xf32>
    %299 = arith.divf %297, %298 : vector<8x128xf32>
    %300 = vector.extract_strided_slice %293 {offsets = [0, 128], sizes = [8, 128], strides = [1, 1]} : vector<8x512xf32> to vector<8x128xf32>
    %301 = arith.negf %300 : vector<8x128xf32>
    %302 = math.exp %301 : vector<8x128xf32>
    %cst_124 = arith.constant 1.000000e+00 : f32
    %303 = vector.broadcast %cst_124 : f32 to vector<8x128xf32>
    %304 = arith.addf %303, %302 : vector<8x128xf32>
    %305 = arith.divf %303, %304 : vector<8x128xf32>
    %306 = vector.extract_strided_slice %293 {offsets = [0, 256], sizes = [8, 128], strides = [1, 1]} : vector<8x512xf32> to vector<8x128xf32>
    %307 = math.tanh %306 : vector<8x128xf32>
    %308 = vector.extract_strided_slice %293 {offsets = [0, 384], sizes = [8, 128], strides = [1, 1]} : vector<8x512xf32> to vector<8x128xf32>
    %309 = arith.negf %308 : vector<8x128xf32>
    %310 = math.exp %309 : vector<8x128xf32>
    %cst_125 = arith.constant 1.000000e+00 : f32
    %311 = vector.broadcast %cst_125 : f32 to vector<8x128xf32>
    %312 = arith.addf %311, %310 : vector<8x128xf32>
    %313 = arith.divf %311, %312 : vector<8x128xf32>
    %314 = vector.extract_strided_slice %290 {offsets = [0, 0], sizes = [8, 128], strides = [1, 1]} : vector<8x256xf32> to vector<8x128xf32>
    %315 = arith.mulf %305, %314 : vector<8x128xf32>
    %316 = arith.mulf %299, %307 : vector<8x128xf32>
    %317 = arith.addf %315, %316 : vector<8x128xf32>
    %318 = math.tanh %317 : vector<8x128xf32>
    %319 = arith.mulf %313, %318 : vector<8x128xf32>
    %c0_126 = arith.constant 0 : index
    %c0_127 = arith.constant 0 : index
    %320 = vector.load %arg9[%c0_126, %c0_127] : memref<8x256xf32, #tpu.memory_space<vmem>>, vector<8x128xf32>
    tpu.vector_store %arg9[%c0_126, %c0_127], %317 {strides = array<i32>} : memref<8x256xf32, #tpu.memory_space<vmem>>, vector<8x128xf32>,
    %c0_128 = arith.constant 0 : index
    %c0_129 = arith.constant 0 : index
    %321 = vector.load %arg8[%c0_128, %c0_129] : memref<8x256xf32, #tpu.memory_space<vmem>>, vector<8x128xf32>
    tpu.vector_store %arg8[%c0_128, %c0_129], %319 {strides = array<i32>} : memref<8x256xf32, #tpu.memory_space<vmem>>, vector<8x128xf32>,
    %c32_130 = arith.constant 32 : index
    %c0_131 = arith.constant 0 : index
    %322 = vector.load %arg7[%c32_130, %c0_131] : memref<64x256xf32, #tpu.memory_space<vmem>>, vector<8x128xf32>
    tpu.vector_store %arg7[%c32_130, %c0_131], %319 {strides = array<i32>} : memref<64x256xf32, #tpu.memory_space<vmem>>, vector<8x128xf32>,
    %c24_132 = arith.constant 24 : index
    %c512_133 = arith.constant 512 : index
    %323 = vector.load %arg6[%c24_132, %c512_133] : memref<64x1024xf32, #tpu.memory_space<vmem>>, vector<8x512xf32>
    %324 = vector.extract_strided_slice %289 {offsets = [0, 512], sizes = [8, 512], strides = [1, 1]} : vector<8x1024xf32> to vector<8x512xf32>
    %325 = arith.addf %323, %324 : vector<8x512xf32>
    %326 = vector.extract_strided_slice %325 {offsets = [0, 0], sizes = [8, 128], strides = [1, 1]} : vector<8x512xf32> to vector<8x128xf32>
    %327 = arith.negf %326 : vector<8x128xf32>
    %328 = math.exp %327 : vector<8x128xf32>
    %cst_134 = arith.constant 1.000000e+00 : f32
    %329 = vector.broadcast %cst_134 : f32 to vector<8x128xf32>
    %330 = arith.addf %329, %328 : vector<8x128xf32>
    %331 = arith.divf %329, %330 : vector<8x128xf32>
    %332 = vector.extract_strided_slice %325 {offsets = [0, 128], sizes = [8, 128], strides = [1, 1]} : vector<8x512xf32> to vector<8x128xf32>
    %333 = arith.negf %332 : vector<8x128xf32>
    %334 = math.exp %333 : vector<8x128xf32>
    %cst_135 = arith.constant 1.000000e+00 : f32
    %335 = vector.broadcast %cst_135 : f32 to vector<8x128xf32>
    %336 = arith.addf %335, %334 : vector<8x128xf32>
    %337 = arith.divf %335, %336 : vector<8x128xf32>
    %338 = vector.extract_strided_slice %325 {offsets = [0, 256], sizes = [8, 128], strides = [1, 1]} : vector<8x512xf32> to vector<8x128xf32>
    %339 = math.tanh %338 : vector<8x128xf32>
    %340 = vector.extract_strided_slice %325 {offsets = [0, 384], sizes = [8, 128], strides = [1, 1]} : vector<8x512xf32> to vector<8x128xf32>
    %341 = arith.negf %340 : vector<8x128xf32>
    %342 = math.exp %341 : vector<8x128xf32>
    %cst_136 = arith.constant 1.000000e+00 : f32
    %343 = vector.broadcast %cst_136 : f32 to vector<8x128xf32>
    %344 = arith.addf %343, %342 : vector<8x128xf32>
    %345 = arith.divf %343, %344 : vector<8x128xf32>
    %346 = vector.extract_strided_slice %290 {offsets = [0, 128], sizes = [8, 128], strides = [1, 1]} : vector<8x256xf32> to vector<8x128xf32>
    %347 = arith.mulf %337, %346 : vector<8x128xf32>
    %348 = arith.mulf %331, %339 : vector<8x128xf32>
    %349 = arith.addf %347, %348 : vector<8x128xf32>
    %350 = math.tanh %349 : vector<8x128xf32>
    %351 = arith.mulf %345, %350 : vector<8x128xf32>
    %c0_137 = arith.constant 0 : index
    %c128_138 = arith.constant 128 : index
    %352 = vector.load %arg9[%c0_137, %c128_138] : memref<8x256xf32, #tpu.memory_space<vmem>>, vector<8x128xf32>
    tpu.vector_store %arg9[%c0_137, %c128_138], %349 {strides = array<i32>} : memref<8x256xf32, #tpu.memory_space<vmem>>, vector<8x128xf32>,
    %c0_139 = arith.constant 0 : index
    %c128_140 = arith.constant 128 : index
    %353 = vector.load %arg8[%c0_139, %c128_140] : memref<8x256xf32, #tpu.memory_space<vmem>>, vector<8x128xf32>
    tpu.vector_store %arg8[%c0_139, %c128_140], %351 {strides = array<i32>} : memref<8x256xf32, #tpu.memory_space<vmem>>, vector<8x128xf32>,
    %c24_141 = arith.constant 24 : index
    %c128_142 = arith.constant 128 : index
    %354 = vector.load %arg7[%c24_141, %c128_142] : memref<64x256xf32, #tpu.memory_space<vmem>>, vector<8x128xf32>
    tpu.vector_store %arg7[%c24_141, %c128_142], %351 {strides = array<i32>} : memref<64x256xf32, #tpu.memory_space<vmem>>, vector<8x128xf32>,
    %c0_143 = arith.constant 0 : index
    %c0_144 = arith.constant 0 : index
    %355 = vector.load %arg8[%c0_143, %c0_144] : memref<8x256xf32, #tpu.memory_space<vmem>>, vector<8x256xf32>
    %356 = arith.truncf %355 : vector<8x256xf32> to vector<8x256xbf16>
    %cst_145 = arith.constant dense<0.000000e+00> : vector<8x1024xf32>
    %357 = tpu.matmul %356, %14, %cst_145 {dimension_numbers = #tpu.dot_dimension_numbers<[1], [0], [0], [1], [0, 0, 1, 1], [], []>} : vector<8x256xbf16>, vector<256x1024xbf16>, vector<8x1024xf32> -> vector<8x1024xf32>
    %c0_146 = arith.constant 0 : index
    %c0_147 = arith.constant 0 : index
    %358 = vector.load %arg9[%c0_146, %c0_147] : memref<8x256xf32, #tpu.memory_space<vmem>>, vector<8x256xf32>
    %c40_148 = arith.constant 40 : index
    %c0_149 = arith.constant 0 : index
    %359 = vector.load %arg6[%c40_148, %c0_149] : memref<64x1024xf32, #tpu.memory_space<vmem>>, vector<8x512xf32>
    %360 = vector.extract_strided_slice %357 {offsets = [0, 0], sizes = [8, 512], strides = [1, 1]} : vector<8x1024xf32> to vector<8x512xf32>
    %361 = arith.addf %359, %360 : vector<8x512xf32>
    %362 = vector.extract_strided_slice %361 {offsets = [0, 0], sizes = [8, 128], strides = [1, 1]} : vector<8x512xf32> to vector<8x128xf32>
    %363 = arith.negf %362 : vector<8x128xf32>
    %364 = math.exp %363 : vector<8x128xf32>
    %cst_150 = arith.constant 1.000000e+00 : f32
    %365 = vector.broadcast %cst_150 : f32 to vector<8x128xf32>
    %366 = arith.addf %365, %364 : vector<8x128xf32>
    %367 = arith.divf %365, %366 : vector<8x128xf32>
    %368 = vector.extract_strided_slice %361 {offsets = [0, 128], sizes = [8, 128], strides = [1, 1]} : vector<8x512xf32> to vector<8x128xf32>
    %369 = arith.negf %368 : vector<8x128xf32>
    %370 = math.exp %369 : vector<8x128xf32>
    %cst_151 = arith.constant 1.000000e+00 : f32
    %371 = vector.broadcast %cst_151 : f32 to vector<8x128xf32>
    %372 = arith.addf %371, %370 : vector<8x128xf32>
    %373 = arith.divf %371, %372 : vector<8x128xf32>
    %374 = vector.extract_strided_slice %361 {offsets = [0, 256], sizes = [8, 128], strides = [1, 1]} : vector<8x512xf32> to vector<8x128xf32>
    %375 = math.tanh %374 : vector<8x128xf32>
    %376 = vector.extract_strided_slice %361 {offsets = [0, 384], sizes = [8, 128], strides = [1, 1]} : vector<8x512xf32> to vector<8x128xf32>
    %377 = arith.negf %376 : vector<8x128xf32>
    %378 = math.exp %377 : vector<8x128xf32>
    %cst_152 = arith.constant 1.000000e+00 : f32
    %379 = vector.broadcast %cst_152 : f32 to vector<8x128xf32>
    %380 = arith.addf %379, %378 : vector<8x128xf32>
    %381 = arith.divf %379, %380 : vector<8x128xf32>
    %382 = vector.extract_strided_slice %358 {offsets = [0, 0], sizes = [8, 128], strides = [1, 1]} : vector<8x256xf32> to vector<8x128xf32>
    %383 = arith.mulf %373, %382 : vector<8x128xf32>
    %384 = arith.mulf %367, %375 : vector<8x128xf32>
    %385 = arith.addf %383, %384 : vector<8x128xf32>
    %386 = math.tanh %385 : vector<8x128xf32>
    %387 = arith.mulf %381, %386 : vector<8x128xf32>
    %c0_153 = arith.constant 0 : index
    %c0_154 = arith.constant 0 : index
    %388 = vector.load %arg9[%c0_153, %c0_154] : memref<8x256xf32, #tpu.memory_space<vmem>>, vector<8x128xf32>
    tpu.vector_store %arg9[%c0_153, %c0_154], %385 {strides = array<i32>} : memref<8x256xf32, #tpu.memory_space<vmem>>, vector<8x128xf32>,
    %c0_155 = arith.constant 0 : index
    %c0_156 = arith.constant 0 : index
    %389 = vector.load %arg8[%c0_155, %c0_156] : memref<8x256xf32, #tpu.memory_space<vmem>>, vector<8x128xf32>
    tpu.vector_store %arg8[%c0_155, %c0_156], %387 {strides = array<i32>} : memref<8x256xf32, #tpu.memory_space<vmem>>, vector<8x128xf32>,
    %c40_157 = arith.constant 40 : index
    %c0_158 = arith.constant 0 : index
    %390 = vector.load %arg7[%c40_157, %c0_158] : memref<64x256xf32, #tpu.memory_space<vmem>>, vector<8x128xf32>
    tpu.vector_store %arg7[%c40_157, %c0_158], %387 {strides = array<i32>} : memref<64x256xf32, #tpu.memory_space<vmem>>, vector<8x128xf32>,
    %c16_159 = arith.constant 16 : index
    %c512_160 = arith.constant 512 : index
    %391 = vector.load %arg6[%c16_159, %c512_160] : memref<64x1024xf32, #tpu.memory_space<vmem>>, vector<8x512xf32>
    %392 = vector.extract_strided_slice %357 {offsets = [0, 512], sizes = [8, 512], strides = [1, 1]} : vector<8x1024xf32> to vector<8x512xf32>
    %393 = arith.addf %391, %392 : vector<8x512xf32>
    %394 = vector.extract_strided_slice %393 {offsets = [0, 0], sizes = [8, 128], strides = [1, 1]} : vector<8x512xf32> to vector<8x128xf32>
    %395 = arith.negf %394 : vector<8x128xf32>
    %396 = math.exp %395 : vector<8x128xf32>
    %cst_161 = arith.constant 1.000000e+00 : f32
    %397 = vector.broadcast %cst_161 : f32 to vector<8x128xf32>
    %398 = arith.addf %397, %396 : vector<8x128xf32>
    %399 = arith.divf %397, %398 : vector<8x128xf32>
    %400 = vector.extract_strided_slice %393 {offsets = [0, 128], sizes = [8, 128], strides = [1, 1]} : vector<8x512xf32> to vector<8x128xf32>
    %401 = arith.negf %400 : vector<8x128xf32>
    %402 = math.exp %401 : vector<8x128xf32>
    %cst_162 = arith.constant 1.000000e+00 : f32
    %403 = vector.broadcast %cst_162 : f32 to vector<8x128xf32>
    %404 = arith.addf %403, %402 : vector<8x128xf32>
    %405 = arith.divf %403, %404 : vector<8x128xf32>
    %406 = vector.extract_strided_slice %393 {offsets = [0, 256], sizes = [8, 128], strides = [1, 1]} : vector<8x512xf32> to vector<8x128xf32>
    %407 = math.tanh %406 : vector<8x128xf32>
    %408 = vector.extract_strided_slice %393 {offsets = [0, 384], sizes = [8, 128], strides = [1, 1]} : vector<8x512xf32> to vector<8x128xf32>
    %409 = arith.negf %408 : vector<8x128xf32>
    %410 = math.exp %409 : vector<8x128xf32>
    %cst_163 = arith.constant 1.000000e+00 : f32
    %411 = vector.broadcast %cst_163 : f32 to vector<8x128xf32>
    %412 = arith.addf %411, %410 : vector<8x128xf32>
    %413 = arith.divf %411, %412 : vector<8x128xf32>
    %414 = vector.extract_strided_slice %358 {offsets = [0, 128], sizes = [8, 128], strides = [1, 1]} : vector<8x256xf32> to vector<8x128xf32>
    %415 = arith.mulf %405, %414 : vector<8x128xf32>
    %416 = arith.mulf %399, %407 : vector<8x128xf32>
    %417 = arith.addf %415, %416 : vector<8x128xf32>
    %418 = math.tanh %417 : vector<8x128xf32>
    %419 = arith.mulf %413, %418 : vector<8x128xf32>
    %c0_164 = arith.constant 0 : index
    %c128_165 = arith.constant 128 : index
    %420 = vector.load %arg9[%c0_164, %c128_165] : memref<8x256xf32, #tpu.memory_space<vmem>>, vector<8x128xf32>
    tpu.vector_store %arg9[%c0_164, %c128_165], %417 {strides = array<i32>} : memref<8x256xf32, #tpu.memory_space<vmem>>, vector<8x128xf32>,
    %c0_166 = arith.constant 0 : index
    %c128_167 = arith.constant 128 : index
    %421 = vector.load %arg8[%c0_166, %c128_167] : memref<8x256xf32, #tpu.memory_space<vmem>>, vector<8x128xf32>
    tpu.vector_store %arg8[%c0_166, %c128_167], %419 {strides = array<i32>} : memref<8x256xf32, #tpu.memory_space<vmem>>, vector<8x128xf32>,
    %c16_168 = arith.constant 16 : index
    %c128_169 = arith.constant 128 : index
    %422 = vector.load %arg7[%c16_168, %c128_169] : memref<64x256xf32, #tpu.memory_space<vmem>>, vector<8x128xf32>
    tpu.vector_store %arg7[%c16_168, %c128_169], %419 {strides = array<i32>} : memref<64x256xf32, #tpu.memory_space<vmem>>, vector<8x128xf32>,
    %c0_170 = arith.constant 0 : index
    %c0_171 = arith.constant 0 : index
    %423 = vector.load %arg8[%c0_170, %c0_171] : memref<8x256xf32, #tpu.memory_space<vmem>>, vector<8x256xf32>
    %424 = arith.truncf %423 : vector<8x256xf32> to vector<8x256xbf16>
    %cst_172 = arith.constant dense<0.000000e+00> : vector<8x1024xf32>
    %425 = tpu.matmul %424, %14, %cst_172 {dimension_numbers = #tpu.dot_dimension_numbers<[1], [0], [0], [1], [0, 0, 1, 1], [], []>} : vector<8x256xbf16>, vector<256x1024xbf16>, vector<8x1024xf32> -> vector<8x1024xf32>
    %c0_173 = arith.constant 0 : index
    %c0_174 = arith.constant 0 : index
    %426 = vector.load %arg9[%c0_173, %c0_174] : memref<8x256xf32, #tpu.memory_space<vmem>>, vector<8x256xf32>
    %c48_175 = arith.constant 48 : index
    %c0_176 = arith.constant 0 : index
    %427 = vector.load %arg6[%c48_175, %c0_176] : memref<64x1024xf32, #tpu.memory_space<vmem>>, vector<8x512xf32>
    %428 = vector.extract_strided_slice %425 {offsets = [0, 0], sizes = [8, 512], strides = [1, 1]} : vector<8x1024xf32> to vector<8x512xf32>
    %429 = arith.addf %427, %428 : vector<8x512xf32>
    %430 = vector.extract_strided_slice %429 {offsets = [0, 0], sizes = [8, 128], strides = [1, 1]} : vector<8x512xf32> to vector<8x128xf32>
    %431 = arith.negf %430 : vector<8x128xf32>
    %432 = math.exp %431 : vector<8x128xf32>
    %cst_177 = arith.constant 1.000000e+00 : f32
    %433 = vector.broadcast %cst_177 : f32 to vector<8x128xf32>
    %434 = arith.addf %433, %432 : vector<8x128xf32>
    %435 = arith.divf %433, %434 : vector<8x128xf32>
    %436 = vector.extract_strided_slice %429 {offsets = [0, 128], sizes = [8, 128], strides = [1, 1]} : vector<8x512xf32> to vector<8x128xf32>
    %437 = arith.negf %436 : vector<8x128xf32>
    %438 = math.exp %437 : vector<8x128xf32>
    %cst_178 = arith.constant 1.000000e+00 : f32
    %439 = vector.broadcast %cst_178 : f32 to vector<8x128xf32>
    %440 = arith.addf %439, %438 : vector<8x128xf32>
    %441 = arith.divf %439, %440 : vector<8x128xf32>
    %442 = vector.extract_strided_slice %429 {offsets = [0, 256], sizes = [8, 128], strides = [1, 1]} : vector<8x512xf32> to vector<8x128xf32>
    %443 = math.tanh %442 : vector<8x128xf32>
    %444 = vector.extract_strided_slice %429 {offsets = [0, 384], sizes = [8, 128], strides = [1, 1]} : vector<8x512xf32> to vector<8x128xf32>
    %445 = arith.negf %444 : vector<8x128xf32>
    %446 = math.exp %445 : vector<8x128xf32>
    %cst_179 = arith.constant 1.000000e+00 : f32
    %447 = vector.broadcast %cst_179 : f32 to vector<8x128xf32>
    %448 = arith.addf %447, %446 : vector<8x128xf32>
    %449 = arith.divf %447, %448 : vector<8x128xf32>
    %450 = vector.extract_strided_slice %426 {offsets = [0, 0], sizes = [8, 128], strides = [1, 1]} : vector<8x256xf32> to vector<8x128xf32>
    %451 = arith.mulf %441, %450 : vector<8x128xf32>
    %452 = arith.mulf %435, %443 : vector<8x128xf32>
    %453 = arith.addf %451, %452 : vector<8x128xf32>
    %454 = math.tanh %453 : vector<8x128xf32>
    %455 = arith.mulf %449, %454 : vector<8x128xf32>
    %c0_180 = arith.constant 0 : index
    %c0_181 = arith.constant 0 : index
    %456 = vector.load %arg9[%c0_180, %c0_181] : memref<8x256xf32, #tpu.memory_space<vmem>>, vector<8x128xf32>
    tpu.vector_store %arg9[%c0_180, %c0_181], %453 {strides = array<i32>} : memref<8x256xf32, #tpu.memory_space<vmem>>, vector<8x128xf32>,
    %c0_182 = arith.constant 0 : index
    %c0_183 = arith.constant 0 : index
    %457 = vector.load %arg8[%c0_182, %c0_183] : memref<8x256xf32, #tpu.memory_space<vmem>>, vector<8x128xf32>
    tpu.vector_store %arg8[%c0_182, %c0_183], %455 {strides = array<i32>} : memref<8x256xf32, #tpu.memory_space<vmem>>, vector<8x128xf32>,
    %c48_184 = arith.constant 48 : index
    %c0_185 = arith.constant 0 : index
    %458 = vector.load %arg7[%c48_184, %c0_185] : memref<64x256xf32, #tpu.memory_space<vmem>>, vector<8x128xf32>
    tpu.vector_store %arg7[%c48_184, %c0_185], %455 {strides = array<i32>} : memref<64x256xf32, #tpu.memory_space<vmem>>, vector<8x128xf32>,
    %c8_186 = arith.constant 8 : index
    %c512_187 = arith.constant 512 : index
    %459 = vector.load %arg6[%c8_186, %c512_187] : memref<64x1024xf32, #tpu.memory_space<vmem>>, vector<8x512xf32>
    %460 = vector.extract_strided_slice %425 {offsets = [0, 512], sizes = [8, 512], strides = [1, 1]} : vector<8x1024xf32> to vector<8x512xf32>
    %461 = arith.addf %459, %460 : vector<8x512xf32>
    %462 = vector.extract_strided_slice %461 {offsets = [0, 0], sizes = [8, 128], strides = [1, 1]} : vector<8x512xf32> to vector<8x128xf32>
    %463 = arith.negf %462 : vector<8x128xf32>
    %464 = math.exp %463 : vector<8x128xf32>
    %cst_188 = arith.constant 1.000000e+00 : f32
    %465 = vector.broadcast %cst_188 : f32 to vector<8x128xf32>
    %466 = arith.addf %465, %464 : vector<8x128xf32>
    %467 = arith.divf %465, %466 : vector<8x128xf32>
    %468 = vector.extract_strided_slice %461 {offsets = [0, 128], sizes = [8, 128], strides = [1, 1]} : vector<8x512xf32> to vector<8x128xf32>
    %469 = arith.negf %468 : vector<8x128xf32>
    %470 = math.exp %469 : vector<8x128xf32>
    %cst_189 = arith.constant 1.000000e+00 : f32
    %471 = vector.broadcast %cst_189 : f32 to vector<8x128xf32>
    %472 = arith.addf %471, %470 : vector<8x128xf32>
    %473 = arith.divf %471, %472 : vector<8x128xf32>
    %474 = vector.extract_strided_slice %461 {offsets = [0, 256], sizes = [8, 128], strides = [1, 1]} : vector<8x512xf32> to vector<8x128xf32>
    %475 = math.tanh %474 : vector<8x128xf32>
    %476 = vector.extract_strided_slice %461 {offsets = [0, 384], sizes = [8, 128], strides = [1, 1]} : vector<8x512xf32> to vector<8x128xf32>
    %477 = arith.negf %476 : vector<8x128xf32>
    %478 = math.exp %477 : vector<8x128xf32>
    %cst_190 = arith.constant 1.000000e+00 : f32
    %479 = vector.broadcast %cst_190 : f32 to vector<8x128xf32>
    %480 = arith.addf %479, %478 : vector<8x128xf32>
    %481 = arith.divf %479, %480 : vector<8x128xf32>
    %482 = vector.extract_strided_slice %426 {offsets = [0, 128], sizes = [8, 128], strides = [1, 1]} : vector<8x256xf32> to vector<8x128xf32>
    %483 = arith.mulf %473, %482 : vector<8x128xf32>
    %484 = arith.mulf %467, %475 : vector<8x128xf32>
    %485 = arith.addf %483, %484 : vector<8x128xf32>
    %486 = math.tanh %485 : vector<8x128xf32>
    %487 = arith.mulf %481, %486 : vector<8x128xf32>
    %c0_191 = arith.constant 0 : index
    %c128_192 = arith.constant 128 : index
    %488 = vector.load %arg9[%c0_191, %c128_192] : memref<8x256xf32, #tpu.memory_space<vmem>>, vector<8x128xf32>
    tpu.vector_store %arg9[%c0_191, %c128_192], %485 {strides = array<i32>} : memref<8x256xf32, #tpu.memory_space<vmem>>, vector<8x128xf32>,
    %c0_193 = arith.constant 0 : index
    %c128_194 = arith.constant 128 : index
    %489 = vector.load %arg8[%c0_193, %c128_194] : memref<8x256xf32, #tpu.memory_space<vmem>>, vector<8x128xf32>
    tpu.vector_store %arg8[%c0_193, %c128_194], %487 {strides = array<i32>} : memref<8x256xf32, #tpu.memory_space<vmem>>, vector<8x128xf32>,
    %c8_195 = arith.constant 8 : index
    %c128_196 = arith.constant 128 : index
    %490 = vector.load %arg7[%c8_195, %c128_196] : memref<64x256xf32, #tpu.memory_space<vmem>>, vector<8x128xf32>
    tpu.vector_store %arg7[%c8_195, %c128_196], %487 {strides = array<i32>} : memref<64x256xf32, #tpu.memory_space<vmem>>, vector<8x128xf32>,
    %c0_197 = arith.constant 0 : index
    %c0_198 = arith.constant 0 : index
    %491 = vector.load %arg8[%c0_197, %c0_198] : memref<8x256xf32, #tpu.memory_space<vmem>>, vector<8x256xf32>
    %492 = arith.truncf %491 : vector<8x256xf32> to vector<8x256xbf16>
    %cst_199 = arith.constant dense<0.000000e+00> : vector<8x1024xf32>
    %493 = tpu.matmul %492, %14, %cst_199 {dimension_numbers = #tpu.dot_dimension_numbers<[1], [0], [0], [1], [0, 0, 1, 1], [], []>} : vector<8x256xbf16>, vector<256x1024xbf16>, vector<8x1024xf32> -> vector<8x1024xf32>
    %c0_200 = arith.constant 0 : index
    %c0_201 = arith.constant 0 : index
    %494 = vector.load %arg9[%c0_200, %c0_201] : memref<8x256xf32, #tpu.memory_space<vmem>>, vector<8x256xf32>
    %c56_202 = arith.constant 56 : index
    %c0_203 = arith.constant 0 : index
    %495 = vector.load %arg6[%c56_202, %c0_203] : memref<64x1024xf32, #tpu.memory_space<vmem>>, vector<8x512xf32>
    %496 = vector.extract_strided_slice %493 {offsets = [0, 0], sizes = [8, 512], strides = [1, 1]} : vector<8x1024xf32> to vector<8x512xf32>
    %497 = arith.addf %495, %496 : vector<8x512xf32>
    %498 = vector.extract_strided_slice %497 {offsets = [0, 0], sizes = [8, 128], strides = [1, 1]} : vector<8x512xf32> to vector<8x128xf32>
    %499 = arith.negf %498 : vector<8x128xf32>
    %500 = math.exp %499 : vector<8x128xf32>
    %cst_204 = arith.constant 1.000000e+00 : f32
    %501 = vector.broadcast %cst_204 : f32 to vector<8x128xf32>
    %502 = arith.addf %501, %500 : vector<8x128xf32>
    %503 = arith.divf %501, %502 : vector<8x128xf32>
    %504 = vector.extract_strided_slice %497 {offsets = [0, 128], sizes = [8, 128], strides = [1, 1]} : vector<8x512xf32> to vector<8x128xf32>
    %505 = arith.negf %504 : vector<8x128xf32>
    %506 = math.exp %505 : vector<8x128xf32>
    %cst_205 = arith.constant 1.000000e+00 : f32
    %507 = vector.broadcast %cst_205 : f32 to vector<8x128xf32>
    %508 = arith.addf %507, %506 : vector<8x128xf32>
    %509 = arith.divf %507, %508 : vector<8x128xf32>
    %510 = vector.extract_strided_slice %497 {offsets = [0, 256], sizes = [8, 128], strides = [1, 1]} : vector<8x512xf32> to vector<8x128xf32>
    %511 = math.tanh %510 : vector<8x128xf32>
    %512 = vector.extract_strided_slice %497 {offsets = [0, 384], sizes = [8, 128], strides = [1, 1]} : vector<8x512xf32> to vector<8x128xf32>
    %513 = arith.negf %512 : vector<8x128xf32>
    %514 = math.exp %513 : vector<8x128xf32>
    %cst_206 = arith.constant 1.000000e+00 : f32
    %515 = vector.broadcast %cst_206 : f32 to vector<8x128xf32>
    %516 = arith.addf %515, %514 : vector<8x128xf32>
    %517 = arith.divf %515, %516 : vector<8x128xf32>
    %518 = vector.extract_strided_slice %494 {offsets = [0, 0], sizes = [8, 128], strides = [1, 1]} : vector<8x256xf32> to vector<8x128xf32>
    %519 = arith.mulf %509, %518 : vector<8x128xf32>
    %520 = arith.mulf %503, %511 : vector<8x128xf32>
    %521 = arith.addf %519, %520 : vector<8x128xf32>
    %522 = math.tanh %521 : vector<8x128xf32>
    %523 = arith.mulf %517, %522 : vector<8x128xf32>
    %c0_207 = arith.constant 0 : index
    %c0_208 = arith.constant 0 : index
    %524 = vector.load %arg9[%c0_207, %c0_208] : memref<8x256xf32, #tpu.memory_space<vmem>>, vector<8x128xf32>
    tpu.vector_store %arg9[%c0_207, %c0_208], %521 {strides = array<i32>} : memref<8x256xf32, #tpu.memory_space<vmem>>, vector<8x128xf32>,
    %c0_209 = arith.constant 0 : index
    %c0_210 = arith.constant 0 : index
    %525 = vector.load %arg8[%c0_209, %c0_210] : memref<8x256xf32, #tpu.memory_space<vmem>>, vector<8x128xf32>
    tpu.vector_store %arg8[%c0_209, %c0_210], %523 {strides = array<i32>} : memref<8x256xf32, #tpu.memory_space<vmem>>, vector<8x128xf32>,
    %c56_211 = arith.constant 56 : index
    %c0_212 = arith.constant 0 : index
    %526 = vector.load %arg7[%c56_211, %c0_212] : memref<64x256xf32, #tpu.memory_space<vmem>>, vector<8x128xf32>
    tpu.vector_store %arg7[%c56_211, %c0_212], %523 {strides = array<i32>} : memref<64x256xf32, #tpu.memory_space<vmem>>, vector<8x128xf32>,
    %c0_213 = arith.constant 0 : index
    %c512_214 = arith.constant 512 : index
    %527 = vector.load %arg6[%c0_213, %c512_214] : memref<64x1024xf32, #tpu.memory_space<vmem>>, vector<8x512xf32>
    %528 = vector.extract_strided_slice %493 {offsets = [0, 512], sizes = [8, 512], strides = [1, 1]} : vector<8x1024xf32> to vector<8x512xf32>
    %529 = arith.addf %527, %528 : vector<8x512xf32>
    %530 = vector.extract_strided_slice %529 {offsets = [0, 0], sizes = [8, 128], strides = [1, 1]} : vector<8x512xf32> to vector<8x128xf32>
    %531 = arith.negf %530 : vector<8x128xf32>
    %532 = math.exp %531 : vector<8x128xf32>
    %cst_215 = arith.constant 1.000000e+00 : f32
    %533 = vector.broadcast %cst_215 : f32 to vector<8x128xf32>
    %534 = arith.addf %533, %532 : vector<8x128xf32>
    %535 = arith.divf %533, %534 : vector<8x128xf32>
    %536 = vector.extract_strided_slice %529 {offsets = [0, 128], sizes = [8, 128], strides = [1, 1]} : vector<8x512xf32> to vector<8x128xf32>
    %537 = arith.negf %536 : vector<8x128xf32>
    %538 = math.exp %537 : vector<8x128xf32>
    %cst_216 = arith.constant 1.000000e+00 : f32
    %539 = vector.broadcast %cst_216 : f32 to vector<8x128xf32>
    %540 = arith.addf %539, %538 : vector<8x128xf32>
    %541 = arith.divf %539, %540 : vector<8x128xf32>
    %542 = vector.extract_strided_slice %529 {offsets = [0, 256], sizes = [8, 128], strides = [1, 1]} : vector<8x512xf32> to vector<8x128xf32>
    %543 = math.tanh %542 : vector<8x128xf32>
    %544 = vector.extract_strided_slice %529 {offsets = [0, 384], sizes = [8, 128], strides = [1, 1]} : vector<8x512xf32> to vector<8x128xf32>
    %545 = arith.negf %544 : vector<8x128xf32>
    %546 = math.exp %545 : vector<8x128xf32>
    %cst_217 = arith.constant 1.000000e+00 : f32
    %547 = vector.broadcast %cst_217 : f32 to vector<8x128xf32>
    %548 = arith.addf %547, %546 : vector<8x128xf32>
    %549 = arith.divf %547, %548 : vector<8x128xf32>
    %550 = vector.extract_strided_slice %494 {offsets = [0, 128], sizes = [8, 128], strides = [1, 1]} : vector<8x256xf32> to vector<8x128xf32>
    %551 = arith.mulf %541, %550 : vector<8x128xf32>
    %552 = arith.mulf %535, %543 : vector<8x128xf32>
    %553 = arith.addf %551, %552 : vector<8x128xf32>
    %554 = math.tanh %553 : vector<8x128xf32>
    %555 = arith.mulf %549, %554 : vector<8x128xf32>
    %c0_218 = arith.constant 0 : index
    %c128_219 = arith.constant 128 : index
    %556 = vector.load %arg9[%c0_218, %c128_219] : memref<8x256xf32, #tpu.memory_space<vmem>>, vector<8x128xf32>
    tpu.vector_store %arg9[%c0_218, %c128_219], %553 {strides = array<i32>} : memref<8x256xf32, #tpu.memory_space<vmem>>, vector<8x128xf32>,
    %c0_220 = arith.constant 0 : index
    %c128_221 = arith.constant 128 : index
    %557 = vector.load %arg8[%c0_220, %c128_221] : memref<8x256xf32, #tpu.memory_space<vmem>>, vector<8x128xf32>
    tpu.vector_store %arg8[%c0_220, %c128_221], %555 {strides = array<i32>} : memref<8x256xf32, #tpu.memory_space<vmem>>, vector<8x128xf32>,
    %c0_222 = arith.constant 0 : index
    %c128_223 = arith.constant 128 : index
    %558 = vector.load %arg7[%c0_222, %c128_223] : memref<64x256xf32, #tpu.memory_space<vmem>>, vector<8x128xf32>
    tpu.vector_store %arg7[%c0_222, %c128_223], %555 {strides = array<i32>} : memref<64x256xf32, #tpu.memory_space<vmem>>, vector<8x128xf32>,
    %c0_224 = arith.constant 0 : index
    %c0_225 = arith.constant 0 : index
    %559 = vector.load %arg7[%c0_224, %c0_225] : memref<64x256xf32, #tpu.memory_space<vmem>>, vector<64x256xf32>
    %560 = arith.truncf %559 : vector<64x256xf32> to vector<64x256xbf16>
    %c0_226 = arith.constant 0 : index
    %c0_227 = arith.constant 0 : index
    %c0_228 = arith.constant 0 : index
    %561 = vector.load %arg2[%c0_226, %c0_227, %c0_228] : memref<1x256x1024xbf16, #tpu.memory_space<vmem>>, vector<1x256x1024xbf16>
    %562 = vector.shape_cast %561 : vector<1x256x1024xbf16> to vector<256x1024xbf16>
    %cst_229 = arith.constant dense<0.000000e+00> : vector<64x1024xf32>
    %563 = tpu.matmul %560, %562, %cst_229 {dimension_numbers = #tpu.dot_dimension_numbers<[1], [0], [0], [1], [0, 0, 1, 1], [], []>} : vector<64x256xbf16>, vector<256x1024xbf16>, vector<64x1024xf32> -> vector<64x1024xf32>
    %c1 = arith.constant 1 : index
    %c0_230 = arith.constant 0 : index
    %c0_231 = arith.constant 0 : index
    %564 = vector.load %arg4[%c1, %c0_230, %c0_231] : memref<2x1x1024xf32, #tpu.memory_space<vmem>>, vector<1x1x1024xf32>
    %565 = vector.shape_cast %564 : vector<1x1x1024xf32> to vector<1x1024xf32>
    %566 = vector.broadcast %565 : vector<1x1024xf32> to vector<64x1024xf32>
    %567 = arith.addf %563, %566 : vector<64x1024xf32>
    %c0_232 = arith.constant 0 : index
    %c0_233 = arith.constant 0 : index
    %568 = vector.load %arg6[%c0_232, %c0_233] : memref<64x1024xf32, #tpu.memory_space<vmem>>, vector<64x1024xf32>
    tpu.vector_store %arg6[%c0_232, %c0_233], %567 {strides = array<i32>} : memref<64x1024xf32, #tpu.memory_space<vmem>>, vector<64x1024xf32>,
    %cst_234 = arith.constant 0.000000e+00 : f32
    %569 = vector.broadcast %cst_234 : f32 to vector<8x256xf32>
    %c0_235 = arith.constant 0 : index
    %c0_236 = arith.constant 0 : index
    %570 = vector.load %arg8[%c0_235, %c0_236] : memref<8x256xf32, #tpu.memory_space<vmem>>, vector<8x256xf32>
    tpu.vector_store %arg8[%c0_235, %c0_236], %569 {strides = array<i32>} : memref<8x256xf32, #tpu.memory_space<vmem>>, vector<8x256xf32>,
    %cst_237 = arith.constant 0.000000e+00 : f32
    %571 = vector.broadcast %cst_237 : f32 to vector<8x256xf32>
    %c0_238 = arith.constant 0 : index
    %c0_239 = arith.constant 0 : index
    %572 = vector.load %arg9[%c0_238, %c0_239] : memref<8x256xf32, #tpu.memory_space<vmem>>, vector<8x256xf32>
    tpu.vector_store %arg9[%c0_238, %c0_239], %571 {strides = array<i32>} : memref<8x256xf32, #tpu.memory_space<vmem>>, vector<8x256xf32>,
    %c1_240 = arith.constant 1 : index
    %c0_241 = arith.constant 0 : index
    %c0_242 = arith.constant 0 : index
    %573 = vector.load %arg3[%c1_240, %c0_241, %c0_242] : memref<2x256x1024xbf16, #tpu.memory_space<vmem>>, vector<1x256x1024xbf16>
    %574 = vector.shape_cast %573 : vector<1x256x1024xbf16> to vector<256x1024xbf16>
    %c0_243 = arith.constant 0 : index
    %c0_244 = arith.constant 0 : index
    %575 = vector.load %arg8[%c0_243, %c0_244] : memref<8x256xf32, #tpu.memory_space<vmem>>, vector<8x256xf32>
    %576 = arith.truncf %575 : vector<8x256xf32> to vector<8x256xbf16>
    %cst_245 = arith.constant dense<0.000000e+00> : vector<8x1024xf32>
    %577 = tpu.matmul %576, %574, %cst_245 {dimension_numbers = #tpu.dot_dimension_numbers<[1], [0], [0], [1], [0, 0, 1, 1], [], []>} : vector<8x256xbf16>, vector<256x1024xbf16>, vector<8x1024xf32> -> vector<8x1024xf32>
    %c0_246 = arith.constant 0 : index
    %c0_247 = arith.constant 0 : index
    %578 = vector.load %arg9[%c0_246, %c0_247] : memref<8x256xf32, #tpu.memory_space<vmem>>, vector<8x256xf32>
    %c0_248 = arith.constant 0 : index
    %c0_249 = arith.constant 0 : index
    %579 = vector.load %arg6[%c0_248, %c0_249] : memref<64x1024xf32, #tpu.memory_space<vmem>>, vector<8x512xf32>
    %580 = vector.extract_strided_slice %577 {offsets = [0, 0], sizes = [8, 512], strides = [1, 1]} : vector<8x1024xf32> to vector<8x512xf32>
    %581 = arith.addf %579, %580 : vector<8x512xf32>
    %582 = vector.extract_strided_slice %581 {offsets = [0, 0], sizes = [8, 128], strides = [1, 1]} : vector<8x512xf32> to vector<8x128xf32>
    %583 = arith.negf %582 : vector<8x128xf32>
    %584 = math.exp %583 : vector<8x128xf32>
    %cst_250 = arith.constant 1.000000e+00 : f32
    %585 = vector.broadcast %cst_250 : f32 to vector<8x128xf32>
    %586 = arith.addf %585, %584 : vector<8x128xf32>
    %587 = arith.divf %585, %586 : vector<8x128xf32>
    %588 = vector.extract_strided_slice %581 {offsets = [0, 128], sizes = [8, 128], strides = [1, 1]} : vector<8x512xf32> to vector<8x128xf32>
    %589 = arith.negf %588 : vector<8x128xf32>
    %590 = math.exp %589 : vector<8x128xf32>
    %cst_251 = arith.constant 1.000000e+00 : f32
    %591 = vector.broadcast %cst_251 : f32 to vector<8x128xf32>
    %592 = arith.addf %591, %590 : vector<8x128xf32>
    %593 = arith.divf %591, %592 : vector<8x128xf32>
    %594 = vector.extract_strided_slice %581 {offsets = [0, 256], sizes = [8, 128], strides = [1, 1]} : vector<8x512xf32> to vector<8x128xf32>
    %595 = math.tanh %594 : vector<8x128xf32>
    %596 = vector.extract_strided_slice %581 {offsets = [0, 384], sizes = [8, 128], strides = [1, 1]} : vector<8x512xf32> to vector<8x128xf32>
    %597 = arith.negf %596 : vector<8x128xf32>
    %598 = math.exp %597 : vector<8x128xf32>
    %cst_252 = arith.constant 1.000000e+00 : f32
    %599 = vector.broadcast %cst_252 : f32 to vector<8x128xf32>
    %600 = arith.addf %599, %598 : vector<8x128xf32>
    %601 = arith.divf %599, %600 : vector<8x128xf32>
    %602 = vector.extract_strided_slice %578 {offsets = [0, 0], sizes = [8, 128], strides = [1, 1]} : vector<8x256xf32> to vector<8x128xf32>
    %603 = arith.mulf %593, %602 : vector<8x128xf32>
    %604 = arith.mulf %587, %595 : vector<8x128xf32>
    %605 = arith.addf %603, %604 : vector<8x128xf32>
    %606 = math.tanh %605 : vector<8x128xf32>
    %607 = arith.mulf %601, %606 : vector<8x128xf32>
    %c0_253 = arith.constant 0 : index
    %c0_254 = arith.constant 0 : index
    %608 = vector.load %arg9[%c0_253, %c0_254] : memref<8x256xf32, #tpu.memory_space<vmem>>, vector<8x128xf32>
    tpu.vector_store %arg9[%c0_253, %c0_254], %605 {strides = array<i32>} : memref<8x256xf32, #tpu.memory_space<vmem>>, vector<8x128xf32>,
    %c0_255 = arith.constant 0 : index
    %c0_256 = arith.constant 0 : index
    %609 = vector.load %arg8[%c0_255, %c0_256] : memref<8x256xf32, #tpu.memory_space<vmem>>, vector<8x128xf32>
    tpu.vector_store %arg8[%c0_255, %c0_256], %607 {strides = array<i32>} : memref<8x256xf32, #tpu.memory_space<vmem>>, vector<8x128xf32>,
    %c0_257 = arith.constant 0 : index
    %c0_258 = arith.constant 0 : index
    %610 = vector.load %arg5[%c0_257, %c0_258] : memref<64x256xf32, #tpu.memory_space<vmem>>, vector<8x128xf32>
    tpu.vector_store %arg5[%c0_257, %c0_258], %607 {strides = array<i32>} : memref<64x256xf32, #tpu.memory_space<vmem>>, vector<8x128xf32>,
    %c56_259 = arith.constant 56 : index
    %c512_260 = arith.constant 512 : index
    %611 = vector.load %arg6[%c56_259, %c512_260] : memref<64x1024xf32, #tpu.memory_space<vmem>>, vector<8x512xf32>
    %612 = vector.extract_strided_slice %577 {offsets = [0, 512], sizes = [8, 512], strides = [1, 1]} : vector<8x1024xf32> to vector<8x512xf32>
    %613 = arith.addf %611, %612 : vector<8x512xf32>
    %614 = vector.extract_strided_slice %613 {offsets = [0, 0], sizes = [8, 128], strides = [1, 1]} : vector<8x512xf32> to vector<8x128xf32>
    %615 = arith.negf %614 : vector<8x128xf32>
    %616 = math.exp %615 : vector<8x128xf32>
    %cst_261 = arith.constant 1.000000e+00 : f32
    %617 = vector.broadcast %cst_261 : f32 to vector<8x128xf32>
    %618 = arith.addf %617, %616 : vector<8x128xf32>
    %619 = arith.divf %617, %618 : vector<8x128xf32>
    %620 = vector.extract_strided_slice %613 {offsets = [0, 128], sizes = [8, 128], strides = [1, 1]} : vector<8x512xf32> to vector<8x128xf32>
    %621 = arith.negf %620 : vector<8x128xf32>
    %622 = math.exp %621 : vector<8x128xf32>
    %cst_262 = arith.constant 1.000000e+00 : f32
    %623 = vector.broadcast %cst_262 : f32 to vector<8x128xf32>
    %624 = arith.addf %623, %622 : vector<8x128xf32>
    %625 = arith.divf %623, %624 : vector<8x128xf32>
    %626 = vector.extract_strided_slice %613 {offsets = [0, 256], sizes = [8, 128], strides = [1, 1]} : vector<8x512xf32> to vector<8x128xf32>
    %627 = math.tanh %626 : vector<8x128xf32>
    %628 = vector.extract_strided_slice %613 {offsets = [0, 384], sizes = [8, 128], strides = [1, 1]} : vector<8x512xf32> to vector<8x128xf32>
    %629 = arith.negf %628 : vector<8x128xf32>
    %630 = math.exp %629 : vector<8x128xf32>
    %cst_263 = arith.constant 1.000000e+00 : f32
    %631 = vector.broadcast %cst_263 : f32 to vector<8x128xf32>
    %632 = arith.addf %631, %630 : vector<8x128xf32>
    %633 = arith.divf %631, %632 : vector<8x128xf32>
    %634 = vector.extract_strided_slice %578 {offsets = [0, 128], sizes = [8, 128], strides = [1, 1]} : vector<8x256xf32> to vector<8x128xf32>
    %635 = arith.mulf %625, %634 : vector<8x128xf32>
    %636 = arith.mulf %619, %627 : vector<8x128xf32>
    %637 = arith.addf %635, %636 : vector<8x128xf32>
    %638 = math.tanh %637 : vector<8x128xf32>
    %639 = arith.mulf %633, %638 : vector<8x128xf32>
    %c0_264 = arith.constant 0 : index
    %c128_265 = arith.constant 128 : index
    %640 = vector.load %arg9[%c0_264, %c128_265] : memref<8x256xf32, #tpu.memory_space<vmem>>, vector<8x128xf32>
    tpu.vector_store %arg9[%c0_264, %c128_265], %637 {strides = array<i32>} : memref<8x256xf32, #tpu.memory_space<vmem>>, vector<8x128xf32>,
    %c0_266 = arith.constant 0 : index
    %c128_267 = arith.constant 128 : index
    %641 = vector.load %arg8[%c0_266, %c128_267] : memref<8x256xf32, #tpu.memory_space<vmem>>, vector<8x128xf32>
    tpu.vector_store %arg8[%c0_266, %c128_267], %639 {strides = array<i32>} : memref<8x256xf32, #tpu.memory_space<vmem>>, vector<8x128xf32>,
    %c56_268 = arith.constant 56 : index
    %c128_269 = arith.constant 128 : index
    %642 = vector.load %arg5[%c56_268, %c128_269] : memref<64x256xf32, #tpu.memory_space<vmem>>, vector<8x128xf32>
    tpu.vector_store %arg5[%c56_268, %c128_269], %639 {strides = array<i32>} : memref<64x256xf32, #tpu.memory_space<vmem>>, vector<8x128xf32>,
    %c0_270 = arith.constant 0 : index
    %c0_271 = arith.constant 0 : index
    %643 = vector.load %arg8[%c0_270, %c0_271] : memref<8x256xf32, #tpu.memory_space<vmem>>, vector<8x256xf32>
    %644 = arith.truncf %643 : vector<8x256xf32> to vector<8x256xbf16>
    %cst_272 = arith.constant dense<0.000000e+00> : vector<8x1024xf32>
    %645 = tpu.matmul %644, %574, %cst_272 {dimension_numbers = #tpu.dot_dimension_numbers<[1], [0], [0], [1], [0, 0, 1, 1], [], []>} : vector<8x256xbf16>, vector<256x1024xbf16>, vector<8x1024xf32> -> vector<8x1024xf32>
    %c0_273 = arith.constant 0 : index
    %c0_274 = arith.constant 0 : index
    %646 = vector.load %arg9[%c0_273, %c0_274] : memref<8x256xf32, #tpu.memory_space<vmem>>, vector<8x256xf32>
    %c8_275 = arith.constant 8 : index
    %c0_276 = arith.constant 0 : index
    %647 = vector.load %arg6[%c8_275, %c0_276] : memref<64x1024xf32, #tpu.memory_space<vmem>>, vector<8x512xf32>
    %648 = vector.extract_strided_slice %645 {offsets = [0, 0], sizes = [8, 512], strides = [1, 1]} : vector<8x1024xf32> to vector<8x512xf32>
    %649 = arith.addf %647, %648 : vector<8x512xf32>
    %650 = vector.extract_strided_slice %649 {offsets = [0, 0], sizes = [8, 128], strides = [1, 1]} : vector<8x512xf32> to vector<8x128xf32>
    %651 = arith.negf %650 : vector<8x128xf32>
    %652 = math.exp %651 : vector<8x128xf32>
    %cst_277 = arith.constant 1.000000e+00 : f32
    %653 = vector.broadcast %cst_277 : f32 to vector<8x128xf32>
    %654 = arith.addf %653, %652 : vector<8x128xf32>
    %655 = arith.divf %653, %654 : vector<8x128xf32>
    %656 = vector.extract_strided_slice %649 {offsets = [0, 128], sizes = [8, 128], strides = [1, 1]} : vector<8x512xf32> to vector<8x128xf32>
    %657 = arith.negf %656 : vector<8x128xf32>
    %658 = math.exp %657 : vector<8x128xf32>
    %cst_278 = arith.constant 1.000000e+00 : f32
    %659 = vector.broadcast %cst_278 : f32 to vector<8x128xf32>
    %660 = arith.addf %659, %658 : vector<8x128xf32>
    %661 = arith.divf %659, %660 : vector<8x128xf32>
    %662 = vector.extract_strided_slice %649 {offsets = [0, 256], sizes = [8, 128], strides = [1, 1]} : vector<8x512xf32> to vector<8x128xf32>
    %663 = math.tanh %662 : vector<8x128xf32>
    %664 = vector.extract_strided_slice %649 {offsets = [0, 384], sizes = [8, 128], strides = [1, 1]} : vector<8x512xf32> to vector<8x128xf32>
    %665 = arith.negf %664 : vector<8x128xf32>
    %666 = math.exp %665 : vector<8x128xf32>
    %cst_279 = arith.constant 1.000000e+00 : f32
    %667 = vector.broadcast %cst_279 : f32 to vector<8x128xf32>
    %668 = arith.addf %667, %666 : vector<8x128xf32>
    %669 = arith.divf %667, %668 : vector<8x128xf32>
    %670 = vector.extract_strided_slice %646 {offsets = [0, 0], sizes = [8, 128], strides = [1, 1]} : vector<8x256xf32> to vector<8x128xf32>
    %671 = arith.mulf %661, %670 : vector<8x128xf32>
    %672 = arith.mulf %655, %663 : vector<8x128xf32>
    %673 = arith.addf %671, %672 : vector<8x128xf32>
    %674 = math.tanh %673 : vector<8x128xf32>
    %675 = arith.mulf %669, %674 : vector<8x128xf32>
    %c0_280 = arith.constant 0 : index
    %c0_281 = arith.constant 0 : index
    %676 = vector.load %arg9[%c0_280, %c0_281] : memref<8x256xf32, #tpu.memory_space<vmem>>, vector<8x128xf32>
    tpu.vector_store %arg9[%c0_280, %c0_281], %673 {strides = array<i32>} : memref<8x256xf32, #tpu.memory_space<vmem>>, vector<8x128xf32>,
    %c0_282 = arith.constant 0 : index
    %c0_283 = arith.constant 0 : index
    %677 = vector.load %arg8[%c0_282, %c0_283] : memref<8x256xf32, #tpu.memory_space<vmem>>, vector<8x128xf32>
    tpu.vector_store %arg8[%c0_282, %c0_283], %675 {strides = array<i32>} : memref<8x256xf32, #tpu.memory_space<vmem>>, vector<8x128xf32>,
    %c8_284 = arith.constant 8 : index
    %c0_285 = arith.constant 0 : index
    %678 = vector.load %arg5[%c8_284, %c0_285] : memref<64x256xf32, #tpu.memory_space<vmem>>, vector<8x128xf32>
    tpu.vector_store %arg5[%c8_284, %c0_285], %675 {strides = array<i32>} : memref<64x256xf32, #tpu.memory_space<vmem>>, vector<8x128xf32>,
    %c48_286 = arith.constant 48 : index
    %c512_287 = arith.constant 512 : index
    %679 = vector.load %arg6[%c48_286, %c512_287] : memref<64x1024xf32, #tpu.memory_space<vmem>>, vector<8x512xf32>
    %680 = vector.extract_strided_slice %645 {offsets = [0, 512], sizes = [8, 512], strides = [1, 1]} : vector<8x1024xf32> to vector<8x512xf32>
    %681 = arith.addf %679, %680 : vector<8x512xf32>
    %682 = vector.extract_strided_slice %681 {offsets = [0, 0], sizes = [8, 128], strides = [1, 1]} : vector<8x512xf32> to vector<8x128xf32>
    %683 = arith.negf %682 : vector<8x128xf32>
    %684 = math.exp %683 : vector<8x128xf32>
    %cst_288 = arith.constant 1.000000e+00 : f32
    %685 = vector.broadcast %cst_288 : f32 to vector<8x128xf32>
    %686 = arith.addf %685, %684 : vector<8x128xf32>
    %687 = arith.divf %685, %686 : vector<8x128xf32>
    %688 = vector.extract_strided_slice %681 {offsets = [0, 128], sizes = [8, 128], strides = [1, 1]} : vector<8x512xf32> to vector<8x128xf32>
    %689 = arith.negf %688 : vector<8x128xf32>
    %690 = math.exp %689 : vector<8x128xf32>
    %cst_289 = arith.constant 1.000000e+00 : f32
    %691 = vector.broadcast %cst_289 : f32 to vector<8x128xf32>
    %692 = arith.addf %691, %690 : vector<8x128xf32>
    %693 = arith.divf %691, %692 : vector<8x128xf32>
    %694 = vector.extract_strided_slice %681 {offsets = [0, 256], sizes = [8, 128], strides = [1, 1]} : vector<8x512xf32> to vector<8x128xf32>
    %695 = math.tanh %694 : vector<8x128xf32>
    %696 = vector.extract_strided_slice %681 {offsets = [0, 384], sizes = [8, 128], strides = [1, 1]} : vector<8x512xf32> to vector<8x128xf32>
    %697 = arith.negf %696 : vector<8x128xf32>
    %698 = math.exp %697 : vector<8x128xf32>
    %cst_290 = arith.constant 1.000000e+00 : f32
    %699 = vector.broadcast %cst_290 : f32 to vector<8x128xf32>
    %700 = arith.addf %699, %698 : vector<8x128xf32>
    %701 = arith.divf %699, %700 : vector<8x128xf32>
    %702 = vector.extract_strided_slice %646 {offsets = [0, 128], sizes = [8, 128], strides = [1, 1]} : vector<8x256xf32> to vector<8x128xf32>
    %703 = arith.mulf %693, %702 : vector<8x128xf32>
    %704 = arith.mulf %687, %695 : vector<8x128xf32>
    %705 = arith.addf %703, %704 : vector<8x128xf32>
    %706 = math.tanh %705 : vector<8x128xf32>
    %707 = arith.mulf %701, %706 : vector<8x128xf32>
    %c0_291 = arith.constant 0 : index
    %c128_292 = arith.constant 128 : index
    %708 = vector.load %arg9[%c0_291, %c128_292] : memref<8x256xf32, #tpu.memory_space<vmem>>, vector<8x128xf32>
    tpu.vector_store %arg9[%c0_291, %c128_292], %705 {strides = array<i32>} : memref<8x256xf32, #tpu.memory_space<vmem>>, vector<8x128xf32>,
    %c0_293 = arith.constant 0 : index
    %c128_294 = arith.constant 128 : index
    %709 = vector.load %arg8[%c0_293, %c128_294] : memref<8x256xf32, #tpu.memory_space<vmem>>, vector<8x128xf32>
    tpu.vector_store %arg8[%c0_293, %c128_294], %707 {strides = array<i32>} : memref<8x256xf32, #tpu.memory_space<vmem>>, vector<8x128xf32>,
    %c48_295 = arith.constant 48 : index
    %c128_296 = arith.constant 128 : index
    %710 = vector.load %arg5[%c48_295, %c128_296] : memref<64x256xf32, #tpu.memory_space<vmem>>, vector<8x128xf32>
    tpu.vector_store %arg5[%c48_295, %c128_296], %707 {strides = array<i32>} : memref<64x256xf32, #tpu.memory_space<vmem>>, vector<8x128xf32>,
    %c0_297 = arith.constant 0 : index
    %c0_298 = arith.constant 0 : index
    %711 = vector.load %arg8[%c0_297, %c0_298] : memref<8x256xf32, #tpu.memory_space<vmem>>, vector<8x256xf32>
    %712 = arith.truncf %711 : vector<8x256xf32> to vector<8x256xbf16>
    %cst_299 = arith.constant dense<0.000000e+00> : vector<8x1024xf32>
    %713 = tpu.matmul %712, %574, %cst_299 {dimension_numbers = #tpu.dot_dimension_numbers<[1], [0], [0], [1], [0, 0, 1, 1], [], []>} : vector<8x256xbf16>, vector<256x1024xbf16>, vector<8x1024xf32> -> vector<8x1024xf32>
    %c0_300 = arith.constant 0 : index
    %c0_301 = arith.constant 0 : index
    %714 = vector.load %arg9[%c0_300, %c0_301] : memref<8x256xf32, #tpu.memory_space<vmem>>, vector<8x256xf32>
    %c16_302 = arith.constant 16 : index
    %c0_303 = arith.constant 0 : index
    %715 = vector.load %arg6[%c16_302, %c0_303] : memref<64x1024xf32, #tpu.memory_space<vmem>>, vector<8x512xf32>
    %716 = vector.extract_strided_slice %713 {offsets = [0, 0], sizes = [8, 512], strides = [1, 1]} : vector<8x1024xf32> to vector<8x512xf32>
    %717 = arith.addf %715, %716 : vector<8x512xf32>
    %718 = vector.extract_strided_slice %717 {offsets = [0, 0], sizes = [8, 128], strides = [1, 1]} : vector<8x512xf32> to vector<8x128xf32>
    %719 = arith.negf %718 : vector<8x128xf32>
    %720 = math.exp %719 : vector<8x128xf32>
    %cst_304 = arith.constant 1.000000e+00 : f32
    %721 = vector.broadcast %cst_304 : f32 to vector<8x128xf32>
    %722 = arith.addf %721, %720 : vector<8x128xf32>
    %723 = arith.divf %721, %722 : vector<8x128xf32>
    %724 = vector.extract_strided_slice %717 {offsets = [0, 128], sizes = [8, 128], strides = [1, 1]} : vector<8x512xf32> to vector<8x128xf32>
    %725 = arith.negf %724 : vector<8x128xf32>
    %726 = math.exp %725 : vector<8x128xf32>
    %cst_305 = arith.constant 1.000000e+00 : f32
    %727 = vector.broadcast %cst_305 : f32 to vector<8x128xf32>
    %728 = arith.addf %727, %726 : vector<8x128xf32>
    %729 = arith.divf %727, %728 : vector<8x128xf32>
    %730 = vector.extract_strided_slice %717 {offsets = [0, 256], sizes = [8, 128], strides = [1, 1]} : vector<8x512xf32> to vector<8x128xf32>
    %731 = math.tanh %730 : vector<8x128xf32>
    %732 = vector.extract_strided_slice %717 {offsets = [0, 384], sizes = [8, 128], strides = [1, 1]} : vector<8x512xf32> to vector<8x128xf32>
    %733 = arith.negf %732 : vector<8x128xf32>
    %734 = math.exp %733 : vector<8x128xf32>
    %cst_306 = arith.constant 1.000000e+00 : f32
    %735 = vector.broadcast %cst_306 : f32 to vector<8x128xf32>
    %736 = arith.addf %735, %734 : vector<8x128xf32>
    %737 = arith.divf %735, %736 : vector<8x128xf32>
    %738 = vector.extract_strided_slice %714 {offsets = [0, 0], sizes = [8, 128], strides = [1, 1]} : vector<8x256xf32> to vector<8x128xf32>
    %739 = arith.mulf %729, %738 : vector<8x128xf32>
    %740 = arith.mulf %723, %731 : vector<8x128xf32>
    %741 = arith.addf %739, %740 : vector<8x128xf32>
    %742 = math.tanh %741 : vector<8x128xf32>
    %743 = arith.mulf %737, %742 : vector<8x128xf32>
    %c0_307 = arith.constant 0 : index
    %c0_308 = arith.constant 0 : index
    %744 = vector.load %arg9[%c0_307, %c0_308] : memref<8x256xf32, #tpu.memory_space<vmem>>, vector<8x128xf32>
    tpu.vector_store %arg9[%c0_307, %c0_308], %741 {strides = array<i32>} : memref<8x256xf32, #tpu.memory_space<vmem>>, vector<8x128xf32>,
    %c0_309 = arith.constant 0 : index
    %c0_310 = arith.constant 0 : index
    %745 = vector.load %arg8[%c0_309, %c0_310] : memref<8x256xf32, #tpu.memory_space<vmem>>, vector<8x128xf32>
    tpu.vector_store %arg8[%c0_309, %c0_310], %743 {strides = array<i32>} : memref<8x256xf32, #tpu.memory_space<vmem>>, vector<8x128xf32>,
    %c16_311 = arith.constant 16 : index
    %c0_312 = arith.constant 0 : index
    %746 = vector.load %arg5[%c16_311, %c0_312] : memref<64x256xf32, #tpu.memory_space<vmem>>, vector<8x128xf32>
    tpu.vector_store %arg5[%c16_311, %c0_312], %743 {strides = array<i32>} : memref<64x256xf32, #tpu.memory_space<vmem>>, vector<8x128xf32>,
    %c40_313 = arith.constant 40 : index
    %c512_314 = arith.constant 512 : index
    %747 = vector.load %arg6[%c40_313, %c512_314] : memref<64x1024xf32, #tpu.memory_space<vmem>>, vector<8x512xf32>
    %748 = vector.extract_strided_slice %713 {offsets = [0, 512], sizes = [8, 512], strides = [1, 1]} : vector<8x1024xf32> to vector<8x512xf32>
    %749 = arith.addf %747, %748 : vector<8x512xf32>
    %750 = vector.extract_strided_slice %749 {offsets = [0, 0], sizes = [8, 128], strides = [1, 1]} : vector<8x512xf32> to vector<8x128xf32>
    %751 = arith.negf %750 : vector<8x128xf32>
    %752 = math.exp %751 : vector<8x128xf32>
    %cst_315 = arith.constant 1.000000e+00 : f32
    %753 = vector.broadcast %cst_315 : f32 to vector<8x128xf32>
    %754 = arith.addf %753, %752 : vector<8x128xf32>
    %755 = arith.divf %753, %754 : vector<8x128xf32>
    %756 = vector.extract_strided_slice %749 {offsets = [0, 128], sizes = [8, 128], strides = [1, 1]} : vector<8x512xf32> to vector<8x128xf32>
    %757 = arith.negf %756 : vector<8x128xf32>
    %758 = math.exp %757 : vector<8x128xf32>
    %cst_316 = arith.constant 1.000000e+00 : f32
    %759 = vector.broadcast %cst_316 : f32 to vector<8x128xf32>
    %760 = arith.addf %759, %758 : vector<8x128xf32>
    %761 = arith.divf %759, %760 : vector<8x128xf32>
    %762 = vector.extract_strided_slice %749 {offsets = [0, 256], sizes = [8, 128], strides = [1, 1]} : vector<8x512xf32> to vector<8x128xf32>
    %763 = math.tanh %762 : vector<8x128xf32>
    %764 = vector.extract_strided_slice %749 {offsets = [0, 384], sizes = [8, 128], strides = [1, 1]} : vector<8x512xf32> to vector<8x128xf32>
    %765 = arith.negf %764 : vector<8x128xf32>
    %766 = math.exp %765 : vector<8x128xf32>
    %cst_317 = arith.constant 1.000000e+00 : f32
    %767 = vector.broadcast %cst_317 : f32 to vector<8x128xf32>
    %768 = arith.addf %767, %766 : vector<8x128xf32>
    %769 = arith.divf %767, %768 : vector<8x128xf32>
    %770 = vector.extract_strided_slice %714 {offsets = [0, 128], sizes = [8, 128], strides = [1, 1]} : vector<8x256xf32> to vector<8x128xf32>
    %771 = arith.mulf %761, %770 : vector<8x128xf32>
    %772 = arith.mulf %755, %763 : vector<8x128xf32>
    %773 = arith.addf %771, %772 : vector<8x128xf32>
    %774 = math.tanh %773 : vector<8x128xf32>
    %775 = arith.mulf %769, %774 : vector<8x128xf32>
    %c0_318 = arith.constant 0 : index
    %c128_319 = arith.constant 128 : index
    %776 = vector.load %arg9[%c0_318, %c128_319] : memref<8x256xf32, #tpu.memory_space<vmem>>, vector<8x128xf32>
    tpu.vector_store %arg9[%c0_318, %c128_319], %773 {strides = array<i32>} : memref<8x256xf32, #tpu.memory_space<vmem>>, vector<8x128xf32>,
    %c0_320 = arith.constant 0 : index
    %c128_321 = arith.constant 128 : index
    %777 = vector.load %arg8[%c0_320, %c128_321] : memref<8x256xf32, #tpu.memory_space<vmem>>, vector<8x128xf32>
    tpu.vector_store %arg8[%c0_320, %c128_321], %775 {strides = array<i32>} : memref<8x256xf32, #tpu.memory_space<vmem>>, vector<8x128xf32>,
    %c40_322 = arith.constant 40 : index
    %c128_323 = arith.constant 128 : index
    %778 = vector.load %arg5[%c40_322, %c128_323] : memref<64x256xf32, #tpu.memory_space<vmem>>, vector<8x128xf32>
    tpu.vector_store %arg5[%c40_322, %c128_323], %775 {strides = array<i32>} : memref<64x256xf32, #tpu.memory_space<vmem>>, vector<8x128xf32>,
    %c0_324 = arith.constant 0 : index
    %c0_325 = arith.constant 0 : index
    %779 = vector.load %arg8[%c0_324, %c0_325] : memref<8x256xf32, #tpu.memory_space<vmem>>, vector<8x256xf32>
    %780 = arith.truncf %779 : vector<8x256xf32> to vector<8x256xbf16>
    %cst_326 = arith.constant dense<0.000000e+00> : vector<8x1024xf32>
    %781 = tpu.matmul %780, %574, %cst_326 {dimension_numbers = #tpu.dot_dimension_numbers<[1], [0], [0], [1], [0, 0, 1, 1], [], []>} : vector<8x256xbf16>, vector<256x1024xbf16>, vector<8x1024xf32> -> vector<8x1024xf32>
    %c0_327 = arith.constant 0 : index
    %c0_328 = arith.constant 0 : index
    %782 = vector.load %arg9[%c0_327, %c0_328] : memref<8x256xf32, #tpu.memory_space<vmem>>, vector<8x256xf32>
    %c24_329 = arith.constant 24 : index
    %c0_330 = arith.constant 0 : index
    %783 = vector.load %arg6[%c24_329, %c0_330] : memref<64x1024xf32, #tpu.memory_space<vmem>>, vector<8x512xf32>
    %784 = vector.extract_strided_slice %781 {offsets = [0, 0], sizes = [8, 512], strides = [1, 1]} : vector<8x1024xf32> to vector<8x512xf32>
    %785 = arith.addf %783, %784 : vector<8x512xf32>
    %786 = vector.extract_strided_slice %785 {offsets = [0, 0], sizes = [8, 128], strides = [1, 1]} : vector<8x512xf32> to vector<8x128xf32>
    %787 = arith.negf %786 : vector<8x128xf32>
    %788 = math.exp %787 : vector<8x128xf32>
    %cst_331 = arith.constant 1.000000e+00 : f32
    %789 = vector.broadcast %cst_331 : f32 to vector<8x128xf32>
    %790 = arith.addf %789, %788 : vector<8x128xf32>
    %791 = arith.divf %789, %790 : vector<8x128xf32>
    %792 = vector.extract_strided_slice %785 {offsets = [0, 128], sizes = [8, 128], strides = [1, 1]} : vector<8x512xf32> to vector<8x128xf32>
    %793 = arith.negf %792 : vector<8x128xf32>
    %794 = math.exp %793 : vector<8x128xf32>
    %cst_332 = arith.constant 1.000000e+00 : f32
    %795 = vector.broadcast %cst_332 : f32 to vector<8x128xf32>
    %796 = arith.addf %795, %794 : vector<8x128xf32>
    %797 = arith.divf %795, %796 : vector<8x128xf32>
    %798 = vector.extract_strided_slice %785 {offsets = [0, 256], sizes = [8, 128], strides = [1, 1]} : vector<8x512xf32> to vector<8x128xf32>
    %799 = math.tanh %798 : vector<8x128xf32>
    %800 = vector.extract_strided_slice %785 {offsets = [0, 384], sizes = [8, 128], strides = [1, 1]} : vector<8x512xf32> to vector<8x128xf32>
    %801 = arith.negf %800 : vector<8x128xf32>
    %802 = math.exp %801 : vector<8x128xf32>
    %cst_333 = arith.constant 1.000000e+00 : f32
    %803 = vector.broadcast %cst_333 : f32 to vector<8x128xf32>
    %804 = arith.addf %803, %802 : vector<8x128xf32>
    %805 = arith.divf %803, %804 : vector<8x128xf32>
    %806 = vector.extract_strided_slice %782 {offsets = [0, 0], sizes = [8, 128], strides = [1, 1]} : vector<8x256xf32> to vector<8x128xf32>
    %807 = arith.mulf %797, %806 : vector<8x128xf32>
    %808 = arith.mulf %791, %799 : vector<8x128xf32>
    %809 = arith.addf %807, %808 : vector<8x128xf32>
    %810 = math.tanh %809 : vector<8x128xf32>
    %811 = arith.mulf %805, %810 : vector<8x128xf32>
    %c0_334 = arith.constant 0 : index
    %c0_335 = arith.constant 0 : index
    %812 = vector.load %arg9[%c0_334, %c0_335] : memref<8x256xf32, #tpu.memory_space<vmem>>, vector<8x128xf32>
    tpu.vector_store %arg9[%c0_334, %c0_335], %809 {strides = array<i32>} : memref<8x256xf32, #tpu.memory_space<vmem>>, vector<8x128xf32>,
    %c0_336 = arith.constant 0 : index
    %c0_337 = arith.constant 0 : index
    %813 = vector.load %arg8[%c0_336, %c0_337] : memref<8x256xf32, #tpu.memory_space<vmem>>, vector<8x128xf32>
    tpu.vector_store %arg8[%c0_336, %c0_337], %811 {strides = array<i32>} : memref<8x256xf32, #tpu.memory_space<vmem>>, vector<8x128xf32>,
    %c24_338 = arith.constant 24 : index
    %c0_339 = arith.constant 0 : index
    %814 = vector.load %arg5[%c24_338, %c0_339] : memref<64x256xf32, #tpu.memory_space<vmem>>, vector<8x128xf32>
    tpu.vector_store %arg5[%c24_338, %c0_339], %811 {strides = array<i32>} : memref<64x256xf32, #tpu.memory_space<vmem>>, vector<8x128xf32>,
    %c32_340 = arith.constant 32 : index
    %c512_341 = arith.constant 512 : index
    %815 = vector.load %arg6[%c32_340, %c512_341] : memref<64x1024xf32, #tpu.memory_space<vmem>>, vector<8x512xf32>
    %816 = vector.extract_strided_slice %781 {offsets = [0, 512], sizes = [8, 512], strides = [1, 1]} : vector<8x1024xf32> to vector<8x512xf32>
    %817 = arith.addf %815, %816 : vector<8x512xf32>
    %818 = vector.extract_strided_slice %817 {offsets = [0, 0], sizes = [8, 128], strides = [1, 1]} : vector<8x512xf32> to vector<8x128xf32>
    %819 = arith.negf %818 : vector<8x128xf32>
    %820 = math.exp %819 : vector<8x128xf32>
    %cst_342 = arith.constant 1.000000e+00 : f32
    %821 = vector.broadcast %cst_342 : f32 to vector<8x128xf32>
    %822 = arith.addf %821, %820 : vector<8x128xf32>
    %823 = arith.divf %821, %822 : vector<8x128xf32>
    %824 = vector.extract_strided_slice %817 {offsets = [0, 128], sizes = [8, 128], strides = [1, 1]} : vector<8x512xf32> to vector<8x128xf32>
    %825 = arith.negf %824 : vector<8x128xf32>
    %826 = math.exp %825 : vector<8x128xf32>
    %cst_343 = arith.constant 1.000000e+00 : f32
    %827 = vector.broadcast %cst_343 : f32 to vector<8x128xf32>
    %828 = arith.addf %827, %826 : vector<8x128xf32>
    %829 = arith.divf %827, %828 : vector<8x128xf32>
    %830 = vector.extract_strided_slice %817 {offsets = [0, 256], sizes = [8, 128], strides = [1, 1]} : vector<8x512xf32> to vector<8x128xf32>
    %831 = math.tanh %830 : vector<8x128xf32>
    %832 = vector.extract_strided_slice %817 {offsets = [0, 384], sizes = [8, 128], strides = [1, 1]} : vector<8x512xf32> to vector<8x128xf32>
    %833 = arith.negf %832 : vector<8x128xf32>
    %834 = math.exp %833 : vector<8x128xf32>
    %cst_344 = arith.constant 1.000000e+00 : f32
    %835 = vector.broadcast %cst_344 : f32 to vector<8x128xf32>
    %836 = arith.addf %835, %834 : vector<8x128xf32>
    %837 = arith.divf %835, %836 : vector<8x128xf32>
    %838 = vector.extract_strided_slice %782 {offsets = [0, 128], sizes = [8, 128], strides = [1, 1]} : vector<8x256xf32> to vector<8x128xf32>
    %839 = arith.mulf %829, %838 : vector<8x128xf32>
    %840 = arith.mulf %823, %831 : vector<8x128xf32>
    %841 = arith.addf %839, %840 : vector<8x128xf32>
    %842 = math.tanh %841 : vector<8x128xf32>
    %843 = arith.mulf %837, %842 : vector<8x128xf32>
    %c0_345 = arith.constant 0 : index
    %c128_346 = arith.constant 128 : index
    %844 = vector.load %arg9[%c0_345, %c128_346] : memref<8x256xf32, #tpu.memory_space<vmem>>, vector<8x128xf32>
    tpu.vector_store %arg9[%c0_345, %c128_346], %841 {strides = array<i32>} : memref<8x256xf32, #tpu.memory_space<vmem>>, vector<8x128xf32>,
    %c0_347 = arith.constant 0 : index
    %c128_348 = arith.constant 128 : index
    %845 = vector.load %arg8[%c0_347, %c128_348] : memref<8x256xf32, #tpu.memory_space<vmem>>, vector<8x128xf32>
    tpu.vector_store %arg8[%c0_347, %c128_348], %843 {strides = array<i32>} : memref<8x256xf32, #tpu.memory_space<vmem>>, vector<8x128xf32>,
    %c32_349 = arith.constant 32 : index
    %c128_350 = arith.constant 128 : index
    %846 = vector.load %arg5[%c32_349, %c128_350] : memref<64x256xf32, #tpu.memory_space<vmem>>, vector<8x128xf32>
    tpu.vector_store %arg5[%c32_349, %c128_350], %843 {strides = array<i32>} : memref<64x256xf32, #tpu.memory_space<vmem>>, vector<8x128xf32>,
    %c0_351 = arith.constant 0 : index
    %c0_352 = arith.constant 0 : index
    %847 = vector.load %arg8[%c0_351, %c0_352] : memref<8x256xf32, #tpu.memory_space<vmem>>, vector<8x256xf32>
    %848 = arith.truncf %847 : vector<8x256xf32> to vector<8x256xbf16>
    %cst_353 = arith.constant dense<0.000000e+00> : vector<8x1024xf32>
    %849 = tpu.matmul %848, %574, %cst_353 {dimension_numbers = #tpu.dot_dimension_numbers<[1], [0], [0], [1], [0, 0, 1, 1], [], []>} : vector<8x256xbf16>, vector<256x1024xbf16>, vector<8x1024xf32> -> vector<8x1024xf32>
    %c0_354 = arith.constant 0 : index
    %c0_355 = arith.constant 0 : index
    %850 = vector.load %arg9[%c0_354, %c0_355] : memref<8x256xf32, #tpu.memory_space<vmem>>, vector<8x256xf32>
    %c32_356 = arith.constant 32 : index
    %c0_357 = arith.constant 0 : index
    %851 = vector.load %arg6[%c32_356, %c0_357] : memref<64x1024xf32, #tpu.memory_space<vmem>>, vector<8x512xf32>
    %852 = vector.extract_strided_slice %849 {offsets = [0, 0], sizes = [8, 512], strides = [1, 1]} : vector<8x1024xf32> to vector<8x512xf32>
    %853 = arith.addf %851, %852 : vector<8x512xf32>
    %854 = vector.extract_strided_slice %853 {offsets = [0, 0], sizes = [8, 128], strides = [1, 1]} : vector<8x512xf32> to vector<8x128xf32>
    %855 = arith.negf %854 : vector<8x128xf32>
    %856 = math.exp %855 : vector<8x128xf32>
    %cst_358 = arith.constant 1.000000e+00 : f32
    %857 = vector.broadcast %cst_358 : f32 to vector<8x128xf32>
    %858 = arith.addf %857, %856 : vector<8x128xf32>
    %859 = arith.divf %857, %858 : vector<8x128xf32>
    %860 = vector.extract_strided_slice %853 {offsets = [0, 128], sizes = [8, 128], strides = [1, 1]} : vector<8x512xf32> to vector<8x128xf32>
    %861 = arith.negf %860 : vector<8x128xf32>
    %862 = math.exp %861 : vector<8x128xf32>
    %cst_359 = arith.constant 1.000000e+00 : f32
    %863 = vector.broadcast %cst_359 : f32 to vector<8x128xf32>
    %864 = arith.addf %863, %862 : vector<8x128xf32>
    %865 = arith.divf %863, %864 : vector<8x128xf32>
    %866 = vector.extract_strided_slice %853 {offsets = [0, 256], sizes = [8, 128], strides = [1, 1]} : vector<8x512xf32> to vector<8x128xf32>
    %867 = math.tanh %866 : vector<8x128xf32>
    %868 = vector.extract_strided_slice %853 {offsets = [0, 384], sizes = [8, 128], strides = [1, 1]} : vector<8x512xf32> to vector<8x128xf32>
    %869 = arith.negf %868 : vector<8x128xf32>
    %870 = math.exp %869 : vector<8x128xf32>
    %cst_360 = arith.constant 1.000000e+00 : f32
    %871 = vector.broadcast %cst_360 : f32 to vector<8x128xf32>
    %872 = arith.addf %871, %870 : vector<8x128xf32>
    %873 = arith.divf %871, %872 : vector<8x128xf32>
    %874 = vector.extract_strided_slice %850 {offsets = [0, 0], sizes = [8, 128], strides = [1, 1]} : vector<8x256xf32> to vector<8x128xf32>
    %875 = arith.mulf %865, %874 : vector<8x128xf32>
    %876 = arith.mulf %859, %867 : vector<8x128xf32>
    %877 = arith.addf %875, %876 : vector<8x128xf32>
    %878 = math.tanh %877 : vector<8x128xf32>
    %879 = arith.mulf %873, %878 : vector<8x128xf32>
    %c0_361 = arith.constant 0 : index
    %c0_362 = arith.constant 0 : index
    %880 = vector.load %arg9[%c0_361, %c0_362] : memref<8x256xf32, #tpu.memory_space<vmem>>, vector<8x128xf32>
    tpu.vector_store %arg9[%c0_361, %c0_362], %877 {strides = array<i32>} : memref<8x256xf32, #tpu.memory_space<vmem>>, vector<8x128xf32>,
    %c0_363 = arith.constant 0 : index
    %c0_364 = arith.constant 0 : index
    %881 = vector.load %arg8[%c0_363, %c0_364] : memref<8x256xf32, #tpu.memory_space<vmem>>, vector<8x128xf32>
    tpu.vector_store %arg8[%c0_363, %c0_364], %879 {strides = array<i32>} : memref<8x256xf32, #tpu.memory_space<vmem>>, vector<8x128xf32>,
    %c32_365 = arith.constant 32 : index
    %c0_366 = arith.constant 0 : index
    %882 = vector.load %arg5[%c32_365, %c0_366] : memref<64x256xf32, #tpu.memory_space<vmem>>, vector<8x128xf32>
    tpu.vector_store %arg5[%c32_365, %c0_366], %879 {strides = array<i32>} : memref<64x256xf32, #tpu.memory_space<vmem>>, vector<8x128xf32>,
    %c24_367 = arith.constant 24 : index
    %c512_368 = arith.constant 512 : index
    %883 = vector.load %arg6[%c24_367, %c512_368] : memref<64x1024xf32, #tpu.memory_space<vmem>>, vector<8x512xf32>
    %884 = vector.extract_strided_slice %849 {offsets = [0, 512], sizes = [8, 512], strides = [1, 1]} : vector<8x1024xf32> to vector<8x512xf32>
    %885 = arith.addf %883, %884 : vector<8x512xf32>
    %886 = vector.extract_strided_slice %885 {offsets = [0, 0], sizes = [8, 128], strides = [1, 1]} : vector<8x512xf32> to vector<8x128xf32>
    %887 = arith.negf %886 : vector<8x128xf32>
    %888 = math.exp %887 : vector<8x128xf32>
    %cst_369 = arith.constant 1.000000e+00 : f32
    %889 = vector.broadcast %cst_369 : f32 to vector<8x128xf32>
    %890 = arith.addf %889, %888 : vector<8x128xf32>
    %891 = arith.divf %889, %890 : vector<8x128xf32>
    %892 = vector.extract_strided_slice %885 {offsets = [0, 128], sizes = [8, 128], strides = [1, 1]} : vector<8x512xf32> to vector<8x128xf32>
    %893 = arith.negf %892 : vector<8x128xf32>
    %894 = math.exp %893 : vector<8x128xf32>
    %cst_370 = arith.constant 1.000000e+00 : f32
    %895 = vector.broadcast %cst_370 : f32 to vector<8x128xf32>
    %896 = arith.addf %895, %894 : vector<8x128xf32>
    %897 = arith.divf %895, %896 : vector<8x128xf32>
    %898 = vector.extract_strided_slice %885 {offsets = [0, 256], sizes = [8, 128], strides = [1, 1]} : vector<8x512xf32> to vector<8x128xf32>
    %899 = math.tanh %898 : vector<8x128xf32>
    %900 = vector.extract_strided_slice %885 {offsets = [0, 384], sizes = [8, 128], strides = [1, 1]} : vector<8x512xf32> to vector<8x128xf32>
    %901 = arith.negf %900 : vector<8x128xf32>
    %902 = math.exp %901 : vector<8x128xf32>
    %cst_371 = arith.constant 1.000000e+00 : f32
    %903 = vector.broadcast %cst_371 : f32 to vector<8x128xf32>
    %904 = arith.addf %903, %902 : vector<8x128xf32>
    %905 = arith.divf %903, %904 : vector<8x128xf32>
    %906 = vector.extract_strided_slice %850 {offsets = [0, 128], sizes = [8, 128], strides = [1, 1]} : vector<8x256xf32> to vector<8x128xf32>
    %907 = arith.mulf %897, %906 : vector<8x128xf32>
    %908 = arith.mulf %891, %899 : vector<8x128xf32>
    %909 = arith.addf %907, %908 : vector<8x128xf32>
    %910 = math.tanh %909 : vector<8x128xf32>
    %911 = arith.mulf %905, %910 : vector<8x128xf32>
    %c0_372 = arith.constant 0 : index
    %c128_373 = arith.constant 128 : index
    %912 = vector.load %arg9[%c0_372, %c128_373] : memref<8x256xf32, #tpu.memory_space<vmem>>, vector<8x128xf32>
    tpu.vector_store %arg9[%c0_372, %c128_373], %909 {strides = array<i32>} : memref<8x256xf32, #tpu.memory_space<vmem>>, vector<8x128xf32>,
    %c0_374 = arith.constant 0 : index
    %c128_375 = arith.constant 128 : index
    %913 = vector.load %arg8[%c0_374, %c128_375] : memref<8x256xf32, #tpu.memory_space<vmem>>, vector<8x128xf32>
    tpu.vector_store %arg8[%c0_374, %c128_375], %911 {strides = array<i32>} : memref<8x256xf32, #tpu.memory_space<vmem>>, vector<8x128xf32>,
    %c24_376 = arith.constant 24 : index
    %c128_377 = arith.constant 128 : index
    %914 = vector.load %arg5[%c24_376, %c128_377] : memref<64x256xf32, #tpu.memory_space<vmem>>, vector<8x128xf32>
    tpu.vector_store %arg5[%c24_376, %c128_377], %911 {strides = array<i32>} : memref<64x256xf32, #tpu.memory_space<vmem>>, vector<8x128xf32>,
    %c0_378 = arith.constant 0 : index
    %c0_379 = arith.constant 0 : index
    %915 = vector.load %arg8[%c0_378, %c0_379] : memref<8x256xf32, #tpu.memory_space<vmem>>, vector<8x256xf32>
    %916 = arith.truncf %915 : vector<8x256xf32> to vector<8x256xbf16>
    %cst_380 = arith.constant dense<0.000000e+00> : vector<8x1024xf32>
    %917 = tpu.matmul %916, %574, %cst_380 {dimension_numbers = #tpu.dot_dimension_numbers<[1], [0], [0], [1], [0, 0, 1, 1], [], []>} : vector<8x256xbf16>, vector<256x1024xbf16>, vector<8x1024xf32> -> vector<8x1024xf32>
    %c0_381 = arith.constant 0 : index
    %c0_382 = arith.constant 0 : index
    %918 = vector.load %arg9[%c0_381, %c0_382] : memref<8x256xf32, #tpu.memory_space<vmem>>, vector<8x256xf32>
    %c40_383 = arith.constant 40 : index
    %c0_384 = arith.constant 0 : index
    %919 = vector.load %arg6[%c40_383, %c0_384] : memref<64x1024xf32, #tpu.memory_space<vmem>>, vector<8x512xf32>
    %920 = vector.extract_strided_slice %917 {offsets = [0, 0], sizes = [8, 512], strides = [1, 1]} : vector<8x1024xf32> to vector<8x512xf32>
    %921 = arith.addf %919, %920 : vector<8x512xf32>
    %922 = vector.extract_strided_slice %921 {offsets = [0, 0], sizes = [8, 128], strides = [1, 1]} : vector<8x512xf32> to vector<8x128xf32>
    %923 = arith.negf %922 : vector<8x128xf32>
    %924 = math.exp %923 : vector<8x128xf32>
    %cst_385 = arith.constant 1.000000e+00 : f32
    %925 = vector.broadcast %cst_385 : f32 to vector<8x128xf32>
    %926 = arith.addf %925, %924 : vector<8x128xf32>
    %927 = arith.divf %925, %926 : vector<8x128xf32>
    %928 = vector.extract_strided_slice %921 {offsets = [0, 128], sizes = [8, 128], strides = [1, 1]} : vector<8x512xf32> to vector<8x128xf32>
    %929 = arith.negf %928 : vector<8x128xf32>
    %930 = math.exp %929 : vector<8x128xf32>
    %cst_386 = arith.constant 1.000000e+00 : f32
    %931 = vector.broadcast %cst_386 : f32 to vector<8x128xf32>
    %932 = arith.addf %931, %930 : vector<8x128xf32>
    %933 = arith.divf %931, %932 : vector<8x128xf32>
    %934 = vector.extract_strided_slice %921 {offsets = [0, 256], sizes = [8, 128], strides = [1, 1]} : vector<8x512xf32> to vector<8x128xf32>
    %935 = math.tanh %934 : vector<8x128xf32>
    %936 = vector.extract_strided_slice %921 {offsets = [0, 384], sizes = [8, 128], strides = [1, 1]} : vector<8x512xf32> to vector<8x128xf32>
    %937 = arith.negf %936 : vector<8x128xf32>
    %938 = math.exp %937 : vector<8x128xf32>
    %cst_387 = arith.constant 1.000000e+00 : f32
    %939 = vector.broadcast %cst_387 : f32 to vector<8x128xf32>
    %940 = arith.addf %939, %938 : vector<8x128xf32>
    %941 = arith.divf %939, %940 : vector<8x128xf32>
    %942 = vector.extract_strided_slice %918 {offsets = [0, 0], sizes = [8, 128], strides = [1, 1]} : vector<8x256xf32> to vector<8x128xf32>
    %943 = arith.mulf %933, %942 : vector<8x128xf32>
    %944 = arith.mulf %927, %935 : vector<8x128xf32>
    %945 = arith.addf %943, %944 : vector<8x128xf32>
    %946 = math.tanh %945 : vector<8x128xf32>
    %947 = arith.mulf %941, %946 : vector<8x128xf32>
    %c0_388 = arith.constant 0 : index
    %c0_389 = arith.constant 0 : index
    %948 = vector.load %arg9[%c0_388, %c0_389] : memref<8x256xf32, #tpu.memory_space<vmem>>, vector<8x128xf32>
    tpu.vector_store %arg9[%c0_388, %c0_389], %945 {strides = array<i32>} : memref<8x256xf32, #tpu.memory_space<vmem>>, vector<8x128xf32>,
    %c0_390 = arith.constant 0 : index
    %c0_391 = arith.constant 0 : index
    %949 = vector.load %arg8[%c0_390, %c0_391] : memref<8x256xf32, #tpu.memory_space<vmem>>, vector<8x128xf32>
    tpu.vector_store %arg8[%c0_390, %c0_391], %947 {strides = array<i32>} : memref<8x256xf32, #tpu.memory_space<vmem>>, vector<8x128xf32>,
    %c40_392 = arith.constant 40 : index
    %c0_393 = arith.constant 0 : index
    %950 = vector.load %arg5[%c40_392, %c0_393] : memref<64x256xf32, #tpu.memory_space<vmem>>, vector<8x128xf32>
    tpu.vector_store %arg5[%c40_392, %c0_393], %947 {strides = array<i32>} : memref<64x256xf32, #tpu.memory_space<vmem>>, vector<8x128xf32>,
    %c16_394 = arith.constant 16 : index
    %c512_395 = arith.constant 512 : index
    %951 = vector.load %arg6[%c16_394, %c512_395] : memref<64x1024xf32, #tpu.memory_space<vmem>>, vector<8x512xf32>
    %952 = vector.extract_strided_slice %917 {offsets = [0, 512], sizes = [8, 512], strides = [1, 1]} : vector<8x1024xf32> to vector<8x512xf32>
    %953 = arith.addf %951, %952 : vector<8x512xf32>
    %954 = vector.extract_strided_slice %953 {offsets = [0, 0], sizes = [8, 128], strides = [1, 1]} : vector<8x512xf32> to vector<8x128xf32>
    %955 = arith.negf %954 : vector<8x128xf32>
    %956 = math.exp %955 : vector<8x128xf32>
    %cst_396 = arith.constant 1.000000e+00 : f32
    %957 = vector.broadcast %cst_396 : f32 to vector<8x128xf32>
    %958 = arith.addf %957, %956 : vector<8x128xf32>
    %959 = arith.divf %957, %958 : vector<8x128xf32>
    %960 = vector.extract_strided_slice %953 {offsets = [0, 128], sizes = [8, 128], strides = [1, 1]} : vector<8x512xf32> to vector<8x128xf32>
    %961 = arith.negf %960 : vector<8x128xf32>
    %962 = math.exp %961 : vector<8x128xf32>
    %cst_397 = arith.constant 1.000000e+00 : f32
    %963 = vector.broadcast %cst_397 : f32 to vector<8x128xf32>
    %964 = arith.addf %963, %962 : vector<8x128xf32>
    %965 = arith.divf %963, %964 : vector<8x128xf32>
    %966 = vector.extract_strided_slice %953 {offsets = [0, 256], sizes = [8, 128], strides = [1, 1]} : vector<8x512xf32> to vector<8x128xf32>
    %967 = math.tanh %966 : vector<8x128xf32>
    %968 = vector.extract_strided_slice %953 {offsets = [0, 384], sizes = [8, 128], strides = [1, 1]} : vector<8x512xf32> to vector<8x128xf32>
    %969 = arith.negf %968 : vector<8x128xf32>
    %970 = math.exp %969 : vector<8x128xf32>
    %cst_398 = arith.constant 1.000000e+00 : f32
    %971 = vector.broadcast %cst_398 : f32 to vector<8x128xf32>
    %972 = arith.addf %971, %970 : vector<8x128xf32>
    %973 = arith.divf %971, %972 : vector<8x128xf32>
    %974 = vector.extract_strided_slice %918 {offsets = [0, 128], sizes = [8, 128], strides = [1, 1]} : vector<8x256xf32> to vector<8x128xf32>
    %975 = arith.mulf %965, %974 : vector<8x128xf32>
    %976 = arith.mulf %959, %967 : vector<8x128xf32>
    %977 = arith.addf %975, %976 : vector<8x128xf32>
    %978 = math.tanh %977 : vector<8x128xf32>
    %979 = arith.mulf %973, %978 : vector<8x128xf32>
    %c0_399 = arith.constant 0 : index
    %c128_400 = arith.constant 128 : index
    %980 = vector.load %arg9[%c0_399, %c128_400] : memref<8x256xf32, #tpu.memory_space<vmem>>, vector<8x128xf32>
    tpu.vector_store %arg9[%c0_399, %c128_400], %977 {strides = array<i32>} : memref<8x256xf32, #tpu.memory_space<vmem>>, vector<8x128xf32>,
    %c0_401 = arith.constant 0 : index
    %c128_402 = arith.constant 128 : index
    %981 = vector.load %arg8[%c0_401, %c128_402] : memref<8x256xf32, #tpu.memory_space<vmem>>, vector<8x128xf32>
    tpu.vector_store %arg8[%c0_401, %c128_402], %979 {strides = array<i32>} : memref<8x256xf32, #tpu.memory_space<vmem>>, vector<8x128xf32>,
    %c16_403 = arith.constant 16 : index
    %c128_404 = arith.constant 128 : index
    %982 = vector.load %arg5[%c16_403, %c128_404] : memref<64x256xf32, #tpu.memory_space<vmem>>, vector<8x128xf32>
    tpu.vector_store %arg5[%c16_403, %c128_404], %979 {strides = array<i32>} : memref<64x256xf32, #tpu.memory_space<vmem>>, vector<8x128xf32>,
    %c0_405 = arith.constant 0 : index
    %c0_406 = arith.constant 0 : index
    %983 = vector.load %arg8[%c0_405, %c0_406] : memref<8x256xf32, #tpu.memory_space<vmem>>, vector<8x256xf32>
    %984 = arith.truncf %983 : vector<8x256xf32> to vector<8x256xbf16>
    %cst_407 = arith.constant dense<0.000000e+00> : vector<8x1024xf32>
    %985 = tpu.matmul %984, %574, %cst_407 {dimension_numbers = #tpu.dot_dimension_numbers<[1], [0], [0], [1], [0, 0, 1, 1], [], []>} : vector<8x256xbf16>, vector<256x1024xbf16>, vector<8x1024xf32> -> vector<8x1024xf32>
    %c0_408 = arith.constant 0 : index
    %c0_409 = arith.constant 0 : index
    %986 = vector.load %arg9[%c0_408, %c0_409] : memref<8x256xf32, #tpu.memory_space<vmem>>, vector<8x256xf32>
    %c48_410 = arith.constant 48 : index
    %c0_411 = arith.constant 0 : index
    %987 = vector.load %arg6[%c48_410, %c0_411] : memref<64x1024xf32, #tpu.memory_space<vmem>>, vector<8x512xf32>
    %988 = vector.extract_strided_slice %985 {offsets = [0, 0], sizes = [8, 512], strides = [1, 1]} : vector<8x1024xf32> to vector<8x512xf32>
    %989 = arith.addf %987, %988 : vector<8x512xf32>
    %990 = vector.extract_strided_slice %989 {offsets = [0, 0], sizes = [8, 128], strides = [1, 1]} : vector<8x512xf32> to vector<8x128xf32>
    %991 = arith.negf %990 : vector<8x128xf32>
    %992 = math.exp %991 : vector<8x128xf32>
    %cst_412 = arith.constant 1.000000e+00 : f32
    %993 = vector.broadcast %cst_412 : f32 to vector<8x128xf32>
    %994 = arith.addf %993, %992 : vector<8x128xf32>
    %995 = arith.divf %993, %994 : vector<8x128xf32>
    %996 = vector.extract_strided_slice %989 {offsets = [0, 128], sizes = [8, 128], strides = [1, 1]} : vector<8x512xf32> to vector<8x128xf32>
    %997 = arith.negf %996 : vector<8x128xf32>
    %998 = math.exp %997 : vector<8x128xf32>
    %cst_413 = arith.constant 1.000000e+00 : f32
    %999 = vector.broadcast %cst_413 : f32 to vector<8x128xf32>
    %1000 = arith.addf %999, %998 : vector<8x128xf32>
    %1001 = arith.divf %999, %1000 : vector<8x128xf32>
    %1002 = vector.extract_strided_slice %989 {offsets = [0, 256], sizes = [8, 128], strides = [1, 1]} : vector<8x512xf32> to vector<8x128xf32>
    %1003 = math.tanh %1002 : vector<8x128xf32>
    %1004 = vector.extract_strided_slice %989 {offsets = [0, 384], sizes = [8, 128], strides = [1, 1]} : vector<8x512xf32> to vector<8x128xf32>
    %1005 = arith.negf %1004 : vector<8x128xf32>
    %1006 = math.exp %1005 : vector<8x128xf32>
    %cst_414 = arith.constant 1.000000e+00 : f32
    %1007 = vector.broadcast %cst_414 : f32 to vector<8x128xf32>
    %1008 = arith.addf %1007, %1006 : vector<8x128xf32>
    %1009 = arith.divf %1007, %1008 : vector<8x128xf32>
    %1010 = vector.extract_strided_slice %986 {offsets = [0, 0], sizes = [8, 128], strides = [1, 1]} : vector<8x256xf32> to vector<8x128xf32>
    %1011 = arith.mulf %1001, %1010 : vector<8x128xf32>
    %1012 = arith.mulf %995, %1003 : vector<8x128xf32>
    %1013 = arith.addf %1011, %1012 : vector<8x128xf32>
    %1014 = math.tanh %1013 : vector<8x128xf32>
    %1015 = arith.mulf %1009, %1014 : vector<8x128xf32>
    %c0_415 = arith.constant 0 : index
    %c0_416 = arith.constant 0 : index
    %1016 = vector.load %arg9[%c0_415, %c0_416] : memref<8x256xf32, #tpu.memory_space<vmem>>, vector<8x128xf32>
    tpu.vector_store %arg9[%c0_415, %c0_416], %1013 {strides = array<i32>} : memref<8x256xf32, #tpu.memory_space<vmem>>, vector<8x128xf32>,
    %c0_417 = arith.constant 0 : index
    %c0_418 = arith.constant 0 : index
    %1017 = vector.load %arg8[%c0_417, %c0_418] : memref<8x256xf32, #tpu.memory_space<vmem>>, vector<8x128xf32>
    tpu.vector_store %arg8[%c0_417, %c0_418], %1015 {strides = array<i32>} : memref<8x256xf32, #tpu.memory_space<vmem>>, vector<8x128xf32>,
    %c48_419 = arith.constant 48 : index
    %c0_420 = arith.constant 0 : index
    %1018 = vector.load %arg5[%c48_419, %c0_420] : memref<64x256xf32, #tpu.memory_space<vmem>>, vector<8x128xf32>
    tpu.vector_store %arg5[%c48_419, %c0_420], %1015 {strides = array<i32>} : memref<64x256xf32, #tpu.memory_space<vmem>>, vector<8x128xf32>,
    %c8_421 = arith.constant 8 : index
    %c512_422 = arith.constant 512 : index
    %1019 = vector.load %arg6[%c8_421, %c512_422] : memref<64x1024xf32, #tpu.memory_space<vmem>>, vector<8x512xf32>
    %1020 = vector.extract_strided_slice %985 {offsets = [0, 512], sizes = [8, 512], strides = [1, 1]} : vector<8x1024xf32> to vector<8x512xf32>
    %1021 = arith.addf %1019, %1020 : vector<8x512xf32>
    %1022 = vector.extract_strided_slice %1021 {offsets = [0, 0], sizes = [8, 128], strides = [1, 1]} : vector<8x512xf32> to vector<8x128xf32>
    %1023 = arith.negf %1022 : vector<8x128xf32>
    %1024 = math.exp %1023 : vector<8x128xf32>
    %cst_423 = arith.constant 1.000000e+00 : f32
    %1025 = vector.broadcast %cst_423 : f32 to vector<8x128xf32>
    %1026 = arith.addf %1025, %1024 : vector<8x128xf32>
    %1027 = arith.divf %1025, %1026 : vector<8x128xf32>
    %1028 = vector.extract_strided_slice %1021 {offsets = [0, 128], sizes = [8, 128], strides = [1, 1]} : vector<8x512xf32> to vector<8x128xf32>
    %1029 = arith.negf %1028 : vector<8x128xf32>
    %1030 = math.exp %1029 : vector<8x128xf32>
    %cst_424 = arith.constant 1.000000e+00 : f32
    %1031 = vector.broadcast %cst_424 : f32 to vector<8x128xf32>
    %1032 = arith.addf %1031, %1030 : vector<8x128xf32>
    %1033 = arith.divf %1031, %1032 : vector<8x128xf32>
    %1034 = vector.extract_strided_slice %1021 {offsets = [0, 256], sizes = [8, 128], strides = [1, 1]} : vector<8x512xf32> to vector<8x128xf32>
    %1035 = math.tanh %1034 : vector<8x128xf32>
    %1036 = vector.extract_strided_slice %1021 {offsets = [0, 384], sizes = [8, 128], strides = [1, 1]} : vector<8x512xf32> to vector<8x128xf32>
    %1037 = arith.negf %1036 : vector<8x128xf32>
    %1038 = math.exp %1037 : vector<8x128xf32>
    %cst_425 = arith.constant 1.000000e+00 : f32
    %1039 = vector.broadcast %cst_425 : f32 to vector<8x128xf32>
    %1040 = arith.addf %1039, %1038 : vector<8x128xf32>
    %1041 = arith.divf %1039, %1040 : vector<8x128xf32>
    %1042 = vector.extract_strided_slice %986 {offsets = [0, 128], sizes = [8, 128], strides = [1, 1]} : vector<8x256xf32> to vector<8x128xf32>
    %1043 = arith.mulf %1033, %1042 : vector<8x128xf32>
    %1044 = arith.mulf %1027, %1035 : vector<8x128xf32>
    %1045 = arith.addf %1043, %1044 : vector<8x128xf32>
    %1046 = math.tanh %1045 : vector<8x128xf32>
    %1047 = arith.mulf %1041, %1046 : vector<8x128xf32>
    %c0_426 = arith.constant 0 : index
    %c128_427 = arith.constant 128 : index
    %1048 = vector.load %arg9[%c0_426, %c128_427] : memref<8x256xf32, #tpu.memory_space<vmem>>, vector<8x128xf32>
    tpu.vector_store %arg9[%c0_426, %c128_427], %1045 {strides = array<i32>} : memref<8x256xf32, #tpu.memory_space<vmem>>, vector<8x128xf32>,
    %c0_428 = arith.constant 0 : index
    %c128_429 = arith.constant 128 : index
    %1049 = vector.load %arg8[%c0_428, %c128_429] : memref<8x256xf32, #tpu.memory_space<vmem>>, vector<8x128xf32>
    tpu.vector_store %arg8[%c0_428, %c128_429], %1047 {strides = array<i32>} : memref<8x256xf32, #tpu.memory_space<vmem>>, vector<8x128xf32>,
    %c8_430 = arith.constant 8 : index
    %c128_431 = arith.constant 128 : index
    %1050 = vector.load %arg5[%c8_430, %c128_431] : memref<64x256xf32, #tpu.memory_space<vmem>>, vector<8x128xf32>
    tpu.vector_store %arg5[%c8_430, %c128_431], %1047 {strides = array<i32>} : memref<64x256xf32, #tpu.memory_space<vmem>>, vector<8x128xf32>,
    %c0_432 = arith.constant 0 : index
    %c0_433 = arith.constant 0 : index
    %1051 = vector.load %arg8[%c0_432, %c0_433] : memref<8x256xf32, #tpu.memory_space<vmem>>, vector<8x256xf32>
    %1052 = arith.truncf %1051 : vector<8x256xf32> to vector<8x256xbf16>
    %cst_434 = arith.constant dense<0.000000e+00> : vector<8x1024xf32>
    %1053 = tpu.matmul %1052, %574, %cst_434 {dimension_numbers = #tpu.dot_dimension_numbers<[1], [0], [0], [1], [0, 0, 1, 1], [], []>} : vector<8x256xbf16>, vector<256x1024xbf16>, vector<8x1024xf32> -> vector<8x1024xf32>
    %c0_435 = arith.constant 0 : index
    %c0_436 = arith.constant 0 : index
    %1054 = vector.load %arg9[%c0_435, %c0_436] : memref<8x256xf32, #tpu.memory_space<vmem>>, vector<8x256xf32>
    %c56_437 = arith.constant 56 : index
    %c0_438 = arith.constant 0 : index
    %1055 = vector.load %arg6[%c56_437, %c0_438] : memref<64x1024xf32, #tpu.memory_space<vmem>>, vector<8x512xf32>
    %1056 = vector.extract_strided_slice %1053 {offsets = [0, 0], sizes = [8, 512], strides = [1, 1]} : vector<8x1024xf32> to vector<8x512xf32>
    %1057 = arith.addf %1055, %1056 : vector<8x512xf32>
    %1058 = vector.extract_strided_slice %1057 {offsets = [0, 0], sizes = [8, 128], strides = [1, 1]} : vector<8x512xf32> to vector<8x128xf32>
    %1059 = arith.negf %1058 : vector<8x128xf32>
    %1060 = math.exp %1059 : vector<8x128xf32>
    %cst_439 = arith.constant 1.000000e+00 : f32
    %1061 = vector.broadcast %cst_439 : f32 to vector<8x128xf32>
    %1062 = arith.addf %1061, %1060 : vector<8x128xf32>
    %1063 = arith.divf %1061, %1062 : vector<8x128xf32>
    %1064 = vector.extract_strided_slice %1057 {offsets = [0, 128], sizes = [8, 128], strides = [1, 1]} : vector<8x512xf32> to vector<8x128xf32>
    %1065 = arith.negf %1064 : vector<8x128xf32>
    %1066 = math.exp %1065 : vector<8x128xf32>
    %cst_440 = arith.constant 1.000000e+00 : f32
    %1067 = vector.broadcast %cst_440 : f32 to vector<8x128xf32>
    %1068 = arith.addf %1067, %1066 : vector<8x128xf32>
    %1069 = arith.divf %1067, %1068 : vector<8x128xf32>
    %1070 = vector.extract_strided_slice %1057 {offsets = [0, 256], sizes = [8, 128], strides = [1, 1]} : vector<8x512xf32> to vector<8x128xf32>
    %1071 = math.tanh %1070 : vector<8x128xf32>
    %1072 = vector.extract_strided_slice %1057 {offsets = [0, 384], sizes = [8, 128], strides = [1, 1]} : vector<8x512xf32> to vector<8x128xf32>
    %1073 = arith.negf %1072 : vector<8x128xf32>
    %1074 = math.exp %1073 : vector<8x128xf32>
    %cst_441 = arith.constant 1.000000e+00 : f32
    %1075 = vector.broadcast %cst_441 : f32 to vector<8x128xf32>
    %1076 = arith.addf %1075, %1074 : vector<8x128xf32>
    %1077 = arith.divf %1075, %1076 : vector<8x128xf32>
    %1078 = vector.extract_strided_slice %1054 {offsets = [0, 0], sizes = [8, 128], strides = [1, 1]} : vector<8x256xf32> to vector<8x128xf32>
    %1079 = arith.mulf %1069, %1078 : vector<8x128xf32>
    %1080 = arith.mulf %1063, %1071 : vector<8x128xf32>
    %1081 = arith.addf %1079, %1080 : vector<8x128xf32>
    %1082 = math.tanh %1081 : vector<8x128xf32>
    %1083 = arith.mulf %1077, %1082 : vector<8x128xf32>
    %c0_442 = arith.constant 0 : index
    %c0_443 = arith.constant 0 : index
    %1084 = vector.load %arg9[%c0_442, %c0_443] : memref<8x256xf32, #tpu.memory_space<vmem>>, vector<8x128xf32>
    tpu.vector_store %arg9[%c0_442, %c0_443], %1081 {strides = array<i32>} : memref<8x256xf32, #tpu.memory_space<vmem>>, vector<8x128xf32>,
    %c0_444 = arith.constant 0 : index
    %c0_445 = arith.constant 0 : index
    %1085 = vector.load %arg8[%c0_444, %c0_445] : memref<8x256xf32, #tpu.memory_space<vmem>>, vector<8x128xf32>
    tpu.vector_store %arg8[%c0_444, %c0_445], %1083 {strides = array<i32>} : memref<8x256xf32, #tpu.memory_space<vmem>>, vector<8x128xf32>,
    %c56_446 = arith.constant 56 : index
    %c0_447 = arith.constant 0 : index
    %1086 = vector.load %arg5[%c56_446, %c0_447] : memref<64x256xf32, #tpu.memory_space<vmem>>, vector<8x128xf32>
    tpu.vector_store %arg5[%c56_446, %c0_447], %1083 {strides = array<i32>} : memref<64x256xf32, #tpu.memory_space<vmem>>, vector<8x128xf32>,
    %c0_448 = arith.constant 0 : index
    %c512_449 = arith.constant 512 : index
    %1087 = vector.load %arg6[%c0_448, %c512_449] : memref<64x1024xf32, #tpu.memory_space<vmem>>, vector<8x512xf32>
    %1088 = vector.extract_strided_slice %1053 {offsets = [0, 512], sizes = [8, 512], strides = [1, 1]} : vector<8x1024xf32> to vector<8x512xf32>
    %1089 = arith.addf %1087, %1088 : vector<8x512xf32>
    %1090 = vector.extract_strided_slice %1089 {offsets = [0, 0], sizes = [8, 128], strides = [1, 1]} : vector<8x512xf32> to vector<8x128xf32>
    %1091 = arith.negf %1090 : vector<8x128xf32>
    %1092 = math.exp %1091 : vector<8x128xf32>
    %cst_450 = arith.constant 1.000000e+00 : f32
    %1093 = vector.broadcast %cst_450 : f32 to vector<8x128xf32>
    %1094 = arith.addf %1093, %1092 : vector<8x128xf32>
    %1095 = arith.divf %1093, %1094 : vector<8x128xf32>
    %1096 = vector.extract_strided_slice %1089 {offsets = [0, 128], sizes = [8, 128], strides = [1, 1]} : vector<8x512xf32> to vector<8x128xf32>
    %1097 = arith.negf %1096 : vector<8x128xf32>
    %1098 = math.exp %1097 : vector<8x128xf32>
    %cst_451 = arith.constant 1.000000e+00 : f32
    %1099 = vector.broadcast %cst_451 : f32 to vector<8x128xf32>
    %1100 = arith.addf %1099, %1098 : vector<8x128xf32>
    %1101 = arith.divf %1099, %1100 : vector<8x128xf32>
    %1102 = vector.extract_strided_slice %1089 {offsets = [0, 256], sizes = [8, 128], strides = [1, 1]} : vector<8x512xf32> to vector<8x128xf32>
    %1103 = math.tanh %1102 : vector<8x128xf32>
    %1104 = vector.extract_strided_slice %1089 {offsets = [0, 384], sizes = [8, 128], strides = [1, 1]} : vector<8x512xf32> to vector<8x128xf32>
    %1105 = arith.negf %1104 : vector<8x128xf32>
    %1106 = math.exp %1105 : vector<8x128xf32>
    %cst_452 = arith.constant 1.000000e+00 : f32
    %1107 = vector.broadcast %cst_452 : f32 to vector<8x128xf32>
    %1108 = arith.addf %1107, %1106 : vector<8x128xf32>
    %1109 = arith.divf %1107, %1108 : vector<8x128xf32>
    %1110 = vector.extract_strided_slice %1054 {offsets = [0, 128], sizes = [8, 128], strides = [1, 1]} : vector<8x256xf32> to vector<8x128xf32>
    %1111 = arith.mulf %1101, %1110 : vector<8x128xf32>
    %1112 = arith.mulf %1095, %1103 : vector<8x128xf32>
    %1113 = arith.addf %1111, %1112 : vector<8x128xf32>
    %1114 = math.tanh %1113 : vector<8x128xf32>
    %1115 = arith.mulf %1109, %1114 : vector<8x128xf32>
    %c0_453 = arith.constant 0 : index
    %c128_454 = arith.constant 128 : index
    %1116 = vector.load %arg9[%c0_453, %c128_454] : memref<8x256xf32, #tpu.memory_space<vmem>>, vector<8x128xf32>
    tpu.vector_store %arg9[%c0_453, %c128_454], %1113 {strides = array<i32>} : memref<8x256xf32, #tpu.memory_space<vmem>>, vector<8x128xf32>,
    %c0_455 = arith.constant 0 : index
    %c128_456 = arith.constant 128 : index
    %1117 = vector.load %arg8[%c0_455, %c128_456] : memref<8x256xf32, #tpu.memory_space<vmem>>, vector<8x128xf32>
    tpu.vector_store %arg8[%c0_455, %c128_456], %1115 {strides = array<i32>} : memref<8x256xf32, #tpu.memory_space<vmem>>, vector<8x128xf32>,
    %c0_457 = arith.constant 0 : index
    %c128_458 = arith.constant 128 : index
    %1118 = vector.load %arg5[%c0_457, %c128_458] : memref<64x256xf32, #tpu.memory_space<vmem>>, vector<8x128xf32>
    tpu.vector_store %arg5[%c0_457, %c128_458], %1115 {strides = array<i32>} : memref<64x256xf32, #tpu.memory_space<vmem>>, vector<8x128xf32>,
    return
  }
}

</mosaic_0001>

<llo_original>
// kernel: lstm_forward.1
$region0: #{lstm_forward.1}
  #allocation0 [shape = 'u32[]', space=smem, size = 0x4, offset = 0x4, fixed_abs, tag = 'smem constant byte address 0x4 - core index']
  #allocation1 [shape = 'u32[144,128]{1,0:T(1,128)}', space=vmem, size = 0x12000, scoped, tag = 'internal scratch']
  #allocation2 [shape = 'f32[64,1024]{1,0:T(8,128)}', space=vmem, size = 0x40000, scoped, tag = 'scratch operand']
  #allocation3 [shape = 'f32[64,256]{1,0:T(8,128)}', space=vmem, size = 0x10000, scoped, tag = 'scratch operand']
  #allocation4 [shape = 'f32[8,256]{1,0:T(8,128)}', space=vmem, size = 0x2000, scoped, tag = 'scratch operand']
  #allocation5 [shape = 'f32[8,256]{1,0:T(8,128)}', space=vmem, size = 0x2000, scoped, tag = 'scratch operand']
  %s0 = inlined_call_operand.vmem [shape: f32[64,32], index: 0, kind: input, shape index: {}]
  %s1 = inlined_call_operand.hbm [shape: bf16[32,1024], index: 1, kind: input, shape index: {}]
  %s2 = inlined_call_operand.hbm [shape: bf16[1,256,1024], index: 2, kind: input, shape index: {}]
  %s3 = inlined_call_operand.hbm [shape: bf16[2,256,1024], index: 3, kind: input, shape index: {}]
  %s4 = inlined_call_operand.vmem [shape: f32[2,1,1024], index: 4, kind: input, shape index: {}]
  %s5 = inlined_call_operand.vmem [shape: f32[64,256], index: 5, kind: output, shape index: {}]
  %s6 = sld [smem:[#allocation0]]
  $region42: #{lstm_forward.1} parent=0
    _
  %s8 = ssub.s32 1, %s6
  %s9 = scalar_select 0, %s8, %s6
  $region1: #{lstm_forward.1} parent=0
    #allocation6 [shape = 'u8[65536]{0}', space=vmem, size = 0x10000, scoped, tag = 'input window, operand 1, single buffered']
    #allocation7 [shape = 's32[1]{0}', space=sflag, size = 0x4, scoped, tag = 'scoped memory for lstm_forward.1']
    #allocation8 [shape = 'u8[524288]{0}', space=vmem, size = 0x80000, scoped, tag = 'input window, operand 2, single buffered']
    #allocation9 [shape = 's32[1]{0}', space=sflag, size = 0x4, scoped, tag = 'scoped memory for lstm_forward.1']
    #allocation10 [shape = 'u8[1048576]{0}', space=vmem, size = 0x100000, scoped, tag = 'input window, operand 3, single buffered']
    %10 = vsyncpa [#allocation7], 0
    %11 = vsyncpa [#allocation9], 0
    // Predicated region
    $region2: #{lstm_forward.1} parent=1 // pred_check
      _
    $region3: #{lstm_forward.1} parent=1 // pred_check_branch
      %13 = sbr.rel (0) target = $region5
    $region4: #{lstm_forward.1} parent=1 // pred_region
      _
    $region5: #{lstm_forward.1} parent=1 // pred_fallthru
      _
    // Predicated region
    $region6: #{lstm_forward.1} parent=1 // pred_check
      _
    $region7: #{lstm_forward.1} parent=1 // pred_check_branch
      %15 = sbr.rel (0) target = $region9
    $region8: #{lstm_forward.1} parent=1 // pred_region
      %s17 = ssub.s32 2048, 2048
      %18 = vsyncadd [#allocation7], %s17
      %s19 = sshll.u32 [#allocation6], 4
      %s20 = int_to_ptr.vmem [resolvable:$true] %s19
      %25 = dma.hbm_to_vmem [thread:$0]  %s1, 2048, %s20, [#allocation7], 512, 512, 32
    $region9: #{lstm_forward.1} parent=1 // pred_fallthru
      _
    // Predicated region
    $region10: #{lstm_forward.1} parent=1 // pred_check
      _
    $region11: #{lstm_forward.1} parent=1 // pred_check_branch
      %27 = sbr.rel (0) target = $region13
    $region12: #{lstm_forward.1} parent=1 // pred_region
      %s29 = ssub.s32 16384, 16384
      %30 = vsyncadd [#allocation9], %s29
      %s31 = sshll.u32 [#allocation8], 4
      %s32 = int_to_ptr.vmem [resolvable:$true] %s31
      %37 = dma.hbm_to_vmem [thread:$0]  %s2, 16384, %s32, [#allocation9], 512, 512, 32
    $region13: #{lstm_forward.1} parent=1 // pred_fallthru
      _
    // Predicated region
    $region14: #{lstm_forward.1} parent=1 // pred_check
      _
    $region15: #{lstm_forward.1} parent=1 // pred_check_branch
      %39 = sbr.rel (0) target = $region17
    $region16: #{lstm_forward.1} parent=1 // pred_region
      %s41 = ssub.s32 32768, 32768
      %42 = vsyncadd [#allocation9], %s41
      %s43 = sshll.u32 [#allocation10], 4
      %s44 = int_to_ptr.vmem [resolvable:$true] %s43
      %49 = dma.hbm_to_vmem [thread:$0]  %s3, 32768, %s44, [#allocation9], 512, 512, 32
    $region17: #{lstm_forward.1} parent=1 // pred_fallthru
      _
    // Predicated region
    $region18: #{lstm_forward.1} parent=1 // pred_check
      _
    $region19: #{lstm_forward.1} parent=1 // pred_check_branch
      %51 = sbr.rel (0) target = $region21
    $region20: #{lstm_forward.1} parent=1 // pred_region
      _
    $region21: #{lstm_forward.1} parent=1 // pred_fallthru
      _
    // Predicated region
    $region22: #{lstm_forward.1} parent=1 // pred_check
      _
    $region23: #{lstm_forward.1} parent=1 // pred_check_branch
      %53 = sbr.rel (0) target = $region25
    $region24: #{lstm_forward.1} parent=1 // pred_region
      %54 = dma.done [#allocation7], 2048
    $region25: #{lstm_forward.1} parent=1 // pred_fallthru
      _
    // Predicated region
    $region26: #{lstm_forward.1} parent=1 // pred_check
      _
    $region27: #{lstm_forward.1} parent=1 // pred_check_branch
      %56 = sbr.rel (0) target = $region29
    $region28: #{lstm_forward.1} parent=1 // pred_region
      %57 = dma.done [#allocation9], 16384
    $region29: #{lstm_forward.1} parent=1 // pred_fallthru
      _
    // Predicated region
    $region30: #{lstm_forward.1} parent=1 // pred_check
      _
    $region31: #{lstm_forward.1} parent=1 // pred_check_branch
      %59 = sbr.rel (0) target = $region33
    $region32: #{lstm_forward.1} parent=1 // pred_region
      %60 = dma.done [#allocation9], 32768
    $region33: #{lstm_forward.1} parent=1 // pred_fallthru
      _
    %v62 = vld [vmem:[%s0] sm:$0xff]
    %v63 = vld [vmem:[%s0 + $0x8] sm:$0xff]
    %v64 = vld [vmem:[%s0 + $0x10] sm:$0xff]
    %v65 = vld [vmem:[%s0 + $0x18] sm:$0xff]
    %v66 = vld [vmem:[%s0 + $0x20] sm:$0xff]
    %v67 = vld [vmem:[%s0 + $0x28] sm:$0xff]
    %v68 = vld [vmem:[%s0 + $0x30] sm:$0xff]
    %v69 = vld [vmem:[%s0 + $0x38] sm:$0xff]
    %v70 = vpack.c.bf16 %v63, %v62
    %v71 = vpack.c.bf16 %v65, %v64
    %v72 = vpack.c.bf16 %v67, %v66
    %v73 = vpack.c.bf16 %v69, %v68
    %v74 = vld [vmem:[#allocation6] sm:$0xff]
    %v75 = vld [vmem:[#allocation6 + $0x8] sm:$0xff]
    %v76 = vld [vmem:[#allocation6 + $0x10] sm:$0xff]
    %v77 = vld [vmem:[#allocation6 + $0x18] sm:$0xff]
    %v78 = vld [vmem:[#allocation6 + $0x20] sm:$0xff]
    %v79 = vld [vmem:[#allocation6 + $0x28] sm:$0xff]
    %v80 = vld [vmem:[#allocation6 + $0x30] sm:$0xff]
    %v81 = vld [vmem:[#allocation6 + $0x38] sm:$0xff]
    %v82 = vld [vmem:[#allocation6 + $0x40] sm:$0xff]
    %v83 = vld [vmem:[#allocation6 + $0x48] sm:$0xff]
    %v84 = vld [vmem:[#allocation6 + $0x50] sm:$0xff]
    %v85 = vld [vmem:[#allocation6 + $0x58] sm:$0xff]
    %v86 = vld [vmem:[#allocation6 + $0x60] sm:$0xff]
    %v87 = vld [vmem:[#allocation6 + $0x68] sm:$0xff]
    %v88 = vld [vmem:[#allocation6 + $0x70] sm:$0xff]
    %v89 = vld [vmem:[#allocation6 + $0x78] sm:$0xff]
    %v90 = vld [vmem:[%s4] sm:$0xff]
    %v92 = vlaneseq
    %v93 = vshrl.u32 %v92, 7
    %v94 = vsub.s32 0, %v93
    %v95 = vrot.slane %v90, %v94
    %v96 = vlaneseq
    %v97 = vshrl.u32 %v96, 7
    %v98 = vsub.s32 1, %v97
    %v99 = vrot.slane %v90, %v98
    %v100 = vlaneseq
    %v101 = vshrl.u32 %v100, 7
    %v102 = vsub.s32 2, %v101
    %v103 = vrot.slane %v90, %v102
    %v104 = vlaneseq
    %v105 = vshrl.u32 %v104, 7
    %v106 = vsub.s32 3, %v105
    %v107 = vrot.slane %v90, %v106
    %v108 = vlaneseq
    %v109 = vshrl.u32 %v108, 7
    %v110 = vsub.s32 4, %v109
    %v111 = vrot.slane %v90, %v110
    %v112 = vlaneseq
    %v113 = vshrl.u32 %v112, 7
    %v114 = vsub.s32 5, %v113
    %v115 = vrot.slane %v90, %v114
    %v116 = vlaneseq
    %v117 = vshrl.u32 %v116, 7
    %v118 = vsub.s32 6, %v117
    %v119 = vrot.slane %v90, %v118
    %v120 = vlaneseq
    %v121 = vshrl.u32 %v120, 7
    %v122 = vsub.s32 7, %v121
    %v123 = vrot.slane %v90, %v122
    %v148 = vunpack.c.l.b16 %v74
    %v149 = vunpack.c.h.b16 %v74
    %v150 = vunpack.c.l.b16 %v75
    %v151 = vunpack.c.h.b16 %v75
    %v152 = vunpack.c.l.b16 %v76
    %v153 = vunpack.c.h.b16 %v76
    %v154 = vunpack.c.l.b16 %v77
    %v155 = vunpack.c.h.b16 %v77
    %v156 = vunpack.c.l.b16 %v78
    %v157 = vunpack.c.h.b16 %v78
    %v158 = vunpack.c.l.b16 %v79
    %v159 = vunpack.c.h.b16 %v79
    %v160 = vunpack.c.l.b16 %v80
    %v161 = vunpack.c.h.b16 %v80
    %v162 = vunpack.c.l.b16 %v81
    %v163 = vunpack.c.h.b16 %v81
    %v164 = vunpack.c.l.b16 %v82
    %v165 = vunpack.c.h.b16 %v82
    %v166 = vunpack.c.l.b16 %v83
    %v167 = vunpack.c.h.b16 %v83
    %v168 = vunpack.c.l.b16 %v84
    %v169 = vunpack.c.h.b16 %v84
    %v170 = vunpack.c.l.b16 %v85
    %v171 = vunpack.c.h.b16 %v85
    %v172 = vunpack.c.l.b16 %v86
    %v173 = vunpack.c.h.b16 %v86
    %v174 = vunpack.c.l.b16 %v87
    %v175 = vunpack.c.h.b16 %v87
    %v176 = vunpack.c.l.b16 %v88
    %v177 = vunpack.c.h.b16 %v88
    %v178 = vunpack.c.l.b16 %v89
    %v179 = vunpack.c.h.b16 %v89
    %v180 = vpack.c.b16 %v156, %v148
    %v181 = vpack.c.b16 %v157, %v149
    %v182 = vpack.c.b16 %v158, %v150
    %v183 = vpack.c.b16 %v159, %v151
    %v184 = vpack.c.b16 %v160, %v152
    %v185 = vpack.c.b16 %v161, %v153
    %v186 = vpack.c.b16 %v162, %v154
    %v187 = vpack.c.b16 %v163, %v155
    %v188 = vpack.c.b16 %v172, %v164
    %v189 = vpack.c.b16 %v173, %v165
    %v190 = vpack.c.b16 %v174, %v166
    %v191 = vpack.c.b16 %v175, %v167
    %v192 = vpack.c.b16 %v176, %v168
    %v193 = vpack.c.b16 %v177, %v169
    %v194 = vpack.c.b16 %v178, %v170
    %v195 = vpack.c.b16 %v179, %v171
    %vm212 = vcmask 261120
    %v214 = vsel %vm212, %v70, 0
    %v217 = vsel %vm212, %v71, 0
    %v220 = vsel %vm212, %v72, 0
    %v223 = vsel %vm212, %v73, 0
    %225 = vmatprep.subr.bf16.mxu0 0
    %226 = vmatpush1.bf16.msra.mxu0 0
    %227 = vmatprep.subr.bf16.mxu0 0
    %228 = vmatpush1.bf16.msra.mxu0 0
    %229 = vmatprep.subr.bf16.mxu0 0
    %230 = vmatpush1.bf16.msra.mxu0 0
    %231 = vmatprep.subr.bf16.mxu0 0
    %232 = vmatpush1.bf16.msra.mxu0 0
    %233 = vmatprep.subr.bf16.mxu0 0
    %234 = vmatpush1.bf16.msra.mxu0 0
    %235 = vmatprep.subr.bf16.mxu0 0
    %236 = vmatpush1.bf16.msra.mxu0 0
    %237 = vmatprep.subr.bf16.mxu0 %v189
    %238 = vmatpush1.bf16.msra.mxu0 %v188
    %239 = vmatprep.subr.bf16.mxu0 %v181
    %240 = vmatpush1.bf16.msra.mxu0 %v180
    %241 = vmatprep.subr.bf16.mxu0 0
    %242 = vmatpush2.bf16.msra.mxu0 0
    %243 = vmatprep.subr.bf16.mxu0 0
    %244 = vmatpush2.bf16.msra.mxu0 0
    %245 = vmatprep.subr.bf16.mxu0 0
    %246 = vmatpush2.bf16.msra.mxu0 0
    %247 = vmatprep.subr.bf16.mxu0 0
    %248 = vmatpush2.bf16.msra.mxu0 0
    %249 = vmatprep.subr.bf16.mxu0 0
    %250 = vmatpush2.bf16.msra.mxu0 0
    %251 = vmatprep.subr.bf16.mxu0 0
    %252 = vmatpush2.bf16.msra.mxu0 0
    %253 = vmatprep.subr.bf16.mxu0 0
    %254 = vmatpush2.bf16.msra.mxu0 0
    %255 = vmatprep.subr.bf16.mxu0 0
    %256 = vmatpush2.bf16.msra.mxu0 0
    %257 = vmatprep.mubr.bf16.mxu0 0
    %258 = vmatmul.mubr.bf16.gmra.mxu0 %v214
    %v259 = vpop.f32.mrf.mxu0
    %v260 = vadd.f32 %v95, %v259
    %v261 = vpop.f32.mrf.mxu0
    %v262 = vadd.f32 %v99, %v261
    %v263 = vpop.f32.mrf.mxu0
    %v264 = vadd.f32 %v95, %v263
    %v265 = vpop.f32.mrf.mxu0
    %v266 = vadd.f32 %v99, %v265
    %267 = vmatprep.mubr.bf16.mxu0 0
    %268 = vmatmul.mubr.bf16.gmra.mxu0 %v217
    %v269 = vpop.f32.mrf.mxu0
    %v270 = vadd.f32 %v95, %v269
    %v271 = vpop.f32.mrf.mxu0
    %v272 = vadd.f32 %v99, %v271
    %v273 = vpop.f32.mrf.mxu0
    %v274 = vadd.f32 %v95, %v273
    %v275 = vpop.f32.mrf.mxu0
    %v276 = vadd.f32 %v99, %v275
    %277 = vmatprep.mubr.bf16.mxu0 0
    %278 = vmatmul.mubr.bf16.gmra.mxu0 %v220
    %v279 = vpop.f32.mrf.mxu0
    %v280 = vadd.f32 %v95, %v279
    %v281 = vpop.f32.mrf.mxu0
    %v282 = vadd.f32 %v99, %v281
    %v283 = vpop.f32.mrf.mxu0
    %v284 = vadd.f32 %v95, %v283
    %v285 = vpop.f32.mrf.mxu0
    %v286 = vadd.f32 %v99, %v285
    %287 = vmatprep.mubr.bf16.mxu0 0
    %288 = vmatmul.mubr.bf16.gmra.mxu0 %v223
    %v289 = vpop.f32.mrf.mxu0
    %v290 = vadd.f32 %v95, %v289
    %v291 = vpop.f32.mrf.mxu0
    %v292 = vadd.f32 %v99, %v291
    %v293 = vpop.f32.mrf.mxu0
    %v294 = vadd.f32 %v95, %v293
    %v295 = vpop.f32.mrf.mxu0
    %v296 = vadd.f32 %v99, %v295
    %297 = vdwg.mxu0
    %298 = vmatprep.subr.bf16.mxu0 0
    %299 = vmatpush1.bf16.msra.mxu0 0
    %300 = vmatprep.subr.bf16.mxu0 0
    %301 = vmatpush1.bf16.msra.mxu0 0
    %302 = vmatprep.subr.bf16.mxu0 0
    %303 = vmatpush1.bf16.msra.mxu0 0
    %304 = vmatprep.subr.bf16.mxu0 0
    %305 = vmatpush1.bf16.msra.mxu0 0
    %306 = vmatprep.subr.bf16.mxu0 0
    %307 = vmatpush1.bf16.msra.mxu0 0
    %308 = vmatprep.subr.bf16.mxu0 0
    %309 = vmatpush1.bf16.msra.mxu0 0
    %310 = vmatprep.subr.bf16.mxu0 %v191
    %311 = vmatpush1.bf16.msra.mxu0 %v190
    %312 = vmatprep.subr.bf16.mxu0 %v183
    %313 = vmatpush1.bf16.msra.mxu0 %v182
    %314 = vmatprep.subr.bf16.mxu0 0
    %315 = vmatpush2.bf16.msra.mxu0 0
    %316 = vmatprep.subr.bf16.mxu0 0
    %317 = vmatpush2.bf16.msra.mxu0 0
    %318 = vmatprep.subr.bf16.mxu0 0
    %319 = vmatpush2.bf16.msra.mxu0 0
    %320 = vmatprep.subr.bf16.mxu0 0
    %321 = vmatpush2.bf16.msra.mxu0 0
    %322 = vmatprep.subr.bf16.mxu0 0
    %323 = vmatpush2.bf16.msra.mxu0 0
    %324 = vmatprep.subr.bf16.mxu0 0
    %325 = vmatpush2.bf16.msra.mxu0 0
    %326 = vmatprep.subr.bf16.mxu0 0
    %327 = vmatpush2.bf16.msra.mxu0 0
    %328 = vmatprep.subr.bf16.mxu0 0
    %329 = vmatpush2.bf16.msra.mxu0 0
    %330 = vmatprep.mubr.bf16.mxu0 0
    %331 = vmatmul.mubr.bf16.gmra.mxu0 %v214
    %v332 = vpop.f32.mrf.mxu0
    %v333 = vadd.f32 %v103, %v332
    %v334 = vpop.f32.mrf.mxu0
    %v335 = vadd.f32 %v107, %v334
    %v336 = vpop.f32.mrf.mxu0
    %v337 = vadd.f32 %v103, %v336
    %v338 = vpop.f32.mrf.mxu0
    %v339 = vadd.f32 %v107, %v338
    %340 = vmatprep.mubr.bf16.mxu0 0
    %341 = vmatmul.mubr.bf16.gmra.mxu0 %v217
    %v342 = vpop.f32.mrf.mxu0
    %v343 = vadd.f32 %v103, %v342
    %v344 = vpop.f32.mrf.mxu0
    %v345 = vadd.f32 %v107, %v344
    %v346 = vpop.f32.mrf.mxu0
    %v347 = vadd.f32 %v103, %v346
    %v348 = vpop.f32.mrf.mxu0
    %v349 = vadd.f32 %v107, %v348
    %350 = vmatprep.mubr.bf16.mxu0 0
    %351 = vmatmul.mubr.bf16.gmra.mxu0 %v220
    %v352 = vpop.f32.mrf.mxu0
    %v353 = vadd.f32 %v103, %v352
    %v354 = vpop.f32.mrf.mxu0
    %v355 = vadd.f32 %v107, %v354
    %v356 = vpop.f32.mrf.mxu0
    %v357 = vadd.f32 %v103, %v356
    %v358 = vpop.f32.mrf.mxu0
    %v359 = vadd.f32 %v107, %v358
    %360 = vmatprep.mubr.bf16.mxu0 0
    %361 = vmatmul.mubr.bf16.gmra.mxu0 %v223
    %v362 = vpop.f32.mrf.mxu0
    %v363 = vadd.f32 %v103, %v362
    %v364 = vpop.f32.mrf.mxu0
    %v365 = vadd.f32 %v107, %v364
    %v366 = vpop.f32.mrf.mxu0
    %v367 = vadd.f32 %v103, %v366
    %v368 = vpop.f32.mrf.mxu0
    %v369 = vadd.f32 %v107, %v368
    %370 = vdwg.mxu0
    %371 = vmatprep.subr.bf16.mxu0 0
    %372 = vmatpush1.bf16.msra.mxu0 0
    %373 = vmatprep.subr.bf16.mxu0 0
    %374 = vmatpush1.bf16.msra.mxu0 0
    %375 = vmatprep.subr.bf16.mxu0 0
    %376 = vmatpush1.bf16.msra.mxu0 0
    %377 = vmatprep.subr.bf16.mxu0 0
    %378 = vmatpush1.bf16.msra.mxu0 0
    %379 = vmatprep.subr.bf16.mxu0 0
    %380 = vmatpush1.bf16.msra.mxu0 0
    %381 = vmatprep.subr.bf16.mxu0 0
    %382 = vmatpush1.bf16.msra.mxu0 0
    %383 = vmatprep.subr.bf16.mxu0 %v193
    %384 = vmatpush1.bf16.msra.mxu0 %v192
    %385 = vmatprep.subr.bf16.mxu0 %v185
    %386 = vmatpush1.bf16.msra.mxu0 %v184
    %387 = vmatprep.subr.bf16.mxu0 0
    %388 = vmatpush2.bf16.msra.mxu0 0
    %389 = vmatprep.subr.bf16.mxu0 0
    %390 = vmatpush2.bf16.msra.mxu0 0
    %391 = vmatprep.subr.bf16.mxu0 0
    %392 = vmatpush2.bf16.msra.mxu0 0
    %393 = vmatprep.subr.bf16.mxu0 0
    %394 = vmatpush2.bf16.msra.mxu0 0
    %395 = vmatprep.subr.bf16.mxu0 0
    %396 = vmatpush2.bf16.msra.mxu0 0
    %397 = vmatprep.subr.bf16.mxu0 0
    %398 = vmatpush2.bf16.msra.mxu0 0
    %399 = vmatprep.subr.bf16.mxu0 0
    %400 = vmatpush2.bf16.msra.mxu0 0
    %401 = vmatprep.subr.bf16.mxu0 0
    %402 = vmatpush2.bf16.msra.mxu0 0
    %403 = vmatprep.mubr.bf16.mxu0 0
    %404 = vmatmul.mubr.bf16.gmra.mxu0 %v214
    %v405 = vpop.f32.mrf.mxu0
    %v406 = vadd.f32 %v111, %v405
    %v407 = vpop.f32.mrf.mxu0
    %v408 = vadd.f32 %v115, %v407
    %v409 = vpop.f32.mrf.mxu0
    %v410 = vadd.f32 %v111, %v409
    %v411 = vpop.f32.mrf.mxu0
    %v412 = vadd.f32 %v115, %v411
    %413 = vmatprep.mubr.bf16.mxu0 0
    %414 = vmatmul.mubr.bf16.gmra.mxu0 %v217
    %v415 = vpop.f32.mrf.mxu0
    %v416 = vadd.f32 %v111, %v415
    %v417 = vpop.f32.mrf.mxu0
    %v418 = vadd.f32 %v115, %v417
    %v419 = vpop.f32.mrf.mxu0
    %v420 = vadd.f32 %v111, %v419
    %v421 = vpop.f32.mrf.mxu0
    %v422 = vadd.f32 %v115, %v421
    %423 = vmatprep.mubr.bf16.mxu0 0
    %424 = vmatmul.mubr.bf16.gmra.mxu0 %v220
    %v425 = vpop.f32.mrf.mxu0
    %v426 = vadd.f32 %v111, %v425
    %v427 = vpop.f32.mrf.mxu0
    %v428 = vadd.f32 %v115, %v427
    %v429 = vpop.f32.mrf.mxu0
    %v430 = vadd.f32 %v111, %v429
    %v431 = vpop.f32.mrf.mxu0
    %v432 = vadd.f32 %v115, %v431
    %433 = vmatprep.mubr.bf16.mxu0 0
    %434 = vmatmul.mubr.bf16.gmra.mxu0 %v223
    %v435 = vpop.f32.mrf.mxu0
    %v436 = vadd.f32 %v111, %v435
    %v437 = vpop.f32.mrf.mxu0
    %v438 = vadd.f32 %v115, %v437
    %v439 = vpop.f32.mrf.mxu0
    %v440 = vadd.f32 %v111, %v439
    %v441 = vpop.f32.mrf.mxu0
    %v442 = vadd.f32 %v115, %v441
    %443 = vdwg.mxu0
    %444 = vmatprep.subr.bf16.mxu0 0
    %445 = vmatpush1.bf16.msra.mxu0 0
    %446 = vmatprep.subr.bf16.mxu0 0
    %447 = vmatpush1.bf16.msra.mxu0 0
    %448 = vmatprep.subr.bf16.mxu0 0
    %449 = vmatpush1.bf16.msra.mxu0 0
    %450 = vmatprep.subr.bf16.mxu0 0
    %451 = vmatpush1.bf16.msra.mxu0 0
    %452 = vmatprep.subr.bf16.mxu0 0
    %453 = vmatpush1.bf16.msra.mxu0 0
    %454 = vmatprep.subr.bf16.mxu0 0
    %455 = vmatpush1.bf16.msra.mxu0 0
    %456 = vmatprep.subr.bf16.mxu0 %v195
    %457 = vmatpush1.bf16.msra.mxu0 %v194
    %458 = vmatprep.subr.bf16.mxu0 %v187
    %459 = vmatpush1.bf16.msra.mxu0 %v186
    %460 = vmatprep.subr.bf16.mxu0 0
    %461 = vmatpush2.bf16.msra.mxu0 0
    %462 = vmatprep.subr.bf16.mxu0 0
    %463 = vmatpush2.bf16.msra.mxu0 0
    %464 = vmatprep.subr.bf16.mxu0 0
    %465 = vmatpush2.bf16.msra.mxu0 0
    %466 = vmatprep.subr.bf16.mxu0 0
    %467 = vmatpush2.bf16.msra.mxu0 0
    %468 = vmatprep.subr.bf16.mxu0 0
    %469 = vmatpush2.bf16.msra.mxu0 0
    %470 = vmatprep.subr.bf16.mxu0 0
    %471 = vmatpush2.bf16.msra.mxu0 0
    %472 = vmatprep.subr.bf16.mxu0 0
    %473 = vmatpush2.bf16.msra.mxu0 0
    %474 = vmatprep.subr.bf16.mxu0 0
    %475 = vmatpush2.bf16.msra.mxu0 0
    %476 = vmatprep.mubr.bf16.mxu0 0
    %477 = vmatmul.mubr.bf16.gmra.mxu0 %v214
    %v478 = vpop.f32.mrf.mxu0
    %v479 = vadd.f32 %v119, %v478
    %v480 = vpop.f32.mrf.mxu0
    %v481 = vadd.f32 %v123, %v480
    %v482 = vpop.f32.mrf.mxu0
    %v483 = vadd.f32 %v119, %v482
    %v484 = vpop.f32.mrf.mxu0
    %v485 = vadd.f32 %v123, %v484
    %486 = vmatprep.mubr.bf16.mxu0 0
    %487 = vmatmul.mubr.bf16.gmra.mxu0 %v217
    %v488 = vpop.f32.mrf.mxu0
    %v489 = vadd.f32 %v119, %v488
    %v490 = vpop.f32.mrf.mxu0
    %v491 = vadd.f32 %v123, %v490
    %v492 = vpop.f32.mrf.mxu0
    %v493 = vadd.f32 %v119, %v492
    %v494 = vpop.f32.mrf.mxu0
    %v495 = vadd.f32 %v123, %v494
    %496 = vmatprep.mubr.bf16.mxu0 0
    %497 = vmatmul.mubr.bf16.gmra.mxu0 %v220
    %v498 = vpop.f32.mrf.mxu0
    %v499 = vadd.f32 %v119, %v498
    %v500 = vpop.f32.mrf.mxu0
    %v501 = vadd.f32 %v123, %v500
    %v502 = vpop.f32.mrf.mxu0
    %v503 = vadd.f32 %v119, %v502
    %v504 = vpop.f32.mrf.mxu0
    %v505 = vadd.f32 %v123, %v504
    %506 = vmatprep.mubr.bf16.mxu0 0
    %507 = vmatmul.mubr.bf16.gmra.mxu0 %v223
    %v508 = vpop.f32.mrf.mxu0
    %v509 = vadd.f32 %v119, %v508
    %v510 = vpop.f32.mrf.mxu0
    %v511 = vadd.f32 %v123, %v510
    %v512 = vpop.f32.mrf.mxu0
    %v513 = vadd.f32 %v119, %v512
    %v514 = vpop.f32.mrf.mxu0
    %v515 = vadd.f32 %v123, %v514
    %516 = vdwg.mxu0
    %517 = vst [vmem:[#allocation2] sm:$0xff] %v260
    %518 = vst [vmem:[#allocation2 + $0x8] sm:$0xff] %v262
    %519 = vst [vmem:[#allocation2 + $0x10] sm:$0xff] %v333
    %520 = vst [vmem:[#allocation2 + $0x18] sm:$0xff] %v335
    %521 = vst [vmem:[#allocation2 + $0x20] sm:$0xff] %v406
    %522 = vst [vmem:[#allocation2 + $0x28] sm:$0xff] %v408
    %523 = vst [vmem:[#allocation2 + $0x30] sm:$0xff] %v479
    %524 = vst [vmem:[#allocation2 + $0x38] sm:$0xff] %v481
    %525 = vst [vmem:[#allocation2 + $0x40] sm:$0xff] %v264
    %526 = vst [vmem:[#allocation2 + $0x48] sm:$0xff] %v266
    %527 = vst [vmem:[#allocation2 + $0x50] sm:$0xff] %v337
    %528 = vst [vmem:[#allocation2 + $0x58] sm:$0xff] %v339
    %529 = vst [vmem:[#allocation2 + $0x60] sm:$0xff] %v410
    %530 = vst [vmem:[#allocation2 + $0x68] sm:$0xff] %v412
    %531 = vst [vmem:[#allocation2 + $0x70] sm:$0xff] %v483
    %532 = vst [vmem:[#allocation2 + $0x78] sm:$0xff] %v485
    %533 = vst [vmem:[#allocation2 + $0x80] sm:$0xff] %v270
    %534 = vst [vmem:[#allocation2 + $0x88] sm:$0xff] %v272
    %535 = vst [vmem:[#allocation2 + $0x90] sm:$0xff] %v343
    %536 = vst [vmem:[#allocation2 + $0x98] sm:$0xff] %v345
    %537 = vst [vmem:[#allocation2 + $0xa0] sm:$0xff] %v416
    %538 = vst [vmem:[#allocation2 + $0xa8] sm:$0xff] %v418
    %539 = vst [vmem:[#allocation2 + $0xb0] sm:$0xff] %v489
    %540 = vst [vmem:[#allocation2 + $0xb8] sm:$0xff] %v491
    %541 = vst [vmem:[#allocation2 + $0xc0] sm:$0xff] %v274
    %542 = vst [vmem:[#allocation2 + $0xc8] sm:$0xff] %v276
    %543 = vst [vmem:[#allocation2 + $0xd0] sm:$0xff] %v347
    %544 = vst [vmem:[#allocation2 + $0xd8] sm:$0xff] %v349
    %545 = vst [vmem:[#allocation2 + $0xe0] sm:$0xff] %v420
    %546 = vst [vmem:[#allocation2 + $0xe8] sm:$0xff] %v422
    %547 = vst [vmem:[#allocation2 + $0xf0] sm:$0xff] %v493
    %548 = vst [vmem:[#allocation2 + $0xf8] sm:$0xff] %v495
    %549 = vst [vmem:[#allocation2 + $0x100] sm:$0xff] %v280
    %550 = vst [vmem:[#allocation2 + $0x108] sm:$0xff] %v282
    %551 = vst [vmem:[#allocation2 + $0x110] sm:$0xff] %v353
    %552 = vst [vmem:[#allocation2 + $0x118] sm:$0xff] %v355
    %553 = vst [vmem:[#allocation2 + $0x120] sm:$0xff] %v426
    %554 = vst [vmem:[#allocation2 + $0x128] sm:$0xff] %v428
    %555 = vst [vmem:[#allocation2 + $0x130] sm:$0xff] %v499
    %556 = vst [vmem:[#allocation2 + $0x138] sm:$0xff] %v501
    %557 = vst [vmem:[#allocation2 + $0x140] sm:$0xff] %v284
    %558 = vst [vmem:[#allocation2 + $0x148] sm:$0xff] %v286
    %559 = vst [vmem:[#allocation2 + $0x150] sm:$0xff] %v357
    %560 = vst [vmem:[#allocation2 + $0x158] sm:$0xff] %v359
    %561 = vst [vmem:[#allocation2 + $0x160] sm:$0xff] %v430
    %562 = vst [vmem:[#allocation2 + $0x168] sm:$0xff] %v432
    %563 = vst [vmem:[#allocation2 + $0x170] sm:$0xff] %v503
    %564 = vst [vmem:[#allocation2 + $0x178] sm:$0xff] %v505
    %565 = vst [vmem:[#allocation2 + $0x180] sm:$0xff] %v290
    %566 = vst [vmem:[#allocation2 + $0x188] sm:$0xff] %v292
    %567 = vst [vmem:[#allocation2 + $0x190] sm:$0xff] %v363
    %568 = vst [vmem:[#allocation2 + $0x198] sm:$0xff] %v365
    %569 = vst [vmem:[#allocation2 + $0x1a0] sm:$0xff] %v436
    %570 = vst [vmem:[#allocation2 + $0x1a8] sm:$0xff] %v438
    %571 = vst [vmem:[#allocation2 + $0x1b0] sm:$0xff] %v509
    %572 = vst [vmem:[#allocation2 + $0x1b8] sm:$0xff] %v511
    %573 = vst [vmem:[#allocation2 + $0x1c0] sm:$0xff] %v294
    %574 = vst [vmem:[#allocation2 + $0x1c8] sm:$0xff] %v296
    %575 = vst [vmem:[#allocation2 + $0x1d0] sm:$0xff] %v367
    %576 = vst [vmem:[#allocation2 + $0x1d8] sm:$0xff] %v369
    %577 = vst [vmem:[#allocation2 + $0x1e0] sm:$0xff] %v440
    %578 = vst [vmem:[#allocation2 + $0x1e8] sm:$0xff] %v442
    %579 = vst [vmem:[#allocation2 + $0x1f0] sm:$0xff] %v513
    %580 = vst [vmem:[#allocation2 + $0x1f8] sm:$0xff] %v515
    %581 = vst [vmem:[#allocation4] sm:$0xff] 0.0
    %582 = vst [vmem:[#allocation4 + $0x8] sm:$0xff] 0.0
    %583 = vst [vmem:[#allocation5] sm:$0xff] 0.0
    %584 = vst [vmem:[#allocation5 + $0x8] sm:$0xff] 0.0
    %v585 = vld [vmem:[#allocation10] sm:$0xff]
    %v586 = vld [vmem:[#allocation10 + $0x8] sm:$0xff]
    %v587 = vld [vmem:[#allocation10 + $0x10] sm:$0xff]
    %v588 = vld [vmem:[#allocation10 + $0x18] sm:$0xff]
    %v589 = vld [vmem:[#allocation10 + $0x20] sm:$0xff]
    %v590 = vld [vmem:[#allocation10 + $0x28] sm:$0xff]
    %v591 = vld [vmem:[#allocation10 + $0x30] sm:$0xff]
    %v592 = vld [vmem:[#allocation10 + $0x38] sm:$0xff]
    %v593 = vld [vmem:[#allocation10 + $0x40] sm:$0xff]
    %v594 = vld [vmem:[#allocation10 + $0x48] sm:$0xff]
    %v595 = vld [vmem:[#allocation10 + $0x50] sm:$0xff]
    %v596 = vld [vmem:[#allocation10 + $0x58] sm:$0xff]
    %v597 = vld [vmem:[#allocation10 + $0x60] sm:$0xff]
    %v598 = vld [vmem:[#allocation10 + $0x68] sm:$0xff]
    %v599 = vld [vmem:[#allocation10 + $0x70] sm:$0xff]
    %v600 = vld [vmem:[#allocation10 + $0x78] sm:$0xff]
    %v601 = vld [vmem:[#allocation10 + $0x80] sm:$0xff]
    %v602 = vld [vmem:[#allocation10 + $0x88] sm:$0xff]
    %v603 = vld [vmem:[#allocation10 + $0x90] sm:$0xff]
    %v604 = vld [vmem:[#allocation10 + $0x98] sm:$0xff]
    %v605 = vld [vmem:[#allocation10 + $0xa0] sm:$0xff]
    %v606 = vld [vmem:[#allocation10 + $0xa8] sm:$0xff]
    %v607 = vld [vmem:[#allocation10 + $0xb0] sm:$0xff]
    %v608 = vld [vmem:[#allocation10 + $0xb8] sm:$0xff]
    %v609 = vld [vmem:[#allocation10 + $0xc0] sm:$0xff]
    %v610 = vld [vmem:[#allocation10 + $0xc8] sm:$0xff]
    %v611 = vld [vmem:[#allocation10 + $0xd0] sm:$0xff]
    %v612 = vld [vmem:[#allocation10 + $0xd8] sm:$0xff]
    %v613 = vld [vmem:[#allocation10 + $0xe0] sm:$0xff]
    %v614 = vld [vmem:[#allocation10 + $0xe8] sm:$0xff]
    %v615 = vld [vmem:[#allocation10 + $0xf0] sm:$0xff]
    %v616 = vld [vmem:[#allocation10 + $0xf8] sm:$0xff]
    %v617 = vld [vmem:[#allocation10 + $0x100] sm:$0xff]
    %v618 = vld [vmem:[#allocation10 + $0x108] sm:$0xff]
    %v619 = vld [vmem:[#allocation10 + $0x110] sm:$0xff]
    %v620 = vld [vmem:[#allocation10 + $0x118] sm:$0xff]
    %v621 = vld [vmem:[#allocation10 + $0x120] sm:$0xff]
    %v622 = vld [vmem:[#allocation10 + $0x128] sm:$0xff]
    %v623 = vld [vmem:[#allocation10 + $0x130] sm:$0xff]
    %v624 = vld [vmem:[#allocation10 + $0x138] sm:$0xff]
    %v625 = vld [vmem:[#allocation10 + $0x140] sm:$0xff]
    %v626 = vld [vmem:[#allocation10 + $0x148] sm:$0xff]
    %v627 = vld [vmem:[#allocation10 + $0x150] sm:$0xff]
    %v628 = vld [vmem:[#allocation10 + $0x158] sm:$0xff]
    %v629 = vld [vmem:[#allocation10 + $0x160] sm:$0xff]
    %v630 = vld [vmem:[#allocation10 + $0x168] sm:$0xff]
    %v631 = vld [vmem:[#allocation10 + $0x170] sm:$0xff]
    %v632 = vld [vmem:[#allocation10 + $0x178] sm:$0xff]
    %v633 = vld [vmem:[#allocation10 + $0x180] sm:$0xff]
    %v634 = vld [vmem:[#allocation10 + $0x188] sm:$0xff]
    %v635 = vld [vmem:[#allocation10 + $0x190] sm:$0xff]
    %v636 = vld [vmem:[#allocation10 + $0x198] sm:$0xff]
    %v637 = vld [vmem:[#allocation10 + $0x1a0] sm:$0xff]
    %v638 = vld [vmem:[#allocation10 + $0x1a8] sm:$0xff]
    %v639 = vld [vmem:[#allocation10 + $0x1b0] sm:$0xff]
    %v640 = vld [vmem:[#allocation10 + $0x1b8] sm:$0xff]
    %v641 = vld [vmem:[#allocation10 + $0x1c0] sm:$0xff]
    %v642 = vld [vmem:[#allocation10 + $0x1c8] sm:$0xff]
    %v643 = vld [vmem:[#allocation10 + $0x1d0] sm:$0xff]
    %v644 = vld [vmem:[#allocation10 + $0x1d8] sm:$0xff]
    %v645 = vld [vmem:[#allocation10 + $0x1e0] sm:$0xff]
    %v646 = vld [vmem:[#allocation10 + $0x1e8] sm:$0xff]
    %v647 = vld [vmem:[#allocation10 + $0x1f0] sm:$0xff]
    %v648 = vld [vmem:[#allocation10 + $0x1f8] sm:$0xff]
    %v649 = vld [vmem:[#allocation10 + $0x200] sm:$0xff]
    %v650 = vld [vmem:[#allocation10 + $0x208] sm:$0xff]
    %v651 = vld [vmem:[#allocation10 + $0x210] sm:$0xff]
    %v652 = vld [vmem:[#allocation10 + $0x218] sm:$0xff]
    %v653 = vld [vmem:[#allocation10 + $0x220] sm:$0xff]
    %v654 = vld [vmem:[#allocation10 + $0x228] sm:$0xff]
    %v655 = vld [vmem:[#allocation10 + $0x230] sm:$0xff]
    %v656 = vld [vmem:[#allocation10 + $0x238] sm:$0xff]
    %v657 = vld [vmem:[#allocation10 + $0x240] sm:$0xff]
    %v658 = vld [vmem:[#allocation10 + $0x248] sm:$0xff]
    %v659 = vld [vmem:[#allocation10 + $0x250] sm:$0xff]
    %v660 = vld [vmem:[#allocation10 + $0x258] sm:$0xff]
    %v661 = vld [vmem:[#allocation10 + $0x260] sm:$0xff]
    %v662 = vld [vmem:[#allocation10 + $0x268] sm:$0xff]
    %v663 = vld [vmem:[#allocation10 + $0x270] sm:$0xff]
    %v664 = vld [vmem:[#allocation10 + $0x278] sm:$0xff]
    %v665 = vld [vmem:[#allocation10 + $0x280] sm:$0xff]
    %v666 = vld [vmem:[#allocation10 + $0x288] sm:$0xff]
    %v667 = vld [vmem:[#allocation10 + $0x290] sm:$0xff]
    %v668 = vld [vmem:[#allocation10 + $0x298] sm:$0xff]
    %v669 = vld [vmem:[#allocation10 + $0x2a0] sm:$0xff]
    %v670 = vld [vmem:[#allocation10 + $0x2a8] sm:$0xff]
    %v671 = vld [vmem:[#allocation10 + $0x2b0] sm:$0xff]
    %v672 = vld [vmem:[#allocation10 + $0x2b8] sm:$0xff]
    %v673 = vld [vmem:[#allocation10 + $0x2c0] sm:$0xff]
    %v674 = vld [vmem:[#allocation10 + $0x2c8] sm:$0xff]
    %v675 = vld [vmem:[#allocation10 + $0x2d0] sm:$0xff]
    %v676 = vld [vmem:[#allocation10 + $0x2d8] sm:$0xff]
    %v677 = vld [vmem:[#allocation10 + $0x2e0] sm:$0xff]
    %v678 = vld [vmem:[#allocation10 + $0x2e8] sm:$0xff]
    %v679 = vld [vmem:[#allocation10 + $0x2f0] sm:$0xff]
    %v680 = vld [vmem:[#allocation10 + $0x2f8] sm:$0xff]
    %v681 = vld [vmem:[#allocation10 + $0x300] sm:$0xff]
    %v682 = vld [vmem:[#allocation10 + $0x308] sm:$0xff]
    %v683 = vld [vmem:[#allocation10 + $0x310] sm:$0xff]
    %v684 = vld [vmem:[#allocation10 + $0x318] sm:$0xff]
    %v685 = vld [vmem:[#allocation10 + $0x320] sm:$0xff]
    %v686 = vld [vmem:[#allocation10 + $0x328] sm:$0xff]
    %v687 = vld [vmem:[#allocation10 + $0x330] sm:$0xff]
    %v688 = vld [vmem:[#allocation10 + $0x338] sm:$0xff]
    %v689 = vld [vmem:[#allocation10 + $0x340] sm:$0xff]
    %v690 = vld [vmem:[#allocation10 + $0x348] sm:$0xff]
    %v691 = vld [vmem:[#allocation10 + $0x350] sm:$0xff]
    %v692 = vld [vmem:[#allocation10 + $0x358] sm:$0xff]
    %v693 = vld [vmem:[#allocation10 + $0x360] sm:$0xff]
    %v694 = vld [vmem:[#allocation10 + $0x368] sm:$0xff]
    %v695 = vld [vmem:[#allocation10 + $0x370] sm:$0xff]
    %v696 = vld [vmem:[#allocation10 + $0x378] sm:$0xff]
    %v697 = vld [vmem:[#allocation10 + $0x380] sm:$0xff]
    %v698 = vld [vmem:[#allocation10 + $0x388] sm:$0xff]
    %v699 = vld [vmem:[#allocation10 + $0x390] sm:$0xff]
    %v700 = vld [vmem:[#allocation10 + $0x398] sm:$0xff]
    %v701 = vld [vmem:[#allocation10 + $0x3a0] sm:$0xff]
    %v702 = vld [vmem:[#allocation10 + $0x3a8] sm:$0xff]
    %v703 = vld [vmem:[#allocation10 + $0x3b0] sm:$0xff]
    %v704 = vld [vmem:[#allocation10 + $0x3b8] sm:$0xff]
    %v705 = vld [vmem:[#allocation10 + $0x3c0] sm:$0xff]
    %v706 = vld [vmem:[#allocation10 + $0x3c8] sm:$0xff]
    %v707 = vld [vmem:[#allocation10 + $0x3d0] sm:$0xff]
    %v708 = vld [vmem:[#allocation10 + $0x3d8] sm:$0xff]
    %v709 = vld [vmem:[#allocation10 + $0x3e0] sm:$0xff]
    %v710 = vld [vmem:[#allocation10 + $0x3e8] sm:$0xff]
    %v711 = vld [vmem:[#allocation10 + $0x3f0] sm:$0xff]
    %v712 = vld [vmem:[#allocation10 + $0x3f8] sm:$0xff]
    %v713 = vld [vmem:[#allocation4] sm:$0xff]
    %v714 = vld [vmem:[#allocation4 + $0x8] sm:$0xff]
    %v715 = vpack.c.bf16 %v713, %v713
    %v716 = vpack.c.bf16 %v714, %v714
    %v845 = vunpack.c.l.b16 %v585
    %v846 = vunpack.c.h.b16 %v585
    %v847 = vunpack.c.l.b16 %v586
    %v848 = vunpack.c.h.b16 %v586
    %v849 = vunpack.c.l.b16 %v587
    %v850 = vunpack.c.h.b16 %v587
    %v851 = vunpack.c.l.b16 %v588
    %v852 = vunpack.c.h.b16 %v588
    %v853 = vunpack.c.l.b16 %v589
    %v854 = vunpack.c.h.b16 %v589
    %v855 = vunpack.c.l.b16 %v590
    %v856 = vunpack.c.h.b16 %v590
    %v857 = vunpack.c.l.b16 %v591
    %v858 = vunpack.c.h.b16 %v591
    %v859 = vunpack.c.l.b16 %v592
    %v860 = vunpack.c.h.b16 %v592
    %v861 = vunpack.c.l.b16 %v593
    %v862 = vunpack.c.h.b16 %v593
    %v863 = vunpack.c.l.b16 %v594
    %v864 = vunpack.c.h.b16 %v594
    %v865 = vunpack.c.l.b16 %v595
    %v866 = vunpack.c.h.b16 %v595
    %v867 = vunpack.c.l.b16 %v596
    %v868 = vunpack.c.h.b16 %v596
    %v869 = vunpack.c.l.b16 %v597
    %v870 = vunpack.c.h.b16 %v597
    %v871 = vunpack.c.l.b16 %v598
    %v872 = vunpack.c.h.b16 %v598
    %v873 = vunpack.c.l.b16 %v599
    %v874 = vunpack.c.h.b16 %v599
    %v875 = vunpack.c.l.b16 %v600
    %v876 = vunpack.c.h.b16 %v600
    %v877 = vunpack.c.l.b16 %v601
    %v878 = vunpack.c.h.b16 %v601
    %v879 = vunpack.c.l.b16 %v602
    %v880 = vunpack.c.h.b16 %v602
    %v881 = vunpack.c.l.b16 %v603
    %v882 = vunpack.c.h.b16 %v603
    %v883 = vunpack.c.l.b16 %v604
    %v884 = vunpack.c.h.b16 %v604
    %v885 = vunpack.c.l.b16 %v605
    %v886 = vunpack.c.h.b16 %v605
    %v887 = vunpack.c.l.b16 %v606
    %v888 = vunpack.c.h.b16 %v606
    %v889 = vunpack.c.l.b16 %v607
    %v890 = vunpack.c.h.b16 %v607
    %v891 = vunpack.c.l.b16 %v608
    %v892 = vunpack.c.h.b16 %v608
    %v893 = vunpack.c.l.b16 %v609
    %v894 = vunpack.c.h.b16 %v609
    %v895 = vunpack.c.l.b16 %v610
    %v896 = vunpack.c.h.b16 %v610
    %v897 = vunpack.c.l.b16 %v611
    %v898 = vunpack.c.h.b16 %v611
    %v899 = vunpack.c.l.b16 %v612
    %v900 = vunpack.c.h.b16 %v612
    %v901 = vunpack.c.l.b16 %v613
    %v902 = vunpack.c.h.b16 %v613
    %v903 = vunpack.c.l.b16 %v614
    %v904 = vunpack.c.h.b16 %v614
    %v905 = vunpack.c.l.b16 %v615
    %v906 = vunpack.c.h.b16 %v615
    %v907 = vunpack.c.l.b16 %v616
    %v908 = vunpack.c.h.b16 %v616
    %v909 = vunpack.c.l.b16 %v617
    %v910 = vunpack.c.h.b16 %v617
    %v911 = vunpack.c.l.b16 %v618
    %v912 = vunpack.c.h.b16 %v618
    %v913 = vunpack.c.l.b16 %v619
    %v914 = vunpack.c.h.b16 %v619
    %v915 = vunpack.c.l.b16 %v620
    %v916 = vunpack.c.h.b16 %v620
    %v917 = vunpack.c.l.b16 %v621
    %v918 = vunpack.c.h.b16 %v621
    %v919 = vunpack.c.l.b16 %v622
    %v920 = vunpack.c.h.b16 %v622
    %v921 = vunpack.c.l.b16 %v623
    %v922 = vunpack.c.h.b16 %v623
    %v923 = vunpack.c.l.b16 %v624
    %v924 = vunpack.c.h.b16 %v624
    %v925 = vunpack.c.l.b16 %v625
    %v926 = vunpack.c.h.b16 %v625
    %v927 = vunpack.c.l.b16 %v626
    %v928 = vunpack.c.h.b16 %v626
    %v929 = vunpack.c.l.b16 %v627
    %v930 = vunpack.c.h.b16 %v627
    %v931 = vunpack.c.l.b16 %v628
    %v932 = vunpack.c.h.b16 %v628
    %v933 = vunpack.c.l.b16 %v629
    %v934 = vunpack.c.h.b16 %v629
    %v935 = vunpack.c.l.b16 %v630
    %v936 = vunpack.c.h.b16 %v630
    %v937 = vunpack.c.l.b16 %v631
    %v938 = vunpack.c.h.b16 %v631
    %v939 = vunpack.c.l.b16 %v632
    %v940 = vunpack.c.h.b16 %v632
    %v941 = vunpack.c.l.b16 %v633
    %v942 = vunpack.c.h.b16 %v633
    %v943 = vunpack.c.l.b16 %v634
    %v944 = vunpack.c.h.b16 %v634
    %v945 = vunpack.c.l.b16 %v635
    %v946 = vunpack.c.h.b16 %v635
    %v947 = vunpack.c.l.b16 %v636
    %v948 = vunpack.c.h.b16 %v636
    %v949 = vunpack.c.l.b16 %v637
    %v950 = vunpack.c.h.b16 %v637
    %v951 = vunpack.c.l.b16 %v638
    %v952 = vunpack.c.h.b16 %v638
    %v953 = vunpack.c.l.b16 %v639
    %v954 = vunpack.c.h.b16 %v639
    %v955 = vunpack.c.l.b16 %v640
    %v956 = vunpack.c.h.b16 %v640
    %v957 = vunpack.c.l.b16 %v641
    %v958 = vunpack.c.h.b16 %v641
    %v959 = vunpack.c.l.b16 %v642
    %v960 = vunpack.c.h.b16 %v642
    %v961 = vunpack.c.l.b16 %v643
    %v962 = vunpack.c.h.b16 %v643
    %v963 = vunpack.c.l.b16 %v644
    %v964 = vunpack.c.h.b16 %v644
    %v965 = vunpack.c.l.b16 %v645
    %v966 = vunpack.c.h.b16 %v645
    %v967 = vunpack.c.l.b16 %v646
    %v968 = vunpack.c.h.b16 %v646
    %v969 = vunpack.c.l.b16 %v647
    %v970 = vunpack.c.h.b16 %v647
    %v971 = vunpack.c.l.b16 %v648
    %v972 = vunpack.c.h.b16 %v648
    %v973 = vunpack.c.l.b16 %v649
    %v974 = vunpack.c.h.b16 %v649
    %v975 = vunpack.c.l.b16 %v650
    %v976 = vunpack.c.h.b16 %v650
    %v977 = vunpack.c.l.b16 %v651
    %v978 = vunpack.c.h.b16 %v651
    %v979 = vunpack.c.l.b16 %v652
    %v980 = vunpack.c.h.b16 %v652
    %v981 = vunpack.c.l.b16 %v653
    %v982 = vunpack.c.h.b16 %v653
    %v983 = vunpack.c.l.b16 %v654
    %v984 = vunpack.c.h.b16 %v654
    %v985 = vunpack.c.l.b16 %v655
    %v986 = vunpack.c.h.b16 %v655
    %v987 = vunpack.c.l.b16 %v656
    %v988 = vunpack.c.h.b16 %v656
    %v989 = vunpack.c.l.b16 %v657
    %v990 = vunpack.c.h.b16 %v657
    %v991 = vunpack.c.l.b16 %v658
    %v992 = vunpack.c.h.b16 %v658
    %v993 = vunpack.c.l.b16 %v659
    %v994 = vunpack.c.h.b16 %v659
    %v995 = vunpack.c.l.b16 %v660
    %v996 = vunpack.c.h.b16 %v660
    %v997 = vunpack.c.l.b16 %v661
    %v998 = vunpack.c.h.b16 %v661
    %v999 = vunpack.c.l.b16 %v662
    %v1000 = vunpack.c.h.b16 %v662
    %v1001 = vunpack.c.l.b16 %v663
    %v1002 = vunpack.c.h.b16 %v663
    %v1003 = vunpack.c.l.b16 %v664
    %v1004 = vunpack.c.h.b16 %v664
    %v1005 = vunpack.c.l.b16 %v665
    %v1006 = vunpack.c.h.b16 %v665
    %v1007 = vunpack.c.l.b16 %v666
    %v1008 = vunpack.c.h.b16 %v666
    %v1009 = vunpack.c.l.b16 %v667
    %v1010 = vunpack.c.h.b16 %v667
    %v1011 = vunpack.c.l.b16 %v668
    %v1012 = vunpack.c.h.b16 %v668
    %v1013 = vunpack.c.l.b16 %v669
    %v1014 = vunpack.c.h.b16 %v669
    %v1015 = vunpack.c.l.b16 %v670
    %v1016 = vunpack.c.h.b16 %v670
    %v1017 = vunpack.c.l.b16 %v671
    %v1018 = vunpack.c.h.b16 %v671
    %v1019 = vunpack.c.l.b16 %v672
    %v1020 = vunpack.c.h.b16 %v672
    %v1021 = vunpack.c.l.b16 %v673
    %v1022 = vunpack.c.h.b16 %v673
    %v1023 = vunpack.c.l.b16 %v674
    %v1024 = vunpack.c.h.b16 %v674
    %v1025 = vunpack.c.l.b16 %v675
    %v1026 = vunpack.c.h.b16 %v675
    %v1027 = vunpack.c.l.b16 %v676
    %v1028 = vunpack.c.h.b16 %v676
    %v1029 = vunpack.c.l.b16 %v677
    %v1030 = vunpack.c.h.b16 %v677
    %v1031 = vunpack.c.l.b16 %v678
    %v1032 = vunpack.c.h.b16 %v678
    %v1033 = vunpack.c.l.b16 %v679
    %v1034 = vunpack.c.h.b16 %v679
    %v1035 = vunpack.c.l.b16 %v680
    %v1036 = vunpack.c.h.b16 %v680
    %v1037 = vunpack.c.l.b16 %v681
    %v1038 = vunpack.c.h.b16 %v681
    %v1039 = vunpack.c.l.b16 %v682
    %v1040 = vunpack.c.h.b16 %v682
    %v1041 = vunpack.c.l.b16 %v683
    %v1042 = vunpack.c.h.b16 %v683
    %v1043 = vunpack.c.l.b16 %v684
    %v1044 = vunpack.c.h.b16 %v684
    %v1045 = vunpack.c.l.b16 %v685
    %v1046 = vunpack.c.h.b16 %v685
    %v1047 = vunpack.c.l.b16 %v686
    %v1048 = vunpack.c.h.b16 %v686
    %v1049 = vunpack.c.l.b16 %v687
    %v1050 = vunpack.c.h.b16 %v687
    %v1051 = vunpack.c.l.b16 %v688
    %v1052 = vunpack.c.h.b16 %v688
    %v1053 = vunpack.c.l.b16 %v689
    %v1054 = vunpack.c.h.b16 %v689
    %v1055 = vunpack.c.l.b16 %v690
    %v1056 = vunpack.c.h.b16 %v690
    %v1057 = vunpack.c.l.b16 %v691
    %v1058 = vunpack.c.h.b16 %v691
    %v1059 = vunpack.c.l.b16 %v692
    %v1060 = vunpack.c.h.b16 %v692
    %v1061 = vunpack.c.l.b16 %v693
    %v1062 = vunpack.c.h.b16 %v693
    %v1063 = vunpack.c.l.b16 %v694
    %v1064 = vunpack.c.h.b16 %v694
    %v1065 = vunpack.c.l.b16 %v695
    %v1066 = vunpack.c.h.b16 %v695
    %v1067 = vunpack.c.l.b16 %v696
    %v1068 = vunpack.c.h.b16 %v696
    %v1069 = vunpack.c.l.b16 %v697
    %v1070 = vunpack.c.h.b16 %v697
    %v1071 = vunpack.c.l.b16 %v698
    %v1072 = vunpack.c.h.b16 %v698
    %v1073 = vunpack.c.l.b16 %v699
    %v1074 = vunpack.c.h.b16 %v699
    %v1075 = vunpack.c.l.b16 %v700
    %v1076 = vunpack.c.h.b16 %v700
    %v1077 = vunpack.c.l.b16 %v701
    %v1078 = vunpack.c.h.b16 %v701
    %v1079 = vunpack.c.l.b16 %v702
    %v1080 = vunpack.c.h.b16 %v702
    %v1081 = vunpack.c.l.b16 %v703
    %v1082 = vunpack.c.h.b16 %v703
    %v1083 = vunpack.c.l.b16 %v704
    %v1084 = vunpack.c.h.b16 %v704
    %v1085 = vunpack.c.l.b16 %v705
    %v1086 = vunpack.c.h.b16 %v705
    %v1087 = vunpack.c.l.b16 %v706
    %v1088 = vunpack.c.h.b16 %v706
    %v1089 = vunpack.c.l.b16 %v707
    %v1090 = vunpack.c.h.b16 %v707
    %v1091 = vunpack.c.l.b16 %v708
    %v1092 = vunpack.c.h.b16 %v708
    %v1093 = vunpack.c.l.b16 %v709
    %v1094 = vunpack.c.h.b16 %v709
    %v1095 = vunpack.c.l.b16 %v710
    %v1096 = vunpack.c.h.b16 %v710
    %v1097 = vunpack.c.l.b16 %v711
    %v1098 = vunpack.c.h.b16 %v711
    %v1099 = vunpack.c.l.b16 %v712
    %v1100 = vunpack.c.h.b16 %v712
    %v1101 = vpack.c.b16 %v853, %v845
    %v1102 = vpack.c.b16 %v854, %v846
    %v1103 = vpack.c.b16 %v855, %v847
    %v1104 = vpack.c.b16 %v856, %v848
    %v1105 = vpack.c.b16 %v857, %v849
    %v1106 = vpack.c.b16 %v858, %v850
    %v1107 = vpack.c.b16 %v859, %v851
    %v1108 = vpack.c.b16 %v860, %v852
    %v1109 = vpack.c.b16 %v869, %v861
    %v1110 = vpack.c.b16 %v870, %v862
    %v1111 = vpack.c.b16 %v871, %v863
    %v1112 = vpack.c.b16 %v872, %v864
    %v1113 = vpack.c.b16 %v873, %v865
    %v1114 = vpack.c.b16 %v874, %v866
    %v1115 = vpack.c.b16 %v875, %v867
    %v1116 = vpack.c.b16 %v876, %v868
    %v1117 = vpack.c.b16 %v885, %v877
    %v1118 = vpack.c.b16 %v886, %v878
    %v1119 = vpack.c.b16 %v887, %v879
    %v1120 = vpack.c.b16 %v888, %v880
    %v1121 = vpack.c.b16 %v889, %v881
    %v1122 = vpack.c.b16 %v890, %v882
    %v1123 = vpack.c.b16 %v891, %v883
    %v1124 = vpack.c.b16 %v892, %v884
    %v1125 = vpack.c.b16 %v901, %v893
    %v1126 = vpack.c.b16 %v902, %v894
    %v1127 = vpack.c.b16 %v903, %v895
    %v1128 = vpack.c.b16 %v904, %v896
    %v1129 = vpack.c.b16 %v905, %v897
    %v1130 = vpack.c.b16 %v906, %v898
    %v1131 = vpack.c.b16 %v907, %v899
    %v1132 = vpack.c.b16 %v908, %v900
    %v1133 = vpack.c.b16 %v917, %v909
    %v1134 = vpack.c.b16 %v918, %v910
    %v1135 = vpack.c.b16 %v919, %v911
    %v1136 = vpack.c.b16 %v920, %v912
    %v1137 = vpack.c.b16 %v921, %v913
    %v1138 = vpack.c.b16 %v922, %v914
    %v1139 = vpack.c.b16 %v923, %v915
    %v1140 = vpack.c.b16 %v924, %v916
    %v1141 = vpack.c.b16 %v933, %v925
    %v1142 = vpack.c.b16 %v934, %v926
    %v1143 = vpack.c.b16 %v935, %v927
    %v1144 = vpack.c.b16 %v936, %v928
    %v1145 = vpack.c.b16 %v937, %v929
    %v1146 = vpack.c.b16 %v938, %v930
    %v1147 = vpack.c.b16 %v939, %v931
    %v1148 = vpack.c.b16 %v940, %v932
    %v1149 = vpack.c.b16 %v949, %v941
    %v1150 = vpack.c.b16 %v950, %v942
    %v1151 = vpack.c.b16 %v951, %v943
    %v1152 = vpack.c.b16 %v952, %v944
    %v1153 = vpack.c.b16 %v953, %v945
    %v1154 = vpack.c.b16 %v954, %v946
    %v1155 = vpack.c.b16 %v955, %v947
    %v1156 = vpack.c.b16 %v956, %v948
    %v1157 = vpack.c.b16 %v965, %v957
    %v1158 = vpack.c.b16 %v966, %v958
    %v1159 = vpack.c.b16 %v967, %v959
    %v1160 = vpack.c.b16 %v968, %v960
    %v1161 = vpack.c.b16 %v969, %v961
    %v1162 = vpack.c.b16 %v970, %v962
    %v1163 = vpack.c.b16 %v971, %v963
    %v1164 = vpack.c.b16 %v972, %v964
    %v1165 = vpack.c.b16 %v981, %v973
    %v1166 = vpack.c.b16 %v982, %v974
    %v1167 = vpack.c.b16 %v983, %v975
    %v1168 = vpack.c.b16 %v984, %v976
    %v1169 = vpack.c.b16 %v985, %v977
    %v1170 = vpack.c.b16 %v986, %v978
    %v1171 = vpack.c.b16 %v987, %v979
    %v1172 = vpack.c.b16 %v988, %v980
    %v1173 = vpack.c.b16 %v997, %v989
    %v1174 = vpack.c.b16 %v998, %v990
    %v1175 = vpack.c.b16 %v999, %v991
    %v1176 = vpack.c.b16 %v1000, %v992
    %v1177 = vpack.c.b16 %v1001, %v993
    %v1178 = vpack.c.b16 %v1002, %v994
    %v1179 = vpack.c.b16 %v1003, %v995
    %v1180 = vpack.c.b16 %v1004, %v996
    %v1181 = vpack.c.b16 %v1013, %v1005
    %v1182 = vpack.c.b16 %v1014, %v1006
    %v1183 = vpack.c.b16 %v1015, %v1007
    %v1184 = vpack.c.b16 %v1016, %v1008
    %v1185 = vpack.c.b16 %v1017, %v1009
    %v1186 = vpack.c.b16 %v1018, %v1010
    %v1187 = vpack.c.b16 %v1019, %v1011
    %v1188 = vpack.c.b16 %v1020, %v1012
    %v1189 = vpack.c.b16 %v1029, %v1021
    %v1190 = vpack.c.b16 %v1030, %v1022
    %v1191 = vpack.c.b16 %v1031, %v1023
    %v1192 = vpack.c.b16 %v1032, %v1024
    %v1193 = vpack.c.b16 %v1033, %v1025
    %v1194 = vpack.c.b16 %v1034, %v1026
    %v1195 = vpack.c.b16 %v1035, %v1027
    %v1196 = vpack.c.b16 %v1036, %v1028
    %v1197 = vpack.c.b16 %v1045, %v1037
    %v1198 = vpack.c.b16 %v1046, %v1038
    %v1199 = vpack.c.b16 %v1047, %v1039
    %v1200 = vpack.c.b16 %v1048, %v1040
    %v1201 = vpack.c.b16 %v1049, %v1041
    %v1202 = vpack.c.b16 %v1050, %v1042
    %v1203 = vpack.c.b16 %v1051, %v1043
    %v1204 = vpack.c.b16 %v1052, %v1044
    %v1205 = vpack.c.b16 %v1061, %v1053
    %v1206 = vpack.c.b16 %v1062, %v1054
    %v1207 = vpack.c.b16 %v1063, %v1055
    %v1208 = vpack.c.b16 %v1064, %v1056
    %v1209 = vpack.c.b16 %v1065, %v1057
    %v1210 = vpack.c.b16 %v1066, %v1058
    %v1211 = vpack.c.b16 %v1067, %v1059
    %v1212 = vpack.c.b16 %v1068, %v1060
    %v1213 = vpack.c.b16 %v1077, %v1069
    %v1214 = vpack.c.b16 %v1078, %v1070
    %v1215 = vpack.c.b16 %v1079, %v1071
    %v1216 = vpack.c.b16 %v1080, %v1072
    %v1217 = vpack.c.b16 %v1081, %v1073
    %v1218 = vpack.c.b16 %v1082, %v1074
    %v1219 = vpack.c.b16 %v1083, %v1075
    %v1220 = vpack.c.b16 %v1084, %v1076
    %v1221 = vpack.c.b16 %v1093, %v1085
    %v1222 = vpack.c.b16 %v1094, %v1086
    %v1223 = vpack.c.b16 %v1095, %v1087
    %v1224 = vpack.c.b16 %v1096, %v1088
    %v1225 = vpack.c.b16 %v1097, %v1089
    %v1226 = vpack.c.b16 %v1098, %v1090
    %v1227 = vpack.c.b16 %v1099, %v1091
    %v1228 = vpack.c.b16 %v1100, %v1092
    %1357 = vmatprep.subr.bf16.mxu0 %v1158
    %1358 = vmatpush1.bf16.msra.mxu0 %v1157
    %1359 = vmatprep.subr.bf16.mxu0 %v1150
    %1360 = vmatpush1.bf16.msra.mxu0 %v1149
    %1361 = vmatprep.subr.bf16.mxu0 %v1142
    %1362 = vmatpush1.bf16.msra.mxu0 %v1141
    %1363 = vmatprep.subr.bf16.mxu0 %v1134
    %1364 = vmatpush1.bf16.msra.mxu0 %v1133
    %1365 = vmatprep.subr.bf16.mxu0 %v1126
    %1366 = vmatpush1.bf16.msra.mxu0 %v1125
    %1367 = vmatprep.subr.bf16.mxu0 %v1118
    %1368 = vmatpush1.bf16.msra.mxu0 %v1117
    %1369 = vmatprep.subr.bf16.mxu0 %v1110
    %1370 = vmatpush1.bf16.msra.mxu0 %v1109
    %1371 = vmatprep.subr.bf16.mxu0 %v1102
    %1372 = vmatpush1.bf16.msra.mxu0 %v1101
    %1373 = vmatprep.subr.bf16.mxu0 %v1222
    %1374 = vmatpush2.bf16.msra.mxu0 %v1221
    %1375 = vmatprep.subr.bf16.mxu0 %v1214
    %1376 = vmatpush2.bf16.msra.mxu0 %v1213
    %1377 = vmatprep.subr.bf16.mxu0 %v1206
    %1378 = vmatpush2.bf16.msra.mxu0 %v1205
    %1379 = vmatprep.subr.bf16.mxu0 %v1198
    %1380 = vmatpush2.bf16.msra.mxu0 %v1197
    %1381 = vmatprep.subr.bf16.mxu0 %v1190
    %1382 = vmatpush2.bf16.msra.mxu0 %v1189
    %1383 = vmatprep.subr.bf16.mxu0 %v1182
    %1384 = vmatpush2.bf16.msra.mxu0 %v1181
    %1385 = vmatprep.subr.bf16.mxu0 %v1174
    %1386 = vmatpush2.bf16.msra.mxu0 %v1173
    %1387 = vmatprep.subr.bf16.mxu0 %v1166
    %1388 = vmatpush2.bf16.msra.mxu0 %v1165
    %1389 = vmatprep.mubr.bf16.mxu0 %v716
    %1390 = vmatmul.mubr.bf16.gmra.mxu0 %v715
    %v1391 = vpop.f32.mrf.mxu0
    %v1392 = vadd.f32 0.0, %v1391
    %v1393 = vpop.f32.mrf.mxu0
    %v1394 = vadd.f32 0.0, %v1393
    %v1395 = vpop.f32.mrf.mxu0
    %v1396 = vpop.f32.mrf.mxu0
    %1397 = vdwg.mxu0
    %1398 = vmatprep.subr.bf16.mxu0 %v1160
    %1399 = vmatpush1.bf16.msra.mxu0 %v1159
    %1400 = vmatprep.subr.bf16.mxu0 %v1152
    %1401 = vmatpush1.bf16.msra.mxu0 %v1151
    %1402 = vmatprep.subr.bf16.mxu0 %v1144
    %1403 = vmatpush1.bf16.msra.mxu0 %v1143
    %1404 = vmatprep.subr.bf16.mxu0 %v1136
    %1405 = vmatpush1.bf16.msra.mxu0 %v1135
    %1406 = vmatprep.subr.bf16.mxu0 %v1128
    %1407 = vmatpush1.bf16.msra.mxu0 %v1127
    %1408 = vmatprep.subr.bf16.mxu0 %v1120
    %1409 = vmatpush1.bf16.msra.mxu0 %v1119
    %1410 = vmatprep.subr.bf16.mxu0 %v1112
    %1411 = vmatpush1.bf16.msra.mxu0 %v1111
    %1412 = vmatprep.subr.bf16.mxu0 %v1104
    %1413 = vmatpush1.bf16.msra.mxu0 %v1103
    %1414 = vmatprep.subr.bf16.mxu0 %v1224
    %1415 = vmatpush2.bf16.msra.mxu0 %v1223
    %1416 = vmatprep.subr.bf16.mxu0 %v1216
    %1417 = vmatpush2.bf16.msra.mxu0 %v1215
    %1418 = vmatprep.subr.bf16.mxu0 %v1208
    %1419 = vmatpush2.bf16.msra.mxu0 %v1207
    %1420 = vmatprep.subr.bf16.mxu0 %v1200
    %1421 = vmatpush2.bf16.msra.mxu0 %v1199
    %1422 = vmatprep.subr.bf16.mxu0 %v1192
    %1423 = vmatpush2.bf16.msra.mxu0 %v1191
    %1424 = vmatprep.subr.bf16.mxu0 %v1184
    %1425 = vmatpush2.bf16.msra.mxu0 %v1183
    %1426 = vmatprep.subr.bf16.mxu0 %v1176
    %1427 = vmatpush2.bf16.msra.mxu0 %v1175
    %1428 = vmatprep.subr.bf16.mxu0 %v1168
    %1429 = vmatpush2.bf16.msra.mxu0 %v1167
    %1430 = vmatprep.mubr.bf16.mxu0 %v716
    %1431 = vmatmul.mubr.bf16.gmra.mxu0 %v715
    %v1432 = vpop.f32.mrf.mxu0
    %v1433 = vadd.f32 0.0, %v1432
    %v1434 = vpop.f32.mrf.mxu0
    %v1435 = vadd.f32 0.0, %v1434
    %v1436 = vpop.f32.mrf.mxu0
    %v1437 = vpop.f32.mrf.mxu0
    %1438 = vdwg.mxu0
    %1439 = vmatprep.subr.bf16.mxu0 %v1162
    %1440 = vmatpush1.bf16.msra.mxu0 %v1161
    %1441 = vmatprep.subr.bf16.mxu0 %v1154
    %1442 = vmatpush1.bf16.msra.mxu0 %v1153
    %1443 = vmatprep.subr.bf16.mxu0 %v1146
    %1444 = vmatpush1.bf16.msra.mxu0 %v1145
    %1445 = vmatprep.subr.bf16.mxu0 %v1138
    %1446 = vmatpush1.bf16.msra.mxu0 %v1137
    %1447 = vmatprep.subr.bf16.mxu0 %v1130
    %1448 = vmatpush1.bf16.msra.mxu0 %v1129
    %1449 = vmatprep.subr.bf16.mxu0 %v1122
    %1450 = vmatpush1.bf16.msra.mxu0 %v1121
    %1451 = vmatprep.subr.bf16.mxu0 %v1114
    %1452 = vmatpush1.bf16.msra.mxu0 %v1113
    %1453 = vmatprep.subr.bf16.mxu0 %v1106
    %1454 = vmatpush1.bf16.msra.mxu0 %v1105
    %1455 = vmatprep.subr.bf16.mxu0 %v1226
    %1456 = vmatpush2.bf16.msra.mxu0 %v1225
    %1457 = vmatprep.subr.bf16.mxu0 %v1218
    %1458 = vmatpush2.bf16.msra.mxu0 %v1217
    %1459 = vmatprep.subr.bf16.mxu0 %v1210
    %1460 = vmatpush2.bf16.msra.mxu0 %v1209
    %1461 = vmatprep.subr.bf16.mxu0 %v1202
    %1462 = vmatpush2.bf16.msra.mxu0 %v1201
    %1463 = vmatprep.subr.bf16.mxu0 %v1194
    %1464 = vmatpush2.bf16.msra.mxu0 %v1193
    %1465 = vmatprep.subr.bf16.mxu0 %v1186
    %1466 = vmatpush2.bf16.msra.mxu0 %v1185
    %1467 = vmatprep.subr.bf16.mxu0 %v1178
    %1468 = vmatpush2.bf16.msra.mxu0 %v1177
    %1469 = vmatprep.subr.bf16.mxu0 %v1170
    %1470 = vmatpush2.bf16.msra.mxu0 %v1169
    %1471 = vmatprep.mubr.bf16.mxu0 %v716
    %1472 = vmatmul.mubr.bf16.gmra.mxu0 %v715
    %v1473 = vpop.f32.mrf.mxu0
    %v1474 = vadd.f32 0.0, %v1473
    %v1475 = vpop.f32.mrf.mxu0
    %v1476 = vadd.f32 0.0, %v1475
    %v1477 = vpop.f32.mrf.mxu0
    %v1478 = vpop.f32.mrf.mxu0
    %1479 = vdwg.mxu0
    %1480 = vmatprep.subr.bf16.mxu0 %v1164
    %1481 = vmatpush1.bf16.msra.mxu0 %v1163
    %1482 = vmatprep.subr.bf16.mxu0 %v1156
    %1483 = vmatpush1.bf16.msra.mxu0 %v1155
    %1484 = vmatprep.subr.bf16.mxu0 %v1148
    %1485 = vmatpush1.bf16.msra.mxu0 %v1147
    %1486 = vmatprep.subr.bf16.mxu0 %v1140
    %1487 = vmatpush1.bf16.msra.mxu0 %v1139
    %1488 = vmatprep.subr.bf16.mxu0 %v1132
    %1489 = vmatpush1.bf16.msra.mxu0 %v1131
    %1490 = vmatprep.subr.bf16.mxu0 %v1124
    %1491 = vmatpush1.bf16.msra.mxu0 %v1123
    %1492 = vmatprep.subr.bf16.mxu0 %v1116
    %1493 = vmatpush1.bf16.msra.mxu0 %v1115
    %1494 = vmatprep.subr.bf16.mxu0 %v1108
    %1495 = vmatpush1.bf16.msra.mxu0 %v1107
    %1496 = vmatprep.subr.bf16.mxu0 %v1228
    %1497 = vmatpush2.bf16.msra.mxu0 %v1227
    %1498 = vmatprep.subr.bf16.mxu0 %v1220
    %1499 = vmatpush2.bf16.msra.mxu0 %v1219
    %1500 = vmatprep.subr.bf16.mxu0 %v1212
    %1501 = vmatpush2.bf16.msra.mxu0 %v1211
    %1502 = vmatprep.subr.bf16.mxu0 %v1204
    %1503 = vmatpush2.bf16.msra.mxu0 %v1203
    %1504 = vmatprep.subr.bf16.mxu0 %v1196
    %1505 = vmatpush2.bf16.msra.mxu0 %v1195
    %1506 = vmatprep.subr.bf16.mxu0 %v1188
    %1507 = vmatpush2.bf16.msra.mxu0 %v1187
    %1508 = vmatprep.subr.bf16.mxu0 %v1180
    %1509 = vmatpush2.bf16.msra.mxu0 %v1179
    %1510 = vmatprep.subr.bf16.mxu0 %v1172
    %1511 = vmatpush2.bf16.msra.mxu0 %v1171
    %1512 = vmatprep.mubr.bf16.mxu0 %v716
    %1513 = vmatmul.mubr.bf16.gmra.mxu0 %v715
    %v1514 = vpop.f32.mrf.mxu0
    %v1515 = vadd.f32 0.0, %v1514
    %v1516 = vpop.f32.mrf.mxu0
    %v1517 = vadd.f32 0.0, %v1516
    %v1518 = vpop.f32.mrf.mxu0
    %v1519 = vpop.f32.mrf.mxu0
    %1520 = vdwg.mxu0
    %v1521 = vld [vmem:[#allocation5] sm:$0xff]
    %v1522 = vld [vmem:[#allocation5 + $0x8] sm:$0xff]
    %v1523 = vld [vmem:[#allocation2] sm:$0xff]
    %v1524 = vld [vmem:[#allocation2 + $0x8] sm:$0xff]
    %v1525 = vld [vmem:[#allocation2 + $0x10] sm:$0xff]
    %v1526 = vld [vmem:[#allocation2 + $0x18] sm:$0xff]
    %v1527 = vadd.f32 %v1523, %v1392
    %v1528 = vadd.f32 %v1524, %v1394
    %v1529 = vadd.f32 %v1525, %v1433
    %v1530 = vadd.f32 %v1526, %v1435
    %v1531 = vxor.u32 %v1527, 2147483648
    %v1532 = vmul.f32 %v1531, 1.442695
    %v1533 = vpow.pop %v1532
    %v1534 = vadd.f32 %v1533, 1.0
    %v1535 = vrcp.pop %v1534
    %v1536 = vmul.f32 1.0, %v1535
    %v1537 = vxor.u32 %v1528, 2147483648
    %v1538 = vmul.f32 %v1537, 1.442695
    %v1539 = vpow.pop %v1538
    %v1540 = vadd.f32 %v1539, 1.0
    %v1541 = vrcp.pop %v1540
    %v1542 = vmul.f32 1.0, %v1541
    %v1543 = vtanh.pop %v1529
    %v1544 = vxor.u32 %v1530, 2147483648
    %v1545 = vmul.f32 %v1544, 1.442695
    %v1546 = vpow.pop %v1545
    %v1547 = vadd.f32 %v1546, 1.0
    %v1548 = vrcp.pop %v1547
    %v1549 = vmul.f32 1.0, %v1548
    %v1550 = vmul.f32 %v1542, %v1521
    %v1551 = vmul.f32 %v1536, %v1543
    %v1552 = vadd.f32 %v1550, %v1551
    %v1553 = vtanh.pop %v1552
    %v1554 = vmul.f32 %v1549, %v1553
    %1555 = vst [vmem:[#allocation5] sm:$0xff] %v1552
    %1556 = vst [vmem:[#allocation4] sm:$0xff] %v1554
    %1557 = vst [vmem:[#allocation3] sm:$0xff] %v1554
    %v1558 = vld [vmem:[#allocation2 + $0x1e0] sm:$0xff]
    %v1559 = vld [vmem:[#allocation2 + $0x1e8] sm:$0xff]
    %v1560 = vld [vmem:[#allocation2 + $0x1f0] sm:$0xff]
    %v1561 = vld [vmem:[#allocation2 + $0x1f8] sm:$0xff]
    %v1562 = vadd.f32 %v1558, %v1474
    %v1563 = vadd.f32 %v1559, %v1476
    %v1564 = vadd.f32 %v1560, %v1515
    %v1565 = vadd.f32 %v1561, %v1517
    %v1566 = vxor.u32 %v1562, 2147483648
    %v1567 = vmul.f32 %v1566, 1.442695
    %v1568 = vpow.pop %v1567
    %v1569 = vadd.f32 %v1568, 1.0
    %v1570 = vrcp.pop %v1569
    %v1571 = vmul.f32 1.0, %v1570
    %v1572 = vxor.u32 %v1563, 2147483648
    %v1573 = vmul.f32 %v1572, 1.442695
    %v1574 = vpow.pop %v1573
    %v1575 = vadd.f32 %v1574, 1.0
    %v1576 = vrcp.pop %v1575
    %v1577 = vmul.f32 1.0, %v1576
    %v1578 = vtanh.pop %v1564
    %v1579 = vxor.u32 %v1565, 2147483648
    %v1580 = vmul.f32 %v1579, 1.442695
    %v1581 = vpow.pop %v1580
    %v1582 = vadd.f32 %v1581, 1.0
    %v1583 = vrcp.pop %v1582
    %v1584 = vmul.f32 1.0, %v1583
    %v1585 = vmul.f32 %v1577, %v1522
    %v1586 = vmul.f32 %v1571, %v1578
    %v1587 = vadd.f32 %v1585, %v1586
    %v1588 = vtanh.pop %v1587
    %v1589 = vmul.f32 %v1584, %v1588
    %1590 = vst [vmem:[#allocation5 + $0x8] sm:$0xff] %v1587
    %1591 = vst [vmem:[#allocation4 + $0x8] sm:$0xff] %v1589
    %1592 = vst [vmem:[#allocation3 + $0x78] sm:$0xff] %v1589
    %v1593 = vld [vmem:[#allocation4] sm:$0xff]
    %v1594 = vld [vmem:[#allocation4 + $0x8] sm:$0xff]
    %v1595 = vpack.c.bf16 %v1593, %v1593
    %v1596 = vpack.c.bf16 %v1594, %v1594
    %1597 = vmatprep.subr.bf16.mxu0 %v1158
    %1598 = vmatpush1.bf16.msra.mxu0 %v1157
    %1599 = vmatprep.subr.bf16.mxu0 %v1150
    %1600 = vmatpush1.bf16.msra.mxu0 %v1149
    %1601 = vmatprep.subr.bf16.mxu0 %v1142
    %1602 = vmatpush1.bf16.msra.mxu0 %v1141
    %1603 = vmatprep.subr.bf16.mxu0 %v1134
    %1604 = vmatpush1.bf16.msra.mxu0 %v1133
    %1605 = vmatprep.subr.bf16.mxu0 %v1126
    %1606 = vmatpush1.bf16.msra.mxu0 %v1125
    %1607 = vmatprep.subr.bf16.mxu0 %v1118
    %1608 = vmatpush1.bf16.msra.mxu0 %v1117
    %1609 = vmatprep.subr.bf16.mxu0 %v1110
    %1610 = vmatpush1.bf16.msra.mxu0 %v1109
    %1611 = vmatprep.subr.bf16.mxu0 %v1102
    %1612 = vmatpush1.bf16.msra.mxu0 %v1101
    %1613 = vmatprep.subr.bf16.mxu0 %v1222
    %1614 = vmatpush2.bf16.msra.mxu0 %v1221
    %1615 = vmatprep.subr.bf16.mxu0 %v1214
    %1616 = vmatpush2.bf16.msra.mxu0 %v1213
    %1617 = vmatprep.subr.bf16.mxu0 %v1206
    %1618 = vmatpush2.bf16.msra.mxu0 %v1205
    %1619 = vmatprep.subr.bf16.mxu0 %v1198
    %1620 = vmatpush2.bf16.msra.mxu0 %v1197
    %1621 = vmatprep.subr.bf16.mxu0 %v1190
    %1622 = vmatpush2.bf16.msra.mxu0 %v1189
    %1623 = vmatprep.subr.bf16.mxu0 %v1182
    %1624 = vmatpush2.bf16.msra.mxu0 %v1181
    %1625 = vmatprep.subr.bf16.mxu0 %v1174
    %1626 = vmatpush2.bf16.msra.mxu0 %v1173
    %1627 = vmatprep.subr.bf16.mxu0 %v1166
    %1628 = vmatpush2.bf16.msra.mxu0 %v1165
    %1629 = vmatprep.mubr.bf16.mxu0 %v1596
    %1630 = vmatmul.mubr.bf16.gmra.mxu0 %v1595
    %v1631 = vpop.f32.mrf.mxu0
    %v1632 = vadd.f32 0.0, %v1631
    %v1633 = vpop.f32.mrf.mxu0
    %v1634 = vadd.f32 0.0, %v1633
    %v1635 = vpop.f32.mrf.mxu0
    %v1636 = vpop.f32.mrf.mxu0
    %1637 = vdwg.mxu0
    %1638 = vmatprep.subr.bf16.mxu0 %v1160
    %1639 = vmatpush1.bf16.msra.mxu0 %v1159
    %1640 = vmatprep.subr.bf16.mxu0 %v1152
    %1641 = vmatpush1.bf16.msra.mxu0 %v1151
    %1642 = vmatprep.subr.bf16.mxu0 %v1144
    %1643 = vmatpush1.bf16.msra.mxu0 %v1143
    %1644 = vmatprep.subr.bf16.mxu0 %v1136
    %1645 = vmatpush1.bf16.msra.mxu0 %v1135
    %1646 = vmatprep.subr.bf16.mxu0 %v1128
    %1647 = vmatpush1.bf16.msra.mxu0 %v1127
    %1648 = vmatprep.subr.bf16.mxu0 %v1120
    %1649 = vmatpush1.bf16.msra.mxu0 %v1119
    %1650 = vmatprep.subr.bf16.mxu0 %v1112
    %1651 = vmatpush1.bf16.msra.mxu0 %v1111
    %1652 = vmatprep.subr.bf16.mxu0 %v1104
    %1653 = vmatpush1.bf16.msra.mxu0 %v1103
    %1654 = vmatprep.subr.bf16.mxu0 %v1224
    %1655 = vmatpush2.bf16.msra.mxu0 %v1223
    %1656 = vmatprep.subr.bf16.mxu0 %v1216
    %1657 = vmatpush2.bf16.msra.mxu0 %v1215
    %1658 = vmatprep.subr.bf16.mxu0 %v1208
    %1659 = vmatpush2.bf16.msra.mxu0 %v1207
    %1660 = vmatprep.subr.bf16.mxu0 %v1200
    %1661 = vmatpush2.bf16.msra.mxu0 %v1199
    %1662 = vmatprep.subr.bf16.mxu0 %v1192
    %1663 = vmatpush2.bf16.msra.mxu0 %v1191
    %1664 = vmatprep.subr.bf16.mxu0 %v1184
    %1665 = vmatpush2.bf16.msra.mxu0 %v1183
    %1666 = vmatprep.subr.bf16.mxu0 %v1176
    %1667 = vmatpush2.bf16.msra.mxu0 %v1175
    %1668 = vmatprep.subr.bf16.mxu0 %v1168
    %1669 = vmatpush2.bf16.msra.mxu0 %v1167
    %1670 = vmatprep.mubr.bf16.mxu0 %v1596
    %1671 = vmatmul.mubr.bf16.gmra.mxu0 %v1595
    %v1672 = vpop.f32.mrf.mxu0
    %v1673 = vadd.f32 0.0, %v1672
    %v1674 = vpop.f32.mrf.mxu0
    %v1675 = vadd.f32 0.0, %v1674
    %v1676 = vpop.f32.mrf.mxu0
    %v1677 = vpop.f32.mrf.mxu0
    %1678 = vdwg.mxu0
    %1679 = vmatprep.subr.bf16.mxu0 %v1162
    %1680 = vmatpush1.bf16.msra.mxu0 %v1161
    %1681 = vmatprep.subr.bf16.mxu0 %v1154
    %1682 = vmatpush1.bf16.msra.mxu0 %v1153
    %1683 = vmatprep.subr.bf16.mxu0 %v1146
    %1684 = vmatpush1.bf16.msra.mxu0 %v1145
    %1685 = vmatprep.subr.bf16.mxu0 %v1138
    %1686 = vmatpush1.bf16.msra.mxu0 %v1137
    %1687 = vmatprep.subr.bf16.mxu0 %v1130
    %1688 = vmatpush1.bf16.msra.mxu0 %v1129
    %1689 = vmatprep.subr.bf16.mxu0 %v1122
    %1690 = vmatpush1.bf16.msra.mxu0 %v1121
    %1691 = vmatprep.subr.bf16.mxu0 %v1114
    %1692 = vmatpush1.bf16.msra.mxu0 %v1113
    %1693 = vmatprep.subr.bf16.mxu0 %v1106
    %1694 = vmatpush1.bf16.msra.mxu0 %v1105
    %1695 = vmatprep.subr.bf16.mxu0 %v1226
    %1696 = vmatpush2.bf16.msra.mxu0 %v1225
    %1697 = vmatprep.subr.bf16.mxu0 %v1218
    %1698 = vmatpush2.bf16.msra.mxu0 %v1217
    %1699 = vmatprep.subr.bf16.mxu0 %v1210
    %1700 = vmatpush2.bf16.msra.mxu0 %v1209
    %1701 = vmatprep.subr.bf16.mxu0 %v1202
    %1702 = vmatpush2.bf16.msra.mxu0 %v1201
    %1703 = vmatprep.subr.bf16.mxu0 %v1194
    %1704 = vmatpush2.bf16.msra.mxu0 %v1193
    %1705 = vmatprep.subr.bf16.mxu0 %v1186
    %1706 = vmatpush2.bf16.msra.mxu0 %v1185
    %1707 = vmatprep.subr.bf16.mxu0 %v1178
    %1708 = vmatpush2.bf16.msra.mxu0 %v1177
    %1709 = vmatprep.subr.bf16.mxu0 %v1170
    %1710 = vmatpush2.bf16.msra.mxu0 %v1169
    %1711 = vmatprep.mubr.bf16.mxu0 %v1596
    %1712 = vmatmul.mubr.bf16.gmra.mxu0 %v1595
    %v1713 = vpop.f32.mrf.mxu0
    %v1714 = vadd.f32 0.0, %v1713
    %v1715 = vpop.f32.mrf.mxu0
    %v1716 = vadd.f32 0.0, %v1715
    %v1717 = vpop.f32.mrf.mxu0
    %v1718 = vpop.f32.mrf.mxu0
    %1719 = vdwg.mxu0
    %1720 = vmatprep.subr.bf16.mxu0 %v1164
    %1721 = vmatpush1.bf16.msra.mxu0 %v1163
    %1722 = vmatprep.subr.bf16.mxu0 %v1156
    %1723 = vmatpush1.bf16.msra.mxu0 %v1155
    %1724 = vmatprep.subr.bf16.mxu0 %v1148
    %1725 = vmatpush1.bf16.msra.mxu0 %v1147
    %1726 = vmatprep.subr.bf16.mxu0 %v1140
    %1727 = vmatpush1.bf16.msra.mxu0 %v1139
    %1728 = vmatprep.subr.bf16.mxu0 %v1132
    %1729 = vmatpush1.bf16.msra.mxu0 %v1131
    %1730 = vmatprep.subr.bf16.mxu0 %v1124
    %1731 = vmatpush1.bf16.msra.mxu0 %v1123
    %1732 = vmatprep.subr.bf16.mxu0 %v1116
    %1733 = vmatpush1.bf16.msra.mxu0 %v1115
    %1734 = vmatprep.subr.bf16.mxu0 %v1108
    %1735 = vmatpush1.bf16.msra.mxu0 %v1107
    %1736 = vmatprep.subr.bf16.mxu0 %v1228
    %1737 = vmatpush2.bf16.msra.mxu0 %v1227
    %1738 = vmatprep.subr.bf16.mxu0 %v1220
    %1739 = vmatpush2.bf16.msra.mxu0 %v1219
    %1740 = vmatprep.subr.bf16.mxu0 %v1212
    %1741 = vmatpush2.bf16.msra.mxu0 %v1211
    %1742 = vmatprep.subr.bf16.mxu0 %v1204
    %1743 = vmatpush2.bf16.msra.mxu0 %v1203
    %1744 = vmatprep.subr.bf16.mxu0 %v1196
    %1745 = vmatpush2.bf16.msra.mxu0 %v1195
    %1746 = vmatprep.subr.bf16.mxu0 %v1188
    %1747 = vmatpush2.bf16.msra.mxu0 %v1187
    %1748 = vmatprep.subr.bf16.mxu0 %v1180
    %1749 = vmatpush2.bf16.msra.mxu0 %v1179
    %1750 = vmatprep.subr.bf16.mxu0 %v1172
    %1751 = vmatpush2.bf16.msra.mxu0 %v1171
    %1752 = vmatprep.mubr.bf16.mxu0 %v1596
    %1753 = vmatmul.mubr.bf16.gmra.mxu0 %v1595
    %v1754 = vpop.f32.mrf.mxu0
    %v1755 = vadd.f32 0.0, %v1754
    %v1756 = vpop.f32.mrf.mxu0
    %v1757 = vadd.f32 0.0, %v1756
    %v1758 = vpop.f32.mrf.mxu0
    %v1759 = vpop.f32.mrf.mxu0
    %1760 = vdwg.mxu0
    %v1761 = vld [vmem:[#allocation5] sm:$0xff]
    %v1762 = vld [vmem:[#allocation5 + $0x8] sm:$0xff]
    %v1763 = vld [vmem:[#allocation2 + $0x40] sm:$0xff]
    %v1764 = vld [vmem:[#allocation2 + $0x48] sm:$0xff]
    %v1765 = vld [vmem:[#allocation2 + $0x50] sm:$0xff]
    %v1766 = vld [vmem:[#allocation2 + $0x58] sm:$0xff]
    %v1767 = vadd.f32 %v1763, %v1632
    %v1768 = vadd.f32 %v1764, %v1634
    %v1769 = vadd.f32 %v1765, %v1673
    %v1770 = vadd.f32 %v1766, %v1675
    %v1771 = vxor.u32 %v1767, 2147483648
    %v1772 = vmul.f32 %v1771, 1.442695
    %v1773 = vpow.pop %v1772
    %v1774 = vadd.f32 %v1773, 1.0
    %v1775 = vrcp.pop %v1774
    %v1776 = vmul.f32 1.0, %v1775
    %v1777 = vxor.u32 %v1768, 2147483648
    %v1778 = vmul.f32 %v1777, 1.442695
    %v1779 = vpow.pop %v1778
    %v1780 = vadd.f32 %v1779, 1.0
    %v1781 = vrcp.pop %v1780
    %v1782 = vmul.f32 1.0, %v1781
    %v1783 = vtanh.pop %v1769
    %v1784 = vxor.u32 %v1770, 2147483648
    %v1785 = vmul.f32 %v1784, 1.442695
    %v1786 = vpow.pop %v1785
    %v1787 = vadd.f32 %v1786, 1.0
    %v1788 = vrcp.pop %v1787
    %v1789 = vmul.f32 1.0, %v1788
    %v1790 = vmul.f32 %v1782, %v1761
    %v1791 = vmul.f32 %v1776, %v1783
    %v1792 = vadd.f32 %v1790, %v1791
    %v1793 = vtanh.pop %v1792
    %v1794 = vmul.f32 %v1789, %v1793
    %1795 = vst [vmem:[#allocation5] sm:$0xff] %v1792
    %1796 = vst [vmem:[#allocation4] sm:$0xff] %v1794
    %1797 = vst [vmem:[#allocation3 + $0x10] sm:$0xff] %v1794
    %v1798 = vld [vmem:[#allocation2 + $0x1a0] sm:$0xff]
    %v1799 = vld [vmem:[#allocation2 + $0x1a8] sm:$0xff]
    %v1800 = vld [vmem:[#allocation2 + $0x1b0] sm:$0xff]
    %v1801 = vld [vmem:[#allocation2 + $0x1b8] sm:$0xff]
    %v1802 = vadd.f32 %v1798, %v1714
    %v1803 = vadd.f32 %v1799, %v1716
    %v1804 = vadd.f32 %v1800, %v1755
    %v1805 = vadd.f32 %v1801, %v1757
    %v1806 = vxor.u32 %v1802, 2147483648
    %v1807 = vmul.f32 %v1806, 1.442695
    %v1808 = vpow.pop %v1807
    %v1809 = vadd.f32 %v1808, 1.0
    %v1810 = vrcp.pop %v1809
    %v1811 = vmul.f32 1.0, %v1810
    %v1812 = vxor.u32 %v1803, 2147483648
    %v1813 = vmul.f32 %v1812, 1.442695
    %v1814 = vpow.pop %v1813
    %v1815 = vadd.f32 %v1814, 1.0
    %v1816 = vrcp.pop %v1815
    %v1817 = vmul.f32 1.0, %v1816
    %v1818 = vtanh.pop %v1804
    %v1819 = vxor.u32 %v1805, 2147483648
    %v1820 = vmul.f32 %v1819, 1.442695
    %v1821 = vpow.pop %v1820
    %v1822 = vadd.f32 %v1821, 1.0
    %v1823 = vrcp.pop %v1822
    %v1824 = vmul.f32 1.0, %v1823
    %v1825 = vmul.f32 %v1817, %v1762
    %v1826 = vmul.f32 %v1811, %v1818
    %v1827 = vadd.f32 %v1825, %v1826
    %v1828 = vtanh.pop %v1827
    %v1829 = vmul.f32 %v1824, %v1828
    %1830 = vst [vmem:[#allocation5 + $0x8] sm:$0xff] %v1827
    %1831 = vst [vmem:[#allocation4 + $0x8] sm:$0xff] %v1829
    %1832 = vst [vmem:[#allocation3 + $0x68] sm:$0xff] %v1829
    %v1833 = vld [vmem:[#allocation4] sm:$0xff]
    %v1834 = vld [vmem:[#allocation4 + $0x8] sm:$0xff]
    %v1835 = vpack.c.bf16 %v1833, %v1833
    %v1836 = vpack.c.bf16 %v1834, %v1834
    %1837 = vmatprep.subr.bf16.mxu0 %v1158
    %1838 = vmatpush1.bf16.msra.mxu0 %v1157
    %1839 = vmatprep.subr.bf16.mxu0 %v1150
    %1840 = vmatpush1.bf16.msra.mxu0 %v1149
    %1841 = vmatprep.subr.bf16.mxu0 %v1142
    %1842 = vmatpush1.bf16.msra.mxu0 %v1141
    %1843 = vmatprep.subr.bf16.mxu0 %v1134
    %1844 = vmatpush1.bf16.msra.mxu0 %v1133
    %1845 = vmatprep.subr.bf16.mxu0 %v1126
    %1846 = vmatpush1.bf16.msra.mxu0 %v1125
    %1847 = vmatprep.subr.bf16.mxu0 %v1118
    %1848 = vmatpush1.bf16.msra.mxu0 %v1117
    %1849 = vmatprep.subr.bf16.mxu0 %v1110
    %1850 = vmatpush1.bf16.msra.mxu0 %v1109
    %1851 = vmatprep.subr.bf16.mxu0 %v1102
    %1852 = vmatpush1.bf16.msra.mxu0 %v1101
    %1853 = vmatprep.subr.bf16.mxu0 %v1222
    %1854 = vmatpush2.bf16.msra.mxu0 %v1221
    %1855 = vmatprep.subr.bf16.mxu0 %v1214
    %1856 = vmatpush2.bf16.msra.mxu0 %v1213
    %1857 = vmatprep.subr.bf16.mxu0 %v1206
    %1858 = vmatpush2.bf16.msra.mxu0 %v1205
    %1859 = vmatprep.subr.bf16.mxu0 %v1198
    %1860 = vmatpush2.bf16.msra.mxu0 %v1197
    %1861 = vmatprep.subr.bf16.mxu0 %v1190
    %1862 = vmatpush2.bf16.msra.mxu0 %v1189
    %1863 = vmatprep.subr.bf16.mxu0 %v1182
    %1864 = vmatpush2.bf16.msra.mxu0 %v1181
    %1865 = vmatprep.subr.bf16.mxu0 %v1174
    %1866 = vmatpush2.bf16.msra.mxu0 %v1173
    %1867 = vmatprep.subr.bf16.mxu0 %v1166
    %1868 = vmatpush2.bf16.msra.mxu0 %v1165
    %1869 = vmatprep.mubr.bf16.mxu0 %v1836
    %1870 = vmatmul.mubr.bf16.gmra.mxu0 %v1835
    %v1871 = vpop.f32.mrf.mxu0
    %v1872 = vadd.f32 0.0, %v1871
    %v1873 = vpop.f32.mrf.mxu0
    %v1874 = vadd.f32 0.0, %v1873
    %v1875 = vpop.f32.mrf.mxu0
    %v1876 = vpop.f32.mrf.mxu0
    %1877 = vdwg.mxu0
    %1878 = vmatprep.subr.bf16.mxu0 %v1160
    %1879 = vmatpush1.bf16.msra.mxu0 %v1159
    %1880 = vmatprep.subr.bf16.mxu0 %v1152
    %1881 = vmatpush1.bf16.msra.mxu0 %v1151
    %1882 = vmatprep.subr.bf16.mxu0 %v1144
    %1883 = vmatpush1.bf16.msra.mxu0 %v1143
    %1884 = vmatprep.subr.bf16.mxu0 %v1136
    %1885 = vmatpush1.bf16.msra.mxu0 %v1135
    %1886 = vmatprep.subr.bf16.mxu0 %v1128
    %1887 = vmatpush1.bf16.msra.mxu0 %v1127
    %1888 = vmatprep.subr.bf16.mxu0 %v1120
    %1889 = vmatpush1.bf16.msra.mxu0 %v1119
    %1890 = vmatprep.subr.bf16.mxu0 %v1112
    %1891 = vmatpush1.bf16.msra.mxu0 %v1111
    %1892 = vmatprep.subr.bf16.mxu0 %v1104
    %1893 = vmatpush1.bf16.msra.mxu0 %v1103
    %1894 = vmatprep.subr.bf16.mxu0 %v1224
    %1895 = vmatpush2.bf16.msra.mxu0 %v1223
    %1896 = vmatprep.subr.bf16.mxu0 %v1216
    %1897 = vmatpush2.bf16.msra.mxu0 %v1215
    %1898 = vmatprep.subr.bf16.mxu0 %v1208
    %1899 = vmatpush2.bf16.msra.mxu0 %v1207
    %1900 = vmatprep.subr.bf16.mxu0 %v1200
    %1901 = vmatpush2.bf16.msra.mxu0 %v1199
    %1902 = vmatprep.subr.bf16.mxu0 %v1192
    %1903 = vmatpush2.bf16.msra.mxu0 %v1191
    %1904 = vmatprep.subr.bf16.mxu0 %v1184
    %1905 = vmatpush2.bf16.msra.mxu0 %v1183
    %1906 = vmatprep.subr.bf16.mxu0 %v1176
    %1907 = vmatpush2.bf16.msra.mxu0 %v1175
    %1908 = vmatprep.subr.bf16.mxu0 %v1168
    %1909 = vmatpush2.bf16.msra.mxu0 %v1167
    %1910 = vmatprep.mubr.bf16.mxu0 %v1836
    %1911 = vmatmul.mubr.bf16.gmra.mxu0 %v1835
    %v1912 = vpop.f32.mrf.mxu0
    %v1913 = vadd.f32 0.0, %v1912
    %v1914 = vpop.f32.mrf.mxu0
    %v1915 = vadd.f32 0.0, %v1914
    %v1916 = vpop.f32.mrf.mxu0
    %v1917 = vpop.f32.mrf.mxu0
    %1918 = vdwg.mxu0
    %1919 = vmatprep.subr.bf16.mxu0 %v1162
    %1920 = vmatpush1.bf16.msra.mxu0 %v1161
    %1921 = vmatprep.subr.bf16.mxu0 %v1154
    %1922 = vmatpush1.bf16.msra.mxu0 %v1153
    %1923 = vmatprep.subr.bf16.mxu0 %v1146
    %1924 = vmatpush1.bf16.msra.mxu0 %v1145
    %1925 = vmatprep.subr.bf16.mxu0 %v1138
    %1926 = vmatpush1.bf16.msra.mxu0 %v1137
    %1927 = vmatprep.subr.bf16.mxu0 %v1130
    %1928 = vmatpush1.bf16.msra.mxu0 %v1129
    %1929 = vmatprep.subr.bf16.mxu0 %v1122
    %1930 = vmatpush1.bf16.msra.mxu0 %v1121
    %1931 = vmatprep.subr.bf16.mxu0 %v1114
    %1932 = vmatpush1.bf16.msra.mxu0 %v1113
    %1933 = vmatprep.subr.bf16.mxu0 %v1106
    %1934 = vmatpush1.bf16.msra.mxu0 %v1105
    %1935 = vmatprep.subr.bf16.mxu0 %v1226
    %1936 = vmatpush2.bf16.msra.mxu0 %v1225
    %1937 = vmatprep.subr.bf16.mxu0 %v1218
    %1938 = vmatpush2.bf16.msra.mxu0 %v1217
    %1939 = vmatprep.subr.bf16.mxu0 %v1210
    %1940 = vmatpush2.bf16.msra.mxu0 %v1209
    %1941 = vmatprep.subr.bf16.mxu0 %v1202
    %1942 = vmatpush2.bf16.msra.mxu0 %v1201
    %1943 = vmatprep.subr.bf16.mxu0 %v1194
    %1944 = vmatpush2.bf16.msra.mxu0 %v1193
    %1945 = vmatprep.subr.bf16.mxu0 %v1186
    %1946 = vmatpush2.bf16.msra.mxu0 %v1185
    %1947 = vmatprep.subr.bf16.mxu0 %v1178
    %1948 = vmatpush2.bf16.msra.mxu0 %v1177
    %1949 = vmatprep.subr.bf16.mxu0 %v1170
    %1950 = vmatpush2.bf16.msra.mxu0 %v1169
    %1951 = vmatprep.mubr.bf16.mxu0 %v1836
    %1952 = vmatmul.mubr.bf16.gmra.mxu0 %v1835
    %v1953 = vpop.f32.mrf.mxu0
    %v1954 = vadd.f32 0.0, %v1953
    %v1955 = vpop.f32.mrf.mxu0
    %v1956 = vadd.f32 0.0, %v1955
    %v1957 = vpop.f32.mrf.mxu0
    %v1958 = vpop.f32.mrf.mxu0
    %1959 = vdwg.mxu0
    %1960 = vmatprep.subr.bf16.mxu0 %v1164
    %1961 = vmatpush1.bf16.msra.mxu0 %v1163
    %1962 = vmatprep.subr.bf16.mxu0 %v1156
    %1963 = vmatpush1.bf16.msra.mxu0 %v1155
    %1964 = vmatprep.subr.bf16.mxu0 %v1148
    %1965 = vmatpush1.bf16.msra.mxu0 %v1147
    %1966 = vmatprep.subr.bf16.mxu0 %v1140
    %1967 = vmatpush1.bf16.msra.mxu0 %v1139
    %1968 = vmatprep.subr.bf16.mxu0 %v1132
    %1969 = vmatpush1.bf16.msra.mxu0 %v1131
    %1970 = vmatprep.subr.bf16.mxu0 %v1124
    %1971 = vmatpush1.bf16.msra.mxu0 %v1123
    %1972 = vmatprep.subr.bf16.mxu0 %v1116
    %1973 = vmatpush1.bf16.msra.mxu0 %v1115
    %1974 = vmatprep.subr.bf16.mxu0 %v1108
    %1975 = vmatpush1.bf16.msra.mxu0 %v1107
    %1976 = vmatprep.subr.bf16.mxu0 %v1228
    %1977 = vmatpush2.bf16.msra.mxu0 %v1227
    %1978 = vmatprep.subr.bf16.mxu0 %v1220
    %1979 = vmatpush2.bf16.msra.mxu0 %v1219
    %1980 = vmatprep.subr.bf16.mxu0 %v1212
    %1981 = vmatpush2.bf16.msra.mxu0 %v1211
    %1982 = vmatprep.subr.bf16.mxu0 %v1204
    %1983 = vmatpush2.bf16.msra.mxu0 %v1203
    %1984 = vmatprep.subr.bf16.mxu0 %v1196
    %1985 = vmatpush2.bf16.msra.mxu0 %v1195
    %1986 = vmatprep.subr.bf16.mxu0 %v1188
    %1987 = vmatpush2.bf16.msra.mxu0 %v1187
    %1988 = vmatprep.subr.bf16.mxu0 %v1180
    %1989 = vmatpush2.bf16.msra.mxu0 %v1179
    %1990 = vmatprep.subr.bf16.mxu0 %v1172
    %1991 = vmatpush2.bf16.msra.mxu0 %v1171
    %1992 = vmatprep.mubr.bf16.mxu0 %v1836
    %1993 = vmatmul.mubr.bf16.gmra.mxu0 %v1835
    %v1994 = vpop.f32.mrf.mxu0
    %v1995 = vadd.f32 0.0, %v1994
    %v1996 = vpop.f32.mrf.mxu0
    %v1997 = vadd.f32 0.0, %v1996
    %v1998 = vpop.f32.mrf.mxu0
    %v1999 = vpop.f32.mrf.mxu0
    %2000 = vdwg.mxu0
    %v2001 = vld [vmem:[#allocation5] sm:$0xff]
    %v2002 = vld [vmem:[#allocation5 + $0x8] sm:$0xff]
    %v2003 = vld [vmem:[#allocation2 + $0x80] sm:$0xff]
    %v2004 = vld [vmem:[#allocation2 + $0x88] sm:$0xff]
    %v2005 = vld [vmem:[#allocation2 + $0x90] sm:$0xff]
    %v2006 = vld [vmem:[#allocation2 + $0x98] sm:$0xff]
    %v2007 = vadd.f32 %v2003, %v1872
    %v2008 = vadd.f32 %v2004, %v1874
    %v2009 = vadd.f32 %v2005, %v1913
    %v2010 = vadd.f32 %v2006, %v1915
    %v2011 = vxor.u32 %v2007, 2147483648
    %v2012 = vmul.f32 %v2011, 1.442695
    %v2013 = vpow.pop %v2012
    %v2014 = vadd.f32 %v2013, 1.0
    %v2015 = vrcp.pop %v2014
    %v2016 = vmul.f32 1.0, %v2015
    %v2017 = vxor.u32 %v2008, 2147483648
    %v2018 = vmul.f32 %v2017, 1.442695
    %v2019 = vpow.pop %v2018
    %v2020 = vadd.f32 %v2019, 1.0
    %v2021 = vrcp.pop %v2020
    %v2022 = vmul.f32 1.0, %v2021
    %v2023 = vtanh.pop %v2009
    %v2024 = vxor.u32 %v2010, 2147483648
    %v2025 = vmul.f32 %v2024, 1.442695
    %v2026 = vpow.pop %v2025
    %v2027 = vadd.f32 %v2026, 1.0
    %v2028 = vrcp.pop %v2027
    %v2029 = vmul.f32 1.0, %v2028
    %v2030 = vmul.f32 %v2022, %v2001
    %v2031 = vmul.f32 %v2016, %v2023
    %v2032 = vadd.f32 %v2030, %v2031
    %v2033 = vtanh.pop %v2032
    %v2034 = vmul.f32 %v2029, %v2033
    %2035 = vst [vmem:[#allocation5] sm:$0xff] %v2032
    %2036 = vst [vmem:[#allocation4] sm:$0xff] %v2034
    %2037 = vst [vmem:[#allocation3 + $0x20] sm:$0xff] %v2034
    %v2038 = vld [vmem:[#allocation2 + $0x160] sm:$0xff]
    %v2039 = vld [vmem:[#allocation2 + $0x168] sm:$0xff]
    %v2040 = vld [vmem:[#allocation2 + $0x170] sm:$0xff]
    %v2041 = vld [vmem:[#allocation2 + $0x178] sm:$0xff]
    %v2042 = vadd.f32 %v2038, %v1954
    %v2043 = vadd.f32 %v2039, %v1956
    %v2044 = vadd.f32 %v2040, %v1995
    %v2045 = vadd.f32 %v2041, %v1997
    %v2046 = vxor.u32 %v2042, 2147483648
    %v2047 = vmul.f32 %v2046, 1.442695
    %v2048 = vpow.pop %v2047
    %v2049 = vadd.f32 %v2048, 1.0
    %v2050 = vrcp.pop %v2049
    %v2051 = vmul.f32 1.0, %v2050
    %v2052 = vxor.u32 %v2043, 2147483648
    %v2053 = vmul.f32 %v2052, 1.442695
    %v2054 = vpow.pop %v2053
    %v2055 = vadd.f32 %v2054, 1.0
    %v2056 = vrcp.pop %v2055
    %v2057 = vmul.f32 1.0, %v2056
    %v2058 = vtanh.pop %v2044
    %v2059 = vxor.u32 %v2045, 2147483648
    %v2060 = vmul.f32 %v2059, 1.442695
    %v2061 = vpow.pop %v2060
    %v2062 = vadd.f32 %v2061, 1.0
    %v2063 = vrcp.pop %v2062
    %v2064 = vmul.f32 1.0, %v2063
    %v2065 = vmul.f32 %v2057, %v2002
    %v2066 = vmul.f32 %v2051, %v2058
    %v2067 = vadd.f32 %v2065, %v2066
    %v2068 = vtanh.pop %v2067
    %v2069 = vmul.f32 %v2064, %v2068
    %2070 = vst [vmem:[#allocation5 + $0x8] sm:$0xff] %v2067
    %2071 = vst [vmem:[#allocation4 + $0x8] sm:$0xff] %v2069
    %2072 = vst [vmem:[#allocation3 + $0x58] sm:$0xff] %v2069
    %v2073 = vld [vmem:[#allocation4] sm:$0xff]
    %v2074 = vld [vmem:[#allocation4 + $0x8] sm:$0xff]
    %v2075 = vpack.c.bf16 %v2073, %v2073
    %v2076 = vpack.c.bf16 %v2074, %v2074
    %2077 = vmatprep.subr.bf16.mxu0 %v1158
    %2078 = vmatpush1.bf16.msra.mxu0 %v1157
    %2079 = vmatprep.subr.bf16.mxu0 %v1150
    %2080 = vmatpush1.bf16.msra.mxu0 %v1149
    %2081 = vmatprep.subr.bf16.mxu0 %v1142
    %2082 = vmatpush1.bf16.msra.mxu0 %v1141
    %2083 = vmatprep.subr.bf16.mxu0 %v1134
    %2084 = vmatpush1.bf16.msra.mxu0 %v1133
    %2085 = vmatprep.subr.bf16.mxu0 %v1126
    %2086 = vmatpush1.bf16.msra.mxu0 %v1125
    %2087 = vmatprep.subr.bf16.mxu0 %v1118
    %2088 = vmatpush1.bf16.msra.mxu0 %v1117
    %2089 = vmatprep.subr.bf16.mxu0 %v1110
    %2090 = vmatpush1.bf16.msra.mxu0 %v1109
    %2091 = vmatprep.subr.bf16.mxu0 %v1102
    %2092 = vmatpush1.bf16.msra.mxu0 %v1101
    %2093 = vmatprep.subr.bf16.mxu0 %v1222
    %2094 = vmatpush2.bf16.msra.mxu0 %v1221
    %2095 = vmatprep.subr.bf16.mxu0 %v1214
    %2096 = vmatpush2.bf16.msra.mxu0 %v1213
    %2097 = vmatprep.subr.bf16.mxu0 %v1206
    %2098 = vmatpush2.bf16.msra.mxu0 %v1205
    %2099 = vmatprep.subr.bf16.mxu0 %v1198
    %2100 = vmatpush2.bf16.msra.mxu0 %v1197
    %2101 = vmatprep.subr.bf16.mxu0 %v1190
    %2102 = vmatpush2.bf16.msra.mxu0 %v1189
    %2103 = vmatprep.subr.bf16.mxu0 %v1182
    %2104 = vmatpush2.bf16.msra.mxu0 %v1181
    %2105 = vmatprep.subr.bf16.mxu0 %v1174
    %2106 = vmatpush2.bf16.msra.mxu0 %v1173
    %2107 = vmatprep.subr.bf16.mxu0 %v1166
    %2108 = vmatpush2.bf16.msra.mxu0 %v1165
    %2109 = vmatprep.mubr.bf16.mxu0 %v2076
    %2110 = vmatmul.mubr.bf16.gmra.mxu0 %v2075
    %v2111 = vpop.f32.mrf.mxu0
    %v2112 = vadd.f32 0.0, %v2111
    %v2113 = vpop.f32.mrf.mxu0
    %v2114 = vadd.f32 0.0, %v2113
    %v2115 = vpop.f32.mrf.mxu0
    %v2116 = vpop.f32.mrf.mxu0
    %2117 = vdwg.mxu0
    %2118 = vmatprep.subr.bf16.mxu0 %v1160
    %2119 = vmatpush1.bf16.msra.mxu0 %v1159
    %2120 = vmatprep.subr.bf16.mxu0 %v1152
    %2121 = vmatpush1.bf16.msra.mxu0 %v1151
    %2122 = vmatprep.subr.bf16.mxu0 %v1144
    %2123 = vmatpush1.bf16.msra.mxu0 %v1143
    %2124 = vmatprep.subr.bf16.mxu0 %v1136
    %2125 = vmatpush1.bf16.msra.mxu0 %v1135
    %2126 = vmatprep.subr.bf16.mxu0 %v1128
    %2127 = vmatpush1.bf16.msra.mxu0 %v1127
    %2128 = vmatprep.subr.bf16.mxu0 %v1120
    %2129 = vmatpush1.bf16.msra.mxu0 %v1119
    %2130 = vmatprep.subr.bf16.mxu0 %v1112
    %2131 = vmatpush1.bf16.msra.mxu0 %v1111
    %2132 = vmatprep.subr.bf16.mxu0 %v1104
    %2133 = vmatpush1.bf16.msra.mxu0 %v1103
    %2134 = vmatprep.subr.bf16.mxu0 %v1224
    %2135 = vmatpush2.bf16.msra.mxu0 %v1223
    %2136 = vmatprep.subr.bf16.mxu0 %v1216
    %2137 = vmatpush2.bf16.msra.mxu0 %v1215
    %2138 = vmatprep.subr.bf16.mxu0 %v1208
    %2139 = vmatpush2.bf16.msra.mxu0 %v1207
    %2140 = vmatprep.subr.bf16.mxu0 %v1200
    %2141 = vmatpush2.bf16.msra.mxu0 %v1199
    %2142 = vmatprep.subr.bf16.mxu0 %v1192
    %2143 = vmatpush2.bf16.msra.mxu0 %v1191
    %2144 = vmatprep.subr.bf16.mxu0 %v1184
    %2145 = vmatpush2.bf16.msra.mxu0 %v1183
    %2146 = vmatprep.subr.bf16.mxu0 %v1176
    %2147 = vmatpush2.bf16.msra.mxu0 %v1175
    %2148 = vmatprep.subr.bf16.mxu0 %v1168
    %2149 = vmatpush2.bf16.msra.mxu0 %v1167
    %2150 = vmatprep.mubr.bf16.mxu0 %v2076
    %2151 = vmatmul.mubr.bf16.gmra.mxu0 %v2075
    %v2152 = vpop.f32.mrf.mxu0
    %v2153 = vadd.f32 0.0, %v2152
    %v2154 = vpop.f32.mrf.mxu0
    %v2155 = vadd.f32 0.0, %v2154
    %v2156 = vpop.f32.mrf.mxu0
    %v2157 = vpop.f32.mrf.mxu0
    %2158 = vdwg.mxu0
    %2159 = vmatprep.subr.bf16.mxu0 %v1162
    %2160 = vmatpush1.bf16.msra.mxu0 %v1161
    %2161 = vmatprep.subr.bf16.mxu0 %v1154
    %2162 = vmatpush1.bf16.msra.mxu0 %v1153
    %2163 = vmatprep.subr.bf16.mxu0 %v1146
    %2164 = vmatpush1.bf16.msra.mxu0 %v1145
    %2165 = vmatprep.subr.bf16.mxu0 %v1138
    %2166 = vmatpush1.bf16.msra.mxu0 %v1137
    %2167 = vmatprep.subr.bf16.mxu0 %v1130
    %2168 = vmatpush1.bf16.msra.mxu0 %v1129
    %2169 = vmatprep.subr.bf16.mxu0 %v1122
    %2170 = vmatpush1.bf16.msra.mxu0 %v1121
    %2171 = vmatprep.subr.bf16.mxu0 %v1114
    %2172 = vmatpush1.bf16.msra.mxu0 %v1113
    %2173 = vmatprep.subr.bf16.mxu0 %v1106
    %2174 = vmatpush1.bf16.msra.mxu0 %v1105
    %2175 = vmatprep.subr.bf16.mxu0 %v1226
    %2176 = vmatpush2.bf16.msra.mxu0 %v1225
    %2177 = vmatprep.subr.bf16.mxu0 %v1218
    %2178 = vmatpush2.bf16.msra.mxu0 %v1217
    %2179 = vmatprep.subr.bf16.mxu0 %v1210
    %2180 = vmatpush2.bf16.msra.mxu0 %v1209
    %2181 = vmatprep.subr.bf16.mxu0 %v1202
    %2182 = vmatpush2.bf16.msra.mxu0 %v1201
    %2183 = vmatprep.subr.bf16.mxu0 %v1194
    %2184 = vmatpush2.bf16.msra.mxu0 %v1193
    %2185 = vmatprep.subr.bf16.mxu0 %v1186
    %2186 = vmatpush2.bf16.msra.mxu0 %v1185
    %2187 = vmatprep.subr.bf16.mxu0 %v1178
    %2188 = vmatpush2.bf16.msra.mxu0 %v1177
    %2189 = vmatprep.subr.bf16.mxu0 %v1170
    %2190 = vmatpush2.bf16.msra.mxu0 %v1169
    %2191 = vmatprep.mubr.bf16.mxu0 %v2076
    %2192 = vmatmul.mubr.bf16.gmra.mxu0 %v2075
    %v2193 = vpop.f32.mrf.mxu0
    %v2194 = vadd.f32 0.0, %v2193
    %v2195 = vpop.f32.mrf.mxu0
    %v2196 = vadd.f32 0.0, %v2195
    %v2197 = vpop.f32.mrf.mxu0
    %v2198 = vpop.f32.mrf.mxu0
    %2199 = vdwg.mxu0
    %2200 = vmatprep.subr.bf16.mxu0 %v1164
    %2201 = vmatpush1.bf16.msra.mxu0 %v1163
    %2202 = vmatprep.subr.bf16.mxu0 %v1156
    %2203 = vmatpush1.bf16.msra.mxu0 %v1155
    %2204 = vmatprep.subr.bf16.mxu0 %v1148
    %2205 = vmatpush1.bf16.msra.mxu0 %v1147
    %2206 = vmatprep.subr.bf16.mxu0 %v1140
    %2207 = vmatpush1.bf16.msra.mxu0 %v1139
    %2208 = vmatprep.subr.bf16.mxu0 %v1132
    %2209 = vmatpush1.bf16.msra.mxu0 %v1131
    %2210 = vmatprep.subr.bf16.mxu0 %v1124
    %2211 = vmatpush1.bf16.msra.mxu0 %v1123
    %2212 = vmatprep.subr.bf16.mxu0 %v1116
    %2213 = vmatpush1.bf16.msra.mxu0 %v1115
    %2214 = vmatprep.subr.bf16.mxu0 %v1108
    %2215 = vmatpush1.bf16.msra.mxu0 %v1107
    %2216 = vmatprep.subr.bf16.mxu0 %v1228
    %2217 = vmatpush2.bf16.msra.mxu0 %v1227
    %2218 = vmatprep.subr.bf16.mxu0 %v1220
    %2219 = vmatpush2.bf16.msra.mxu0 %v1219
    %2220 = vmatprep.subr.bf16.mxu0 %v1212
    %2221 = vmatpush2.bf16.msra.mxu0 %v1211
    %2222 = vmatprep.subr.bf16.mxu0 %v1204
    %2223 = vmatpush2.bf16.msra.mxu0 %v1203
    %2224 = vmatprep.subr.bf16.mxu0 %v1196
    %2225 = vmatpush2.bf16.msra.mxu0 %v1195
    %2226 = vmatprep.subr.bf16.mxu0 %v1188
    %2227 = vmatpush2.bf16.msra.mxu0 %v1187
    %2228 = vmatprep.subr.bf16.mxu0 %v1180
    %2229 = vmatpush2.bf16.msra.mxu0 %v1179
    %2230 = vmatprep.subr.bf16.mxu0 %v1172
    %2231 = vmatpush2.bf16.msra.mxu0 %v1171
    %2232 = vmatprep.mubr.bf16.mxu0 %v2076
    %2233 = vmatmul.mubr.bf16.gmra.mxu0 %v2075
    %v2234 = vpop.f32.mrf.mxu0
    %v2235 = vadd.f32 0.0, %v2234
    %v2236 = vpop.f32.mrf.mxu0
    %v2237 = vadd.f32 0.0, %v2236
    %v2238 = vpop.f32.mrf.mxu0
    %v2239 = vpop.f32.mrf.mxu0
    %2240 = vdwg.mxu0
    %v2241 = vld [vmem:[#allocation5] sm:$0xff]
    %v2242 = vld [vmem:[#allocation5 + $0x8] sm:$0xff]
    %v2243 = vld [vmem:[#allocation2 + $0xc0] sm:$0xff]
    %v2244 = vld [vmem:[#allocation2 + $0xc8] sm:$0xff]
    %v2245 = vld [vmem:[#allocation2 + $0xd0] sm:$0xff]
    %v2246 = vld [vmem:[#allocation2 + $0xd8] sm:$0xff]
    %v2247 = vadd.f32 %v2243, %v2112
    %v2248 = vadd.f32 %v2244, %v2114
    %v2249 = vadd.f32 %v2245, %v2153
    %v2250 = vadd.f32 %v2246, %v2155
    %v2251 = vxor.u32 %v2247, 2147483648
    %v2252 = vmul.f32 %v2251, 1.442695
    %v2253 = vpow.pop %v2252
    %v2254 = vadd.f32 %v2253, 1.0
    %v2255 = vrcp.pop %v2254
    %v2256 = vmul.f32 1.0, %v2255
    %v2257 = vxor.u32 %v2248, 2147483648
    %v2258 = vmul.f32 %v2257, 1.442695
    %v2259 = vpow.pop %v2258
    %v2260 = vadd.f32 %v2259, 1.0
    %v2261 = vrcp.pop %v2260
    %v2262 = vmul.f32 1.0, %v2261
    %v2263 = vtanh.pop %v2249
    %v2264 = vxor.u32 %v2250, 2147483648
    %v2265 = vmul.f32 %v2264, 1.442695
    %v2266 = vpow.pop %v2265
    %v2267 = vadd.f32 %v2266, 1.0
    %v2268 = vrcp.pop %v2267
    %v2269 = vmul.f32 1.0, %v2268
    %v2270 = vmul.f32 %v2262, %v2241
    %v2271 = vmul.f32 %v2256, %v2263
    %v2272 = vadd.f32 %v2270, %v2271
    %v2273 = vtanh.pop %v2272
    %v2274 = vmul.f32 %v2269, %v2273
    %2275 = vst [vmem:[#allocation5] sm:$0xff] %v2272
    %2276 = vst [vmem:[#allocation4] sm:$0xff] %v2274
    %2277 = vst [vmem:[#allocation3 + $0x30] sm:$0xff] %v2274
    %v2278 = vld [vmem:[#allocation2 + $0x120] sm:$0xff]
    %v2279 = vld [vmem:[#allocation2 + $0x128] sm:$0xff]
    %v2280 = vld [vmem:[#allocation2 + $0x130] sm:$0xff]
    %v2281 = vld [vmem:[#allocation2 + $0x138] sm:$0xff]
    %v2282 = vadd.f32 %v2278, %v2194
    %v2283 = vadd.f32 %v2279, %v2196
    %v2284 = vadd.f32 %v2280, %v2235
    %v2285 = vadd.f32 %v2281, %v2237
    %v2286 = vxor.u32 %v2282, 2147483648
    %v2287 = vmul.f32 %v2286, 1.442695
    %v2288 = vpow.pop %v2287
    %v2289 = vadd.f32 %v2288, 1.0
    %v2290 = vrcp.pop %v2289
    %v2291 = vmul.f32 1.0, %v2290
    %v2292 = vxor.u32 %v2283, 2147483648
    %v2293 = vmul.f32 %v2292, 1.442695
    %v2294 = vpow.pop %v2293
    %v2295 = vadd.f32 %v2294, 1.0
    %v2296 = vrcp.pop %v2295
    %v2297 = vmul.f32 1.0, %v2296
    %v2298 = vtanh.pop %v2284
    %v2299 = vxor.u32 %v2285, 2147483648
    %v2300 = vmul.f32 %v2299, 1.442695
    %v2301 = vpow.pop %v2300
    %v2302 = vadd.f32 %v2301, 1.0
    %v2303 = vrcp.pop %v2302
    %v2304 = vmul.f32 1.0, %v2303
    %v2305 = vmul.f32 %v2297, %v2242
    %v2306 = vmul.f32 %v2291, %v2298
    %v2307 = vadd.f32 %v2305, %v2306
    %v2308 = vtanh.pop %v2307
    %v2309 = vmul.f32 %v2304, %v2308
    %2310 = vst [vmem:[#allocation5 + $0x8] sm:$0xff] %v2307
    %2311 = vst [vmem:[#allocation4 + $0x8] sm:$0xff] %v2309
    %2312 = vst [vmem:[#allocation3 + $0x48] sm:$0xff] %v2309
    %v2313 = vld [vmem:[#allocation4] sm:$0xff]
    %v2314 = vld [vmem:[#allocation4 + $0x8] sm:$0xff]
    %v2315 = vpack.c.bf16 %v2313, %v2313
    %v2316 = vpack.c.bf16 %v2314, %v2314
    %2317 = vmatprep.subr.bf16.mxu0 %v1158
    %2318 = vmatpush1.bf16.msra.mxu0 %v1157
    %2319 = vmatprep.subr.bf16.mxu0 %v1150
    %2320 = vmatpush1.bf16.msra.mxu0 %v1149
    %2321 = vmatprep.subr.bf16.mxu0 %v1142
    %2322 = vmatpush1.bf16.msra.mxu0 %v1141
    %2323 = vmatprep.subr.bf16.mxu0 %v1134
    %2324 = vmatpush1.bf16.msra.mxu0 %v1133
    %2325 = vmatprep.subr.bf16.mxu0 %v1126
    %2326 = vmatpush1.bf16.msra.mxu0 %v1125
    %2327 = vmatprep.subr.bf16.mxu0 %v1118
    %2328 = vmatpush1.bf16.msra.mxu0 %v1117
    %2329 = vmatprep.subr.bf16.mxu0 %v1110
    %2330 = vmatpush1.bf16.msra.mxu0 %v1109
    %2331 = vmatprep.subr.bf16.mxu0 %v1102
    %2332 = vmatpush1.bf16.msra.mxu0 %v1101
    %2333 = vmatprep.subr.bf16.mxu0 %v1222
    %2334 = vmatpush2.bf16.msra.mxu0 %v1221
    %2335 = vmatprep.subr.bf16.mxu0 %v1214
    %2336 = vmatpush2.bf16.msra.mxu0 %v1213
    %2337 = vmatprep.subr.bf16.mxu0 %v1206
    %2338 = vmatpush2.bf16.msra.mxu0 %v1205
    %2339 = vmatprep.subr.bf16.mxu0 %v1198
    %2340 = vmatpush2.bf16.msra.mxu0 %v1197
    %2341 = vmatprep.subr.bf16.mxu0 %v1190
    %2342 = vmatpush2.bf16.msra.mxu0 %v1189
    %2343 = vmatprep.subr.bf16.mxu0 %v1182
    %2344 = vmatpush2.bf16.msra.mxu0 %v1181
    %2345 = vmatprep.subr.bf16.mxu0 %v1174
    %2346 = vmatpush2.bf16.msra.mxu0 %v1173
    %2347 = vmatprep.subr.bf16.mxu0 %v1166
    %2348 = vmatpush2.bf16.msra.mxu0 %v1165
    %2349 = vmatprep.mubr.bf16.mxu0 %v2316
    %2350 = vmatmul.mubr.bf16.gmra.mxu0 %v2315
    %v2351 = vpop.f32.mrf.mxu0
    %v2352 = vadd.f32 0.0, %v2351
    %v2353 = vpop.f32.mrf.mxu0
    %v2354 = vadd.f32 0.0, %v2353
    %v2355 = vpop.f32.mrf.mxu0
    %v2356 = vpop.f32.mrf.mxu0
    %2357 = vdwg.mxu0
    %2358 = vmatprep.subr.bf16.mxu0 %v1160
    %2359 = vmatpush1.bf16.msra.mxu0 %v1159
    %2360 = vmatprep.subr.bf16.mxu0 %v1152
    %2361 = vmatpush1.bf16.msra.mxu0 %v1151
    %2362 = vmatprep.subr.bf16.mxu0 %v1144
    %2363 = vmatpush1.bf16.msra.mxu0 %v1143
    %2364 = vmatprep.subr.bf16.mxu0 %v1136
    %2365 = vmatpush1.bf16.msra.mxu0 %v1135
    %2366 = vmatprep.subr.bf16.mxu0 %v1128
    %2367 = vmatpush1.bf16.msra.mxu0 %v1127
    %2368 = vmatprep.subr.bf16.mxu0 %v1120
    %2369 = vmatpush1.bf16.msra.mxu0 %v1119
    %2370 = vmatprep.subr.bf16.mxu0 %v1112
    %2371 = vmatpush1.bf16.msra.mxu0 %v1111
    %2372 = vmatprep.subr.bf16.mxu0 %v1104
    %2373 = vmatpush1.bf16.msra.mxu0 %v1103
    %2374 = vmatprep.subr.bf16.mxu0 %v1224
    %2375 = vmatpush2.bf16.msra.mxu0 %v1223
    %2376 = vmatprep.subr.bf16.mxu0 %v1216
    %2377 = vmatpush2.bf16.msra.mxu0 %v1215
    %2378 = vmatprep.subr.bf16.mxu0 %v1208
    %2379 = vmatpush2.bf16.msra.mxu0 %v1207
    %2380 = vmatprep.subr.bf16.mxu0 %v1200
    %2381 = vmatpush2.bf16.msra.mxu0 %v1199
    %2382 = vmatprep.subr.bf16.mxu0 %v1192
    %2383 = vmatpush2.bf16.msra.mxu0 %v1191
    %2384 = vmatprep.subr.bf16.mxu0 %v1184
    %2385 = vmatpush2.bf16.msra.mxu0 %v1183
    %2386 = vmatprep.subr.bf16.mxu0 %v1176
    %2387 = vmatpush2.bf16.msra.mxu0 %v1175
    %2388 = vmatprep.subr.bf16.mxu0 %v1168
    %2389 = vmatpush2.bf16.msra.mxu0 %v1167
    %2390 = vmatprep.mubr.bf16.mxu0 %v2316
    %2391 = vmatmul.mubr.bf16.gmra.mxu0 %v2315
    %v2392 = vpop.f32.mrf.mxu0
    %v2393 = vadd.f32 0.0, %v2392
    %v2394 = vpop.f32.mrf.mxu0
    %v2395 = vadd.f32 0.0, %v2394
    %v2396 = vpop.f32.mrf.mxu0
    %v2397 = vpop.f32.mrf.mxu0
    %2398 = vdwg.mxu0
    %2399 = vmatprep.subr.bf16.mxu0 %v1162
    %2400 = vmatpush1.bf16.msra.mxu0 %v1161
    %2401 = vmatprep.subr.bf16.mxu0 %v1154
    %2402 = vmatpush1.bf16.msra.mxu0 %v1153
    %2403 = vmatprep.subr.bf16.mxu0 %v1146
    %2404 = vmatpush1.bf16.msra.mxu0 %v1145
    %2405 = vmatprep.subr.bf16.mxu0 %v1138
    %2406 = vmatpush1.bf16.msra.mxu0 %v1137
    %2407 = vmatprep.subr.bf16.mxu0 %v1130
    %2408 = vmatpush1.bf16.msra.mxu0 %v1129
    %2409 = vmatprep.subr.bf16.mxu0 %v1122
    %2410 = vmatpush1.bf16.msra.mxu0 %v1121
    %2411 = vmatprep.subr.bf16.mxu0 %v1114
    %2412 = vmatpush1.bf16.msra.mxu0 %v1113
    %2413 = vmatprep.subr.bf16.mxu0 %v1106
    %2414 = vmatpush1.bf16.msra.mxu0 %v1105
    %2415 = vmatprep.subr.bf16.mxu0 %v1226
    %2416 = vmatpush2.bf16.msra.mxu0 %v1225
    %2417 = vmatprep.subr.bf16.mxu0 %v1218
    %2418 = vmatpush2.bf16.msra.mxu0 %v1217
    %2419 = vmatprep.subr.bf16.mxu0 %v1210
    %2420 = vmatpush2.bf16.msra.mxu0 %v1209
    %2421 = vmatprep.subr.bf16.mxu0 %v1202
    %2422 = vmatpush2.bf16.msra.mxu0 %v1201
    %2423 = vmatprep.subr.bf16.mxu0 %v1194
    %2424 = vmatpush2.bf16.msra.mxu0 %v1193
    %2425 = vmatprep.subr.bf16.mxu0 %v1186
    %2426 = vmatpush2.bf16.msra.mxu0 %v1185
    %2427 = vmatprep.subr.bf16.mxu0 %v1178
    %2428 = vmatpush2.bf16.msra.mxu0 %v1177
    %2429 = vmatprep.subr.bf16.mxu0 %v1170
    %2430 = vmatpush2.bf16.msra.mxu0 %v1169
    %2431 = vmatprep.mubr.bf16.mxu0 %v2316
    %2432 = vmatmul.mubr.bf16.gmra.mxu0 %v2315
    %v2433 = vpop.f32.mrf.mxu0
    %v2434 = vadd.f32 0.0, %v2433
    %v2435 = vpop.f32.mrf.mxu0
    %v2436 = vadd.f32 0.0, %v2435
    %v2437 = vpop.f32.mrf.mxu0
    %v2438 = vpop.f32.mrf.mxu0
    %2439 = vdwg.mxu0
    %2440 = vmatprep.subr.bf16.mxu0 %v1164
    %2441 = vmatpush1.bf16.msra.mxu0 %v1163
    %2442 = vmatprep.subr.bf16.mxu0 %v1156
    %2443 = vmatpush1.bf16.msra.mxu0 %v1155
    %2444 = vmatprep.subr.bf16.mxu0 %v1148
    %2445 = vmatpush1.bf16.msra.mxu0 %v1147
    %2446 = vmatprep.subr.bf16.mxu0 %v1140
    %2447 = vmatpush1.bf16.msra.mxu0 %v1139
    %2448 = vmatprep.subr.bf16.mxu0 %v1132
    %2449 = vmatpush1.bf16.msra.mxu0 %v1131
    %2450 = vmatprep.subr.bf16.mxu0 %v1124
    %2451 = vmatpush1.bf16.msra.mxu0 %v1123
    %2452 = vmatprep.subr.bf16.mxu0 %v1116
    %2453 = vmatpush1.bf16.msra.mxu0 %v1115
    %2454 = vmatprep.subr.bf16.mxu0 %v1108
    %2455 = vmatpush1.bf16.msra.mxu0 %v1107
    %2456 = vmatprep.subr.bf16.mxu0 %v1228
    %2457 = vmatpush2.bf16.msra.mxu0 %v1227
    %2458 = vmatprep.subr.bf16.mxu0 %v1220
    %2459 = vmatpush2.bf16.msra.mxu0 %v1219
    %2460 = vmatprep.subr.bf16.mxu0 %v1212
    %2461 = vmatpush2.bf16.msra.mxu0 %v1211
    %2462 = vmatprep.subr.bf16.mxu0 %v1204
    %2463 = vmatpush2.bf16.msra.mxu0 %v1203
    %2464 = vmatprep.subr.bf16.mxu0 %v1196
    %2465 = vmatpush2.bf16.msra.mxu0 %v1195
    %2466 = vmatprep.subr.bf16.mxu0 %v1188
    %2467 = vmatpush2.bf16.msra.mxu0 %v1187
    %2468 = vmatprep.subr.bf16.mxu0 %v1180
    %2469 = vmatpush2.bf16.msra.mxu0 %v1179
    %2470 = vmatprep.subr.bf16.mxu0 %v1172
    %2471 = vmatpush2.bf16.msra.mxu0 %v1171
    %2472 = vmatprep.mubr.bf16.mxu0 %v2316
    %2473 = vmatmul.mubr.bf16.gmra.mxu0 %v2315
    %v2474 = vpop.f32.mrf.mxu0
    %v2475 = vadd.f32 0.0, %v2474
    %v2476 = vpop.f32.mrf.mxu0
    %v2477 = vadd.f32 0.0, %v2476
    %v2478 = vpop.f32.mrf.mxu0
    %v2479 = vpop.f32.mrf.mxu0
    %2480 = vdwg.mxu0
    %v2481 = vld [vmem:[#allocation5] sm:$0xff]
    %v2482 = vld [vmem:[#allocation5 + $0x8] sm:$0xff]
    %v2483 = vld [vmem:[#allocation2 + $0x100] sm:$0xff]
    %v2484 = vld [vmem:[#allocation2 + $0x108] sm:$0xff]
    %v2485 = vld [vmem:[#allocation2 + $0x110] sm:$0xff]
    %v2486 = vld [vmem:[#allocation2 + $0x118] sm:$0xff]
    %v2487 = vadd.f32 %v2483, %v2352
    %v2488 = vadd.f32 %v2484, %v2354
    %v2489 = vadd.f32 %v2485, %v2393
    %v2490 = vadd.f32 %v2486, %v2395
    %v2491 = vxor.u32 %v2487, 2147483648
    %v2492 = vmul.f32 %v2491, 1.442695
    %v2493 = vpow.pop %v2492
    %v2494 = vadd.f32 %v2493, 1.0
    %v2495 = vrcp.pop %v2494
    %v2496 = vmul.f32 1.0, %v2495
    %v2497 = vxor.u32 %v2488, 2147483648
    %v2498 = vmul.f32 %v2497, 1.442695
    %v2499 = vpow.pop %v2498
    %v2500 = vadd.f32 %v2499, 1.0
    %v2501 = vrcp.pop %v2500
    %v2502 = vmul.f32 1.0, %v2501
    %v2503 = vtanh.pop %v2489
    %v2504 = vxor.u32 %v2490, 2147483648
    %v2505 = vmul.f32 %v2504, 1.442695
    %v2506 = vpow.pop %v2505
    %v2507 = vadd.f32 %v2506, 1.0
    %v2508 = vrcp.pop %v2507
    %v2509 = vmul.f32 1.0, %v2508
    %v2510 = vmul.f32 %v2502, %v2481
    %v2511 = vmul.f32 %v2496, %v2503
    %v2512 = vadd.f32 %v2510, %v2511
    %v2513 = vtanh.pop %v2512
    %v2514 = vmul.f32 %v2509, %v2513
    %2515 = vst [vmem:[#allocation5] sm:$0xff] %v2512
    %2516 = vst [vmem:[#allocation4] sm:$0xff] %v2514
    %2517 = vst [vmem:[#allocation3 + $0x40] sm:$0xff] %v2514
    %v2518 = vld [vmem:[#allocation2 + $0xe0] sm:$0xff]
    %v2519 = vld [vmem:[#allocation2 + $0xe8] sm:$0xff]
    %v2520 = vld [vmem:[#allocation2 + $0xf0] sm:$0xff]
    %v2521 = vld [vmem:[#allocation2 + $0xf8] sm:$0xff]
    %v2522 = vadd.f32 %v2518, %v2434
    %v2523 = vadd.f32 %v2519, %v2436
    %v2524 = vadd.f32 %v2520, %v2475
    %v2525 = vadd.f32 %v2521, %v2477
    %v2526 = vxor.u32 %v2522, 2147483648
    %v2527 = vmul.f32 %v2526, 1.442695
    %v2528 = vpow.pop %v2527
    %v2529 = vadd.f32 %v2528, 1.0
    %v2530 = vrcp.pop %v2529
    %v2531 = vmul.f32 1.0, %v2530
    %v2532 = vxor.u32 %v2523, 2147483648
    %v2533 = vmul.f32 %v2532, 1.442695
    %v2534 = vpow.pop %v2533
    %v2535 = vadd.f32 %v2534, 1.0
    %v2536 = vrcp.pop %v2535
    %v2537 = vmul.f32 1.0, %v2536
    %v2538 = vtanh.pop %v2524
    %v2539 = vxor.u32 %v2525, 2147483648
    %v2540 = vmul.f32 %v2539, 1.442695
    %v2541 = vpow.pop %v2540
    %v2542 = vadd.f32 %v2541, 1.0
    %v2543 = vrcp.pop %v2542
    %v2544 = vmul.f32 1.0, %v2543
    %v2545 = vmul.f32 %v2537, %v2482
    %v2546 = vmul.f32 %v2531, %v2538
    %v2547 = vadd.f32 %v2545, %v2546
    %v2548 = vtanh.pop %v2547
    %v2549 = vmul.f32 %v2544, %v2548
    %2550 = vst [vmem:[#allocation5 + $0x8] sm:$0xff] %v2547
    %2551 = vst [vmem:[#allocation4 + $0x8] sm:$0xff] %v2549
    %2552 = vst [vmem:[#allocation3 + $0x38] sm:$0xff] %v2549
    %v2553 = vld [vmem:[#allocation4] sm:$0xff]
    %v2554 = vld [vmem:[#allocation4 + $0x8] sm:$0xff]
    %v2555 = vpack.c.bf16 %v2553, %v2553
    %v2556 = vpack.c.bf16 %v2554, %v2554
    %2557 = vmatprep.subr.bf16.mxu0 %v1158
    %2558 = vmatpush1.bf16.msra.mxu0 %v1157
    %2559 = vmatprep.subr.bf16.mxu0 %v1150
    %2560 = vmatpush1.bf16.msra.mxu0 %v1149
    %2561 = vmatprep.subr.bf16.mxu0 %v1142
    %2562 = vmatpush1.bf16.msra.mxu0 %v1141
    %2563 = vmatprep.subr.bf16.mxu0 %v1134
    %2564 = vmatpush1.bf16.msra.mxu0 %v1133
    %2565 = vmatprep.subr.bf16.mxu0 %v1126
    %2566 = vmatpush1.bf16.msra.mxu0 %v1125
    %2567 = vmatprep.subr.bf16.mxu0 %v1118
    %2568 = vmatpush1.bf16.msra.mxu0 %v1117
    %2569 = vmatprep.subr.bf16.mxu0 %v1110
    %2570 = vmatpush1.bf16.msra.mxu0 %v1109
    %2571 = vmatprep.subr.bf16.mxu0 %v1102
    %2572 = vmatpush1.bf16.msra.mxu0 %v1101
    %2573 = vmatprep.subr.bf16.mxu0 %v1222
    %2574 = vmatpush2.bf16.msra.mxu0 %v1221
    %2575 = vmatprep.subr.bf16.mxu0 %v1214
    %2576 = vmatpush2.bf16.msra.mxu0 %v1213
    %2577 = vmatprep.subr.bf16.mxu0 %v1206
    %2578 = vmatpush2.bf16.msra.mxu0 %v1205
    %2579 = vmatprep.subr.bf16.mxu0 %v1198
    %2580 = vmatpush2.bf16.msra.mxu0 %v1197
    %2581 = vmatprep.subr.bf16.mxu0 %v1190
    %2582 = vmatpush2.bf16.msra.mxu0 %v1189
    %2583 = vmatprep.subr.bf16.mxu0 %v1182
    %2584 = vmatpush2.bf16.msra.mxu0 %v1181
    %2585 = vmatprep.subr.bf16.mxu0 %v1174
    %2586 = vmatpush2.bf16.msra.mxu0 %v1173
    %2587 = vmatprep.subr.bf16.mxu0 %v1166
    %2588 = vmatpush2.bf16.msra.mxu0 %v1165
    %2589 = vmatprep.mubr.bf16.mxu0 %v2556
    %2590 = vmatmul.mubr.bf16.gmra.mxu0 %v2555
    %v2591 = vpop.f32.mrf.mxu0
    %v2592 = vadd.f32 0.0, %v2591
    %v2593 = vpop.f32.mrf.mxu0
    %v2594 = vadd.f32 0.0, %v2593
    %v2595 = vpop.f32.mrf.mxu0
    %v2596 = vpop.f32.mrf.mxu0
    %2597 = vdwg.mxu0
    %2598 = vmatprep.subr.bf16.mxu0 %v1160
    %2599 = vmatpush1.bf16.msra.mxu0 %v1159
    %2600 = vmatprep.subr.bf16.mxu0 %v1152
    %2601 = vmatpush1.bf16.msra.mxu0 %v1151
    %2602 = vmatprep.subr.bf16.mxu0 %v1144
    %2603 = vmatpush1.bf16.msra.mxu0 %v1143
    %2604 = vmatprep.subr.bf16.mxu0 %v1136
    %2605 = vmatpush1.bf16.msra.mxu0 %v1135
    %2606 = vmatprep.subr.bf16.mxu0 %v1128
    %2607 = vmatpush1.bf16.msra.mxu0 %v1127
    %2608 = vmatprep.subr.bf16.mxu0 %v1120
    %2609 = vmatpush1.bf16.msra.mxu0 %v1119
    %2610 = vmatprep.subr.bf16.mxu0 %v1112
    %2611 = vmatpush1.bf16.msra.mxu0 %v1111
    %2612 = vmatprep.subr.bf16.mxu0 %v1104
    %2613 = vmatpush1.bf16.msra.mxu0 %v1103
    %2614 = vmatprep.subr.bf16.mxu0 %v1224
    %2615 = vmatpush2.bf16.msra.mxu0 %v1223
    %2616 = vmatprep.subr.bf16.mxu0 %v1216
    %2617 = vmatpush2.bf16.msra.mxu0 %v1215
    %2618 = vmatprep.subr.bf16.mxu0 %v1208
    %2619 = vmatpush2.bf16.msra.mxu0 %v1207
    %2620 = vmatprep.subr.bf16.mxu0 %v1200
    %2621 = vmatpush2.bf16.msra.mxu0 %v1199
    %2622 = vmatprep.subr.bf16.mxu0 %v1192
    %2623 = vmatpush2.bf16.msra.mxu0 %v1191
    %2624 = vmatprep.subr.bf16.mxu0 %v1184
    %2625 = vmatpush2.bf16.msra.mxu0 %v1183
    %2626 = vmatprep.subr.bf16.mxu0 %v1176
    %2627 = vmatpush2.bf16.msra.mxu0 %v1175
    %2628 = vmatprep.subr.bf16.mxu0 %v1168
    %2629 = vmatpush2.bf16.msra.mxu0 %v1167
    %2630 = vmatprep.mubr.bf16.mxu0 %v2556
    %2631 = vmatmul.mubr.bf16.gmra.mxu0 %v2555
    %v2632 = vpop.f32.mrf.mxu0
    %v2633 = vadd.f32 0.0, %v2632
    %v2634 = vpop.f32.mrf.mxu0
    %v2635 = vadd.f32 0.0, %v2634
    %v2636 = vpop.f32.mrf.mxu0
    %v2637 = vpop.f32.mrf.mxu0
    %2638 = vdwg.mxu0
    %2639 = vmatprep.subr.bf16.mxu0 %v1162
    %2640 = vmatpush1.bf16.msra.mxu0 %v1161
    %2641 = vmatprep.subr.bf16.mxu0 %v1154
    %2642 = vmatpush1.bf16.msra.mxu0 %v1153
    %2643 = vmatprep.subr.bf16.mxu0 %v1146
    %2644 = vmatpush1.bf16.msra.mxu0 %v1145
    %2645 = vmatprep.subr.bf16.mxu0 %v1138
    %2646 = vmatpush1.bf16.msra.mxu0 %v1137
    %2647 = vmatprep.subr.bf16.mxu0 %v1130
    %2648 = vmatpush1.bf16.msra.mxu0 %v1129
    %2649 = vmatprep.subr.bf16.mxu0 %v1122
    %2650 = vmatpush1.bf16.msra.mxu0 %v1121
    %2651 = vmatprep.subr.bf16.mxu0 %v1114
    %2652 = vmatpush1.bf16.msra.mxu0 %v1113
    %2653 = vmatprep.subr.bf16.mxu0 %v1106
    %2654 = vmatpush1.bf16.msra.mxu0 %v1105
    %2655 = vmatprep.subr.bf16.mxu0 %v1226
    %2656 = vmatpush2.bf16.msra.mxu0 %v1225
    %2657 = vmatprep.subr.bf16.mxu0 %v1218
    %2658 = vmatpush2.bf16.msra.mxu0 %v1217
    %2659 = vmatprep.subr.bf16.mxu0 %v1210
    %2660 = vmatpush2.bf16.msra.mxu0 %v1209
    %2661 = vmatprep.subr.bf16.mxu0 %v1202
    %2662 = vmatpush2.bf16.msra.mxu0 %v1201
    %2663 = vmatprep.subr.bf16.mxu0 %v1194
    %2664 = vmatpush2.bf16.msra.mxu0 %v1193
    %2665 = vmatprep.subr.bf16.mxu0 %v1186
    %2666 = vmatpush2.bf16.msra.mxu0 %v1185
    %2667 = vmatprep.subr.bf16.mxu0 %v1178
    %2668 = vmatpush2.bf16.msra.mxu0 %v1177
    %2669 = vmatprep.subr.bf16.mxu0 %v1170
    %2670 = vmatpush2.bf16.msra.mxu0 %v1169
    %2671 = vmatprep.mubr.bf16.mxu0 %v2556
    %2672 = vmatmul.mubr.bf16.gmra.mxu0 %v2555
    %v2673 = vpop.f32.mrf.mxu0
    %v2674 = vadd.f32 0.0, %v2673
    %v2675 = vpop.f32.mrf.mxu0
    %v2676 = vadd.f32 0.0, %v2675
    %v2677 = vpop.f32.mrf.mxu0
    %v2678 = vpop.f32.mrf.mxu0
    %2679 = vdwg.mxu0
    %2680 = vmatprep.subr.bf16.mxu0 %v1164
    %2681 = vmatpush1.bf16.msra.mxu0 %v1163
    %2682 = vmatprep.subr.bf16.mxu0 %v1156
    %2683 = vmatpush1.bf16.msra.mxu0 %v1155
    %2684 = vmatprep.subr.bf16.mxu0 %v1148
    %2685 = vmatpush1.bf16.msra.mxu0 %v1147
    %2686 = vmatprep.subr.bf16.mxu0 %v1140
    %2687 = vmatpush1.bf16.msra.mxu0 %v1139
    %2688 = vmatprep.subr.bf16.mxu0 %v1132
    %2689 = vmatpush1.bf16.msra.mxu0 %v1131
    %2690 = vmatprep.subr.bf16.mxu0 %v1124
    %2691 = vmatpush1.bf16.msra.mxu0 %v1123
    %2692 = vmatprep.subr.bf16.mxu0 %v1116
    %2693 = vmatpush1.bf16.msra.mxu0 %v1115
    %2694 = vmatprep.subr.bf16.mxu0 %v1108
    %2695 = vmatpush1.bf16.msra.mxu0 %v1107
    %2696 = vmatprep.subr.bf16.mxu0 %v1228
    %2697 = vmatpush2.bf16.msra.mxu0 %v1227
    %2698 = vmatprep.subr.bf16.mxu0 %v1220
    %2699 = vmatpush2.bf16.msra.mxu0 %v1219
    %2700 = vmatprep.subr.bf16.mxu0 %v1212
    %2701 = vmatpush2.bf16.msra.mxu0 %v1211
    %2702 = vmatprep.subr.bf16.mxu0 %v1204
    %2703 = vmatpush2.bf16.msra.mxu0 %v1203
    %2704 = vmatprep.subr.bf16.mxu0 %v1196
    %2705 = vmatpush2.bf16.msra.mxu0 %v1195
    %2706 = vmatprep.subr.bf16.mxu0 %v1188
    %2707 = vmatpush2.bf16.msra.mxu0 %v1187
    %2708 = vmatprep.subr.bf16.mxu0 %v1180
    %2709 = vmatpush2.bf16.msra.mxu0 %v1179
    %2710 = vmatprep.subr.bf16.mxu0 %v1172
    %2711 = vmatpush2.bf16.msra.mxu0 %v1171
    %2712 = vmatprep.mubr.bf16.mxu0 %v2556
    %2713 = vmatmul.mubr.bf16.gmra.mxu0 %v2555
    %v2714 = vpop.f32.mrf.mxu0
    %v2715 = vadd.f32 0.0, %v2714
    %v2716 = vpop.f32.mrf.mxu0
    %v2717 = vadd.f32 0.0, %v2716
    %v2718 = vpop.f32.mrf.mxu0
    %v2719 = vpop.f32.mrf.mxu0
    %2720 = vdwg.mxu0
    %v2721 = vld [vmem:[#allocation5] sm:$0xff]
    %v2722 = vld [vmem:[#allocation5 + $0x8] sm:$0xff]
    %v2723 = vld [vmem:[#allocation2 + $0x140] sm:$0xff]
    %v2724 = vld [vmem:[#allocation2 + $0x148] sm:$0xff]
    %v2725 = vld [vmem:[#allocation2 + $0x150] sm:$0xff]
    %v2726 = vld [vmem:[#allocation2 + $0x158] sm:$0xff]
    %v2727 = vadd.f32 %v2723, %v2592
    %v2728 = vadd.f32 %v2724, %v2594
    %v2729 = vadd.f32 %v2725, %v2633
    %v2730 = vadd.f32 %v2726, %v2635
    %v2731 = vxor.u32 %v2727, 2147483648
    %v2732 = vmul.f32 %v2731, 1.442695
    %v2733 = vpow.pop %v2732
    %v2734 = vadd.f32 %v2733, 1.0
    %v2735 = vrcp.pop %v2734
    %v2736 = vmul.f32 1.0, %v2735
    %v2737 = vxor.u32 %v2728, 2147483648
    %v2738 = vmul.f32 %v2737, 1.442695
    %v2739 = vpow.pop %v2738
    %v2740 = vadd.f32 %v2739, 1.0
    %v2741 = vrcp.pop %v2740
    %v2742 = vmul.f32 1.0, %v2741
    %v2743 = vtanh.pop %v2729
    %v2744 = vxor.u32 %v2730, 2147483648
    %v2745 = vmul.f32 %v2744, 1.442695
    %v2746 = vpow.pop %v2745
    %v2747 = vadd.f32 %v2746, 1.0
    %v2748 = vrcp.pop %v2747
    %v2749 = vmul.f32 1.0, %v2748
    %v2750 = vmul.f32 %v2742, %v2721
    %v2751 = vmul.f32 %v2736, %v2743
    %v2752 = vadd.f32 %v2750, %v2751
    %v2753 = vtanh.pop %v2752
    %v2754 = vmul.f32 %v2749, %v2753
    %2755 = vst [vmem:[#allocation5] sm:$0xff] %v2752
    %2756 = vst [vmem:[#allocation4] sm:$0xff] %v2754
    %2757 = vst [vmem:[#allocation3 + $0x50] sm:$0xff] %v2754
    %v2758 = vld [vmem:[#allocation2 + $0xa0] sm:$0xff]
    %v2759 = vld [vmem:[#allocation2 + $0xa8] sm:$0xff]
    %v2760 = vld [vmem:[#allocation2 + $0xb0] sm:$0xff]
    %v2761 = vld [vmem:[#allocation2 + $0xb8] sm:$0xff]
    %v2762 = vadd.f32 %v2758, %v2674
    %v2763 = vadd.f32 %v2759, %v2676
    %v2764 = vadd.f32 %v2760, %v2715
    %v2765 = vadd.f32 %v2761, %v2717
    %v2766 = vxor.u32 %v2762, 2147483648
    %v2767 = vmul.f32 %v2766, 1.442695
    %v2768 = vpow.pop %v2767
    %v2769 = vadd.f32 %v2768, 1.0
    %v2770 = vrcp.pop %v2769
    %v2771 = vmul.f32 1.0, %v2770
    %v2772 = vxor.u32 %v2763, 2147483648
    %v2773 = vmul.f32 %v2772, 1.442695
    %v2774 = vpow.pop %v2773
    %v2775 = vadd.f32 %v2774, 1.0
    %v2776 = vrcp.pop %v2775
    %v2777 = vmul.f32 1.0, %v2776
    %v2778 = vtanh.pop %v2764
    %v2779 = vxor.u32 %v2765, 2147483648
    %v2780 = vmul.f32 %v2779, 1.442695
    %v2781 = vpow.pop %v2780
    %v2782 = vadd.f32 %v2781, 1.0
    %v2783 = vrcp.pop %v2782
    %v2784 = vmul.f32 1.0, %v2783
    %v2785 = vmul.f32 %v2777, %v2722
    %v2786 = vmul.f32 %v2771, %v2778
    %v2787 = vadd.f32 %v2785, %v2786
    %v2788 = vtanh.pop %v2787
    %v2789 = vmul.f32 %v2784, %v2788
    %2790 = vst [vmem:[#allocation5 + $0x8] sm:$0xff] %v2787
    %2791 = vst [vmem:[#allocation4 + $0x8] sm:$0xff] %v2789
    %2792 = vst [vmem:[#allocation3 + $0x28] sm:$0xff] %v2789
    %v2793 = vld [vmem:[#allocation4] sm:$0xff]
    %v2794 = vld [vmem:[#allocation4 + $0x8] sm:$0xff]
    %v2795 = vpack.c.bf16 %v2793, %v2793
    %v2796 = vpack.c.bf16 %v2794, %v2794
    %2797 = vmatprep.subr.bf16.mxu0 %v1158
    %2798 = vmatpush1.bf16.msra.mxu0 %v1157
    %2799 = vmatprep.subr.bf16.mxu0 %v1150
    %2800 = vmatpush1.bf16.msra.mxu0 %v1149
    %2801 = vmatprep.subr.bf16.mxu0 %v1142
    %2802 = vmatpush1.bf16.msra.mxu0 %v1141
    %2803 = vmatprep.subr.bf16.mxu0 %v1134
    %2804 = vmatpush1.bf16.msra.mxu0 %v1133
    %2805 = vmatprep.subr.bf16.mxu0 %v1126
    %2806 = vmatpush1.bf16.msra.mxu0 %v1125
    %2807 = vmatprep.subr.bf16.mxu0 %v1118
    %2808 = vmatpush1.bf16.msra.mxu0 %v1117
    %2809 = vmatprep.subr.bf16.mxu0 %v1110
    %2810 = vmatpush1.bf16.msra.mxu0 %v1109
    %2811 = vmatprep.subr.bf16.mxu0 %v1102
    %2812 = vmatpush1.bf16.msra.mxu0 %v1101
    %2813 = vmatprep.subr.bf16.mxu0 %v1222
    %2814 = vmatpush2.bf16.msra.mxu0 %v1221
    %2815 = vmatprep.subr.bf16.mxu0 %v1214
    %2816 = vmatpush2.bf16.msra.mxu0 %v1213
    %2817 = vmatprep.subr.bf16.mxu0 %v1206
    %2818 = vmatpush2.bf16.msra.mxu0 %v1205
    %2819 = vmatprep.subr.bf16.mxu0 %v1198
    %2820 = vmatpush2.bf16.msra.mxu0 %v1197
    %2821 = vmatprep.subr.bf16.mxu0 %v1190
    %2822 = vmatpush2.bf16.msra.mxu0 %v1189
    %2823 = vmatprep.subr.bf16.mxu0 %v1182
    %2824 = vmatpush2.bf16.msra.mxu0 %v1181
    %2825 = vmatprep.subr.bf16.mxu0 %v1174
    %2826 = vmatpush2.bf16.msra.mxu0 %v1173
    %2827 = vmatprep.subr.bf16.mxu0 %v1166
    %2828 = vmatpush2.bf16.msra.mxu0 %v1165
    %2829 = vmatprep.mubr.bf16.mxu0 %v2796
    %2830 = vmatmul.mubr.bf16.gmra.mxu0 %v2795
    %v2831 = vpop.f32.mrf.mxu0
    %v2832 = vadd.f32 0.0, %v2831
    %v2833 = vpop.f32.mrf.mxu0
    %v2834 = vadd.f32 0.0, %v2833
    %v2835 = vpop.f32.mrf.mxu0
    %v2836 = vpop.f32.mrf.mxu0
    %2837 = vdwg.mxu0
    %2838 = vmatprep.subr.bf16.mxu0 %v1160
    %2839 = vmatpush1.bf16.msra.mxu0 %v1159
    %2840 = vmatprep.subr.bf16.mxu0 %v1152
    %2841 = vmatpush1.bf16.msra.mxu0 %v1151
    %2842 = vmatprep.subr.bf16.mxu0 %v1144
    %2843 = vmatpush1.bf16.msra.mxu0 %v1143
    %2844 = vmatprep.subr.bf16.mxu0 %v1136
    %2845 = vmatpush1.bf16.msra.mxu0 %v1135
    %2846 = vmatprep.subr.bf16.mxu0 %v1128
    %2847 = vmatpush1.bf16.msra.mxu0 %v1127
    %2848 = vmatprep.subr.bf16.mxu0 %v1120
    %2849 = vmatpush1.bf16.msra.mxu0 %v1119
    %2850 = vmatprep.subr.bf16.mxu0 %v1112
    %2851 = vmatpush1.bf16.msra.mxu0 %v1111
    %2852 = vmatprep.subr.bf16.mxu0 %v1104
    %2853 = vmatpush1.bf16.msra.mxu0 %v1103
    %2854 = vmatprep.subr.bf16.mxu0 %v1224
    %2855 = vmatpush2.bf16.msra.mxu0 %v1223
    %2856 = vmatprep.subr.bf16.mxu0 %v1216
    %2857 = vmatpush2.bf16.msra.mxu0 %v1215
    %2858 = vmatprep.subr.bf16.mxu0 %v1208
    %2859 = vmatpush2.bf16.msra.mxu0 %v1207
    %2860 = vmatprep.subr.bf16.mxu0 %v1200
    %2861 = vmatpush2.bf16.msra.mxu0 %v1199
    %2862 = vmatprep.subr.bf16.mxu0 %v1192
    %2863 = vmatpush2.bf16.msra.mxu0 %v1191
    %2864 = vmatprep.subr.bf16.mxu0 %v1184
    %2865 = vmatpush2.bf16.msra.mxu0 %v1183
    %2866 = vmatprep.subr.bf16.mxu0 %v1176
    %2867 = vmatpush2.bf16.msra.mxu0 %v1175
    %2868 = vmatprep.subr.bf16.mxu0 %v1168
    %2869 = vmatpush2.bf16.msra.mxu0 %v1167
    %2870 = vmatprep.mubr.bf16.mxu0 %v2796
    %2871 = vmatmul.mubr.bf16.gmra.mxu0 %v2795
    %v2872 = vpop.f32.mrf.mxu0
    %v2873 = vadd.f32 0.0, %v2872
    %v2874 = vpop.f32.mrf.mxu0
    %v2875 = vadd.f32 0.0, %v2874
    %v2876 = vpop.f32.mrf.mxu0
    %v2877 = vpop.f32.mrf.mxu0
    %2878 = vdwg.mxu0
    %2879 = vmatprep.subr.bf16.mxu0 %v1162
    %2880 = vmatpush1.bf16.msra.mxu0 %v1161
    %2881 = vmatprep.subr.bf16.mxu0 %v1154
    %2882 = vmatpush1.bf16.msra.mxu0 %v1153
    %2883 = vmatprep.subr.bf16.mxu0 %v1146
    %2884 = vmatpush1.bf16.msra.mxu0 %v1145
    %2885 = vmatprep.subr.bf16.mxu0 %v1138
    %2886 = vmatpush1.bf16.msra.mxu0 %v1137
    %2887 = vmatprep.subr.bf16.mxu0 %v1130
    %2888 = vmatpush1.bf16.msra.mxu0 %v1129
    %2889 = vmatprep.subr.bf16.mxu0 %v1122
    %2890 = vmatpush1.bf16.msra.mxu0 %v1121
    %2891 = vmatprep.subr.bf16.mxu0 %v1114
    %2892 = vmatpush1.bf16.msra.mxu0 %v1113
    %2893 = vmatprep.subr.bf16.mxu0 %v1106
    %2894 = vmatpush1.bf16.msra.mxu0 %v1105
    %2895 = vmatprep.subr.bf16.mxu0 %v1226
    %2896 = vmatpush2.bf16.msra.mxu0 %v1225
    %2897 = vmatprep.subr.bf16.mxu0 %v1218
    %2898 = vmatpush2.bf16.msra.mxu0 %v1217
    %2899 = vmatprep.subr.bf16.mxu0 %v1210
    %2900 = vmatpush2.bf16.msra.mxu0 %v1209
    %2901 = vmatprep.subr.bf16.mxu0 %v1202
    %2902 = vmatpush2.bf16.msra.mxu0 %v1201
    %2903 = vmatprep.subr.bf16.mxu0 %v1194
    %2904 = vmatpush2.bf16.msra.mxu0 %v1193
    %2905 = vmatprep.subr.bf16.mxu0 %v1186
    %2906 = vmatpush2.bf16.msra.mxu0 %v1185
    %2907 = vmatprep.subr.bf16.mxu0 %v1178
    %2908 = vmatpush2.bf16.msra.mxu0 %v1177
    %2909 = vmatprep.subr.bf16.mxu0 %v1170
    %2910 = vmatpush2.bf16.msra.mxu0 %v1169
    %2911 = vmatprep.mubr.bf16.mxu0 %v2796
    %2912 = vmatmul.mubr.bf16.gmra.mxu0 %v2795
    %v2913 = vpop.f32.mrf.mxu0
    %v2914 = vadd.f32 0.0, %v2913
    %v2915 = vpop.f32.mrf.mxu0
    %v2916 = vadd.f32 0.0, %v2915
    %v2917 = vpop.f32.mrf.mxu0
    %v2918 = vpop.f32.mrf.mxu0
    %2919 = vdwg.mxu0
    %2920 = vmatprep.subr.bf16.mxu0 %v1164
    %2921 = vmatpush1.bf16.msra.mxu0 %v1163
    %2922 = vmatprep.subr.bf16.mxu0 %v1156
    %2923 = vmatpush1.bf16.msra.mxu0 %v1155
    %2924 = vmatprep.subr.bf16.mxu0 %v1148
    %2925 = vmatpush1.bf16.msra.mxu0 %v1147
    %2926 = vmatprep.subr.bf16.mxu0 %v1140
    %2927 = vmatpush1.bf16.msra.mxu0 %v1139
    %2928 = vmatprep.subr.bf16.mxu0 %v1132
    %2929 = vmatpush1.bf16.msra.mxu0 %v1131
    %2930 = vmatprep.subr.bf16.mxu0 %v1124
    %2931 = vmatpush1.bf16.msra.mxu0 %v1123
    %2932 = vmatprep.subr.bf16.mxu0 %v1116
    %2933 = vmatpush1.bf16.msra.mxu0 %v1115
    %2934 = vmatprep.subr.bf16.mxu0 %v1108
    %2935 = vmatpush1.bf16.msra.mxu0 %v1107
    %2936 = vmatprep.subr.bf16.mxu0 %v1228
    %2937 = vmatpush2.bf16.msra.mxu0 %v1227
    %2938 = vmatprep.subr.bf16.mxu0 %v1220
    %2939 = vmatpush2.bf16.msra.mxu0 %v1219
    %2940 = vmatprep.subr.bf16.mxu0 %v1212
    %2941 = vmatpush2.bf16.msra.mxu0 %v1211
    %2942 = vmatprep.subr.bf16.mxu0 %v1204
    %2943 = vmatpush2.bf16.msra.mxu0 %v1203
    %2944 = vmatprep.subr.bf16.mxu0 %v1196
    %2945 = vmatpush2.bf16.msra.mxu0 %v1195
    %2946 = vmatprep.subr.bf16.mxu0 %v1188
    %2947 = vmatpush2.bf16.msra.mxu0 %v1187
    %2948 = vmatprep.subr.bf16.mxu0 %v1180
    %2949 = vmatpush2.bf16.msra.mxu0 %v1179
    %2950 = vmatprep.subr.bf16.mxu0 %v1172
    %2951 = vmatpush2.bf16.msra.mxu0 %v1171
    %2952 = vmatprep.mubr.bf16.mxu0 %v2796
    %2953 = vmatmul.mubr.bf16.gmra.mxu0 %v2795
    %v2954 = vpop.f32.mrf.mxu0
    %v2955 = vadd.f32 0.0, %v2954
    %v2956 = vpop.f32.mrf.mxu0
    %v2957 = vadd.f32 0.0, %v2956
    %v2958 = vpop.f32.mrf.mxu0
    %v2959 = vpop.f32.mrf.mxu0
    %2960 = vdwg.mxu0
    %v2961 = vld [vmem:[#allocation5] sm:$0xff]
    %v2962 = vld [vmem:[#allocation5 + $0x8] sm:$0xff]
    %v2963 = vld [vmem:[#allocation2 + $0x180] sm:$0xff]
    %v2964 = vld [vmem:[#allocation2 + $0x188] sm:$0xff]
    %v2965 = vld [vmem:[#allocation2 + $0x190] sm:$0xff]
    %v2966 = vld [vmem:[#allocation2 + $0x198] sm:$0xff]
    %v2967 = vadd.f32 %v2963, %v2832
    %v2968 = vadd.f32 %v2964, %v2834
    %v2969 = vadd.f32 %v2965, %v2873
    %v2970 = vadd.f32 %v2966, %v2875
    %v2971 = vxor.u32 %v2967, 2147483648
    %v2972 = vmul.f32 %v2971, 1.442695
    %v2973 = vpow.pop %v2972
    %v2974 = vadd.f32 %v2973, 1.0
    %v2975 = vrcp.pop %v2974
    %v2976 = vmul.f32 1.0, %v2975
    %v2977 = vxor.u32 %v2968, 2147483648
    %v2978 = vmul.f32 %v2977, 1.442695
    %v2979 = vpow.pop %v2978
    %v2980 = vadd.f32 %v2979, 1.0
    %v2981 = vrcp.pop %v2980
    %v2982 = vmul.f32 1.0, %v2981
    %v2983 = vtanh.pop %v2969
    %v2984 = vxor.u32 %v2970, 2147483648
    %v2985 = vmul.f32 %v2984, 1.442695
    %v2986 = vpow.pop %v2985
    %v2987 = vadd.f32 %v2986, 1.0
    %v2988 = vrcp.pop %v2987
    %v2989 = vmul.f32 1.0, %v2988
    %v2990 = vmul.f32 %v2982, %v2961
    %v2991 = vmul.f32 %v2976, %v2983
    %v2992 = vadd.f32 %v2990, %v2991
    %v2993 = vtanh.pop %v2992
    %v2994 = vmul.f32 %v2989, %v2993
    %2995 = vst [vmem:[#allocation5] sm:$0xff] %v2992
    %2996 = vst [vmem:[#allocation4] sm:$0xff] %v2994
    %2997 = vst [vmem:[#allocation3 + $0x60] sm:$0xff] %v2994
    %v2998 = vld [vmem:[#allocation2 + $0x60] sm:$0xff]
    %v2999 = vld [vmem:[#allocation2 + $0x68] sm:$0xff]
    %v3000 = vld [vmem:[#allocation2 + $0x70] sm:$0xff]
    %v3001 = vld [vmem:[#allocation2 + $0x78] sm:$0xff]
    %v3002 = vadd.f32 %v2998, %v2914
    %v3003 = vadd.f32 %v2999, %v2916
    %v3004 = vadd.f32 %v3000, %v2955
    %v3005 = vadd.f32 %v3001, %v2957
    %v3006 = vxor.u32 %v3002, 2147483648
    %v3007 = vmul.f32 %v3006, 1.442695
    %v3008 = vpow.pop %v3007
    %v3009 = vadd.f32 %v3008, 1.0
    %v3010 = vrcp.pop %v3009
    %v3011 = vmul.f32 1.0, %v3010
    %v3012 = vxor.u32 %v3003, 2147483648
    %v3013 = vmul.f32 %v3012, 1.442695
    %v3014 = vpow.pop %v3013
    %v3015 = vadd.f32 %v3014, 1.0
    %v3016 = vrcp.pop %v3015
    %v3017 = vmul.f32 1.0, %v3016
    %v3018 = vtanh.pop %v3004
    %v3019 = vxor.u32 %v3005, 2147483648
    %v3020 = vmul.f32 %v3019, 1.442695
    %v3021 = vpow.pop %v3020
    %v3022 = vadd.f32 %v3021, 1.0
    %v3023 = vrcp.pop %v3022
    %v3024 = vmul.f32 1.0, %v3023
    %v3025 = vmul.f32 %v3017, %v2962
    %v3026 = vmul.f32 %v3011, %v3018
    %v3027 = vadd.f32 %v3025, %v3026
    %v3028 = vtanh.pop %v3027
    %v3029 = vmul.f32 %v3024, %v3028
    %3030 = vst [vmem:[#allocation5 + $0x8] sm:$0xff] %v3027
    %3031 = vst [vmem:[#allocation4 + $0x8] sm:$0xff] %v3029
    %3032 = vst [vmem:[#allocation3 + $0x18] sm:$0xff] %v3029
    %v3033 = vld [vmem:[#allocation4] sm:$0xff]
    %v3034 = vld [vmem:[#allocation4 + $0x8] sm:$0xff]
    %v3035 = vpack.c.bf16 %v3033, %v3033
    %v3036 = vpack.c.bf16 %v3034, %v3034
    %3037 = vmatprep.subr.bf16.mxu0 %v1158
    %3038 = vmatpush1.bf16.msra.mxu0 %v1157
    %3039 = vmatprep.subr.bf16.mxu0 %v1150
    %3040 = vmatpush1.bf16.msra.mxu0 %v1149
    %3041 = vmatprep.subr.bf16.mxu0 %v1142
    %3042 = vmatpush1.bf16.msra.mxu0 %v1141
    %3043 = vmatprep.subr.bf16.mxu0 %v1134
    %3044 = vmatpush1.bf16.msra.mxu0 %v1133
    %3045 = vmatprep.subr.bf16.mxu0 %v1126
    %3046 = vmatpush1.bf16.msra.mxu0 %v1125
    %3047 = vmatprep.subr.bf16.mxu0 %v1118
    %3048 = vmatpush1.bf16.msra.mxu0 %v1117
    %3049 = vmatprep.subr.bf16.mxu0 %v1110
    %3050 = vmatpush1.bf16.msra.mxu0 %v1109
    %3051 = vmatprep.subr.bf16.mxu0 %v1102
    %3052 = vmatpush1.bf16.msra.mxu0 %v1101
    %3053 = vmatprep.subr.bf16.mxu0 %v1222
    %3054 = vmatpush2.bf16.msra.mxu0 %v1221
    %3055 = vmatprep.subr.bf16.mxu0 %v1214
    %3056 = vmatpush2.bf16.msra.mxu0 %v1213
    %3057 = vmatprep.subr.bf16.mxu0 %v1206
    %3058 = vmatpush2.bf16.msra.mxu0 %v1205
    %3059 = vmatprep.subr.bf16.mxu0 %v1198
    %3060 = vmatpush2.bf16.msra.mxu0 %v1197
    %3061 = vmatprep.subr.bf16.mxu0 %v1190
    %3062 = vmatpush2.bf16.msra.mxu0 %v1189
    %3063 = vmatprep.subr.bf16.mxu0 %v1182
    %3064 = vmatpush2.bf16.msra.mxu0 %v1181
    %3065 = vmatprep.subr.bf16.mxu0 %v1174
    %3066 = vmatpush2.bf16.msra.mxu0 %v1173
    %3067 = vmatprep.subr.bf16.mxu0 %v1166
    %3068 = vmatpush2.bf16.msra.mxu0 %v1165
    %3069 = vmatprep.mubr.bf16.mxu0 %v3036
    %3070 = vmatmul.mubr.bf16.gmra.mxu0 %v3035
    %v3071 = vpop.f32.mrf.mxu0
    %v3072 = vadd.f32 0.0, %v3071
    %v3073 = vpop.f32.mrf.mxu0
    %v3074 = vadd.f32 0.0, %v3073
    %v3075 = vpop.f32.mrf.mxu0
    %v3076 = vpop.f32.mrf.mxu0
    %3077 = vdwg.mxu0
    %3078 = vmatprep.subr.bf16.mxu0 %v1160
    %3079 = vmatpush1.bf16.msra.mxu0 %v1159
    %3080 = vmatprep.subr.bf16.mxu0 %v1152
    %3081 = vmatpush1.bf16.msra.mxu0 %v1151
    %3082 = vmatprep.subr.bf16.mxu0 %v1144
    %3083 = vmatpush1.bf16.msra.mxu0 %v1143
    %3084 = vmatprep.subr.bf16.mxu0 %v1136
    %3085 = vmatpush1.bf16.msra.mxu0 %v1135
    %3086 = vmatprep.subr.bf16.mxu0 %v1128
    %3087 = vmatpush1.bf16.msra.mxu0 %v1127
    %3088 = vmatprep.subr.bf16.mxu0 %v1120
    %3089 = vmatpush1.bf16.msra.mxu0 %v1119
    %3090 = vmatprep.subr.bf16.mxu0 %v1112
    %3091 = vmatpush1.bf16.msra.mxu0 %v1111
    %3092 = vmatprep.subr.bf16.mxu0 %v1104
    %3093 = vmatpush1.bf16.msra.mxu0 %v1103
    %3094 = vmatprep.subr.bf16.mxu0 %v1224
    %3095 = vmatpush2.bf16.msra.mxu0 %v1223
    %3096 = vmatprep.subr.bf16.mxu0 %v1216
    %3097 = vmatpush2.bf16.msra.mxu0 %v1215
    %3098 = vmatprep.subr.bf16.mxu0 %v1208
    %3099 = vmatpush2.bf16.msra.mxu0 %v1207
    %3100 = vmatprep.subr.bf16.mxu0 %v1200
    %3101 = vmatpush2.bf16.msra.mxu0 %v1199
    %3102 = vmatprep.subr.bf16.mxu0 %v1192
    %3103 = vmatpush2.bf16.msra.mxu0 %v1191
    %3104 = vmatprep.subr.bf16.mxu0 %v1184
    %3105 = vmatpush2.bf16.msra.mxu0 %v1183
    %3106 = vmatprep.subr.bf16.mxu0 %v1176
    %3107 = vmatpush2.bf16.msra.mxu0 %v1175
    %3108 = vmatprep.subr.bf16.mxu0 %v1168
    %3109 = vmatpush2.bf16.msra.mxu0 %v1167
    %3110 = vmatprep.mubr.bf16.mxu0 %v3036
    %3111 = vmatmul.mubr.bf16.gmra.mxu0 %v3035
    %v3112 = vpop.f32.mrf.mxu0
    %v3113 = vadd.f32 0.0, %v3112
    %v3114 = vpop.f32.mrf.mxu0
    %v3115 = vadd.f32 0.0, %v3114
    %v3116 = vpop.f32.mrf.mxu0
    %v3117 = vpop.f32.mrf.mxu0
    %3118 = vdwg.mxu0
    %3119 = vmatprep.subr.bf16.mxu0 %v1162
    %3120 = vmatpush1.bf16.msra.mxu0 %v1161
    %3121 = vmatprep.subr.bf16.mxu0 %v1154
    %3122 = vmatpush1.bf16.msra.mxu0 %v1153
    %3123 = vmatprep.subr.bf16.mxu0 %v1146
    %3124 = vmatpush1.bf16.msra.mxu0 %v1145
    %3125 = vmatprep.subr.bf16.mxu0 %v1138
    %3126 = vmatpush1.bf16.msra.mxu0 %v1137
    %3127 = vmatprep.subr.bf16.mxu0 %v1130
    %3128 = vmatpush1.bf16.msra.mxu0 %v1129
    %3129 = vmatprep.subr.bf16.mxu0 %v1122
    %3130 = vmatpush1.bf16.msra.mxu0 %v1121
    %3131 = vmatprep.subr.bf16.mxu0 %v1114
    %3132 = vmatpush1.bf16.msra.mxu0 %v1113
    %3133 = vmatprep.subr.bf16.mxu0 %v1106
    %3134 = vmatpush1.bf16.msra.mxu0 %v1105
    %3135 = vmatprep.subr.bf16.mxu0 %v1226
    %3136 = vmatpush2.bf16.msra.mxu0 %v1225
    %3137 = vmatprep.subr.bf16.mxu0 %v1218
    %3138 = vmatpush2.bf16.msra.mxu0 %v1217
    %3139 = vmatprep.subr.bf16.mxu0 %v1210
    %3140 = vmatpush2.bf16.msra.mxu0 %v1209
    %3141 = vmatprep.subr.bf16.mxu0 %v1202
    %3142 = vmatpush2.bf16.msra.mxu0 %v1201
    %3143 = vmatprep.subr.bf16.mxu0 %v1194
    %3144 = vmatpush2.bf16.msra.mxu0 %v1193
    %3145 = vmatprep.subr.bf16.mxu0 %v1186
    %3146 = vmatpush2.bf16.msra.mxu0 %v1185
    %3147 = vmatprep.subr.bf16.mxu0 %v1178
    %3148 = vmatpush2.bf16.msra.mxu0 %v1177
    %3149 = vmatprep.subr.bf16.mxu0 %v1170
    %3150 = vmatpush2.bf16.msra.mxu0 %v1169
    %3151 = vmatprep.mubr.bf16.mxu0 %v3036
    %3152 = vmatmul.mubr.bf16.gmra.mxu0 %v3035
    %v3153 = vpop.f32.mrf.mxu0
    %v3154 = vadd.f32 0.0, %v3153
    %v3155 = vpop.f32.mrf.mxu0
    %v3156 = vadd.f32 0.0, %v3155
    %v3157 = vpop.f32.mrf.mxu0
    %v3158 = vpop.f32.mrf.mxu0
    %3159 = vdwg.mxu0
    %3160 = vmatprep.subr.bf16.mxu0 %v1164
    %3161 = vmatpush1.bf16.msra.mxu0 %v1163
    %3162 = vmatprep.subr.bf16.mxu0 %v1156
    %3163 = vmatpush1.bf16.msra.mxu0 %v1155
    %3164 = vmatprep.subr.bf16.mxu0 %v1148
    %3165 = vmatpush1.bf16.msra.mxu0 %v1147
    %3166 = vmatprep.subr.bf16.mxu0 %v1140
    %3167 = vmatpush1.bf16.msra.mxu0 %v1139
    %3168 = vmatprep.subr.bf16.mxu0 %v1132
    %3169 = vmatpush1.bf16.msra.mxu0 %v1131
    %3170 = vmatprep.subr.bf16.mxu0 %v1124
    %3171 = vmatpush1.bf16.msra.mxu0 %v1123
    %3172 = vmatprep.subr.bf16.mxu0 %v1116
    %3173 = vmatpush1.bf16.msra.mxu0 %v1115
    %3174 = vmatprep.subr.bf16.mxu0 %v1108
    %3175 = vmatpush1.bf16.msra.mxu0 %v1107
    %3176 = vmatprep.subr.bf16.mxu0 %v1228
    %3177 = vmatpush2.bf16.msra.mxu0 %v1227
    %3178 = vmatprep.subr.bf16.mxu0 %v1220
    %3179 = vmatpush2.bf16.msra.mxu0 %v1219
    %3180 = vmatprep.subr.bf16.mxu0 %v1212
    %3181 = vmatpush2.bf16.msra.mxu0 %v1211
    %3182 = vmatprep.subr.bf16.mxu0 %v1204
    %3183 = vmatpush2.bf16.msra.mxu0 %v1203
    %3184 = vmatprep.subr.bf16.mxu0 %v1196
    %3185 = vmatpush2.bf16.msra.mxu0 %v1195
    %3186 = vmatprep.subr.bf16.mxu0 %v1188
    %3187 = vmatpush2.bf16.msra.mxu0 %v1187
    %3188 = vmatprep.subr.bf16.mxu0 %v1180
    %3189 = vmatpush2.bf16.msra.mxu0 %v1179
    %3190 = vmatprep.subr.bf16.mxu0 %v1172
    %3191 = vmatpush2.bf16.msra.mxu0 %v1171
    %3192 = vmatprep.mubr.bf16.mxu0 %v3036
    %3193 = vmatmul.mubr.bf16.gmra.mxu0 %v3035
    %v3194 = vpop.f32.mrf.mxu0
    %v3195 = vadd.f32 0.0, %v3194
    %v3196 = vpop.f32.mrf.mxu0
    %v3197 = vadd.f32 0.0, %v3196
    %v3198 = vpop.f32.mrf.mxu0
    %v3199 = vpop.f32.mrf.mxu0
    %3200 = vdwg.mxu0
    %v3201 = vld [vmem:[#allocation5] sm:$0xff]
    %v3202 = vld [vmem:[#allocation5 + $0x8] sm:$0xff]
    %v3203 = vld [vmem:[#allocation2 + $0x1c0] sm:$0xff]
    %v3204 = vld [vmem:[#allocation2 + $0x1c8] sm:$0xff]
    %v3205 = vld [vmem:[#allocation2 + $0x1d0] sm:$0xff]
    %v3206 = vld [vmem:[#allocation2 + $0x1d8] sm:$0xff]
    %v3207 = vadd.f32 %v3203, %v3072
    %v3208 = vadd.f32 %v3204, %v3074
    %v3209 = vadd.f32 %v3205, %v3113
    %v3210 = vadd.f32 %v3206, %v3115
    %v3211 = vxor.u32 %v3207, 2147483648
    %v3212 = vmul.f32 %v3211, 1.442695
    %v3213 = vpow.pop %v3212
    %v3214 = vadd.f32 %v3213, 1.0
    %v3215 = vrcp.pop %v3214
    %v3216 = vmul.f32 1.0, %v3215
    %v3217 = vxor.u32 %v3208, 2147483648
    %v3218 = vmul.f32 %v3217, 1.442695
    %v3219 = vpow.pop %v3218
    %v3220 = vadd.f32 %v3219, 1.0
    %v3221 = vrcp.pop %v3220
    %v3222 = vmul.f32 1.0, %v3221
    %v3223 = vtanh.pop %v3209
    %v3224 = vxor.u32 %v3210, 2147483648
    %v3225 = vmul.f32 %v3224, 1.442695
    %v3226 = vpow.pop %v3225
    %v3227 = vadd.f32 %v3226, 1.0
    %v3228 = vrcp.pop %v3227
    %v3229 = vmul.f32 1.0, %v3228
    %v3230 = vmul.f32 %v3222, %v3201
    %v3231 = vmul.f32 %v3216, %v3223
    %v3232 = vadd.f32 %v3230, %v3231
    %v3233 = vtanh.pop %v3232
    %v3234 = vmul.f32 %v3229, %v3233
    %3235 = vst [vmem:[#allocation5] sm:$0xff] %v3232
    %3236 = vst [vmem:[#allocation4] sm:$0xff] %v3234
    %3237 = vst [vmem:[#allocation3 + $0x70] sm:$0xff] %v3234
    %v3238 = vld [vmem:[#allocation2 + $0x20] sm:$0xff]
    %v3239 = vld [vmem:[#allocation2 + $0x28] sm:$0xff]
    %v3240 = vld [vmem:[#allocation2 + $0x30] sm:$0xff]
    %v3241 = vld [vmem:[#allocation2 + $0x38] sm:$0xff]
    %v3242 = vadd.f32 %v3238, %v3154
    %v3243 = vadd.f32 %v3239, %v3156
    %v3244 = vadd.f32 %v3240, %v3195
    %v3245 = vadd.f32 %v3241, %v3197
    %v3246 = vxor.u32 %v3242, 2147483648
    %v3247 = vmul.f32 %v3246, 1.442695
    %v3248 = vpow.pop %v3247
    %v3249 = vadd.f32 %v3248, 1.0
    %v3250 = vrcp.pop %v3249
    %v3251 = vmul.f32 1.0, %v3250
    %v3252 = vxor.u32 %v3243, 2147483648
    %v3253 = vmul.f32 %v3252, 1.442695
    %v3254 = vpow.pop %v3253
    %v3255 = vadd.f32 %v3254, 1.0
    %v3256 = vrcp.pop %v3255
    %v3257 = vmul.f32 1.0, %v3256
    %v3258 = vtanh.pop %v3244
    %v3259 = vxor.u32 %v3245, 2147483648
    %v3260 = vmul.f32 %v3259, 1.442695
    %v3261 = vpow.pop %v3260
    %v3262 = vadd.f32 %v3261, 1.0
    %v3263 = vrcp.pop %v3262
    %v3264 = vmul.f32 1.0, %v3263
    %v3265 = vmul.f32 %v3257, %v3202
    %v3266 = vmul.f32 %v3251, %v3258
    %v3267 = vadd.f32 %v3265, %v3266
    %v3268 = vtanh.pop %v3267
    %v3269 = vmul.f32 %v3264, %v3268
    %3270 = vst [vmem:[#allocation5 + $0x8] sm:$0xff] %v3267
    %3271 = vst [vmem:[#allocation4 + $0x8] sm:$0xff] %v3269
    %3272 = vst [vmem:[#allocation3 + $0x8] sm:$0xff] %v3269
    %v3273 = vld [vmem:[#allocation3] sm:$0xff]
    %v3274 = vld [vmem:[#allocation3 + $0x8] sm:$0xff]
    %v3275 = vld [vmem:[#allocation3 + $0x10] sm:$0xff]
    %v3276 = vld [vmem:[#allocation3 + $0x18] sm:$0xff]
    %v3277 = vld [vmem:[#allocation3 + $0x20] sm:$0xff]
    %v3278 = vld [vmem:[#allocation3 + $0x28] sm:$0xff]
    %v3279 = vld [vmem:[#allocation3 + $0x30] sm:$0xff]
    %v3280 = vld [vmem:[#allocation3 + $0x38] sm:$0xff]
    %v3281 = vld [vmem:[#allocation3 + $0x40] sm:$0xff]
    %v3282 = vld [vmem:[#allocation3 + $0x48] sm:$0xff]
    %v3283 = vld [vmem:[#allocation3 + $0x50] sm:$0xff]
    %v3284 = vld [vmem:[#allocation3 + $0x58] sm:$0xff]
    %v3285 = vld [vmem:[#allocation3 + $0x60] sm:$0xff]
    %v3286 = vld [vmem:[#allocation3 + $0x68] sm:$0xff]
    %v3287 = vld [vmem:[#allocation3 + $0x70] sm:$0xff]
    %v3288 = vld [vmem:[#allocation3 + $0x78] sm:$0xff]
    %v3289 = vpack.c.bf16 %v3275, %v3273
    %v3290 = vpack.c.bf16 %v3276, %v3274
    %v3291 = vpack.c.bf16 %v3279, %v3277
    %v3292 = vpack.c.bf16 %v3280, %v3278
    %v3293 = vpack.c.bf16 %v3283, %v3281
    %v3294 = vpack.c.bf16 %v3284, %v3282
    %v3295 = vpack.c.bf16 %v3287, %v3285
    %v3296 = vpack.c.bf16 %v3288, %v3286
    %v3297 = vld [vmem:[#allocation8] sm:$0xff]
    %v3298 = vld [vmem:[#allocation8 + $0x8] sm:$0xff]
    %v3299 = vld [vmem:[#allocation8 + $0x10] sm:$0xff]
    %v3300 = vld [vmem:[#allocation8 + $0x18] sm:$0xff]
    %v3301 = vld [vmem:[#allocation8 + $0x20] sm:$0xff]
    %v3302 = vld [vmem:[#allocation8 + $0x28] sm:$0xff]
    %v3303 = vld [vmem:[#allocation8 + $0x30] sm:$0xff]
    %v3304 = vld [vmem:[#allocation8 + $0x38] sm:$0xff]
    %v3305 = vld [vmem:[#allocation8 + $0x40] sm:$0xff]
    %v3306 = vld [vmem:[#allocation8 + $0x48] sm:$0xff]
    %v3307 = vld [vmem:[#allocation8 + $0x50] sm:$0xff]
    %v3308 = vld [vmem:[#allocation8 + $0x58] sm:$0xff]
    %v3309 = vld [vmem:[#allocation8 + $0x60] sm:$0xff]
    %v3310 = vld [vmem:[#allocation8 + $0x68] sm:$0xff]
    %v3311 = vld [vmem:[#allocation8 + $0x70] sm:$0xff]
    %v3312 = vld [vmem:[#allocation8 + $0x78] sm:$0xff]
    %v3313 = vld [vmem:[#allocation8 + $0x80] sm:$0xff]
    %v3314 = vld [vmem:[#allocation8 + $0x88] sm:$0xff]
    %v3315 = vld [vmem:[#allocation8 + $0x90] sm:$0xff]
    %v3316 = vld [vmem:[#allocation8 + $0x98] sm:$0xff]
    %v3317 = vld [vmem:[#allocation8 + $0xa0] sm:$0xff]
    %v3318 = vld [vmem:[#allocation8 + $0xa8] sm:$0xff]
    %v3319 = vld [vmem:[#allocation8 + $0xb0] sm:$0xff]
    %v3320 = vld [vmem:[#allocation8 + $0xb8] sm:$0xff]
    %v3321 = vld [vmem:[#allocation8 + $0xc0] sm:$0xff]
    %v3322 = vld [vmem:[#allocation8 + $0xc8] sm:$0xff]
    %v3323 = vld [vmem:[#allocation8 + $0xd0] sm:$0xff]
    %v3324 = vld [vmem:[#allocation8 + $0xd8] sm:$0xff]
    %v3325 = vld [vmem:[#allocation8 + $0xe0] sm:$0xff]
    %v3326 = vld [vmem:[#allocation8 + $0xe8] sm:$0xff]
    %v3327 = vld [vmem:[#allocation8 + $0xf0] sm:$0xff]
    %v3328 = vld [vmem:[#allocation8 + $0xf8] sm:$0xff]
    %v3329 = vld [vmem:[#allocation8 + $0x100] sm:$0xff]
    %v3330 = vld [vmem:[#allocation8 + $0x108] sm:$0xff]
    %v3331 = vld [vmem:[#allocation8 + $0x110] sm:$0xff]
    %v3332 = vld [vmem:[#allocation8 + $0x118] sm:$0xff]
    %v3333 = vld [vmem:[#allocation8 + $0x120] sm:$0xff]
    %v3334 = vld [vmem:[#allocation8 + $0x128] sm:$0xff]
    %v3335 = vld [vmem:[#allocation8 + $0x130] sm:$0xff]
    %v3336 = vld [vmem:[#allocation8 + $0x138] sm:$0xff]
    %v3337 = vld [vmem:[#allocation8 + $0x140] sm:$0xff]
    %v3338 = vld [vmem:[#allocation8 + $0x148] sm:$0xff]
    %v3339 = vld [vmem:[#allocation8 + $0x150] sm:$0xff]
    %v3340 = vld [vmem:[#allocation8 + $0x158] sm:$0xff]
    %v3341 = vld [vmem:[#allocation8 + $0x160] sm:$0xff]
    %v3342 = vld [vmem:[#allocation8 + $0x168] sm:$0xff]
    %v3343 = vld [vmem:[#allocation8 + $0x170] sm:$0xff]
    %v3344 = vld [vmem:[#allocation8 + $0x178] sm:$0xff]
    %v3345 = vld [vmem:[#allocation8 + $0x180] sm:$0xff]
    %v3346 = vld [vmem:[#allocation8 + $0x188] sm:$0xff]
    %v3347 = vld [vmem:[#allocation8 + $0x190] sm:$0xff]
    %v3348 = vld [vmem:[#allocation8 + $0x198] sm:$0xff]
    %v3349 = vld [vmem:[#allocation8 + $0x1a0] sm:$0xff]
    %v3350 = vld [vmem:[#allocation8 + $0x1a8] sm:$0xff]
    %v3351 = vld [vmem:[#allocation8 + $0x1b0] sm:$0xff]
    %v3352 = vld [vmem:[#allocation8 + $0x1b8] sm:$0xff]
    %v3353 = vld [vmem:[#allocation8 + $0x1c0] sm:$0xff]
    %v3354 = vld [vmem:[#allocation8 + $0x1c8] sm:$0xff]
    %v3355 = vld [vmem:[#allocation8 + $0x1d0] sm:$0xff]
    %v3356 = vld [vmem:[#allocation8 + $0x1d8] sm:$0xff]
    %v3357 = vld [vmem:[#allocation8 + $0x1e0] sm:$0xff]
    %v3358 = vld [vmem:[#allocation8 + $0x1e8] sm:$0xff]
    %v3359 = vld [vmem:[#allocation8 + $0x1f0] sm:$0xff]
    %v3360 = vld [vmem:[#allocation8 + $0x1f8] sm:$0xff]
    %v3361 = vld [vmem:[#allocation8 + $0x200] sm:$0xff]
    %v3362 = vld [vmem:[#allocation8 + $0x208] sm:$0xff]
    %v3363 = vld [vmem:[#allocation8 + $0x210] sm:$0xff]
    %v3364 = vld [vmem:[#allocation8 + $0x218] sm:$0xff]
    %v3365 = vld [vmem:[#allocation8 + $0x220] sm:$0xff]
    %v3366 = vld [vmem:[#allocation8 + $0x228] sm:$0xff]
    %v3367 = vld [vmem:[#allocation8 + $0x230] sm:$0xff]
    %v3368 = vld [vmem:[#allocation8 + $0x238] sm:$0xff]
    %v3369 = vld [vmem:[#allocation8 + $0x240] sm:$0xff]
    %v3370 = vld [vmem:[#allocation8 + $0x248] sm:$0xff]
    %v3371 = vld [vmem:[#allocation8 + $0x250] sm:$0xff]
    %v3372 = vld [vmem:[#allocation8 + $0x258] sm:$0xff]
    %v3373 = vld [vmem:[#allocation8 + $0x260] sm:$0xff]
    %v3374 = vld [vmem:[#allocation8 + $0x268] sm:$0xff]
    %v3375 = vld [vmem:[#allocation8 + $0x270] sm:$0xff]
    %v3376 = vld [vmem:[#allocation8 + $0x278] sm:$0xff]
    %v3377 = vld [vmem:[#allocation8 + $0x280] sm:$0xff]
    %v3378 = vld [vmem:[#allocation8 + $0x288] sm:$0xff]
    %v3379 = vld [vmem:[#allocation8 + $0x290] sm:$0xff]
    %v3380 = vld [vmem:[#allocation8 + $0x298] sm:$0xff]
    %v3381 = vld [vmem:[#allocation8 + $0x2a0] sm:$0xff]
    %v3382 = vld [vmem:[#allocation8 + $0x2a8] sm:$0xff]
    %v3383 = vld [vmem:[#allocation8 + $0x2b0] sm:$0xff]
    %v3384 = vld [vmem:[#allocation8 + $0x2b8] sm:$0xff]
    %v3385 = vld [vmem:[#allocation8 + $0x2c0] sm:$0xff]
    %v3386 = vld [vmem:[#allocation8 + $0x2c8] sm:$0xff]
    %v3387 = vld [vmem:[#allocation8 + $0x2d0] sm:$0xff]
    %v3388 = vld [vmem:[#allocation8 + $0x2d8] sm:$0xff]
    %v3389 = vld [vmem:[#allocation8 + $0x2e0] sm:$0xff]
    %v3390 = vld [vmem:[#allocation8 + $0x2e8] sm:$0xff]
    %v3391 = vld [vmem:[#allocation8 + $0x2f0] sm:$0xff]
    %v3392 = vld [vmem:[#allocation8 + $0x2f8] sm:$0xff]
    %v3393 = vld [vmem:[#allocation8 + $0x300] sm:$0xff]
    %v3394 = vld [vmem:[#allocation8 + $0x308] sm:$0xff]
    %v3395 = vld [vmem:[#allocation8 + $0x310] sm:$0xff]
    %v3396 = vld [vmem:[#allocation8 + $0x318] sm:$0xff]
    %v3397 = vld [vmem:[#allocation8 + $0x320] sm:$0xff]
    %v3398 = vld [vmem:[#allocation8 + $0x328] sm:$0xff]
    %v3399 = vld [vmem:[#allocation8 + $0x330] sm:$0xff]
    %v3400 = vld [vmem:[#allocation8 + $0x338] sm:$0xff]
    %v3401 = vld [vmem:[#allocation8 + $0x340] sm:$0xff]
    %v3402 = vld [vmem:[#allocation8 + $0x348] sm:$0xff]
    %v3403 = vld [vmem:[#allocation8 + $0x350] sm:$0xff]
    %v3404 = vld [vmem:[#allocation8 + $0x358] sm:$0xff]
    %v3405 = vld [vmem:[#allocation8 + $0x360] sm:$0xff]
    %v3406 = vld [vmem:[#allocation8 + $0x368] sm:$0xff]
    %v3407 = vld [vmem:[#allocation8 + $0x370] sm:$0xff]
    %v3408 = vld [vmem:[#allocation8 + $0x378] sm:$0xff]
    %v3409 = vld [vmem:[#allocation8 + $0x380] sm:$0xff]
    %v3410 = vld [vmem:[#allocation8 + $0x388] sm:$0xff]
    %v3411 = vld [vmem:[#allocation8 + $0x390] sm:$0xff]
    %v3412 = vld [vmem:[#allocation8 + $0x398] sm:$0xff]
    %v3413 = vld [vmem:[#allocation8 + $0x3a0] sm:$0xff]
    %v3414 = vld [vmem:[#allocation8 + $0x3a8] sm:$0xff]
    %v3415 = vld [vmem:[#allocation8 + $0x3b0] sm:$0xff]
    %v3416 = vld [vmem:[#allocation8 + $0x3b8] sm:$0xff]
    %v3417 = vld [vmem:[#allocation8 + $0x3c0] sm:$0xff]
    %v3418 = vld [vmem:[#allocation8 + $0x3c8] sm:$0xff]
    %v3419 = vld [vmem:[#allocation8 + $0x3d0] sm:$0xff]
    %v3420 = vld [vmem:[#allocation8 + $0x3d8] sm:$0xff]
    %v3421 = vld [vmem:[#allocation8 + $0x3e0] sm:$0xff]
    %v3422 = vld [vmem:[#allocation8 + $0x3e8] sm:$0xff]
    %v3423 = vld [vmem:[#allocation8 + $0x3f0] sm:$0xff]
    %v3424 = vld [vmem:[#allocation8 + $0x3f8] sm:$0xff]
    %s3425 = scalar_lea.vmem %s4, 8
    %v3426 = vld [vmem:[%s3425] sm:$0xff]
    %v3428 = vlaneseq
    %v3429 = vshrl.u32 %v3428, 7
    %v3430 = vsub.s32 0, %v3429
    %v3431 = vrot.slane %v3426, %v3430
    %v3432 = vlaneseq
    %v3433 = vshrl.u32 %v3432, 7
    %v3434 = vsub.s32 1, %v3433
    %v3435 = vrot.slane %v3426, %v3434
    %v3436 = vlaneseq
    %v3437 = vshrl.u32 %v3436, 7
    %v3438 = vsub.s32 2, %v3437
    %v3439 = vrot.slane %v3426, %v3438
    %v3440 = vlaneseq
    %v3441 = vshrl.u32 %v3440, 7
    %v3442 = vsub.s32 3, %v3441
    %v3443 = vrot.slane %v3426, %v3442
    %v3444 = vlaneseq
    %v3445 = vshrl.u32 %v3444, 7
    %v3446 = vsub.s32 4, %v3445
    %v3447 = vrot.slane %v3426, %v3446
    %v3448 = vlaneseq
    %v3449 = vshrl.u32 %v3448, 7
    %v3450 = vsub.s32 5, %v3449
    %v3451 = vrot.slane %v3426, %v3450
    %v3452 = vlaneseq
    %v3453 = vshrl.u32 %v3452, 7
    %v3454 = vsub.s32 6, %v3453
    %v3455 = vrot.slane %v3426, %v3454
    %v3456 = vlaneseq
    %v3457 = vshrl.u32 %v3456, 7
    %v3458 = vsub.s32 7, %v3457
    %v3459 = vrot.slane %v3426, %v3458
    %v3596 = vunpack.c.l.b16 %v3297
    %v3597 = vunpack.c.h.b16 %v3297
    %v3598 = vunpack.c.l.b16 %v3298
    %v3599 = vunpack.c.h.b16 %v3298
    %v3600 = vunpack.c.l.b16 %v3299
    %v3601 = vunpack.c.h.b16 %v3299
    %v3602 = vunpack.c.l.b16 %v3300
    %v3603 = vunpack.c.h.b16 %v3300
    %v3604 = vunpack.c.l.b16 %v3301
    %v3605 = vunpack.c.h.b16 %v3301
    %v3606 = vunpack.c.l.b16 %v3302
    %v3607 = vunpack.c.h.b16 %v3302
    %v3608 = vunpack.c.l.b16 %v3303
    %v3609 = vunpack.c.h.b16 %v3303
    %v3610 = vunpack.c.l.b16 %v3304
    %v3611 = vunpack.c.h.b16 %v3304
    %v3612 = vunpack.c.l.b16 %v3305
    %v3613 = vunpack.c.h.b16 %v3305
    %v3614 = vunpack.c.l.b16 %v3306
    %v3615 = vunpack.c.h.b16 %v3306
    %v3616 = vunpack.c.l.b16 %v3307
    %v3617 = vunpack.c.h.b16 %v3307
    %v3618 = vunpack.c.l.b16 %v3308
    %v3619 = vunpack.c.h.b16 %v3308
    %v3620 = vunpack.c.l.b16 %v3309
    %v3621 = vunpack.c.h.b16 %v3309
    %v3622 = vunpack.c.l.b16 %v3310
    %v3623 = vunpack.c.h.b16 %v3310
    %v3624 = vunpack.c.l.b16 %v3311
    %v3625 = vunpack.c.h.b16 %v3311
    %v3626 = vunpack.c.l.b16 %v3312
    %v3627 = vunpack.c.h.b16 %v3312
    %v3628 = vunpack.c.l.b16 %v3313
    %v3629 = vunpack.c.h.b16 %v3313
    %v3630 = vunpack.c.l.b16 %v3314
    %v3631 = vunpack.c.h.b16 %v3314
    %v3632 = vunpack.c.l.b16 %v3315
    %v3633 = vunpack.c.h.b16 %v3315
    %v3634 = vunpack.c.l.b16 %v3316
    %v3635 = vunpack.c.h.b16 %v3316
    %v3636 = vunpack.c.l.b16 %v3317
    %v3637 = vunpack.c.h.b16 %v3317
    %v3638 = vunpack.c.l.b16 %v3318
    %v3639 = vunpack.c.h.b16 %v3318
    %v3640 = vunpack.c.l.b16 %v3319
    %v3641 = vunpack.c.h.b16 %v3319
    %v3642 = vunpack.c.l.b16 %v3320
    %v3643 = vunpack.c.h.b16 %v3320
    %v3644 = vunpack.c.l.b16 %v3321
    %v3645 = vunpack.c.h.b16 %v3321
    %v3646 = vunpack.c.l.b16 %v3322
    %v3647 = vunpack.c.h.b16 %v3322
    %v3648 = vunpack.c.l.b16 %v3323
    %v3649 = vunpack.c.h.b16 %v3323
    %v3650 = vunpack.c.l.b16 %v3324
    %v3651 = vunpack.c.h.b16 %v3324
    %v3652 = vunpack.c.l.b16 %v3325
    %v3653 = vunpack.c.h.b16 %v3325
    %v3654 = vunpack.c.l.b16 %v3326
    %v3655 = vunpack.c.h.b16 %v3326
    %v3656 = vunpack.c.l.b16 %v3327
    %v3657 = vunpack.c.h.b16 %v3327
    %v3658 = vunpack.c.l.b16 %v3328
    %v3659 = vunpack.c.h.b16 %v3328
    %v3660 = vunpack.c.l.b16 %v3329
    %v3661 = vunpack.c.h.b16 %v3329
    %v3662 = vunpack.c.l.b16 %v3330
    %v3663 = vunpack.c.h.b16 %v3330
    %v3664 = vunpack.c.l.b16 %v3331
    %v3665 = vunpack.c.h.b16 %v3331
    %v3666 = vunpack.c.l.b16 %v3332
    %v3667 = vunpack.c.h.b16 %v3332
    %v3668 = vunpack.c.l.b16 %v3333
    %v3669 = vunpack.c.h.b16 %v3333
    %v3670 = vunpack.c.l.b16 %v3334
    %v3671 = vunpack.c.h.b16 %v3334
    %v3672 = vunpack.c.l.b16 %v3335
    %v3673 = vunpack.c.h.b16 %v3335
    %v3674 = vunpack.c.l.b16 %v3336
    %v3675 = vunpack.c.h.b16 %v3336
    %v3676 = vunpack.c.l.b16 %v3337
    %v3677 = vunpack.c.h.b16 %v3337
    %v3678 = vunpack.c.l.b16 %v3338
    %v3679 = vunpack.c.h.b16 %v3338
    %v3680 = vunpack.c.l.b16 %v3339
    %v3681 = vunpack.c.h.b16 %v3339
    %v3682 = vunpack.c.l.b16 %v3340
    %v3683 = vunpack.c.h.b16 %v3340
    %v3684 = vunpack.c.l.b16 %v3341
    %v3685 = vunpack.c.h.b16 %v3341
    %v3686 = vunpack.c.l.b16 %v3342
    %v3687 = vunpack.c.h.b16 %v3342
    %v3688 = vunpack.c.l.b16 %v3343
    %v3689 = vunpack.c.h.b16 %v3343
    %v3690 = vunpack.c.l.b16 %v3344
    %v3691 = vunpack.c.h.b16 %v3344
    %v3692 = vunpack.c.l.b16 %v3345
    %v3693 = vunpack.c.h.b16 %v3345
    %v3694 = vunpack.c.l.b16 %v3346
    %v3695 = vunpack.c.h.b16 %v3346
    %v3696 = vunpack.c.l.b16 %v3347
    %v3697 = vunpack.c.h.b16 %v3347
    %v3698 = vunpack.c.l.b16 %v3348
    %v3699 = vunpack.c.h.b16 %v3348
    %v3700 = vunpack.c.l.b16 %v3349
    %v3701 = vunpack.c.h.b16 %v3349
    %v3702 = vunpack.c.l.b16 %v3350
    %v3703 = vunpack.c.h.b16 %v3350
    %v3704 = vunpack.c.l.b16 %v3351
    %v3705 = vunpack.c.h.b16 %v3351
    %v3706 = vunpack.c.l.b16 %v3352
    %v3707 = vunpack.c.h.b16 %v3352
    %v3708 = vunpack.c.l.b16 %v3353
    %v3709 = vunpack.c.h.b16 %v3353
    %v3710 = vunpack.c.l.b16 %v3354
    %v3711 = vunpack.c.h.b16 %v3354
    %v3712 = vunpack.c.l.b16 %v3355
    %v3713 = vunpack.c.h.b16 %v3355
    %v3714 = vunpack.c.l.b16 %v3356
    %v3715 = vunpack.c.h.b16 %v3356
    %v3716 = vunpack.c.l.b16 %v3357
    %v3717 = vunpack.c.h.b16 %v3357
    %v3718 = vunpack.c.l.b16 %v3358
    %v3719 = vunpack.c.h.b16 %v3358
    %v3720 = vunpack.c.l.b16 %v3359
    %v3721 = vunpack.c.h.b16 %v3359
    %v3722 = vunpack.c.l.b16 %v3360
    %v3723 = vunpack.c.h.b16 %v3360
    %v3724 = vunpack.c.l.b16 %v3361
    %v3725 = vunpack.c.h.b16 %v3361
    %v3726 = vunpack.c.l.b16 %v3362
    %v3727 = vunpack.c.h.b16 %v3362
    %v3728 = vunpack.c.l.b16 %v3363
    %v3729 = vunpack.c.h.b16 %v3363
    %v3730 = vunpack.c.l.b16 %v3364
    %v3731 = vunpack.c.h.b16 %v3364
    %v3732 = vunpack.c.l.b16 %v3365
    %v3733 = vunpack.c.h.b16 %v3365
    %v3734 = vunpack.c.l.b16 %v3366
    %v3735 = vunpack.c.h.b16 %v3366
    %v3736 = vunpack.c.l.b16 %v3367
    %v3737 = vunpack.c.h.b16 %v3367
    %v3738 = vunpack.c.l.b16 %v3368
    %v3739 = vunpack.c.h.b16 %v3368
    %v3740 = vunpack.c.l.b16 %v3369
    %v3741 = vunpack.c.h.b16 %v3369
    %v3742 = vunpack.c.l.b16 %v3370
    %v3743 = vunpack.c.h.b16 %v3370
    %v3744 = vunpack.c.l.b16 %v3371
    %v3745 = vunpack.c.h.b16 %v3371
    %v3746 = vunpack.c.l.b16 %v3372
    %v3747 = vunpack.c.h.b16 %v3372
    %v3748 = vunpack.c.l.b16 %v3373
    %v3749 = vunpack.c.h.b16 %v3373
    %v3750 = vunpack.c.l.b16 %v3374
    %v3751 = vunpack.c.h.b16 %v3374
    %v3752 = vunpack.c.l.b16 %v3375
    %v3753 = vunpack.c.h.b16 %v3375
    %v3754 = vunpack.c.l.b16 %v3376
    %v3755 = vunpack.c.h.b16 %v3376
    %v3756 = vunpack.c.l.b16 %v3377
    %v3757 = vunpack.c.h.b16 %v3377
    %v3758 = vunpack.c.l.b16 %v3378
    %v3759 = vunpack.c.h.b16 %v3378
    %v3760 = vunpack.c.l.b16 %v3379
    %v3761 = vunpack.c.h.b16 %v3379
    %v3762 = vunpack.c.l.b16 %v3380
    %v3763 = vunpack.c.h.b16 %v3380
    %v3764 = vunpack.c.l.b16 %v3381
    %v3765 = vunpack.c.h.b16 %v3381
    %v3766 = vunpack.c.l.b16 %v3382
    %v3767 = vunpack.c.h.b16 %v3382
    %v3768 = vunpack.c.l.b16 %v3383
    %v3769 = vunpack.c.h.b16 %v3383
    %v3770 = vunpack.c.l.b16 %v3384
    %v3771 = vunpack.c.h.b16 %v3384
    %v3772 = vunpack.c.l.b16 %v3385
    %v3773 = vunpack.c.h.b16 %v3385
    %v3774 = vunpack.c.l.b16 %v3386
    %v3775 = vunpack.c.h.b16 %v3386
    %v3776 = vunpack.c.l.b16 %v3387
    %v3777 = vunpack.c.h.b16 %v3387
    %v3778 = vunpack.c.l.b16 %v3388
    %v3779 = vunpack.c.h.b16 %v3388
    %v3780 = vunpack.c.l.b16 %v3389
    %v3781 = vunpack.c.h.b16 %v3389
    %v3782 = vunpack.c.l.b16 %v3390
    %v3783 = vunpack.c.h.b16 %v3390
    %v3784 = vunpack.c.l.b16 %v3391
    %v3785 = vunpack.c.h.b16 %v3391
    %v3786 = vunpack.c.l.b16 %v3392
    %v3787 = vunpack.c.h.b16 %v3392
    %v3788 = vunpack.c.l.b16 %v3393
    %v3789 = vunpack.c.h.b16 %v3393
    %v3790 = vunpack.c.l.b16 %v3394
    %v3791 = vunpack.c.h.b16 %v3394
    %v3792 = vunpack.c.l.b16 %v3395
    %v3793 = vunpack.c.h.b16 %v3395
    %v3794 = vunpack.c.l.b16 %v3396
    %v3795 = vunpack.c.h.b16 %v3396
    %v3796 = vunpack.c.l.b16 %v3397
    %v3797 = vunpack.c.h.b16 %v3397
    %v3798 = vunpack.c.l.b16 %v3398
    %v3799 = vunpack.c.h.b16 %v3398
    %v3800 = vunpack.c.l.b16 %v3399
    %v3801 = vunpack.c.h.b16 %v3399
    %v3802 = vunpack.c.l.b16 %v3400
    %v3803 = vunpack.c.h.b16 %v3400
    %v3804 = vunpack.c.l.b16 %v3401
    %v3805 = vunpack.c.h.b16 %v3401
    %v3806 = vunpack.c.l.b16 %v3402
    %v3807 = vunpack.c.h.b16 %v3402
    %v3808 = vunpack.c.l.b16 %v3403
    %v3809 = vunpack.c.h.b16 %v3403
    %v3810 = vunpack.c.l.b16 %v3404
    %v3811 = vunpack.c.h.b16 %v3404
    %v3812 = vunpack.c.l.b16 %v3405
    %v3813 = vunpack.c.h.b16 %v3405
    %v3814 = vunpack.c.l.b16 %v3406
    %v3815 = vunpack.c.h.b16 %v3406
    %v3816 = vunpack.c.l.b16 %v3407
    %v3817 = vunpack.c.h.b16 %v3407
    %v3818 = vunpack.c.l.b16 %v3408
    %v3819 = vunpack.c.h.b16 %v3408
    %v3820 = vunpack.c.l.b16 %v3409
    %v3821 = vunpack.c.h.b16 %v3409
    %v3822 = vunpack.c.l.b16 %v3410
    %v3823 = vunpack.c.h.b16 %v3410
    %v3824 = vunpack.c.l.b16 %v3411
    %v3825 = vunpack.c.h.b16 %v3411
    %v3826 = vunpack.c.l.b16 %v3412
    %v3827 = vunpack.c.h.b16 %v3412
    %v3828 = vunpack.c.l.b16 %v3413
    %v3829 = vunpack.c.h.b16 %v3413
    %v3830 = vunpack.c.l.b16 %v3414
    %v3831 = vunpack.c.h.b16 %v3414
    %v3832 = vunpack.c.l.b16 %v3415
    %v3833 = vunpack.c.h.b16 %v3415
    %v3834 = vunpack.c.l.b16 %v3416
    %v3835 = vunpack.c.h.b16 %v3416
    %v3836 = vunpack.c.l.b16 %v3417
    %v3837 = vunpack.c.h.b16 %v3417
    %v3838 = vunpack.c.l.b16 %v3418
    %v3839 = vunpack.c.h.b16 %v3418
    %v3840 = vunpack.c.l.b16 %v3419
    %v3841 = vunpack.c.h.b16 %v3419
    %v3842 = vunpack.c.l.b16 %v3420
    %v3843 = vunpack.c.h.b16 %v3420
    %v3844 = vunpack.c.l.b16 %v3421
    %v3845 = vunpack.c.h.b16 %v3421
    %v3846 = vunpack.c.l.b16 %v3422
    %v3847 = vunpack.c.h.b16 %v3422
    %v3848 = vunpack.c.l.b16 %v3423
    %v3849 = vunpack.c.h.b16 %v3423
    %v3850 = vunpack.c.l.b16 %v3424
    %v3851 = vunpack.c.h.b16 %v3424
    %v3852 = vpack.c.b16 %v3604, %v3596
    %v3853 = vpack.c.b16 %v3605, %v3597
    %v3854 = vpack.c.b16 %v3606, %v3598
    %v3855 = vpack.c.b16 %v3607, %v3599
    %v3856 = vpack.c.b16 %v3608, %v3600
    %v3857 = vpack.c.b16 %v3609, %v3601
    %v3858 = vpack.c.b16 %v3610, %v3602
    %v3859 = vpack.c.b16 %v3611, %v3603
    %v3860 = vpack.c.b16 %v3620, %v3612
    %v3861 = vpack.c.b16 %v3621, %v3613
    %v3862 = vpack.c.b16 %v3622, %v3614
    %v3863 = vpack.c.b16 %v3623, %v3615
    %v3864 = vpack.c.b16 %v3624, %v3616
    %v3865 = vpack.c.b16 %v3625, %v3617
    %v3866 = vpack.c.b16 %v3626, %v3618
    %v3867 = vpack.c.b16 %v3627, %v3619
    %v3868 = vpack.c.b16 %v3636, %v3628
    %v3869 = vpack.c.b16 %v3637, %v3629
    %v3870 = vpack.c.b16 %v3638, %v3630
    %v3871 = vpack.c.b16 %v3639, %v3631
    %v3872 = vpack.c.b16 %v3640, %v3632
    %v3873 = vpack.c.b16 %v3641, %v3633
    %v3874 = vpack.c.b16 %v3642, %v3634
    %v3875 = vpack.c.b16 %v3643, %v3635
    %v3876 = vpack.c.b16 %v3652, %v3644
    %v3877 = vpack.c.b16 %v3653, %v3645
    %v3878 = vpack.c.b16 %v3654, %v3646
    %v3879 = vpack.c.b16 %v3655, %v3647
    %v3880 = vpack.c.b16 %v3656, %v3648
    %v3881 = vpack.c.b16 %v3657, %v3649
    %v3882 = vpack.c.b16 %v3658, %v3650
    %v3883 = vpack.c.b16 %v3659, %v3651
    %v3884 = vpack.c.b16 %v3668, %v3660
    %v3885 = vpack.c.b16 %v3669, %v3661
    %v3886 = vpack.c.b16 %v3670, %v3662
    %v3887 = vpack.c.b16 %v3671, %v3663
    %v3888 = vpack.c.b16 %v3672, %v3664
    %v3889 = vpack.c.b16 %v3673, %v3665
    %v3890 = vpack.c.b16 %v3674, %v3666
    %v3891 = vpack.c.b16 %v3675, %v3667
    %v3892 = vpack.c.b16 %v3684, %v3676
    %v3893 = vpack.c.b16 %v3685, %v3677
    %v3894 = vpack.c.b16 %v3686, %v3678
    %v3895 = vpack.c.b16 %v3687, %v3679
    %v3896 = vpack.c.b16 %v3688, %v3680
    %v3897 = vpack.c.b16 %v3689, %v3681
    %v3898 = vpack.c.b16 %v3690, %v3682
    %v3899 = vpack.c.b16 %v3691, %v3683
    %v3900 = vpack.c.b16 %v3700, %v3692
    %v3901 = vpack.c.b16 %v3701, %v3693
    %v3902 = vpack.c.b16 %v3702, %v3694
    %v3903 = vpack.c.b16 %v3703, %v3695
    %v3904 = vpack.c.b16 %v3704, %v3696
    %v3905 = vpack.c.b16 %v3705, %v3697
    %v3906 = vpack.c.b16 %v3706, %v3698
    %v3907 = vpack.c.b16 %v3707, %v3699
    %v3908 = vpack.c.b16 %v3716, %v3708
    %v3909 = vpack.c.b16 %v3717, %v3709
    %v3910 = vpack.c.b16 %v3718, %v3710
    %v3911 = vpack.c.b16 %v3719, %v3711
    %v3912 = vpack.c.b16 %v3720, %v3712
    %v3913 = vpack.c.b16 %v3721, %v3713
    %v3914 = vpack.c.b16 %v3722, %v3714
    %v3915 = vpack.c.b16 %v3723, %v3715
    %v3916 = vpack.c.b16 %v3732, %v3724
    %v3917 = vpack.c.b16 %v3733, %v3725
    %v3918 = vpack.c.b16 %v3734, %v3726
    %v3919 = vpack.c.b16 %v3735, %v3727
    %v3920 = vpack.c.b16 %v3736, %v3728
    %v3921 = vpack.c.b16 %v3737, %v3729
    %v3922 = vpack.c.b16 %v3738, %v3730
    %v3923 = vpack.c.b16 %v3739, %v3731
    %v3924 = vpack.c.b16 %v3748, %v3740
    %v3925 = vpack.c.b16 %v3749, %v3741
    %v3926 = vpack.c.b16 %v3750, %v3742
    %v3927 = vpack.c.b16 %v3751, %v3743
    %v3928 = vpack.c.b16 %v3752, %v3744
    %v3929 = vpack.c.b16 %v3753, %v3745
    %v3930 = vpack.c.b16 %v3754, %v3746
    %v3931 = vpack.c.b16 %v3755, %v3747
    %v3932 = vpack.c.b16 %v3764, %v3756
    %v3933 = vpack.c.b16 %v3765, %v3757
    %v3934 = vpack.c.b16 %v3766, %v3758
    %v3935 = vpack.c.b16 %v3767, %v3759
    %v3936 = vpack.c.b16 %v3768, %v3760
    %v3937 = vpack.c.b16 %v3769, %v3761
    %v3938 = vpack.c.b16 %v3770, %v3762
    %v3939 = vpack.c.b16 %v3771, %v3763
    %v3940 = vpack.c.b16 %v3780, %v3772
    %v3941 = vpack.c.b16 %v3781, %v3773
    %v3942 = vpack.c.b16 %v3782, %v3774
    %v3943 = vpack.c.b16 %v3783, %v3775
    %v3944 = vpack.c.b16 %v3784, %v3776
    %v3945 = vpack.c.b16 %v3785, %v3777
    %v3946 = vpack.c.b16 %v3786, %v3778
    %v3947 = vpack.c.b16 %v3787, %v3779
    %v3948 = vpack.c.b16 %v3796, %v3788
    %v3949 = vpack.c.b16 %v3797, %v3789
    %v3950 = vpack.c.b16 %v3798, %v3790
    %v3951 = vpack.c.b16 %v3799, %v3791
    %v3952 = vpack.c.b16 %v3800, %v3792
    %v3953 = vpack.c.b16 %v3801, %v3793
    %v3954 = vpack.c.b16 %v3802, %v3794
    %v3955 = vpack.c.b16 %v3803, %v3795
    %v3956 = vpack.c.b16 %v3812, %v3804
    %v3957 = vpack.c.b16 %v3813, %v3805
    %v3958 = vpack.c.b16 %v3814, %v3806
    %v3959 = vpack.c.b16 %v3815, %v3807
    %v3960 = vpack.c.b16 %v3816, %v3808
    %v3961 = vpack.c.b16 %v3817, %v3809
    %v3962 = vpack.c.b16 %v3818, %v3810
    %v3963 = vpack.c.b16 %v3819, %v3811
    %v3964 = vpack.c.b16 %v3828, %v3820
    %v3965 = vpack.c.b16 %v3829, %v3821
    %v3966 = vpack.c.b16 %v3830, %v3822
    %v3967 = vpack.c.b16 %v3831, %v3823
    %v3968 = vpack.c.b16 %v3832, %v3824
    %v3969 = vpack.c.b16 %v3833, %v3825
    %v3970 = vpack.c.b16 %v3834, %v3826
    %v3971 = vpack.c.b16 %v3835, %v3827
    %v3972 = vpack.c.b16 %v3844, %v3836
    %v3973 = vpack.c.b16 %v3845, %v3837
    %v3974 = vpack.c.b16 %v3846, %v3838
    %v3975 = vpack.c.b16 %v3847, %v3839
    %v3976 = vpack.c.b16 %v3848, %v3840
    %v3977 = vpack.c.b16 %v3849, %v3841
    %v3978 = vpack.c.b16 %v3850, %v3842
    %v3979 = vpack.c.b16 %v3851, %v3843
    %4108 = vmatprep.subr.bf16.mxu0 %v3909
    %4109 = vmatpush1.bf16.msra.mxu0 %v3908
    %4110 = vmatprep.subr.bf16.mxu0 %v3901
    %4111 = vmatpush1.bf16.msra.mxu0 %v3900
    %4112 = vmatprep.subr.bf16.mxu0 %v3893
    %4113 = vmatpush1.bf16.msra.mxu0 %v3892
    %4114 = vmatprep.subr.bf16.mxu0 %v3885
    %4115 = vmatpush1.bf16.msra.mxu0 %v3884
    %4116 = vmatprep.subr.bf16.mxu0 %v3877
    %4117 = vmatpush1.bf16.msra.mxu0 %v3876
    %4118 = vmatprep.subr.bf16.mxu0 %v3869
    %4119 = vmatpush1.bf16.msra.mxu0 %v3868
    %4120 = vmatprep.subr.bf16.mxu0 %v3861
    %4121 = vmatpush1.bf16.msra.mxu0 %v3860
    %4122 = vmatprep.subr.bf16.mxu0 %v3853
    %4123 = vmatpush1.bf16.msra.mxu0 %v3852
    %4124 = vmatprep.subr.bf16.mxu0 %v3973
    %4125 = vmatpush2.bf16.msra.mxu0 %v3972
    %4126 = vmatprep.subr.bf16.mxu0 %v3965
    %4127 = vmatpush2.bf16.msra.mxu0 %v3964
    %4128 = vmatprep.subr.bf16.mxu0 %v3957
    %4129 = vmatpush2.bf16.msra.mxu0 %v3956
    %4130 = vmatprep.subr.bf16.mxu0 %v3949
    %4131 = vmatpush2.bf16.msra.mxu0 %v3948
    %4132 = vmatprep.subr.bf16.mxu0 %v3941
    %4133 = vmatpush2.bf16.msra.mxu0 %v3940
    %4134 = vmatprep.subr.bf16.mxu0 %v3933
    %4135 = vmatpush2.bf16.msra.mxu0 %v3932
    %4136 = vmatprep.subr.bf16.mxu0 %v3925
    %4137 = vmatpush2.bf16.msra.mxu0 %v3924
    %4138 = vmatprep.subr.bf16.mxu0 %v3917
    %4139 = vmatpush2.bf16.msra.mxu0 %v3916
    %4140 = vmatprep.mubr.bf16.mxu0 %v3290
    %4141 = vmatmul.mubr.bf16.gmra.mxu0 %v3289
    %v4142 = vpop.f32.mrf.mxu0
    %v4143 = vadd.f32 %v3431, %v4142
    %v4144 = vpop.f32.mrf.mxu0
    %v4145 = vadd.f32 %v3435, %v4144
    %v4146 = vpop.f32.mrf.mxu0
    %v4147 = vadd.f32 %v3431, %v4146
    %v4148 = vpop.f32.mrf.mxu0
    %v4149 = vadd.f32 %v3435, %v4148
    %4150 = vmatprep.mubr.bf16.mxu0 %v3292
    %4151 = vmatmul.mubr.bf16.gmra.mxu0 %v3291
    %v4152 = vpop.f32.mrf.mxu0
    %v4153 = vadd.f32 %v3431, %v4152
    %v4154 = vpop.f32.mrf.mxu0
    %v4155 = vadd.f32 %v3435, %v4154
    %v4156 = vpop.f32.mrf.mxu0
    %v4157 = vadd.f32 %v3431, %v4156
    %v4158 = vpop.f32.mrf.mxu0
    %v4159 = vadd.f32 %v3435, %v4158
    %4160 = vmatprep.mubr.bf16.mxu0 %v3294
    %4161 = vmatmul.mubr.bf16.gmra.mxu0 %v3293
    %v4162 = vpop.f32.mrf.mxu0
    %v4163 = vadd.f32 %v3431, %v4162
    %v4164 = vpop.f32.mrf.mxu0
    %v4165 = vadd.f32 %v3435, %v4164
    %v4166 = vpop.f32.mrf.mxu0
    %v4167 = vadd.f32 %v3431, %v4166
    %v4168 = vpop.f32.mrf.mxu0
    %v4169 = vadd.f32 %v3435, %v4168
    %4170 = vmatprep.mubr.bf16.mxu0 %v3296
    %4171 = vmatmul.mubr.bf16.gmra.mxu0 %v3295
    %v4172 = vpop.f32.mrf.mxu0
    %v4173 = vadd.f32 %v3431, %v4172
    %v4174 = vpop.f32.mrf.mxu0
    %v4175 = vadd.f32 %v3435, %v4174
    %v4176 = vpop.f32.mrf.mxu0
    %v4177 = vadd.f32 %v3431, %v4176
    %v4178 = vpop.f32.mrf.mxu0
    %v4179 = vadd.f32 %v3435, %v4178
    %4180 = vdwg.mxu0
    %4181 = vmatprep.subr.bf16.mxu0 %v3911
    %4182 = vmatpush1.bf16.msra.mxu0 %v3910
    %4183 = vmatprep.subr.bf16.mxu0 %v3903
    %4184 = vmatpush1.bf16.msra.mxu0 %v3902
    %4185 = vmatprep.subr.bf16.mxu0 %v3895
    %4186 = vmatpush1.bf16.msra.mxu0 %v3894
    %4187 = vmatprep.subr.bf16.mxu0 %v3887
    %4188 = vmatpush1.bf16.msra.mxu0 %v3886
    %4189 = vmatprep.subr.bf16.mxu0 %v3879
    %4190 = vmatpush1.bf16.msra.mxu0 %v3878
    %4191 = vmatprep.subr.bf16.mxu0 %v3871
    %4192 = vmatpush1.bf16.msra.mxu0 %v3870
    %4193 = vmatprep.subr.bf16.mxu0 %v3863
    %4194 = vmatpush1.bf16.msra.mxu0 %v3862
    %4195 = vmatprep.subr.bf16.mxu0 %v3855
    %4196 = vmatpush1.bf16.msra.mxu0 %v3854
    %4197 = vmatprep.subr.bf16.mxu0 %v3975
    %4198 = vmatpush2.bf16.msra.mxu0 %v3974
    %4199 = vmatprep.subr.bf16.mxu0 %v3967
    %4200 = vmatpush2.bf16.msra.mxu0 %v3966
    %4201 = vmatprep.subr.bf16.mxu0 %v3959
    %4202 = vmatpush2.bf16.msra.mxu0 %v3958
    %4203 = vmatprep.subr.bf16.mxu0 %v3951
    %4204 = vmatpush2.bf16.msra.mxu0 %v3950
    %4205 = vmatprep.subr.bf16.mxu0 %v3943
    %4206 = vmatpush2.bf16.msra.mxu0 %v3942
    %4207 = vmatprep.subr.bf16.mxu0 %v3935
    %4208 = vmatpush2.bf16.msra.mxu0 %v3934
    %4209 = vmatprep.subr.bf16.mxu0 %v3927
    %4210 = vmatpush2.bf16.msra.mxu0 %v3926
    %4211 = vmatprep.subr.bf16.mxu0 %v3919
    %4212 = vmatpush2.bf16.msra.mxu0 %v3918
    %4213 = vmatprep.mubr.bf16.mxu0 %v3290
    %4214 = vmatmul.mubr.bf16.gmra.mxu0 %v3289
    %v4215 = vpop.f32.mrf.mxu0
    %v4216 = vadd.f32 %v3439, %v4215
    %v4217 = vpop.f32.mrf.mxu0
    %v4218 = vadd.f32 %v3443, %v4217
    %v4219 = vpop.f32.mrf.mxu0
    %v4220 = vadd.f32 %v3439, %v4219
    %v4221 = vpop.f32.mrf.mxu0
    %v4222 = vadd.f32 %v3443, %v4221
    %4223 = vmatprep.mubr.bf16.mxu0 %v3292
    %4224 = vmatmul.mubr.bf16.gmra.mxu0 %v3291
    %v4225 = vpop.f32.mrf.mxu0
    %v4226 = vadd.f32 %v3439, %v4225
    %v4227 = vpop.f32.mrf.mxu0
    %v4228 = vadd.f32 %v3443, %v4227
    %v4229 = vpop.f32.mrf.mxu0
    %v4230 = vadd.f32 %v3439, %v4229
    %v4231 = vpop.f32.mrf.mxu0
    %v4232 = vadd.f32 %v3443, %v4231
    %4233 = vmatprep.mubr.bf16.mxu0 %v3294
    %4234 = vmatmul.mubr.bf16.gmra.mxu0 %v3293
    %v4235 = vpop.f32.mrf.mxu0
    %v4236 = vadd.f32 %v3439, %v4235
    %v4237 = vpop.f32.mrf.mxu0
    %v4238 = vadd.f32 %v3443, %v4237
    %v4239 = vpop.f32.mrf.mxu0
    %v4240 = vadd.f32 %v3439, %v4239
    %v4241 = vpop.f32.mrf.mxu0
    %v4242 = vadd.f32 %v3443, %v4241
    %4243 = vmatprep.mubr.bf16.mxu0 %v3296
    %4244 = vmatmul.mubr.bf16.gmra.mxu0 %v3295
    %v4245 = vpop.f32.mrf.mxu0
    %v4246 = vadd.f32 %v3439, %v4245
    %v4247 = vpop.f32.mrf.mxu0
    %v4248 = vadd.f32 %v3443, %v4247
    %v4249 = vpop.f32.mrf.mxu0
    %v4250 = vadd.f32 %v3439, %v4249
    %v4251 = vpop.f32.mrf.mxu0
    %v4252 = vadd.f32 %v3443, %v4251
    %4253 = vdwg.mxu0
    %4254 = vmatprep.subr.bf16.mxu0 %v3913
    %4255 = vmatpush1.bf16.msra.mxu0 %v3912
    %4256 = vmatprep.subr.bf16.mxu0 %v3905
    %4257 = vmatpush1.bf16.msra.mxu0 %v3904
    %4258 = vmatprep.subr.bf16.mxu0 %v3897
    %4259 = vmatpush1.bf16.msra.mxu0 %v3896
    %4260 = vmatprep.subr.bf16.mxu0 %v3889
    %4261 = vmatpush1.bf16.msra.mxu0 %v3888
    %4262 = vmatprep.subr.bf16.mxu0 %v3881
    %4263 = vmatpush1.bf16.msra.mxu0 %v3880
    %4264 = vmatprep.subr.bf16.mxu0 %v3873
    %4265 = vmatpush1.bf16.msra.mxu0 %v3872
    %4266 = vmatprep.subr.bf16.mxu0 %v3865
    %4267 = vmatpush1.bf16.msra.mxu0 %v3864
    %4268 = vmatprep.subr.bf16.mxu0 %v3857
    %4269 = vmatpush1.bf16.msra.mxu0 %v3856
    %4270 = vmatprep.subr.bf16.mxu0 %v3977
    %4271 = vmatpush2.bf16.msra.mxu0 %v3976
    %4272 = vmatprep.subr.bf16.mxu0 %v3969
    %4273 = vmatpush2.bf16.msra.mxu0 %v3968
    %4274 = vmatprep.subr.bf16.mxu0 %v3961
    %4275 = vmatpush2.bf16.msra.mxu0 %v3960
    %4276 = vmatprep.subr.bf16.mxu0 %v3953
    %4277 = vmatpush2.bf16.msra.mxu0 %v3952
    %4278 = vmatprep.subr.bf16.mxu0 %v3945
    %4279 = vmatpush2.bf16.msra.mxu0 %v3944
    %4280 = vmatprep.subr.bf16.mxu0 %v3937
    %4281 = vmatpush2.bf16.msra.mxu0 %v3936
    %4282 = vmatprep.subr.bf16.mxu0 %v3929
    %4283 = vmatpush2.bf16.msra.mxu0 %v3928
    %4284 = vmatprep.subr.bf16.mxu0 %v3921
    %4285 = vmatpush2.bf16.msra.mxu0 %v3920
    %4286 = vmatprep.mubr.bf16.mxu0 %v3290
    %4287 = vmatmul.mubr.bf16.gmra.mxu0 %v3289
    %v4288 = vpop.f32.mrf.mxu0
    %v4289 = vadd.f32 %v3447, %v4288
    %v4290 = vpop.f32.mrf.mxu0
    %v4291 = vadd.f32 %v3451, %v4290
    %v4292 = vpop.f32.mrf.mxu0
    %v4293 = vadd.f32 %v3447, %v4292
    %v4294 = vpop.f32.mrf.mxu0
    %v4295 = vadd.f32 %v3451, %v4294
    %4296 = vmatprep.mubr.bf16.mxu0 %v3292
    %4297 = vmatmul.mubr.bf16.gmra.mxu0 %v3291
    %v4298 = vpop.f32.mrf.mxu0
    %v4299 = vadd.f32 %v3447, %v4298
    %v4300 = vpop.f32.mrf.mxu0
    %v4301 = vadd.f32 %v3451, %v4300
    %v4302 = vpop.f32.mrf.mxu0
    %v4303 = vadd.f32 %v3447, %v4302
    %v4304 = vpop.f32.mrf.mxu0
    %v4305 = vadd.f32 %v3451, %v4304
    %4306 = vmatprep.mubr.bf16.mxu0 %v3294
    %4307 = vmatmul.mubr.bf16.gmra.mxu0 %v3293
    %v4308 = vpop.f32.mrf.mxu0
    %v4309 = vadd.f32 %v3447, %v4308
    %v4310 = vpop.f32.mrf.mxu0
    %v4311 = vadd.f32 %v3451, %v4310
    %v4312 = vpop.f32.mrf.mxu0
    %v4313 = vadd.f32 %v3447, %v4312
    %v4314 = vpop.f32.mrf.mxu0
    %v4315 = vadd.f32 %v3451, %v4314
    %4316 = vmatprep.mubr.bf16.mxu0 %v3296
    %4317 = vmatmul.mubr.bf16.gmra.mxu0 %v3295
    %v4318 = vpop.f32.mrf.mxu0
    %v4319 = vadd.f32 %v3447, %v4318
    %v4320 = vpop.f32.mrf.mxu0
    %v4321 = vadd.f32 %v3451, %v4320
    %v4322 = vpop.f32.mrf.mxu0
    %v4323 = vadd.f32 %v3447, %v4322
    %v4324 = vpop.f32.mrf.mxu0
    %v4325 = vadd.f32 %v3451, %v4324
    %4326 = vdwg.mxu0
    %4327 = vmatprep.subr.bf16.mxu0 %v3915
    %4328 = vmatpush1.bf16.msra.mxu0 %v3914
    %4329 = vmatprep.subr.bf16.mxu0 %v3907
    %4330 = vmatpush1.bf16.msra.mxu0 %v3906
    %4331 = vmatprep.subr.bf16.mxu0 %v3899
    %4332 = vmatpush1.bf16.msra.mxu0 %v3898
    %4333 = vmatprep.subr.bf16.mxu0 %v3891
    %4334 = vmatpush1.bf16.msra.mxu0 %v3890
    %4335 = vmatprep.subr.bf16.mxu0 %v3883
    %4336 = vmatpush1.bf16.msra.mxu0 %v3882
    %4337 = vmatprep.subr.bf16.mxu0 %v3875
    %4338 = vmatpush1.bf16.msra.mxu0 %v3874
    %4339 = vmatprep.subr.bf16.mxu0 %v3867
    %4340 = vmatpush1.bf16.msra.mxu0 %v3866
    %4341 = vmatprep.subr.bf16.mxu0 %v3859
    %4342 = vmatpush1.bf16.msra.mxu0 %v3858
    %4343 = vmatprep.subr.bf16.mxu0 %v3979
    %4344 = vmatpush2.bf16.msra.mxu0 %v3978
    %4345 = vmatprep.subr.bf16.mxu0 %v3971
    %4346 = vmatpush2.bf16.msra.mxu0 %v3970
    %4347 = vmatprep.subr.bf16.mxu0 %v3963
    %4348 = vmatpush2.bf16.msra.mxu0 %v3962
    %4349 = vmatprep.subr.bf16.mxu0 %v3955
    %4350 = vmatpush2.bf16.msra.mxu0 %v3954
    %4351 = vmatprep.subr.bf16.mxu0 %v3947
    %4352 = vmatpush2.bf16.msra.mxu0 %v3946
    %4353 = vmatprep.subr.bf16.mxu0 %v3939
    %4354 = vmatpush2.bf16.msra.mxu0 %v3938
    %4355 = vmatprep.subr.bf16.mxu0 %v3931
    %4356 = vmatpush2.bf16.msra.mxu0 %v3930
    %4357 = vmatprep.subr.bf16.mxu0 %v3923
    %4358 = vmatpush2.bf16.msra.mxu0 %v3922
    %4359 = vmatprep.mubr.bf16.mxu0 %v3290
    %4360 = vmatmul.mubr.bf16.gmra.mxu0 %v3289
    %v4361 = vpop.f32.mrf.mxu0
    %v4362 = vadd.f32 %v3455, %v4361
    %v4363 = vpop.f32.mrf.mxu0
    %v4364 = vadd.f32 %v3459, %v4363
    %v4365 = vpop.f32.mrf.mxu0
    %v4366 = vadd.f32 %v3455, %v4365
    %v4367 = vpop.f32.mrf.mxu0
    %v4368 = vadd.f32 %v3459, %v4367
    %4369 = vmatprep.mubr.bf16.mxu0 %v3292
    %4370 = vmatmul.mubr.bf16.gmra.mxu0 %v3291
    %v4371 = vpop.f32.mrf.mxu0
    %v4372 = vadd.f32 %v3455, %v4371
    %v4373 = vpop.f32.mrf.mxu0
    %v4374 = vadd.f32 %v3459, %v4373
    %v4375 = vpop.f32.mrf.mxu0
    %v4376 = vadd.f32 %v3455, %v4375
    %v4377 = vpop.f32.mrf.mxu0
    %v4378 = vadd.f32 %v3459, %v4377
    %4379 = vmatprep.mubr.bf16.mxu0 %v3294
    %4380 = vmatmul.mubr.bf16.gmra.mxu0 %v3293
    %v4381 = vpop.f32.mrf.mxu0
    %v4382 = vadd.f32 %v3455, %v4381
    %v4383 = vpop.f32.mrf.mxu0
    %v4384 = vadd.f32 %v3459, %v4383
    %v4385 = vpop.f32.mrf.mxu0
    %v4386 = vadd.f32 %v3455, %v4385
    %v4387 = vpop.f32.mrf.mxu0
    %v4388 = vadd.f32 %v3459, %v4387
    %4389 = vmatprep.mubr.bf16.mxu0 %v3296
    %4390 = vmatmul.mubr.bf16.gmra.mxu0 %v3295
    %v4391 = vpop.f32.mrf.mxu0
    %v4392 = vadd.f32 %v3455, %v4391
    %v4393 = vpop.f32.mrf.mxu0
    %v4394 = vadd.f32 %v3459, %v4393
    %v4395 = vpop.f32.mrf.mxu0
    %v4396 = vadd.f32 %v3455, %v4395
    %v4397 = vpop.f32.mrf.mxu0
    %v4398 = vadd.f32 %v3459, %v4397
    %4399 = vdwg.mxu0
    %4400 = vst [vmem:[#allocation2] sm:$0xff] %v4143
    %4401 = vst [vmem:[#allocation2 + $0x8] sm:$0xff] %v4145
    %4402 = vst [vmem:[#allocation2 + $0x10] sm:$0xff] %v4216
    %4403 = vst [vmem:[#allocation2 + $0x18] sm:$0xff] %v4218
    %4404 = vst [vmem:[#allocation2 + $0x20] sm:$0xff] %v4289
    %4405 = vst [vmem:[#allocation2 + $0x28] sm:$0xff] %v4291
    %4406 = vst [vmem:[#allocation2 + $0x30] sm:$0xff] %v4362
    %4407 = vst [vmem:[#allocation2 + $0x38] sm:$0xff] %v4364
    %4408 = vst [vmem:[#allocation2 + $0x40] sm:$0xff] %v4147
    %4409 = vst [vmem:[#allocation2 + $0x48] sm:$0xff] %v4149
    %4410 = vst [vmem:[#allocation2 + $0x50] sm:$0xff] %v4220
    %4411 = vst [vmem:[#allocation2 + $0x58] sm:$0xff] %v4222
    %4412 = vst [vmem:[#allocation2 + $0x60] sm:$0xff] %v4293
    %4413 = vst [vmem:[#allocation2 + $0x68] sm:$0xff] %v4295
    %4414 = vst [vmem:[#allocation2 + $0x70] sm:$0xff] %v4366
    %4415 = vst [vmem:[#allocation2 + $0x78] sm:$0xff] %v4368
    %4416 = vst [vmem:[#allocation2 + $0x80] sm:$0xff] %v4153
    %4417 = vst [vmem:[#allocation2 + $0x88] sm:$0xff] %v4155
    %4418 = vst [vmem:[#allocation2 + $0x90] sm:$0xff] %v4226
    %4419 = vst [vmem:[#allocation2 + $0x98] sm:$0xff] %v4228
    %4420 = vst [vmem:[#allocation2 + $0xa0] sm:$0xff] %v4299
    %4421 = vst [vmem:[#allocation2 + $0xa8] sm:$0xff] %v4301
    %4422 = vst [vmem:[#allocation2 + $0xb0] sm:$0xff] %v4372
    %4423 = vst [vmem:[#allocation2 + $0xb8] sm:$0xff] %v4374
    %4424 = vst [vmem:[#allocation2 + $0xc0] sm:$0xff] %v4157
    %4425 = vst [vmem:[#allocation2 + $0xc8] sm:$0xff] %v4159
    %4426 = vst [vmem:[#allocation2 + $0xd0] sm:$0xff] %v4230
    %4427 = vst [vmem:[#allocation2 + $0xd8] sm:$0xff] %v4232
    %4428 = vst [vmem:[#allocation2 + $0xe0] sm:$0xff] %v4303
    %4429 = vst [vmem:[#allocation2 + $0xe8] sm:$0xff] %v4305
    %4430 = vst [vmem:[#allocation2 + $0xf0] sm:$0xff] %v4376
    %4431 = vst [vmem:[#allocation2 + $0xf8] sm:$0xff] %v4378
    %4432 = vst [vmem:[#allocation2 + $0x100] sm:$0xff] %v4163
    %4433 = vst [vmem:[#allocation2 + $0x108] sm:$0xff] %v4165
    %4434 = vst [vmem:[#allocation2 + $0x110] sm:$0xff] %v4236
    %4435 = vst [vmem:[#allocation2 + $0x118] sm:$0xff] %v4238
    %4436 = vst [vmem:[#allocation2 + $0x120] sm:$0xff] %v4309
    %4437 = vst [vmem:[#allocation2 + $0x128] sm:$0xff] %v4311
    %4438 = vst [vmem:[#allocation2 + $0x130] sm:$0xff] %v4382
    %4439 = vst [vmem:[#allocation2 + $0x138] sm:$0xff] %v4384
    %4440 = vst [vmem:[#allocation2 + $0x140] sm:$0xff] %v4167
    %4441 = vst [vmem:[#allocation2 + $0x148] sm:$0xff] %v4169
    %4442 = vst [vmem:[#allocation2 + $0x150] sm:$0xff] %v4240
    %4443 = vst [vmem:[#allocation2 + $0x158] sm:$0xff] %v4242
    %4444 = vst [vmem:[#allocation2 + $0x160] sm:$0xff] %v4313
    %4445 = vst [vmem:[#allocation2 + $0x168] sm:$0xff] %v4315
    %4446 = vst [vmem:[#allocation2 + $0x170] sm:$0xff] %v4386
    %4447 = vst [vmem:[#allocation2 + $0x178] sm:$0xff] %v4388
    %4448 = vst [vmem:[#allocation2 + $0x180] sm:$0xff] %v4173
    %4449 = vst [vmem:[#allocation2 + $0x188] sm:$0xff] %v4175
    %4450 = vst [vmem:[#allocation2 + $0x190] sm:$0xff] %v4246
    %4451 = vst [vmem:[#allocation2 + $0x198] sm:$0xff] %v4248
    %4452 = vst [vmem:[#allocation2 + $0x1a0] sm:$0xff] %v4319
    %4453 = vst [vmem:[#allocation2 + $0x1a8] sm:$0xff] %v4321
    %4454 = vst [vmem:[#allocation2 + $0x1b0] sm:$0xff] %v4392
    %4455 = vst [vmem:[#allocation2 + $0x1b8] sm:$0xff] %v4394
    %4456 = vst [vmem:[#allocation2 + $0x1c0] sm:$0xff] %v4177
    %4457 = vst [vmem:[#allocation2 + $0x1c8] sm:$0xff] %v4179
    %4458 = vst [vmem:[#allocation2 + $0x1d0] sm:$0xff] %v4250
    %4459 = vst [vmem:[#allocation2 + $0x1d8] sm:$0xff] %v4252
    %4460 = vst [vmem:[#allocation2 + $0x1e0] sm:$0xff] %v4323
    %4461 = vst [vmem:[#allocation2 + $0x1e8] sm:$0xff] %v4325
    %4462 = vst [vmem:[#allocation2 + $0x1f0] sm:$0xff] %v4396
    %4463 = vst [vmem:[#allocation2 + $0x1f8] sm:$0xff] %v4398
    %4464 = vst [vmem:[#allocation4] sm:$0xff] 0.0
    %4465 = vst [vmem:[#allocation4 + $0x8] sm:$0xff] 0.0
    %4466 = vst [vmem:[#allocation5] sm:$0xff] 0.0
    %4467 = vst [vmem:[#allocation5 + $0x8] sm:$0xff] 0.0
    %s4468 = scalar_lea.vmem [#allocation10], 1024
    %v4469 = vld [vmem:[%s4468] sm:$0xff]
    %v4470 = vld [vmem:[%s4468 + $0x8] sm:$0xff]
    %v4471 = vld [vmem:[%s4468 + $0x10] sm:$0xff]
    %v4472 = vld [vmem:[%s4468 + $0x18] sm:$0xff]
    %v4473 = vld [vmem:[%s4468 + $0x20] sm:$0xff]
    %v4474 = vld [vmem:[%s4468 + $0x28] sm:$0xff]
    %v4475 = vld [vmem:[%s4468 + $0x30] sm:$0xff]
    %v4476 = vld [vmem:[%s4468 + $0x38] sm:$0xff]
    %v4477 = vld [vmem:[%s4468 + $0x40] sm:$0xff]
    %v4478 = vld [vmem:[%s4468 + $0x48] sm:$0xff]
    %v4479 = vld [vmem:[%s4468 + $0x50] sm:$0xff]
    %v4480 = vld [vmem:[%s4468 + $0x58] sm:$0xff]
    %v4481 = vld [vmem:[%s4468 + $0x60] sm:$0xff]
    %v4482 = vld [vmem:[%s4468 + $0x68] sm:$0xff]
    %v4483 = vld [vmem:[%s4468 + $0x70] sm:$0xff]
    %v4484 = vld [vmem:[%s4468 + $0x78] sm:$0xff]
    %v4485 = vld [vmem:[%s4468 + $0x80] sm:$0xff]
    %v4486 = vld [vmem:[%s4468 + $0x88] sm:$0xff]
    %v4487 = vld [vmem:[%s4468 + $0x90] sm:$0xff]
    %v4488 = vld [vmem:[%s4468 + $0x98] sm:$0xff]
    %v4489 = vld [vmem:[%s4468 + $0xa0] sm:$0xff]
    %v4490 = vld [vmem:[%s4468 + $0xa8] sm:$0xff]
    %v4491 = vld [vmem:[%s4468 + $0xb0] sm:$0xff]
    %v4492 = vld [vmem:[%s4468 + $0xb8] sm:$0xff]
    %v4493 = vld [vmem:[%s4468 + $0xc0] sm:$0xff]
    %v4494 = vld [vmem:[%s4468 + $0xc8] sm:$0xff]
    %v4495 = vld [vmem:[%s4468 + $0xd0] sm:$0xff]
    %v4496 = vld [vmem:[%s4468 + $0xd8] sm:$0xff]
    %v4497 = vld [vmem:[%s4468 + $0xe0] sm:$0xff]
    %v4498 = vld [vmem:[%s4468 + $0xe8] sm:$0xff]
    %v4499 = vld [vmem:[%s4468 + $0xf0] sm:$0xff]
    %v4500 = vld [vmem:[%s4468 + $0xf8] sm:$0xff]
    %v4501 = vld [vmem:[%s4468 + $0x100] sm:$0xff]
    %v4502 = vld [vmem:[%s4468 + $0x108] sm:$0xff]
    %v4503 = vld [vmem:[%s4468 + $0x110] sm:$0xff]
    %v4504 = vld [vmem:[%s4468 + $0x118] sm:$0xff]
    %v4505 = vld [vmem:[%s4468 + $0x120] sm:$0xff]
    %v4506 = vld [vmem:[%s4468 + $0x128] sm:$0xff]
    %v4507 = vld [vmem:[%s4468 + $0x130] sm:$0xff]
    %v4508 = vld [vmem:[%s4468 + $0x138] sm:$0xff]
    %v4509 = vld [vmem:[%s4468 + $0x140] sm:$0xff]
    %v4510 = vld [vmem:[%s4468 + $0x148] sm:$0xff]
    %v4511 = vld [vmem:[%s4468 + $0x150] sm:$0xff]
    %v4512 = vld [vmem:[%s4468 + $0x158] sm:$0xff]
    %v4513 = vld [vmem:[%s4468 + $0x160] sm:$0xff]
    %v4514 = vld [vmem:[%s4468 + $0x168] sm:$0xff]
    %v4515 = vld [vmem:[%s4468 + $0x170] sm:$0xff]
    %v4516 = vld [vmem:[%s4468 + $0x178] sm:$0xff]
    %v4517 = vld [vmem:[%s4468 + $0x180] sm:$0xff]
    %v4518 = vld [vmem:[%s4468 + $0x188] sm:$0xff]
    %v4519 = vld [vmem:[%s4468 + $0x190] sm:$0xff]
    %v4520 = vld [vmem:[%s4468 + $0x198] sm:$0xff]
    %v4521 = vld [vmem:[%s4468 + $0x1a0] sm:$0xff]
    %v4522 = vld [vmem:[%s4468 + $0x1a8] sm:$0xff]
    %v4523 = vld [vmem:[%s4468 + $0x1b0] sm:$0xff]
    %v4524 = vld [vmem:[%s4468 + $0x1b8] sm:$0xff]
    %v4525 = vld [vmem:[%s4468 + $0x1c0] sm:$0xff]
    %v4526 = vld [vmem:[%s4468 + $0x1c8] sm:$0xff]
    %v4527 = vld [vmem:[%s4468 + $0x1d0] sm:$0xff]
    %v4528 = vld [vmem:[%s4468 + $0x1d8] sm:$0xff]
    %v4529 = vld [vmem:[%s4468 + $0x1e0] sm:$0xff]
    %v4530 = vld [vmem:[%s4468 + $0x1e8] sm:$0xff]
    %v4531 = vld [vmem:[%s4468 + $0x1f0] sm:$0xff]
    %v4532 = vld [vmem:[%s4468 + $0x1f8] sm:$0xff]
    %v4533 = vld [vmem:[%s4468 + $0x200] sm:$0xff]
    %v4534 = vld [vmem:[%s4468 + $0x208] sm:$0xff]
    %v4535 = vld [vmem:[%s4468 + $0x210] sm:$0xff]
    %v4536 = vld [vmem:[%s4468 + $0x218] sm:$0xff]
    %v4537 = vld [vmem:[%s4468 + $0x220] sm:$0xff]
    %v4538 = vld [vmem:[%s4468 + $0x228] sm:$0xff]
    %v4539 = vld [vmem:[%s4468 + $0x230] sm:$0xff]
    %v4540 = vld [vmem:[%s4468 + $0x238] sm:$0xff]
    %v4541 = vld [vmem:[%s4468 + $0x240] sm:$0xff]
    %v4542 = vld [vmem:[%s4468 + $0x248] sm:$0xff]
    %v4543 = vld [vmem:[%s4468 + $0x250] sm:$0xff]
    %v4544 = vld [vmem:[%s4468 + $0x258] sm:$0xff]
    %v4545 = vld [vmem:[%s4468 + $0x260] sm:$0xff]
    %v4546 = vld [vmem:[%s4468 + $0x268] sm:$0xff]
    %v4547 = vld [vmem:[%s4468 + $0x270] sm:$0xff]
    %v4548 = vld [vmem:[%s4468 + $0x278] sm:$0xff]
    %v4549 = vld [vmem:[%s4468 + $0x280] sm:$0xff]
    %v4550 = vld [vmem:[%s4468 + $0x288] sm:$0xff]
    %v4551 = vld [vmem:[%s4468 + $0x290] sm:$0xff]
    %v4552 = vld [vmem:[%s4468 + $0x298] sm:$0xff]
    %v4553 = vld [vmem:[%s4468 + $0x2a0] sm:$0xff]
    %v4554 = vld [vmem:[%s4468 + $0x2a8] sm:$0xff]
    %v4555 = vld [vmem:[%s4468 + $0x2b0] sm:$0xff]
    %v4556 = vld [vmem:[%s4468 + $0x2b8] sm:$0xff]
    %v4557 = vld [vmem:[%s4468 + $0x2c0] sm:$0xff]
    %v4558 = vld [vmem:[%s4468 + $0x2c8] sm:$0xff]
    %v4559 = vld [vmem:[%s4468 + $0x2d0] sm:$0xff]
    %v4560 = vld [vmem:[%s4468 + $0x2d8] sm:$0xff]
    %v4561 = vld [vmem:[%s4468 + $0x2e0] sm:$0xff]
    %v4562 = vld [vmem:[%s4468 + $0x2e8] sm:$0xff]
    %v4563 = vld [vmem:[%s4468 + $0x2f0] sm:$0xff]
    %v4564 = vld [vmem:[%s4468 + $0x2f8] sm:$0xff]
    %v4565 = vld [vmem:[%s4468 + $0x300] sm:$0xff]
    %v4566 = vld [vmem:[%s4468 + $0x308] sm:$0xff]
    %v4567 = vld [vmem:[%s4468 + $0x310] sm:$0xff]
    %v4568 = vld [vmem:[%s4468 + $0x318] sm:$0xff]
    %v4569 = vld [vmem:[%s4468 + $0x320] sm:$0xff]
    %v4570 = vld [vmem:[%s4468 + $0x328] sm:$0xff]
    %v4571 = vld [vmem:[%s4468 + $0x330] sm:$0xff]
    %v4572 = vld [vmem:[%s4468 + $0x338] sm:$0xff]
    %v4573 = vld [vmem:[%s4468 + $0x340] sm:$0xff]
    %v4574 = vld [vmem:[%s4468 + $0x348] sm:$0xff]
    %v4575 = vld [vmem:[%s4468 + $0x350] sm:$0xff]
    %v4576 = vld [vmem:[%s4468 + $0x358] sm:$0xff]
    %v4577 = vld [vmem:[%s4468 + $0x360] sm:$0xff]
    %v4578 = vld [vmem:[%s4468 + $0x368] sm:$0xff]
    %v4579 = vld [vmem:[%s4468 + $0x370] sm:$0xff]
    %v4580 = vld [vmem:[%s4468 + $0x378] sm:$0xff]
    %v4581 = vld [vmem:[%s4468 + $0x380] sm:$0xff]
    %v4582 = vld [vmem:[%s4468 + $0x388] sm:$0xff]
    %v4583 = vld [vmem:[%s4468 + $0x390] sm:$0xff]
    %v4584 = vld [vmem:[%s4468 + $0x398] sm:$0xff]
    %v4585 = vld [vmem:[%s4468 + $0x3a0] sm:$0xff]
    %v4586 = vld [vmem:[%s4468 + $0x3a8] sm:$0xff]
    %v4587 = vld [vmem:[%s4468 + $0x3b0] sm:$0xff]
    %v4588 = vld [vmem:[%s4468 + $0x3b8] sm:$0xff]
    %v4589 = vld [vmem:[%s4468 + $0x3c0] sm:$0xff]
    %v4590 = vld [vmem:[%s4468 + $0x3c8] sm:$0xff]
    %v4591 = vld [vmem:[%s4468 + $0x3d0] sm:$0xff]
    %v4592 = vld [vmem:[%s4468 + $0x3d8] sm:$0xff]
    %v4593 = vld [vmem:[%s4468 + $0x3e0] sm:$0xff]
    %v4594 = vld [vmem:[%s4468 + $0x3e8] sm:$0xff]
    %v4595 = vld [vmem:[%s4468 + $0x3f0] sm:$0xff]
    %v4596 = vld [vmem:[%s4468 + $0x3f8] sm:$0xff]
    %v4597 = vld [vmem:[#allocation4] sm:$0xff]
    %v4598 = vld [vmem:[#allocation4 + $0x8] sm:$0xff]
    %v4599 = vpack.c.bf16 %v4597, %v4597
    %v4600 = vpack.c.bf16 %v4598, %v4598
    %v4729 = vunpack.c.l.b16 %v4469
    %v4730 = vunpack.c.h.b16 %v4469
    %v4731 = vunpack.c.l.b16 %v4470
    %v4732 = vunpack.c.h.b16 %v4470
    %v4733 = vunpack.c.l.b16 %v4471
    %v4734 = vunpack.c.h.b16 %v4471
    %v4735 = vunpack.c.l.b16 %v4472
    %v4736 = vunpack.c.h.b16 %v4472
    %v4737 = vunpack.c.l.b16 %v4473
    %v4738 = vunpack.c.h.b16 %v4473
    %v4739 = vunpack.c.l.b16 %v4474
    %v4740 = vunpack.c.h.b16 %v4474
    %v4741 = vunpack.c.l.b16 %v4475
    %v4742 = vunpack.c.h.b16 %v4475
    %v4743 = vunpack.c.l.b16 %v4476
    %v4744 = vunpack.c.h.b16 %v4476
    %v4745 = vunpack.c.l.b16 %v4477
    %v4746 = vunpack.c.h.b16 %v4477
    %v4747 = vunpack.c.l.b16 %v4478
    %v4748 = vunpack.c.h.b16 %v4478
    %v4749 = vunpack.c.l.b16 %v4479
    %v4750 = vunpack.c.h.b16 %v4479
    %v4751 = vunpack.c.l.b16 %v4480
    %v4752 = vunpack.c.h.b16 %v4480
    %v4753 = vunpack.c.l.b16 %v4481
    %v4754 = vunpack.c.h.b16 %v4481
    %v4755 = vunpack.c.l.b16 %v4482
    %v4756 = vunpack.c.h.b16 %v4482
    %v4757 = vunpack.c.l.b16 %v4483
    %v4758 = vunpack.c.h.b16 %v4483
    %v4759 = vunpack.c.l.b16 %v4484
    %v4760 = vunpack.c.h.b16 %v4484
    %v4761 = vunpack.c.l.b16 %v4485
    %v4762 = vunpack.c.h.b16 %v4485
    %v4763 = vunpack.c.l.b16 %v4486
    %v4764 = vunpack.c.h.b16 %v4486
    %v4765 = vunpack.c.l.b16 %v4487
    %v4766 = vunpack.c.h.b16 %v4487
    %v4767 = vunpack.c.l.b16 %v4488
    %v4768 = vunpack.c.h.b16 %v4488
    %v4769 = vunpack.c.l.b16 %v4489
    %v4770 = vunpack.c.h.b16 %v4489
    %v4771 = vunpack.c.l.b16 %v4490
    %v4772 = vunpack.c.h.b16 %v4490
    %v4773 = vunpack.c.l.b16 %v4491
    %v4774 = vunpack.c.h.b16 %v4491
    %v4775 = vunpack.c.l.b16 %v4492
    %v4776 = vunpack.c.h.b16 %v4492
    %v4777 = vunpack.c.l.b16 %v4493
    %v4778 = vunpack.c.h.b16 %v4493
    %v4779 = vunpack.c.l.b16 %v4494
    %v4780 = vunpack.c.h.b16 %v4494
    %v4781 = vunpack.c.l.b16 %v4495
    %v4782 = vunpack.c.h.b16 %v4495
    %v4783 = vunpack.c.l.b16 %v4496
    %v4784 = vunpack.c.h.b16 %v4496
    %v4785 = vunpack.c.l.b16 %v4497
    %v4786 = vunpack.c.h.b16 %v4497
    %v4787 = vunpack.c.l.b16 %v4498
    %v4788 = vunpack.c.h.b16 %v4498
    %v4789 = vunpack.c.l.b16 %v4499
    %v4790 = vunpack.c.h.b16 %v4499
    %v4791 = vunpack.c.l.b16 %v4500
    %v4792 = vunpack.c.h.b16 %v4500
    %v4793 = vunpack.c.l.b16 %v4501
    %v4794 = vunpack.c.h.b16 %v4501
    %v4795 = vunpack.c.l.b16 %v4502
    %v4796 = vunpack.c.h.b16 %v4502
    %v4797 = vunpack.c.l.b16 %v4503
    %v4798 = vunpack.c.h.b16 %v4503
    %v4799 = vunpack.c.l.b16 %v4504
    %v4800 = vunpack.c.h.b16 %v4504
    %v4801 = vunpack.c.l.b16 %v4505
    %v4802 = vunpack.c.h.b16 %v4505
    %v4803 = vunpack.c.l.b16 %v4506
    %v4804 = vunpack.c.h.b16 %v4506
    %v4805 = vunpack.c.l.b16 %v4507
    %v4806 = vunpack.c.h.b16 %v4507
    %v4807 = vunpack.c.l.b16 %v4508
    %v4808 = vunpack.c.h.b16 %v4508
    %v4809 = vunpack.c.l.b16 %v4509
    %v4810 = vunpack.c.h.b16 %v4509
    %v4811 = vunpack.c.l.b16 %v4510
    %v4812 = vunpack.c.h.b16 %v4510
    %v4813 = vunpack.c.l.b16 %v4511
    %v4814 = vunpack.c.h.b16 %v4511
    %v4815 = vunpack.c.l.b16 %v4512
    %v4816 = vunpack.c.h.b16 %v4512
    %v4817 = vunpack.c.l.b16 %v4513
    %v4818 = vunpack.c.h.b16 %v4513
    %v4819 = vunpack.c.l.b16 %v4514
    %v4820 = vunpack.c.h.b16 %v4514
    %v4821 = vunpack.c.l.b16 %v4515
    %v4822 = vunpack.c.h.b16 %v4515
    %v4823 = vunpack.c.l.b16 %v4516
    %v4824 = vunpack.c.h.b16 %v4516
    %v4825 = vunpack.c.l.b16 %v4517
    %v4826 = vunpack.c.h.b16 %v4517
    %v4827 = vunpack.c.l.b16 %v4518
    %v4828 = vunpack.c.h.b16 %v4518
    %v4829 = vunpack.c.l.b16 %v4519
    %v4830 = vunpack.c.h.b16 %v4519
    %v4831 = vunpack.c.l.b16 %v4520
    %v4832 = vunpack.c.h.b16 %v4520
    %v4833 = vunpack.c.l.b16 %v4521
    %v4834 = vunpack.c.h.b16 %v4521
    %v4835 = vunpack.c.l.b16 %v4522
    %v4836 = vunpack.c.h.b16 %v4522
    %v4837 = vunpack.c.l.b16 %v4523
    %v4838 = vunpack.c.h.b16 %v4523
    %v4839 = vunpack.c.l.b16 %v4524
    %v4840 = vunpack.c.h.b16 %v4524
    %v4841 = vunpack.c.l.b16 %v4525
    %v4842 = vunpack.c.h.b16 %v4525
    %v4843 = vunpack.c.l.b16 %v4526
    %v4844 = vunpack.c.h.b16 %v4526
    %v4845 = vunpack.c.l.b16 %v4527
    %v4846 = vunpack.c.h.b16 %v4527
    %v4847 = vunpack.c.l.b16 %v4528
    %v4848 = vunpack.c.h.b16 %v4528
    %v4849 = vunpack.c.l.b16 %v4529
    %v4850 = vunpack.c.h.b16 %v4529
    %v4851 = vunpack.c.l.b16 %v4530
    %v4852 = vunpack.c.h.b16 %v4530
    %v4853 = vunpack.c.l.b16 %v4531
    %v4854 = vunpack.c.h.b16 %v4531
    %v4855 = vunpack.c.l.b16 %v4532
    %v4856 = vunpack.c.h.b16 %v4532
    %v4857 = vunpack.c.l.b16 %v4533
    %v4858 = vunpack.c.h.b16 %v4533
    %v4859 = vunpack.c.l.b16 %v4534
    %v4860 = vunpack.c.h.b16 %v4534
    %v4861 = vunpack.c.l.b16 %v4535
    %v4862 = vunpack.c.h.b16 %v4535
    %v4863 = vunpack.c.l.b16 %v4536
    %v4864 = vunpack.c.h.b16 %v4536
    %v4865 = vunpack.c.l.b16 %v4537
    %v4866 = vunpack.c.h.b16 %v4537
    %v4867 = vunpack.c.l.b16 %v4538
    %v4868 = vunpack.c.h.b16 %v4538
    %v4869 = vunpack.c.l.b16 %v4539
    %v4870 = vunpack.c.h.b16 %v4539
    %v4871 = vunpack.c.l.b16 %v4540
    %v4872 = vunpack.c.h.b16 %v4540
    %v4873 = vunpack.c.l.b16 %v4541
    %v4874 = vunpack.c.h.b16 %v4541
    %v4875 = vunpack.c.l.b16 %v4542
    %v4876 = vunpack.c.h.b16 %v4542
    %v4877 = vunpack.c.l.b16 %v4543
    %v4878 = vunpack.c.h.b16 %v4543
    %v4879 = vunpack.c.l.b16 %v4544
    %v4880 = vunpack.c.h.b16 %v4544
    %v4881 = vunpack.c.l.b16 %v4545
    %v4882 = vunpack.c.h.b16 %v4545
    %v4883 = vunpack.c.l.b16 %v4546
    %v4884 = vunpack.c.h.b16 %v4546
    %v4885 = vunpack.c.l.b16 %v4547
    %v4886 = vunpack.c.h.b16 %v4547
    %v4887 = vunpack.c.l.b16 %v4548
    %v4888 = vunpack.c.h.b16 %v4548
    %v4889 = vunpack.c.l.b16 %v4549
    %v4890 = vunpack.c.h.b16 %v4549
    %v4891 = vunpack.c.l.b16 %v4550
    %v4892 = vunpack.c.h.b16 %v4550
    %v4893 = vunpack.c.l.b16 %v4551
    %v4894 = vunpack.c.h.b16 %v4551
    %v4895 = vunpack.c.l.b16 %v4552
    %v4896 = vunpack.c.h.b16 %v4552
    %v4897 = vunpack.c.l.b16 %v4553
    %v4898 = vunpack.c.h.b16 %v4553
    %v4899 = vunpack.c.l.b16 %v4554
    %v4900 = vunpack.c.h.b16 %v4554
    %v4901 = vunpack.c.l.b16 %v4555
    %v4902 = vunpack.c.h.b16 %v4555
    %v4903 = vunpack.c.l.b16 %v4556
    %v4904 = vunpack.c.h.b16 %v4556
    %v4905 = vunpack.c.l.b16 %v4557
    %v4906 = vunpack.c.h.b16 %v4557
    %v4907 = vunpack.c.l.b16 %v4558
    %v4908 = vunpack.c.h.b16 %v4558
    %v4909 = vunpack.c.l.b16 %v4559
    %v4910 = vunpack.c.h.b16 %v4559
    %v4911 = vunpack.c.l.b16 %v4560
    %v4912 = vunpack.c.h.b16 %v4560
    %v4913 = vunpack.c.l.b16 %v4561
    %v4914 = vunpack.c.h.b16 %v4561
    %v4915 = vunpack.c.l.b16 %v4562
    %v4916 = vunpack.c.h.b16 %v4562
    %v4917 = vunpack.c.l.b16 %v4563
    %v4918 = vunpack.c.h.b16 %v4563
    %v4919 = vunpack.c.l.b16 %v4564
    %v4920 = vunpack.c.h.b16 %v4564
    %v4921 = vunpack.c.l.b16 %v4565
    %v4922 = vunpack.c.h.b16 %v4565
    %v4923 = vunpack.c.l.b16 %v4566
    %v4924 = vunpack.c.h.b16 %v4566
    %v4925 = vunpack.c.l.b16 %v4567
    %v4926 = vunpack.c.h.b16 %v4567
    %v4927 = vunpack.c.l.b16 %v4568
    %v4928 = vunpack.c.h.b16 %v4568
    %v4929 = vunpack.c.l.b16 %v4569
    %v4930 = vunpack.c.h.b16 %v4569
    %v4931 = vunpack.c.l.b16 %v4570
    %v4932 = vunpack.c.h.b16 %v4570
    %v4933 = vunpack.c.l.b16 %v4571
    %v4934 = vunpack.c.h.b16 %v4571
    %v4935 = vunpack.c.l.b16 %v4572
    %v4936 = vunpack.c.h.b16 %v4572
    %v4937 = vunpack.c.l.b16 %v4573
    %v4938 = vunpack.c.h.b16 %v4573
    %v4939 = vunpack.c.l.b16 %v4574
    %v4940 = vunpack.c.h.b16 %v4574
    %v4941 = vunpack.c.l.b16 %v4575
    %v4942 = vunpack.c.h.b16 %v4575
    %v4943 = vunpack.c.l.b16 %v4576
    %v4944 = vunpack.c.h.b16 %v4576
    %v4945 = vunpack.c.l.b16 %v4577
    %v4946 = vunpack.c.h.b16 %v4577
    %v4947 = vunpack.c.l.b16 %v4578
    %v4948 = vunpack.c.h.b16 %v4578
    %v4949 = vunpack.c.l.b16 %v4579
    %v4950 = vunpack.c.h.b16 %v4579
    %v4951 = vunpack.c.l.b16 %v4580
    %v4952 = vunpack.c.h.b16 %v4580
    %v4953 = vunpack.c.l.b16 %v4581
    %v4954 = vunpack.c.h.b16 %v4581
    %v4955 = vunpack.c.l.b16 %v4582
    %v4956 = vunpack.c.h.b16 %v4582
    %v4957 = vunpack.c.l.b16 %v4583
    %v4958 = vunpack.c.h.b16 %v4583
    %v4959 = vunpack.c.l.b16 %v4584
    %v4960 = vunpack.c.h.b16 %v4584
    %v4961 = vunpack.c.l.b16 %v4585
    %v4962 = vunpack.c.h.b16 %v4585
    %v4963 = vunpack.c.l.b16 %v4586
    %v4964 = vunpack.c.h.b16 %v4586
    %v4965 = vunpack.c.l.b16 %v4587
    %v4966 = vunpack.c.h.b16 %v4587
    %v4967 = vunpack.c.l.b16 %v4588
    %v4968 = vunpack.c.h.b16 %v4588
    %v4969 = vunpack.c.l.b16 %v4589
    %v4970 = vunpack.c.h.b16 %v4589
    %v4971 = vunpack.c.l.b16 %v4590
    %v4972 = vunpack.c.h.b16 %v4590
    %v4973 = vunpack.c.l.b16 %v4591
    %v4974 = vunpack.c.h.b16 %v4591
    %v4975 = vunpack.c.l.b16 %v4592
    %v4976 = vunpack.c.h.b16 %v4592
    %v4977 = vunpack.c.l.b16 %v4593
    %v4978 = vunpack.c.h.b16 %v4593
    %v4979 = vunpack.c.l.b16 %v4594
    %v4980 = vunpack.c.h.b16 %v4594
    %v4981 = vunpack.c.l.b16 %v4595
    %v4982 = vunpack.c.h.b16 %v4595
    %v4983 = vunpack.c.l.b16 %v4596
    %v4984 = vunpack.c.h.b16 %v4596
    %v4985 = vpack.c.b16 %v4737, %v4729
    %v4986 = vpack.c.b16 %v4738, %v4730
    %v4987 = vpack.c.b16 %v4739, %v4731
    %v4988 = vpack.c.b16 %v4740, %v4732
    %v4989 = vpack.c.b16 %v4741, %v4733
    %v4990 = vpack.c.b16 %v4742, %v4734
    %v4991 = vpack.c.b16 %v4743, %v4735
    %v4992 = vpack.c.b16 %v4744, %v4736
    %v4993 = vpack.c.b16 %v4753, %v4745
    %v4994 = vpack.c.b16 %v4754, %v4746
    %v4995 = vpack.c.b16 %v4755, %v4747
    %v4996 = vpack.c.b16 %v4756, %v4748
    %v4997 = vpack.c.b16 %v4757, %v4749
    %v4998 = vpack.c.b16 %v4758, %v4750
    %v4999 = vpack.c.b16 %v4759, %v4751
    %v5000 = vpack.c.b16 %v4760, %v4752
    %v5001 = vpack.c.b16 %v4769, %v4761
    %v5002 = vpack.c.b16 %v4770, %v4762
    %v5003 = vpack.c.b16 %v4771, %v4763
    %v5004 = vpack.c.b16 %v4772, %v4764
    %v5005 = vpack.c.b16 %v4773, %v4765
    %v5006 = vpack.c.b16 %v4774, %v4766
    %v5007 = vpack.c.b16 %v4775, %v4767
    %v5008 = vpack.c.b16 %v4776, %v4768
    %v5009 = vpack.c.b16 %v4785, %v4777
    %v5010 = vpack.c.b16 %v4786, %v4778
    %v5011 = vpack.c.b16 %v4787, %v4779
    %v5012 = vpack.c.b16 %v4788, %v4780
    %v5013 = vpack.c.b16 %v4789, %v4781
    %v5014 = vpack.c.b16 %v4790, %v4782
    %v5015 = vpack.c.b16 %v4791, %v4783
    %v5016 = vpack.c.b16 %v4792, %v4784
    %v5017 = vpack.c.b16 %v4801, %v4793
    %v5018 = vpack.c.b16 %v4802, %v4794
    %v5019 = vpack.c.b16 %v4803, %v4795
    %v5020 = vpack.c.b16 %v4804, %v4796
    %v5021 = vpack.c.b16 %v4805, %v4797
    %v5022 = vpack.c.b16 %v4806, %v4798
    %v5023 = vpack.c.b16 %v4807, %v4799
    %v5024 = vpack.c.b16 %v4808, %v4800
    %v5025 = vpack.c.b16 %v4817, %v4809
    %v5026 = vpack.c.b16 %v4818, %v4810
    %v5027 = vpack.c.b16 %v4819, %v4811
    %v5028 = vpack.c.b16 %v4820, %v4812
    %v5029 = vpack.c.b16 %v4821, %v4813
    %v5030 = vpack.c.b16 %v4822, %v4814
    %v5031 = vpack.c.b16 %v4823, %v4815
    %v5032 = vpack.c.b16 %v4824, %v4816
    %v5033 = vpack.c.b16 %v4833, %v4825
    %v5034 = vpack.c.b16 %v4834, %v4826
    %v5035 = vpack.c.b16 %v4835, %v4827
    %v5036 = vpack.c.b16 %v4836, %v4828
    %v5037 = vpack.c.b16 %v4837, %v4829
    %v5038 = vpack.c.b16 %v4838, %v4830
    %v5039 = vpack.c.b16 %v4839, %v4831
    %v5040 = vpack.c.b16 %v4840, %v4832
    %v5041 = vpack.c.b16 %v4849, %v4841
    %v5042 = vpack.c.b16 %v4850, %v4842
    %v5043 = vpack.c.b16 %v4851, %v4843
    %v5044 = vpack.c.b16 %v4852, %v4844
    %v5045 = vpack.c.b16 %v4853, %v4845
    %v5046 = vpack.c.b16 %v4854, %v4846
    %v5047 = vpack.c.b16 %v4855, %v4847
    %v5048 = vpack.c.b16 %v4856, %v4848
    %v5049 = vpack.c.b16 %v4865, %v4857
    %v5050 = vpack.c.b16 %v4866, %v4858
    %v5051 = vpack.c.b16 %v4867, %v4859
    %v5052 = vpack.c.b16 %v4868, %v4860
    %v5053 = vpack.c.b16 %v4869, %v4861
    %v5054 = vpack.c.b16 %v4870, %v4862
    %v5055 = vpack.c.b16 %v4871, %v4863
    %v5056 = vpack.c.b16 %v4872, %v4864
    %v5057 = vpack.c.b16 %v4881, %v4873
    %v5058 = vpack.c.b16 %v4882, %v4874
    %v5059 = vpack.c.b16 %v4883, %v4875
    %v5060 = vpack.c.b16 %v4884, %v4876
    %v5061 = vpack.c.b16 %v4885, %v4877
    %v5062 = vpack.c.b16 %v4886, %v4878
    %v5063 = vpack.c.b16 %v4887, %v4879
    %v5064 = vpack.c.b16 %v4888, %v4880
    %v5065 = vpack.c.b16 %v4897, %v4889
    %v5066 = vpack.c.b16 %v4898, %v4890
    %v5067 = vpack.c.b16 %v4899, %v4891
    %v5068 = vpack.c.b16 %v4900, %v4892
    %v5069 = vpack.c.b16 %v4901, %v4893
    %v5070 = vpack.c.b16 %v4902, %v4894
    %v5071 = vpack.c.b16 %v4903, %v4895
    %v5072 = vpack.c.b16 %v4904, %v4896
    %v5073 = vpack.c.b16 %v4913, %v4905
    %v5074 = vpack.c.b16 %v4914, %v4906
    %v5075 = vpack.c.b16 %v4915, %v4907
    %v5076 = vpack.c.b16 %v4916, %v4908
    %v5077 = vpack.c.b16 %v4917, %v4909
    %v5078 = vpack.c.b16 %v4918, %v4910
    %v5079 = vpack.c.b16 %v4919, %v4911
    %v5080 = vpack.c.b16 %v4920, %v4912
    %v5081 = vpack.c.b16 %v4929, %v4921
    %v5082 = vpack.c.b16 %v4930, %v4922
    %v5083 = vpack.c.b16 %v4931, %v4923
    %v5084 = vpack.c.b16 %v4932, %v4924
    %v5085 = vpack.c.b16 %v4933, %v4925
    %v5086 = vpack.c.b16 %v4934, %v4926
    %v5087 = vpack.c.b16 %v4935, %v4927
    %v5088 = vpack.c.b16 %v4936, %v4928
    %v5089 = vpack.c.b16 %v4945, %v4937
    %v5090 = vpack.c.b16 %v4946, %v4938
    %v5091 = vpack.c.b16 %v4947, %v4939
    %v5092 = vpack.c.b16 %v4948, %v4940
    %v5093 = vpack.c.b16 %v4949, %v4941
    %v5094 = vpack.c.b16 %v4950, %v4942
    %v5095 = vpack.c.b16 %v4951, %v4943
    %v5096 = vpack.c.b16 %v4952, %v4944
    %v5097 = vpack.c.b16 %v4961, %v4953
    %v5098 = vpack.c.b16 %v4962, %v4954
    %v5099 = vpack.c.b16 %v4963, %v4955
    %v5100 = vpack.c.b16 %v4964, %v4956
    %v5101 = vpack.c.b16 %v4965, %v4957
    %v5102 = vpack.c.b16 %v4966, %v4958
    %v5103 = vpack.c.b16 %v4967, %v4959
    %v5104 = vpack.c.b16 %v4968, %v4960
    %v5105 = vpack.c.b16 %v4977, %v4969
    %v5106 = vpack.c.b16 %v4978, %v4970
    %v5107 = vpack.c.b16 %v4979, %v4971
    %v5108 = vpack.c.b16 %v4980, %v4972
    %v5109 = vpack.c.b16 %v4981, %v4973
    %v5110 = vpack.c.b16 %v4982, %v4974
    %v5111 = vpack.c.b16 %v4983, %v4975
    %v5112 = vpack.c.b16 %v4984, %v4976
    %5241 = vmatprep.subr.bf16.mxu0 %v5042
    %5242 = vmatpush1.bf16.msra.mxu0 %v5041
    %5243 = vmatprep.subr.bf16.mxu0 %v5034
    %5244 = vmatpush1.bf16.msra.mxu0 %v5033
    %5245 = vmatprep.subr.bf16.mxu0 %v5026
    %5246 = vmatpush1.bf16.msra.mxu0 %v5025
    %5247 = vmatprep.subr.bf16.mxu0 %v5018
    %5248 = vmatpush1.bf16.msra.mxu0 %v5017
    %5249 = vmatprep.subr.bf16.mxu0 %v5010
    %5250 = vmatpush1.bf16.msra.mxu0 %v5009
    %5251 = vmatprep.subr.bf16.mxu0 %v5002
    %5252 = vmatpush1.bf16.msra.mxu0 %v5001
    %5253 = vmatprep.subr.bf16.mxu0 %v4994
    %5254 = vmatpush1.bf16.msra.mxu0 %v4993
    %5255 = vmatprep.subr.bf16.mxu0 %v4986
    %5256 = vmatpush1.bf16.msra.mxu0 %v4985
    %5257 = vmatprep.subr.bf16.mxu0 %v5106
    %5258 = vmatpush2.bf16.msra.mxu0 %v5105
    %5259 = vmatprep.subr.bf16.mxu0 %v5098
    %5260 = vmatpush2.bf16.msra.mxu0 %v5097
    %5261 = vmatprep.subr.bf16.mxu0 %v5090
    %5262 = vmatpush2.bf16.msra.mxu0 %v5089
    %5263 = vmatprep.subr.bf16.mxu0 %v5082
    %5264 = vmatpush2.bf16.msra.mxu0 %v5081
    %5265 = vmatprep.subr.bf16.mxu0 %v5074
    %5266 = vmatpush2.bf16.msra.mxu0 %v5073
    %5267 = vmatprep.subr.bf16.mxu0 %v5066
    %5268 = vmatpush2.bf16.msra.mxu0 %v5065
    %5269 = vmatprep.subr.bf16.mxu0 %v5058
    %5270 = vmatpush2.bf16.msra.mxu0 %v5057
    %5271 = vmatprep.subr.bf16.mxu0 %v5050
    %5272 = vmatpush2.bf16.msra.mxu0 %v5049
    %5273 = vmatprep.mubr.bf16.mxu0 %v4600
    %5274 = vmatmul.mubr.bf16.gmra.mxu0 %v4599
    %v5275 = vpop.f32.mrf.mxu0
    %v5276 = vadd.f32 0.0, %v5275
    %v5277 = vpop.f32.mrf.mxu0
    %v5278 = vadd.f32 0.0, %v5277
    %v5279 = vpop.f32.mrf.mxu0
    %v5280 = vpop.f32.mrf.mxu0
    %5281 = vdwg.mxu0
    %5282 = vmatprep.subr.bf16.mxu0 %v5044
    %5283 = vmatpush1.bf16.msra.mxu0 %v5043
    %5284 = vmatprep.subr.bf16.mxu0 %v5036
    %5285 = vmatpush1.bf16.msra.mxu0 %v5035
    %5286 = vmatprep.subr.bf16.mxu0 %v5028
    %5287 = vmatpush1.bf16.msra.mxu0 %v5027
    %5288 = vmatprep.subr.bf16.mxu0 %v5020
    %5289 = vmatpush1.bf16.msra.mxu0 %v5019
    %5290 = vmatprep.subr.bf16.mxu0 %v5012
    %5291 = vmatpush1.bf16.msra.mxu0 %v5011
    %5292 = vmatprep.subr.bf16.mxu0 %v5004
    %5293 = vmatpush1.bf16.msra.mxu0 %v5003
    %5294 = vmatprep.subr.bf16.mxu0 %v4996
    %5295 = vmatpush1.bf16.msra.mxu0 %v4995
    %5296 = vmatprep.subr.bf16.mxu0 %v4988
    %5297 = vmatpush1.bf16.msra.mxu0 %v4987
    %5298 = vmatprep.subr.bf16.mxu0 %v5108
    %5299 = vmatpush2.bf16.msra.mxu0 %v5107
    %5300 = vmatprep.subr.bf16.mxu0 %v5100
    %5301 = vmatpush2.bf16.msra.mxu0 %v5099
    %5302 = vmatprep.subr.bf16.mxu0 %v5092
    %5303 = vmatpush2.bf16.msra.mxu0 %v5091
    %5304 = vmatprep.subr.bf16.mxu0 %v5084
    %5305 = vmatpush2.bf16.msra.mxu0 %v5083
    %5306 = vmatprep.subr.bf16.mxu0 %v5076
    %5307 = vmatpush2.bf16.msra.mxu0 %v5075
    %5308 = vmatprep.subr.bf16.mxu0 %v5068
    %5309 = vmatpush2.bf16.msra.mxu0 %v5067
    %5310 = vmatprep.subr.bf16.mxu0 %v5060
    %5311 = vmatpush2.bf16.msra.mxu0 %v5059
    %5312 = vmatprep.subr.bf16.mxu0 %v5052
    %5313 = vmatpush2.bf16.msra.mxu0 %v5051
    %5314 = vmatprep.mubr.bf16.mxu0 %v4600
    %5315 = vmatmul.mubr.bf16.gmra.mxu0 %v4599
    %v5316 = vpop.f32.mrf.mxu0
    %v5317 = vadd.f32 0.0, %v5316
    %v5318 = vpop.f32.mrf.mxu0
    %v5319 = vadd.f32 0.0, %v5318
    %v5320 = vpop.f32.mrf.mxu0
    %v5321 = vpop.f32.mrf.mxu0
    %5322 = vdwg.mxu0
    %5323 = vmatprep.subr.bf16.mxu0 %v5046
    %5324 = vmatpush1.bf16.msra.mxu0 %v5045
    %5325 = vmatprep.subr.bf16.mxu0 %v5038
    %5326 = vmatpush1.bf16.msra.mxu0 %v5037
    %5327 = vmatprep.subr.bf16.mxu0 %v5030
    %5328 = vmatpush1.bf16.msra.mxu0 %v5029
    %5329 = vmatprep.subr.bf16.mxu0 %v5022
    %5330 = vmatpush1.bf16.msra.mxu0 %v5021
    %5331 = vmatprep.subr.bf16.mxu0 %v5014
    %5332 = vmatpush1.bf16.msra.mxu0 %v5013
    %5333 = vmatprep.subr.bf16.mxu0 %v5006
    %5334 = vmatpush1.bf16.msra.mxu0 %v5005
    %5335 = vmatprep.subr.bf16.mxu0 %v4998
    %5336 = vmatpush1.bf16.msra.mxu0 %v4997
    %5337 = vmatprep.subr.bf16.mxu0 %v4990
    %5338 = vmatpush1.bf16.msra.mxu0 %v4989
    %5339 = vmatprep.subr.bf16.mxu0 %v5110
    %5340 = vmatpush2.bf16.msra.mxu0 %v5109
    %5341 = vmatprep.subr.bf16.mxu0 %v5102
    %5342 = vmatpush2.bf16.msra.mxu0 %v5101
    %5343 = vmatprep.subr.bf16.mxu0 %v5094
    %5344 = vmatpush2.bf16.msra.mxu0 %v5093
    %5345 = vmatprep.subr.bf16.mxu0 %v5086
    %5346 = vmatpush2.bf16.msra.mxu0 %v5085
    %5347 = vmatprep.subr.bf16.mxu0 %v5078
    %5348 = vmatpush2.bf16.msra.mxu0 %v5077
    %5349 = vmatprep.subr.bf16.mxu0 %v5070
    %5350 = vmatpush2.bf16.msra.mxu0 %v5069
    %5351 = vmatprep.subr.bf16.mxu0 %v5062
    %5352 = vmatpush2.bf16.msra.mxu0 %v5061
    %5353 = vmatprep.subr.bf16.mxu0 %v5054
    %5354 = vmatpush2.bf16.msra.mxu0 %v5053
    %5355 = vmatprep.mubr.bf16.mxu0 %v4600
    %5356 = vmatmul.mubr.bf16.gmra.mxu0 %v4599
    %v5357 = vpop.f32.mrf.mxu0
    %v5358 = vadd.f32 0.0, %v5357
    %v5359 = vpop.f32.mrf.mxu0
    %v5360 = vadd.f32 0.0, %v5359
    %v5361 = vpop.f32.mrf.mxu0
    %v5362 = vpop.f32.mrf.mxu0
    %5363 = vdwg.mxu0
    %5364 = vmatprep.subr.bf16.mxu0 %v5048
    %5365 = vmatpush1.bf16.msra.mxu0 %v5047
    %5366 = vmatprep.subr.bf16.mxu0 %v5040
    %5367 = vmatpush1.bf16.msra.mxu0 %v5039
    %5368 = vmatprep.subr.bf16.mxu0 %v5032
    %5369 = vmatpush1.bf16.msra.mxu0 %v5031
    %5370 = vmatprep.subr.bf16.mxu0 %v5024
    %5371 = vmatpush1.bf16.msra.mxu0 %v5023
    %5372 = vmatprep.subr.bf16.mxu0 %v5016
    %5373 = vmatpush1.bf16.msra.mxu0 %v5015
    %5374 = vmatprep.subr.bf16.mxu0 %v5008
    %5375 = vmatpush1.bf16.msra.mxu0 %v5007
    %5376 = vmatprep.subr.bf16.mxu0 %v5000
    %5377 = vmatpush1.bf16.msra.mxu0 %v4999
    %5378 = vmatprep.subr.bf16.mxu0 %v4992
    %5379 = vmatpush1.bf16.msra.mxu0 %v4991
    %5380 = vmatprep.subr.bf16.mxu0 %v5112
    %5381 = vmatpush2.bf16.msra.mxu0 %v5111
    %5382 = vmatprep.subr.bf16.mxu0 %v5104
    %5383 = vmatpush2.bf16.msra.mxu0 %v5103
    %5384 = vmatprep.subr.bf16.mxu0 %v5096
    %5385 = vmatpush2.bf16.msra.mxu0 %v5095
    %5386 = vmatprep.subr.bf16.mxu0 %v5088
    %5387 = vmatpush2.bf16.msra.mxu0 %v5087
    %5388 = vmatprep.subr.bf16.mxu0 %v5080
    %5389 = vmatpush2.bf16.msra.mxu0 %v5079
    %5390 = vmatprep.subr.bf16.mxu0 %v5072
    %5391 = vmatpush2.bf16.msra.mxu0 %v5071
    %5392 = vmatprep.subr.bf16.mxu0 %v5064
    %5393 = vmatpush2.bf16.msra.mxu0 %v5063
    %5394 = vmatprep.subr.bf16.mxu0 %v5056
    %5395 = vmatpush2.bf16.msra.mxu0 %v5055
    %5396 = vmatprep.mubr.bf16.mxu0 %v4600
    %5397 = vmatmul.mubr.bf16.gmra.mxu0 %v4599
    %v5398 = vpop.f32.mrf.mxu0
    %v5399 = vadd.f32 0.0, %v5398
    %v5400 = vpop.f32.mrf.mxu0
    %v5401 = vadd.f32 0.0, %v5400
    %v5402 = vpop.f32.mrf.mxu0
    %v5403 = vpop.f32.mrf.mxu0
    %5404 = vdwg.mxu0
    %v5405 = vld [vmem:[#allocation5] sm:$0xff]
    %v5406 = vld [vmem:[#allocation5 + $0x8] sm:$0xff]
    %v5407 = vld [vmem:[#allocation2] sm:$0xff]
    %v5408 = vld [vmem:[#allocation2 + $0x8] sm:$0xff]
    %v5409 = vld [vmem:[#allocation2 + $0x10] sm:$0xff]
    %v5410 = vld [vmem:[#allocation2 + $0x18] sm:$0xff]
    %v5411 = vadd.f32 %v5407, %v5276
    %v5412 = vadd.f32 %v5408, %v5278
    %v5413 = vadd.f32 %v5409, %v5317
    %v5414 = vadd.f32 %v5410, %v5319
    %v5415 = vxor.u32 %v5411, 2147483648
    %v5416 = vmul.f32 %v5415, 1.442695
    %v5417 = vpow.pop %v5416
    %v5418 = vadd.f32 %v5417, 1.0
    %v5419 = vrcp.pop %v5418
    %v5420 = vmul.f32 1.0, %v5419
    %v5421 = vxor.u32 %v5412, 2147483648
    %v5422 = vmul.f32 %v5421, 1.442695
    %v5423 = vpow.pop %v5422
    %v5424 = vadd.f32 %v5423, 1.0
    %v5425 = vrcp.pop %v5424
    %v5426 = vmul.f32 1.0, %v5425
    %v5427 = vtanh.pop %v5413
    %v5428 = vxor.u32 %v5414, 2147483648
    %v5429 = vmul.f32 %v5428, 1.442695
    %v5430 = vpow.pop %v5429
    %v5431 = vadd.f32 %v5430, 1.0
    %v5432 = vrcp.pop %v5431
    %v5433 = vmul.f32 1.0, %v5432
    %v5434 = vmul.f32 %v5426, %v5405
    %v5435 = vmul.f32 %v5420, %v5427
    %v5436 = vadd.f32 %v5434, %v5435
    %v5437 = vtanh.pop %v5436
    %v5438 = vmul.f32 %v5433, %v5437
    %5439 = vst [vmem:[#allocation5] sm:$0xff] %v5436
    %5440 = vst [vmem:[#allocation4] sm:$0xff] %v5438
    %5441 = vst [vmem:[%s5] sm:$0xff] %v5438
    %v5442 = vld [vmem:[#allocation2 + $0x1e0] sm:$0xff]
    %v5443 = vld [vmem:[#allocation2 + $0x1e8] sm:$0xff]
    %v5444 = vld [vmem:[#allocation2 + $0x1f0] sm:$0xff]
    %v5445 = vld [vmem:[#allocation2 + $0x1f8] sm:$0xff]
    %v5446 = vadd.f32 %v5442, %v5358
    %v5447 = vadd.f32 %v5443, %v5360
    %v5448 = vadd.f32 %v5444, %v5399
    %v5449 = vadd.f32 %v5445, %v5401
    %v5450 = vxor.u32 %v5446, 2147483648
    %v5451 = vmul.f32 %v5450, 1.442695
    %v5452 = vpow.pop %v5451
    %v5453 = vadd.f32 %v5452, 1.0
    %v5454 = vrcp.pop %v5453
    %v5455 = vmul.f32 1.0, %v5454
    %v5456 = vxor.u32 %v5447, 2147483648
    %v5457 = vmul.f32 %v5456, 1.442695
    %v5458 = vpow.pop %v5457
    %v5459 = vadd.f32 %v5458, 1.0
    %v5460 = vrcp.pop %v5459
    %v5461 = vmul.f32 1.0, %v5460
    %v5462 = vtanh.pop %v5448
    %v5463 = vxor.u32 %v5449, 2147483648
    %v5464 = vmul.f32 %v5463, 1.442695
    %v5465 = vpow.pop %v5464
    %v5466 = vadd.f32 %v5465, 1.0
    %v5467 = vrcp.pop %v5466
    %v5468 = vmul.f32 1.0, %v5467
    %v5469 = vmul.f32 %v5461, %v5406
    %v5470 = vmul.f32 %v5455, %v5462
    %v5471 = vadd.f32 %v5469, %v5470
    %v5472 = vtanh.pop %v5471
    %v5473 = vmul.f32 %v5468, %v5472
    %5474 = vst [vmem:[#allocation5 + $0x8] sm:$0xff] %v5471
    %5475 = vst [vmem:[#allocation4 + $0x8] sm:$0xff] %v5473
    %5476 = vst [vmem:[%s5 + $0x78] sm:$0xff] %v5473
    %v5477 = vld [vmem:[#allocation4] sm:$0xff]
    %v5478 = vld [vmem:[#allocation4 + $0x8] sm:$0xff]
    %v5479 = vpack.c.bf16 %v5477, %v5477
    %v5480 = vpack.c.bf16 %v5478, %v5478
    %5481 = vmatprep.subr.bf16.mxu0 %v5042
    %5482 = vmatpush1.bf16.msra.mxu0 %v5041
    %5483 = vmatprep.subr.bf16.mxu0 %v5034
    %5484 = vmatpush1.bf16.msra.mxu0 %v5033
    %5485 = vmatprep.subr.bf16.mxu0 %v5026
    %5486 = vmatpush1.bf16.msra.mxu0 %v5025
    %5487 = vmatprep.subr.bf16.mxu0 %v5018
    %5488 = vmatpush1.bf16.msra.mxu0 %v5017
    %5489 = vmatprep.subr.bf16.mxu0 %v5010
    %5490 = vmatpush1.bf16.msra.mxu0 %v5009
    %5491 = vmatprep.subr.bf16.mxu0 %v5002
    %5492 = vmatpush1.bf16.msra.mxu0 %v5001
    %5493 = vmatprep.subr.bf16.mxu0 %v4994
    %5494 = vmatpush1.bf16.msra.mxu0 %v4993
    %5495 = vmatprep.subr.bf16.mxu0 %v4986
    %5496 = vmatpush1.bf16.msra.mxu0 %v4985
    %5497 = vmatprep.subr.bf16.mxu0 %v5106
    %5498 = vmatpush2.bf16.msra.mxu0 %v5105
    %5499 = vmatprep.subr.bf16.mxu0 %v5098
    %5500 = vmatpush2.bf16.msra.mxu0 %v5097
    %5501 = vmatprep.subr.bf16.mxu0 %v5090
    %5502 = vmatpush2.bf16.msra.mxu0 %v5089
    %5503 = vmatprep.subr.bf16.mxu0 %v5082
    %5504 = vmatpush2.bf16.msra.mxu0 %v5081
    %5505 = vmatprep.subr.bf16.mxu0 %v5074
    %5506 = vmatpush2.bf16.msra.mxu0 %v5073
    %5507 = vmatprep.subr.bf16.mxu0 %v5066
    %5508 = vmatpush2.bf16.msra.mxu0 %v5065
    %5509 = vmatprep.subr.bf16.mxu0 %v5058
    %5510 = vmatpush2.bf16.msra.mxu0 %v5057
    %5511 = vmatprep.subr.bf16.mxu0 %v5050
    %5512 = vmatpush2.bf16.msra.mxu0 %v5049
    %5513 = vmatprep.mubr.bf16.mxu0 %v5480
    %5514 = vmatmul.mubr.bf16.gmra.mxu0 %v5479
    %v5515 = vpop.f32.mrf.mxu0
    %v5516 = vadd.f32 0.0, %v5515
    %v5517 = vpop.f32.mrf.mxu0
    %v5518 = vadd.f32 0.0, %v5517
    %v5519 = vpop.f32.mrf.mxu0
    %v5520 = vpop.f32.mrf.mxu0
    %5521 = vdwg.mxu0
    %5522 = vmatprep.subr.bf16.mxu0 %v5044
    %5523 = vmatpush1.bf16.msra.mxu0 %v5043
    %5524 = vmatprep.subr.bf16.mxu0 %v5036
    %5525 = vmatpush1.bf16.msra.mxu0 %v5035
    %5526 = vmatprep.subr.bf16.mxu0 %v5028
    %5527 = vmatpush1.bf16.msra.mxu0 %v5027
    %5528 = vmatprep.subr.bf16.mxu0 %v5020
    %5529 = vmatpush1.bf16.msra.mxu0 %v5019
    %5530 = vmatprep.subr.bf16.mxu0 %v5012
    %5531 = vmatpush1.bf16.msra.mxu0 %v5011
    %5532 = vmatprep.subr.bf16.mxu0 %v5004
    %5533 = vmatpush1.bf16.msra.mxu0 %v5003
    %5534 = vmatprep.subr.bf16.mxu0 %v4996
    %5535 = vmatpush1.bf16.msra.mxu0 %v4995
    %5536 = vmatprep.subr.bf16.mxu0 %v4988
    %5537 = vmatpush1.bf16.msra.mxu0 %v4987
    %5538 = vmatprep.subr.bf16.mxu0 %v5108
    %5539 = vmatpush2.bf16.msra.mxu0 %v5107
    %5540 = vmatprep.subr.bf16.mxu0 %v5100
    %5541 = vmatpush2.bf16.msra.mxu0 %v5099
    %5542 = vmatprep.subr.bf16.mxu0 %v5092
    %5543 = vmatpush2.bf16.msra.mxu0 %v5091
    %5544 = vmatprep.subr.bf16.mxu0 %v5084
    %5545 = vmatpush2.bf16.msra.mxu0 %v5083
    %5546 = vmatprep.subr.bf16.mxu0 %v5076
    %5547 = vmatpush2.bf16.msra.mxu0 %v5075
    %5548 = vmatprep.subr.bf16.mxu0 %v5068
    %5549 = vmatpush2.bf16.msra.mxu0 %v5067
    %5550 = vmatprep.subr.bf16.mxu0 %v5060
    %5551 = vmatpush2.bf16.msra.mxu0 %v5059
    %5552 = vmatprep.subr.bf16.mxu0 %v5052
    %5553 = vmatpush2.bf16.msra.mxu0 %v5051
    %5554 = vmatprep.mubr.bf16.mxu0 %v5480
    %5555 = vmatmul.mubr.bf16.gmra.mxu0 %v5479
    %v5556 = vpop.f32.mrf.mxu0
    %v5557 = vadd.f32 0.0, %v5556
    %v5558 = vpop.f32.mrf.mxu0
    %v5559 = vadd.f32 0.0, %v5558
    %v5560 = vpop.f32.mrf.mxu0
    %v5561 = vpop.f32.mrf.mxu0
    %5562 = vdwg.mxu0
    %5563 = vmatprep.subr.bf16.mxu0 %v5046
    %5564 = vmatpush1.bf16.msra.mxu0 %v5045
    %5565 = vmatprep.subr.bf16.mxu0 %v5038
    %5566 = vmatpush1.bf16.msra.mxu0 %v5037
    %5567 = vmatprep.subr.bf16.mxu0 %v5030
    %5568 = vmatpush1.bf16.msra.mxu0 %v5029
    %5569 = vmatprep.subr.bf16.mxu0 %v5022
    %5570 = vmatpush1.bf16.msra.mxu0 %v5021
    %5571 = vmatprep.subr.bf16.mxu0 %v5014
    %5572 = vmatpush1.bf16.msra.mxu0 %v5013
    %5573 = vmatprep.subr.bf16.mxu0 %v5006
    %5574 = vmatpush1.bf16.msra.mxu0 %v5005
    %5575 = vmatprep.subr.bf16.mxu0 %v4998
    %5576 = vmatpush1.bf16.msra.mxu0 %v4997
    %5577 = vmatprep.subr.bf16.mxu0 %v4990
    %5578 = vmatpush1.bf16.msra.mxu0 %v4989
    %5579 = vmatprep.subr.bf16.mxu0 %v5110
    %5580 = vmatpush2.bf16.msra.mxu0 %v5109
    %5581 = vmatprep.subr.bf16.mxu0 %v5102
    %5582 = vmatpush2.bf16.msra.mxu0 %v5101
    %5583 = vmatprep.subr.bf16.mxu0 %v5094
    %5584 = vmatpush2.bf16.msra.mxu0 %v5093
    %5585 = vmatprep.subr.bf16.mxu0 %v5086
    %5586 = vmatpush2.bf16.msra.mxu0 %v5085
    %5587 = vmatprep.subr.bf16.mxu0 %v5078
    %5588 = vmatpush2.bf16.msra.mxu0 %v5077
    %5589 = vmatprep.subr.bf16.mxu0 %v5070
    %5590 = vmatpush2.bf16.msra.mxu0 %v5069
    %5591 = vmatprep.subr.bf16.mxu0 %v5062
    %5592 = vmatpush2.bf16.msra.mxu0 %v5061
    %5593 = vmatprep.subr.bf16.mxu0 %v5054
    %5594 = vmatpush2.bf16.msra.mxu0 %v5053
    %5595 = vmatprep.mubr.bf16.mxu0 %v5480
    %5596 = vmatmul.mubr.bf16.gmra.mxu0 %v5479
    %v5597 = vpop.f32.mrf.mxu0
    %v5598 = vadd.f32 0.0, %v5597
    %v5599 = vpop.f32.mrf.mxu0
    %v5600 = vadd.f32 0.0, %v5599
    %v5601 = vpop.f32.mrf.mxu0
    %v5602 = vpop.f32.mrf.mxu0
    %5603 = vdwg.mxu0
    %5604 = vmatprep.subr.bf16.mxu0 %v5048
    %5605 = vmatpush1.bf16.msra.mxu0 %v5047
    %5606 = vmatprep.subr.bf16.mxu0 %v5040
    %5607 = vmatpush1.bf16.msra.mxu0 %v5039
    %5608 = vmatprep.subr.bf16.mxu0 %v5032
    %5609 = vmatpush1.bf16.msra.mxu0 %v5031
    %5610 = vmatprep.subr.bf16.mxu0 %v5024
    %5611 = vmatpush1.bf16.msra.mxu0 %v5023
    %5612 = vmatprep.subr.bf16.mxu0 %v5016
    %5613 = vmatpush1.bf16.msra.mxu0 %v5015
    %5614 = vmatprep.subr.bf16.mxu0 %v5008
    %5615 = vmatpush1.bf16.msra.mxu0 %v5007
    %5616 = vmatprep.subr.bf16.mxu0 %v5000
    %5617 = vmatpush1.bf16.msra.mxu0 %v4999
    %5618 = vmatprep.subr.bf16.mxu0 %v4992
    %5619 = vmatpush1.bf16.msra.mxu0 %v4991
    %5620 = vmatprep.subr.bf16.mxu0 %v5112
    %5621 = vmatpush2.bf16.msra.mxu0 %v5111
    %5622 = vmatprep.subr.bf16.mxu0 %v5104
    %5623 = vmatpush2.bf16.msra.mxu0 %v5103
    %5624 = vmatprep.subr.bf16.mxu0 %v5096
    %5625 = vmatpush2.bf16.msra.mxu0 %v5095
    %5626 = vmatprep.subr.bf16.mxu0 %v5088
    %5627 = vmatpush2.bf16.msra.mxu0 %v5087
    %5628 = vmatprep.subr.bf16.mxu0 %v5080
    %5629 = vmatpush2.bf16.msra.mxu0 %v5079
    %5630 = vmatprep.subr.bf16.mxu0 %v5072
    %5631 = vmatpush2.bf16.msra.mxu0 %v5071
    %5632 = vmatprep.subr.bf16.mxu0 %v5064
    %5633 = vmatpush2.bf16.msra.mxu0 %v5063
    %5634 = vmatprep.subr.bf16.mxu0 %v5056
    %5635 = vmatpush2.bf16.msra.mxu0 %v5055
    %5636 = vmatprep.mubr.bf16.mxu0 %v5480
    %5637 = vmatmul.mubr.bf16.gmra.mxu0 %v5479
    %v5638 = vpop.f32.mrf.mxu0
    %v5639 = vadd.f32 0.0, %v5638
    %v5640 = vpop.f32.mrf.mxu0
    %v5641 = vadd.f32 0.0, %v5640
    %v5642 = vpop.f32.mrf.mxu0
    %v5643 = vpop.f32.mrf.mxu0
    %5644 = vdwg.mxu0
    %v5645 = vld [vmem:[#allocation5] sm:$0xff]
    %v5646 = vld [vmem:[#allocation5 + $0x8] sm:$0xff]
    %v5647 = vld [vmem:[#allocation2 + $0x40] sm:$0xff]
    %v5648 = vld [vmem:[#allocation2 + $0x48] sm:$0xff]
    %v5649 = vld [vmem:[#allocation2 + $0x50] sm:$0xff]
    %v5650 = vld [vmem:[#allocation2 + $0x58] sm:$0xff]
    %v5651 = vadd.f32 %v5647, %v5516
    %v5652 = vadd.f32 %v5648, %v5518
    %v5653 = vadd.f32 %v5649, %v5557
    %v5654 = vadd.f32 %v5650, %v5559
    %v5655 = vxor.u32 %v5651, 2147483648
    %v5656 = vmul.f32 %v5655, 1.442695
    %v5657 = vpow.pop %v5656
    %v5658 = vadd.f32 %v5657, 1.0
    %v5659 = vrcp.pop %v5658
    %v5660 = vmul.f32 1.0, %v5659
    %v5661 = vxor.u32 %v5652, 2147483648
    %v5662 = vmul.f32 %v5661, 1.442695
    %v5663 = vpow.pop %v5662
    %v5664 = vadd.f32 %v5663, 1.0
    %v5665 = vrcp.pop %v5664
    %v5666 = vmul.f32 1.0, %v5665
    %v5667 = vtanh.pop %v5653
    %v5668 = vxor.u32 %v5654, 2147483648
    %v5669 = vmul.f32 %v5668, 1.442695
    %v5670 = vpow.pop %v5669
    %v5671 = vadd.f32 %v5670, 1.0
    %v5672 = vrcp.pop %v5671
    %v5673 = vmul.f32 1.0, %v5672
    %v5674 = vmul.f32 %v5666, %v5645
    %v5675 = vmul.f32 %v5660, %v5667
    %v5676 = vadd.f32 %v5674, %v5675
    %v5677 = vtanh.pop %v5676
    %v5678 = vmul.f32 %v5673, %v5677
    %5679 = vst [vmem:[#allocation5] sm:$0xff] %v5676
    %5680 = vst [vmem:[#allocation4] sm:$0xff] %v5678
    %5681 = vst [vmem:[%s5 + $0x10] sm:$0xff] %v5678
    %v5682 = vld [vmem:[#allocation2 + $0x1a0] sm:$0xff]
    %v5683 = vld [vmem:[#allocation2 + $0x1a8] sm:$0xff]
    %v5684 = vld [vmem:[#allocation2 + $0x1b0] sm:$0xff]
    %v5685 = vld [vmem:[#allocation2 + $0x1b8] sm:$0xff]
    %v5686 = vadd.f32 %v5682, %v5598
    %v5687 = vadd.f32 %v5683, %v5600
    %v5688 = vadd.f32 %v5684, %v5639
    %v5689 = vadd.f32 %v5685, %v5641
    %v5690 = vxor.u32 %v5686, 2147483648
    %v5691 = vmul.f32 %v5690, 1.442695
    %v5692 = vpow.pop %v5691
    %v5693 = vadd.f32 %v5692, 1.0
    %v5694 = vrcp.pop %v5693
    %v5695 = vmul.f32 1.0, %v5694
    %v5696 = vxor.u32 %v5687, 2147483648
    %v5697 = vmul.f32 %v5696, 1.442695
    %v5698 = vpow.pop %v5697
    %v5699 = vadd.f32 %v5698, 1.0
    %v5700 = vrcp.pop %v5699
    %v5701 = vmul.f32 1.0, %v5700
    %v5702 = vtanh.pop %v5688
    %v5703 = vxor.u32 %v5689, 2147483648
    %v5704 = vmul.f32 %v5703, 1.442695
    %v5705 = vpow.pop %v5704
    %v5706 = vadd.f32 %v5705, 1.0
    %v5707 = vrcp.pop %v5706
    %v5708 = vmul.f32 1.0, %v5707
    %v5709 = vmul.f32 %v5701, %v5646
    %v5710 = vmul.f32 %v5695, %v5702
    %v5711 = vadd.f32 %v5709, %v5710
    %v5712 = vtanh.pop %v5711
    %v5713 = vmul.f32 %v5708, %v5712
    %5714 = vst [vmem:[#allocation5 + $0x8] sm:$0xff] %v5711
    %5715 = vst [vmem:[#allocation4 + $0x8] sm:$0xff] %v5713
    %5716 = vst [vmem:[%s5 + $0x68] sm:$0xff] %v5713
    %v5717 = vld [vmem:[#allocation4] sm:$0xff]
    %v5718 = vld [vmem:[#allocation4 + $0x8] sm:$0xff]
    %v5719 = vpack.c.bf16 %v5717, %v5717
    %v5720 = vpack.c.bf16 %v5718, %v5718
    %5721 = vmatprep.subr.bf16.mxu0 %v5042
    %5722 = vmatpush1.bf16.msra.mxu0 %v5041
    %5723 = vmatprep.subr.bf16.mxu0 %v5034
    %5724 = vmatpush1.bf16.msra.mxu0 %v5033
    %5725 = vmatprep.subr.bf16.mxu0 %v5026
    %5726 = vmatpush1.bf16.msra.mxu0 %v5025
    %5727 = vmatprep.subr.bf16.mxu0 %v5018
    %5728 = vmatpush1.bf16.msra.mxu0 %v5017
    %5729 = vmatprep.subr.bf16.mxu0 %v5010
    %5730 = vmatpush1.bf16.msra.mxu0 %v5009
    %5731 = vmatprep.subr.bf16.mxu0 %v5002
    %5732 = vmatpush1.bf16.msra.mxu0 %v5001
    %5733 = vmatprep.subr.bf16.mxu0 %v4994
    %5734 = vmatpush1.bf16.msra.mxu0 %v4993
    %5735 = vmatprep.subr.bf16.mxu0 %v4986
    %5736 = vmatpush1.bf16.msra.mxu0 %v4985
    %5737 = vmatprep.subr.bf16.mxu0 %v5106
    %5738 = vmatpush2.bf16.msra.mxu0 %v5105
    %5739 = vmatprep.subr.bf16.mxu0 %v5098
    %5740 = vmatpush2.bf16.msra.mxu0 %v5097
    %5741 = vmatprep.subr.bf16.mxu0 %v5090
    %5742 = vmatpush2.bf16.msra.mxu0 %v5089
    %5743 = vmatprep.subr.bf16.mxu0 %v5082
    %5744 = vmatpush2.bf16.msra.mxu0 %v5081
    %5745 = vmatprep.subr.bf16.mxu0 %v5074
    %5746 = vmatpush2.bf16.msra.mxu0 %v5073
    %5747 = vmatprep.subr.bf16.mxu0 %v5066
    %5748 = vmatpush2.bf16.msra.mxu0 %v5065
    %5749 = vmatprep.subr.bf16.mxu0 %v5058
    %5750 = vmatpush2.bf16.msra.mxu0 %v5057
    %5751 = vmatprep.subr.bf16.mxu0 %v5050
    %5752 = vmatpush2.bf16.msra.mxu0 %v5049
    %5753 = vmatprep.mubr.bf16.mxu0 %v5720
    %5754 = vmatmul.mubr.bf16.gmra.mxu0 %v5719
    %v5755 = vpop.f32.mrf.mxu0
    %v5756 = vadd.f32 0.0, %v5755
    %v5757 = vpop.f32.mrf.mxu0
    %v5758 = vadd.f32 0.0, %v5757
    %v5759 = vpop.f32.mrf.mxu0
    %v5760 = vpop.f32.mrf.mxu0
    %5761 = vdwg.mxu0
    %5762 = vmatprep.subr.bf16.mxu0 %v5044
    %5763 = vmatpush1.bf16.msra.mxu0 %v5043
    %5764 = vmatprep.subr.bf16.mxu0 %v5036
    %5765 = vmatpush1.bf16.msra.mxu0 %v5035
    %5766 = vmatprep.subr.bf16.mxu0 %v5028
    %5767 = vmatpush1.bf16.msra.mxu0 %v5027
    %5768 = vmatprep.subr.bf16.mxu0 %v5020
    %5769 = vmatpush1.bf16.msra.mxu0 %v5019
    %5770 = vmatprep.subr.bf16.mxu0 %v5012
    %5771 = vmatpush1.bf16.msra.mxu0 %v5011
    %5772 = vmatprep.subr.bf16.mxu0 %v5004
    %5773 = vmatpush1.bf16.msra.mxu0 %v5003
    %5774 = vmatprep.subr.bf16.mxu0 %v4996
    %5775 = vmatpush1.bf16.msra.mxu0 %v4995
    %5776 = vmatprep.subr.bf16.mxu0 %v4988
    %5777 = vmatpush1.bf16.msra.mxu0 %v4987
    %5778 = vmatprep.subr.bf16.mxu0 %v5108
    %5779 = vmatpush2.bf16.msra.mxu0 %v5107
    %5780 = vmatprep.subr.bf16.mxu0 %v5100
    %5781 = vmatpush2.bf16.msra.mxu0 %v5099
    %5782 = vmatprep.subr.bf16.mxu0 %v5092
    %5783 = vmatpush2.bf16.msra.mxu0 %v5091
    %5784 = vmatprep.subr.bf16.mxu0 %v5084
    %5785 = vmatpush2.bf16.msra.mxu0 %v5083
    %5786 = vmatprep.subr.bf16.mxu0 %v5076
    %5787 = vmatpush2.bf16.msra.mxu0 %v5075
    %5788 = vmatprep.subr.bf16.mxu0 %v5068
    %5789 = vmatpush2.bf16.msra.mxu0 %v5067
    %5790 = vmatprep.subr.bf16.mxu0 %v5060
    %5791 = vmatpush2.bf16.msra.mxu0 %v5059
    %5792 = vmatprep.subr.bf16.mxu0 %v5052
    %5793 = vmatpush2.bf16.msra.mxu0 %v5051
    %5794 = vmatprep.mubr.bf16.mxu0 %v5720
    %5795 = vmatmul.mubr.bf16.gmra.mxu0 %v5719
    %v5796 = vpop.f32.mrf.mxu0
    %v5797 = vadd.f32 0.0, %v5796
    %v5798 = vpop.f32.mrf.mxu0
    %v5799 = vadd.f32 0.0, %v5798
    %v5800 = vpop.f32.mrf.mxu0
    %v5801 = vpop.f32.mrf.mxu0
    %5802 = vdwg.mxu0
    %5803 = vmatprep.subr.bf16.mxu0 %v5046
    %5804 = vmatpush1.bf16.msra.mxu0 %v5045
    %5805 = vmatprep.subr.bf16.mxu0 %v5038
    %5806 = vmatpush1.bf16.msra.mxu0 %v5037
    %5807 = vmatprep.subr.bf16.mxu0 %v5030
    %5808 = vmatpush1.bf16.msra.mxu0 %v5029
    %5809 = vmatprep.subr.bf16.mxu0 %v5022
    %5810 = vmatpush1.bf16.msra.mxu0 %v5021
    %5811 = vmatprep.subr.bf16.mxu0 %v5014
    %5812 = vmatpush1.bf16.msra.mxu0 %v5013
    %5813 = vmatprep.subr.bf16.mxu0 %v5006
    %5814 = vmatpush1.bf16.msra.mxu0 %v5005
    %5815 = vmatprep.subr.bf16.mxu0 %v4998
    %5816 = vmatpush1.bf16.msra.mxu0 %v4997
    %5817 = vmatprep.subr.bf16.mxu0 %v4990
    %5818 = vmatpush1.bf16.msra.mxu0 %v4989
    %5819 = vmatprep.subr.bf16.mxu0 %v5110
    %5820 = vmatpush2.bf16.msra.mxu0 %v5109
    %5821 = vmatprep.subr.bf16.mxu0 %v5102
    %5822 = vmatpush2.bf16.msra.mxu0 %v5101
    %5823 = vmatprep.subr.bf16.mxu0 %v5094
    %5824 = vmatpush2.bf16.msra.mxu0 %v5093
    %5825 = vmatprep.subr.bf16.mxu0 %v5086
    %5826 = vmatpush2.bf16.msra.mxu0 %v5085
    %5827 = vmatprep.subr.bf16.mxu0 %v5078
    %5828 = vmatpush2.bf16.msra.mxu0 %v5077
    %5829 = vmatprep.subr.bf16.mxu0 %v5070
    %5830 = vmatpush2.bf16.msra.mxu0 %v5069
    %5831 = vmatprep.subr.bf16.mxu0 %v5062
    %5832 = vmatpush2.bf16.msra.mxu0 %v5061
    %5833 = vmatprep.subr.bf16.mxu0 %v5054
    %5834 = vmatpush2.bf16.msra.mxu0 %v5053
    %5835 = vmatprep.mubr.bf16.mxu0 %v5720
    %5836 = vmatmul.mubr.bf16.gmra.mxu0 %v5719
    %v5837 = vpop.f32.mrf.mxu0
    %v5838 = vadd.f32 0.0, %v5837
    %v5839 = vpop.f32.mrf.mxu0
    %v5840 = vadd.f32 0.0, %v5839
    %v5841 = vpop.f32.mrf.mxu0
    %v5842 = vpop.f32.mrf.mxu0
    %5843 = vdwg.mxu0
    %5844 = vmatprep.subr.bf16.mxu0 %v5048
    %5845 = vmatpush1.bf16.msra.mxu0 %v5047
    %5846 = vmatprep.subr.bf16.mxu0 %v5040
    %5847 = vmatpush1.bf16.msra.mxu0 %v5039
    %5848 = vmatprep.subr.bf16.mxu0 %v5032
    %5849 = vmatpush1.bf16.msra.mxu0 %v5031
    %5850 = vmatprep.subr.bf16.mxu0 %v5024
    %5851 = vmatpush1.bf16.msra.mxu0 %v5023
    %5852 = vmatprep.subr.bf16.mxu0 %v5016
    %5853 = vmatpush1.bf16.msra.mxu0 %v5015
    %5854 = vmatprep.subr.bf16.mxu0 %v5008
    %5855 = vmatpush1.bf16.msra.mxu0 %v5007
    %5856 = vmatprep.subr.bf16.mxu0 %v5000
    %5857 = vmatpush1.bf16.msra.mxu0 %v4999
    %5858 = vmatprep.subr.bf16.mxu0 %v4992
    %5859 = vmatpush1.bf16.msra.mxu0 %v4991
    %5860 = vmatprep.subr.bf16.mxu0 %v5112
    %5861 = vmatpush2.bf16.msra.mxu0 %v5111
    %5862 = vmatprep.subr.bf16.mxu0 %v5104
    %5863 = vmatpush2.bf16.msra.mxu0 %v5103
    %5864 = vmatprep.subr.bf16.mxu0 %v5096
    %5865 = vmatpush2.bf16.msra.mxu0 %v5095
    %5866 = vmatprep.subr.bf16.mxu0 %v5088
    %5867 = vmatpush2.bf16.msra.mxu0 %v5087
    %5868 = vmatprep.subr.bf16.mxu0 %v5080
    %5869 = vmatpush2.bf16.msra.mxu0 %v5079
    %5870 = vmatprep.subr.bf16.mxu0 %v5072
    %5871 = vmatpush2.bf16.msra.mxu0 %v5071
    %5872 = vmatprep.subr.bf16.mxu0 %v5064
    %5873 = vmatpush2.bf16.msra.mxu0 %v5063
    %5874 = vmatprep.subr.bf16.mxu0 %v5056
    %5875 = vmatpush2.bf16.msra.mxu0 %v5055
    %5876 = vmatprep.mubr.bf16.mxu0 %v5720
    %5877 = vmatmul.mubr.bf16.gmra.mxu0 %v5719
    %v5878 = vpop.f32.mrf.mxu0
    %v5879 = vadd.f32 0.0, %v5878
    %v5880 = vpop.f32.mrf.mxu0
    %v5881 = vadd.f32 0.0, %v5880
    %v5882 = vpop.f32.mrf.mxu0
    %v5883 = vpop.f32.mrf.mxu0
    %5884 = vdwg.mxu0
    %v5885 = vld [vmem:[#allocation5] sm:$0xff]
    %v5886 = vld [vmem:[#allocation5 + $0x8] sm:$0xff]
    %v5887 = vld [vmem:[#allocation2 + $0x80] sm:$0xff]
    %v5888 = vld [vmem:[#allocation2 + $0x88] sm:$0xff]
    %v5889 = vld [vmem:[#allocation2 + $0x90] sm:$0xff]
    %v5890 = vld [vmem:[#allocation2 + $0x98] sm:$0xff]
    %v5891 = vadd.f32 %v5887, %v5756
    %v5892 = vadd.f32 %v5888, %v5758
    %v5893 = vadd.f32 %v5889, %v5797
    %v5894 = vadd.f32 %v5890, %v5799
    %v5895 = vxor.u32 %v5891, 2147483648
    %v5896 = vmul.f32 %v5895, 1.442695
    %v5897 = vpow.pop %v5896
    %v5898 = vadd.f32 %v5897, 1.0
    %v5899 = vrcp.pop %v5898
    %v5900 = vmul.f32 1.0, %v5899
    %v5901 = vxor.u32 %v5892, 2147483648
    %v5902 = vmul.f32 %v5901, 1.442695
    %v5903 = vpow.pop %v5902
    %v5904 = vadd.f32 %v5903, 1.0
    %v5905 = vrcp.pop %v5904
    %v5906 = vmul.f32 1.0, %v5905
    %v5907 = vtanh.pop %v5893
    %v5908 = vxor.u32 %v5894, 2147483648
    %v5909 = vmul.f32 %v5908, 1.442695
    %v5910 = vpow.pop %v5909
    %v5911 = vadd.f32 %v5910, 1.0
    %v5912 = vrcp.pop %v5911
    %v5913 = vmul.f32 1.0, %v5912
    %v5914 = vmul.f32 %v5906, %v5885
    %v5915 = vmul.f32 %v5900, %v5907
    %v5916 = vadd.f32 %v5914, %v5915
    %v5917 = vtanh.pop %v5916
    %v5918 = vmul.f32 %v5913, %v5917
    %5919 = vst [vmem:[#allocation5] sm:$0xff] %v5916
    %5920 = vst [vmem:[#allocation4] sm:$0xff] %v5918
    %5921 = vst [vmem:[%s5 + $0x20] sm:$0xff] %v5918
    %v5922 = vld [vmem:[#allocation2 + $0x160] sm:$0xff]
    %v5923 = vld [vmem:[#allocation2 + $0x168] sm:$0xff]
    %v5924 = vld [vmem:[#allocation2 + $0x170] sm:$0xff]
    %v5925 = vld [vmem:[#allocation2 + $0x178] sm:$0xff]
    %v5926 = vadd.f32 %v5922, %v5838
    %v5927 = vadd.f32 %v5923, %v5840
    %v5928 = vadd.f32 %v5924, %v5879
    %v5929 = vadd.f32 %v5925, %v5881
    %v5930 = vxor.u32 %v5926, 2147483648
    %v5931 = vmul.f32 %v5930, 1.442695
    %v5932 = vpow.pop %v5931
    %v5933 = vadd.f32 %v5932, 1.0
    %v5934 = vrcp.pop %v5933
    %v5935 = vmul.f32 1.0, %v5934
    %v5936 = vxor.u32 %v5927, 2147483648
    %v5937 = vmul.f32 %v5936, 1.442695
    %v5938 = vpow.pop %v5937
    %v5939 = vadd.f32 %v5938, 1.0
    %v5940 = vrcp.pop %v5939
    %v5941 = vmul.f32 1.0, %v5940
    %v5942 = vtanh.pop %v5928
    %v5943 = vxor.u32 %v5929, 2147483648
    %v5944 = vmul.f32 %v5943, 1.442695
    %v5945 = vpow.pop %v5944
    %v5946 = vadd.f32 %v5945, 1.0
    %v5947 = vrcp.pop %v5946
    %v5948 = vmul.f32 1.0, %v5947
    %v5949 = vmul.f32 %v5941, %v5886
    %v5950 = vmul.f32 %v5935, %v5942
    %v5951 = vadd.f32 %v5949, %v5950
    %v5952 = vtanh.pop %v5951
    %v5953 = vmul.f32 %v5948, %v5952
    %5954 = vst [vmem:[#allocation5 + $0x8] sm:$0xff] %v5951
    %5955 = vst [vmem:[#allocation4 + $0x8] sm:$0xff] %v5953
    %5956 = vst [vmem:[%s5 + $0x58] sm:$0xff] %v5953
    %v5957 = vld [vmem:[#allocation4] sm:$0xff]
    %v5958 = vld [vmem:[#allocation4 + $0x8] sm:$0xff]
    %v5959 = vpack.c.bf16 %v5957, %v5957
    %v5960 = vpack.c.bf16 %v5958, %v5958
    %5961 = vmatprep.subr.bf16.mxu0 %v5042
    %5962 = vmatpush1.bf16.msra.mxu0 %v5041
    %5963 = vmatprep.subr.bf16.mxu0 %v5034
    %5964 = vmatpush1.bf16.msra.mxu0 %v5033
    %5965 = vmatprep.subr.bf16.mxu0 %v5026
    %5966 = vmatpush1.bf16.msra.mxu0 %v5025
    %5967 = vmatprep.subr.bf16.mxu0 %v5018
    %5968 = vmatpush1.bf16.msra.mxu0 %v5017
    %5969 = vmatprep.subr.bf16.mxu0 %v5010
    %5970 = vmatpush1.bf16.msra.mxu0 %v5009
    %5971 = vmatprep.subr.bf16.mxu0 %v5002
    %5972 = vmatpush1.bf16.msra.mxu0 %v5001
    %5973 = vmatprep.subr.bf16.mxu0 %v4994
    %5974 = vmatpush1.bf16.msra.mxu0 %v4993
    %5975 = vmatprep.subr.bf16.mxu0 %v4986
    %5976 = vmatpush1.bf16.msra.mxu0 %v4985
    %5977 = vmatprep.subr.bf16.mxu0 %v5106
    %5978 = vmatpush2.bf16.msra.mxu0 %v5105
    %5979 = vmatprep.subr.bf16.mxu0 %v5098
    %5980 = vmatpush2.bf16.msra.mxu0 %v5097
    %5981 = vmatprep.subr.bf16.mxu0 %v5090
    %5982 = vmatpush2.bf16.msra.mxu0 %v5089
    %5983 = vmatprep.subr.bf16.mxu0 %v5082
    %5984 = vmatpush2.bf16.msra.mxu0 %v5081
    %5985 = vmatprep.subr.bf16.mxu0 %v5074
    %5986 = vmatpush2.bf16.msra.mxu0 %v5073
    %5987 = vmatprep.subr.bf16.mxu0 %v5066
    %5988 = vmatpush2.bf16.msra.mxu0 %v5065
    %5989 = vmatprep.subr.bf16.mxu0 %v5058
    %5990 = vmatpush2.bf16.msra.mxu0 %v5057
    %5991 = vmatprep.subr.bf16.mxu0 %v5050
    %5992 = vmatpush2.bf16.msra.mxu0 %v5049
    %5993 = vmatprep.mubr.bf16.mxu0 %v5960
    %5994 = vmatmul.mubr.bf16.gmra.mxu0 %v5959
    %v5995 = vpop.f32.mrf.mxu0
    %v5996 = vadd.f32 0.0, %v5995
    %v5997 = vpop.f32.mrf.mxu0
    %v5998 = vadd.f32 0.0, %v5997
    %v5999 = vpop.f32.mrf.mxu0
    %v6000 = vpop.f32.mrf.mxu0
    %6001 = vdwg.mxu0
    %6002 = vmatprep.subr.bf16.mxu0 %v5044
    %6003 = vmatpush1.bf16.msra.mxu0 %v5043
    %6004 = vmatprep.subr.bf16.mxu0 %v5036
    %6005 = vmatpush1.bf16.msra.mxu0 %v5035
    %6006 = vmatprep.subr.bf16.mxu0 %v5028
    %6007 = vmatpush1.bf16.msra.mxu0 %v5027
    %6008 = vmatprep.subr.bf16.mxu0 %v5020
    %6009 = vmatpush1.bf16.msra.mxu0 %v5019
    %6010 = vmatprep.subr.bf16.mxu0 %v5012
    %6011 = vmatpush1.bf16.msra.mxu0 %v5011
    %6012 = vmatprep.subr.bf16.mxu0 %v5004
    %6013 = vmatpush1.bf16.msra.mxu0 %v5003
    %6014 = vmatprep.subr.bf16.mxu0 %v4996
    %6015 = vmatpush1.bf16.msra.mxu0 %v4995
    %6016 = vmatprep.subr.bf16.mxu0 %v4988
    %6017 = vmatpush1.bf16.msra.mxu0 %v4987
    %6018 = vmatprep.subr.bf16.mxu0 %v5108
    %6019 = vmatpush2.bf16.msra.mxu0 %v5107
    %6020 = vmatprep.subr.bf16.mxu0 %v5100
    %6021 = vmatpush2.bf16.msra.mxu0 %v5099
    %6022 = vmatprep.subr.bf16.mxu0 %v5092
    %6023 = vmatpush2.bf16.msra.mxu0 %v5091
    %6024 = vmatprep.subr.bf16.mxu0 %v5084
    %6025 = vmatpush2.bf16.msra.mxu0 %v5083
    %6026 = vmatprep.subr.bf16.mxu0 %v5076
    %6027 = vmatpush2.bf16.msra.mxu0 %v5075
    %6028 = vmatprep.subr.bf16.mxu0 %v5068
    %6029 = vmatpush2.bf16.msra.mxu0 %v5067
    %6030 = vmatprep.subr.bf16.mxu0 %v5060
    %6031 = vmatpush2.bf16.msra.mxu0 %v5059
    %6032 = vmatprep.subr.bf16.mxu0 %v5052
    %6033 = vmatpush2.bf16.msra.mxu0 %v5051
    %6034 = vmatprep.mubr.bf16.mxu0 %v5960
    %6035 = vmatmul.mubr.bf16.gmra.mxu0 %v5959
    %v6036 = vpop.f32.mrf.mxu0
    %v6037 = vadd.f32 0.0, %v6036
    %v6038 = vpop.f32.mrf.mxu0
    %v6039 = vadd.f32 0.0, %v6038
    %v6040 = vpop.f32.mrf.mxu0
    %v6041 = vpop.f32.mrf.mxu0
    %6042 = vdwg.mxu0
    %6043 = vmatprep.subr.bf16.mxu0 %v5046
    %6044 = vmatpush1.bf16.msra.mxu0 %v5045
    %6045 = vmatprep.subr.bf16.mxu0 %v5038
    %6046 = vmatpush1.bf16.msra.mxu0 %v5037
    %6047 = vmatprep.subr.bf16.mxu0 %v5030
    %6048 = vmatpush1.bf16.msra.mxu0 %v5029
    %6049 = vmatprep.subr.bf16.mxu0 %v5022
    %6050 = vmatpush1.bf16.msra.mxu0 %v5021
    %6051 = vmatprep.subr.bf16.mxu0 %v5014
    %6052 = vmatpush1.bf16.msra.mxu0 %v5013
    %6053 = vmatprep.subr.bf16.mxu0 %v5006
    %6054 = vmatpush1.bf16.msra.mxu0 %v5005
    %6055 = vmatprep.subr.bf16.mxu0 %v4998
    %6056 = vmatpush1.bf16.msra.mxu0 %v4997
    %6057 = vmatprep.subr.bf16.mxu0 %v4990
    %6058 = vmatpush1.bf16.msra.mxu0 %v4989
    %6059 = vmatprep.subr.bf16.mxu0 %v5110
    %6060 = vmatpush2.bf16.msra.mxu0 %v5109
    %6061 = vmatprep.subr.bf16.mxu0 %v5102
    %6062 = vmatpush2.bf16.msra.mxu0 %v5101
    %6063 = vmatprep.subr.bf16.mxu0 %v5094
    %6064 = vmatpush2.bf16.msra.mxu0 %v5093
    %6065 = vmatprep.subr.bf16.mxu0 %v5086
    %6066 = vmatpush2.bf16.msra.mxu0 %v5085
    %6067 = vmatprep.subr.bf16.mxu0 %v5078
    %6068 = vmatpush2.bf16.msra.mxu0 %v5077
    %6069 = vmatprep.subr.bf16.mxu0 %v5070
    %6070 = vmatpush2.bf16.msra.mxu0 %v5069
    %6071 = vmatprep.subr.bf16.mxu0 %v5062
    %6072 = vmatpush2.bf16.msra.mxu0 %v5061
    %6073 = vmatprep.subr.bf16.mxu0 %v5054
    %6074 = vmatpush2.bf16.msra.mxu0 %v5053
    %6075 = vmatprep.mubr.bf16.mxu0 %v5960
    %6076 = vmatmul.mubr.bf16.gmra.mxu0 %v5959
    %v6077 = vpop.f32.mrf.mxu0
    %v6078 = vadd.f32 0.0, %v6077
    %v6079 = vpop.f32.mrf.mxu0
    %v6080 = vadd.f32 0.0, %v6079
    %v6081 = vpop.f32.mrf.mxu0
    %v6082 = vpop.f32.mrf.mxu0
    %6083 = vdwg.mxu0
    %6084 = vmatprep.subr.bf16.mxu0 %v5048
    %6085 = vmatpush1.bf16.msra.mxu0 %v5047
    %6086 = vmatprep.subr.bf16.mxu0 %v5040
    %6087 = vmatpush1.bf16.msra.mxu0 %v5039
    %6088 = vmatprep.subr.bf16.mxu0 %v5032
    %6089 = vmatpush1.bf16.msra.mxu0 %v5031
    %6090 = vmatprep.subr.bf16.mxu0 %v5024
    %6091 = vmatpush1.bf16.msra.mxu0 %v5023
    %6092 = vmatprep.subr.bf16.mxu0 %v5016
    %6093 = vmatpush1.bf16.msra.mxu0 %v5015
    %6094 = vmatprep.subr.bf16.mxu0 %v5008
    %6095 = vmatpush1.bf16.msra.mxu0 %v5007
    %6096 = vmatprep.subr.bf16.mxu0 %v5000
    %6097 = vmatpush1.bf16.msra.mxu0 %v4999
    %6098 = vmatprep.subr.bf16.mxu0 %v4992
    %6099 = vmatpush1.bf16.msra.mxu0 %v4991
    %6100 = vmatprep.subr.bf16.mxu0 %v5112
    %6101 = vmatpush2.bf16.msra.mxu0 %v5111
    %6102 = vmatprep.subr.bf16.mxu0 %v5104
    %6103 = vmatpush2.bf16.msra.mxu0 %v5103
    %6104 = vmatprep.subr.bf16.mxu0 %v5096
    %6105 = vmatpush2.bf16.msra.mxu0 %v5095
    %6106 = vmatprep.subr.bf16.mxu0 %v5088
    %6107 = vmatpush2.bf16.msra.mxu0 %v5087
    %6108 = vmatprep.subr.bf16.mxu0 %v5080
    %6109 = vmatpush2.bf16.msra.mxu0 %v5079
    %6110 = vmatprep.subr.bf16.mxu0 %v5072
    %6111 = vmatpush2.bf16.msra.mxu0 %v5071
    %6112 = vmatprep.subr.bf16.mxu0 %v5064
    %6113 = vmatpush2.bf16.msra.mxu0 %v5063
    %6114 = vmatprep.subr.bf16.mxu0 %v5056
    %6115 = vmatpush2.bf16.msra.mxu0 %v5055
    %6116 = vmatprep.mubr.bf16.mxu0 %v5960
    %6117 = vmatmul.mubr.bf16.gmra.mxu0 %v5959
    %v6118 = vpop.f32.mrf.mxu0
    %v6119 = vadd.f32 0.0, %v6118
    %v6120 = vpop.f32.mrf.mxu0
    %v6121 = vadd.f32 0.0, %v6120
    %v6122 = vpop.f32.mrf.mxu0
    %v6123 = vpop.f32.mrf.mxu0
    %6124 = vdwg.mxu0
    %v6125 = vld [vmem:[#allocation5] sm:$0xff]
    %v6126 = vld [vmem:[#allocation5 + $0x8] sm:$0xff]
    %v6127 = vld [vmem:[#allocation2 + $0xc0] sm:$0xff]
    %v6128 = vld [vmem:[#allocation2 + $0xc8] sm:$0xff]
    %v6129 = vld [vmem:[#allocation2 + $0xd0] sm:$0xff]
    %v6130 = vld [vmem:[#allocation2 + $0xd8] sm:$0xff]
    %v6131 = vadd.f32 %v6127, %v5996
    %v6132 = vadd.f32 %v6128, %v5998
    %v6133 = vadd.f32 %v6129, %v6037
    %v6134 = vadd.f32 %v6130, %v6039
    %v6135 = vxor.u32 %v6131, 2147483648
    %v6136 = vmul.f32 %v6135, 1.442695
    %v6137 = vpow.pop %v6136
    %v6138 = vadd.f32 %v6137, 1.0
    %v6139 = vrcp.pop %v6138
    %v6140 = vmul.f32 1.0, %v6139
    %v6141 = vxor.u32 %v6132, 2147483648
    %v6142 = vmul.f32 %v6141, 1.442695
    %v6143 = vpow.pop %v6142
    %v6144 = vadd.f32 %v6143, 1.0
    %v6145 = vrcp.pop %v6144
    %v6146 = vmul.f32 1.0, %v6145
    %v6147 = vtanh.pop %v6133
    %v6148 = vxor.u32 %v6134, 2147483648
    %v6149 = vmul.f32 %v6148, 1.442695
    %v6150 = vpow.pop %v6149
    %v6151 = vadd.f32 %v6150, 1.0
    %v6152 = vrcp.pop %v6151
    %v6153 = vmul.f32 1.0, %v6152
    %v6154 = vmul.f32 %v6146, %v6125
    %v6155 = vmul.f32 %v6140, %v6147
    %v6156 = vadd.f32 %v6154, %v6155
    %v6157 = vtanh.pop %v6156
    %v6158 = vmul.f32 %v6153, %v6157
    %6159 = vst [vmem:[#allocation5] sm:$0xff] %v6156
    %6160 = vst [vmem:[#allocation4] sm:$0xff] %v6158
    %6161 = vst [vmem:[%s5 + $0x30] sm:$0xff] %v6158
    %v6162 = vld [vmem:[#allocation2 + $0x120] sm:$0xff]
    %v6163 = vld [vmem:[#allocation2 + $0x128] sm:$0xff]
    %v6164 = vld [vmem:[#allocation2 + $0x130] sm:$0xff]
    %v6165 = vld [vmem:[#allocation2 + $0x138] sm:$0xff]
    %v6166 = vadd.f32 %v6162, %v6078
    %v6167 = vadd.f32 %v6163, %v6080
    %v6168 = vadd.f32 %v6164, %v6119
    %v6169 = vadd.f32 %v6165, %v6121
    %v6170 = vxor.u32 %v6166, 2147483648
    %v6171 = vmul.f32 %v6170, 1.442695
    %v6172 = vpow.pop %v6171
    %v6173 = vadd.f32 %v6172, 1.0
    %v6174 = vrcp.pop %v6173
    %v6175 = vmul.f32 1.0, %v6174
    %v6176 = vxor.u32 %v6167, 2147483648
    %v6177 = vmul.f32 %v6176, 1.442695
    %v6178 = vpow.pop %v6177
    %v6179 = vadd.f32 %v6178, 1.0
    %v6180 = vrcp.pop %v6179
    %v6181 = vmul.f32 1.0, %v6180
    %v6182 = vtanh.pop %v6168
    %v6183 = vxor.u32 %v6169, 2147483648
    %v6184 = vmul.f32 %v6183, 1.442695
    %v6185 = vpow.pop %v6184
    %v6186 = vadd.f32 %v6185, 1.0
    %v6187 = vrcp.pop %v6186
    %v6188 = vmul.f32 1.0, %v6187
    %v6189 = vmul.f32 %v6181, %v6126
    %v6190 = vmul.f32 %v6175, %v6182
    %v6191 = vadd.f32 %v6189, %v6190
    %v6192 = vtanh.pop %v6191
    %v6193 = vmul.f32 %v6188, %v6192
    %6194 = vst [vmem:[#allocation5 + $0x8] sm:$0xff] %v6191
    %6195 = vst [vmem:[#allocation4 + $0x8] sm:$0xff] %v6193
    %6196 = vst [vmem:[%s5 + $0x48] sm:$0xff] %v6193
    %v6197 = vld [vmem:[#allocation4] sm:$0xff]
    %v6198 = vld [vmem:[#allocation4 + $0x8] sm:$0xff]
    %v6199 = vpack.c.bf16 %v6197, %v6197
    %v6200 = vpack.c.bf16 %v6198, %v6198
    %6201 = vmatprep.subr.bf16.mxu0 %v5042
    %6202 = vmatpush1.bf16.msra.mxu0 %v5041
    %6203 = vmatprep.subr.bf16.mxu0 %v5034
    %6204 = vmatpush1.bf16.msra.mxu0 %v5033
    %6205 = vmatprep.subr.bf16.mxu0 %v5026
    %6206 = vmatpush1.bf16.msra.mxu0 %v5025
    %6207 = vmatprep.subr.bf16.mxu0 %v5018
    %6208 = vmatpush1.bf16.msra.mxu0 %v5017
    %6209 = vmatprep.subr.bf16.mxu0 %v5010
    %6210 = vmatpush1.bf16.msra.mxu0 %v5009
    %6211 = vmatprep.subr.bf16.mxu0 %v5002
    %6212 = vmatpush1.bf16.msra.mxu0 %v5001
    %6213 = vmatprep.subr.bf16.mxu0 %v4994
    %6214 = vmatpush1.bf16.msra.mxu0 %v4993
    %6215 = vmatprep.subr.bf16.mxu0 %v4986
    %6216 = vmatpush1.bf16.msra.mxu0 %v4985
    %6217 = vmatprep.subr.bf16.mxu0 %v5106
    %6218 = vmatpush2.bf16.msra.mxu0 %v5105
    %6219 = vmatprep.subr.bf16.mxu0 %v5098
    %6220 = vmatpush2.bf16.msra.mxu0 %v5097
    %6221 = vmatprep.subr.bf16.mxu0 %v5090
    %6222 = vmatpush2.bf16.msra.mxu0 %v5089
    %6223 = vmatprep.subr.bf16.mxu0 %v5082
    %6224 = vmatpush2.bf16.msra.mxu0 %v5081
    %6225 = vmatprep.subr.bf16.mxu0 %v5074
    %6226 = vmatpush2.bf16.msra.mxu0 %v5073
    %6227 = vmatprep.subr.bf16.mxu0 %v5066
    %6228 = vmatpush2.bf16.msra.mxu0 %v5065
    %6229 = vmatprep.subr.bf16.mxu0 %v5058
    %6230 = vmatpush2.bf16.msra.mxu0 %v5057
    %6231 = vmatprep.subr.bf16.mxu0 %v5050
    %6232 = vmatpush2.bf16.msra.mxu0 %v5049
    %6233 = vmatprep.mubr.bf16.mxu0 %v6200
    %6234 = vmatmul.mubr.bf16.gmra.mxu0 %v6199
    %v6235 = vpop.f32.mrf.mxu0
    %v6236 = vadd.f32 0.0, %v6235
    %v6237 = vpop.f32.mrf.mxu0
    %v6238 = vadd.f32 0.0, %v6237
    %v6239 = vpop.f32.mrf.mxu0
    %v6240 = vpop.f32.mrf.mxu0
    %6241 = vdwg.mxu0
    %6242 = vmatprep.subr.bf16.mxu0 %v5044
    %6243 = vmatpush1.bf16.msra.mxu0 %v5043
    %6244 = vmatprep.subr.bf16.mxu0 %v5036
    %6245 = vmatpush1.bf16.msra.mxu0 %v5035
    %6246 = vmatprep.subr.bf16.mxu0 %v5028
    %6247 = vmatpush1.bf16.msra.mxu0 %v5027
    %6248 = vmatprep.subr.bf16.mxu0 %v5020
    %6249 = vmatpush1.bf16.msra.mxu0 %v5019
    %6250 = vmatprep.subr.bf16.mxu0 %v5012
    %6251 = vmatpush1.bf16.msra.mxu0 %v5011
    %6252 = vmatprep.subr.bf16.mxu0 %v5004
    %6253 = vmatpush1.bf16.msra.mxu0 %v5003
    %6254 = vmatprep.subr.bf16.mxu0 %v4996
    %6255 = vmatpush1.bf16.msra.mxu0 %v4995
    %6256 = vmatprep.subr.bf16.mxu0 %v4988
    %6257 = vmatpush1.bf16.msra.mxu0 %v4987
    %6258 = vmatprep.subr.bf16.mxu0 %v5108
    %6259 = vmatpush2.bf16.msra.mxu0 %v5107
    %6260 = vmatprep.subr.bf16.mxu0 %v5100
    %6261 = vmatpush2.bf16.msra.mxu0 %v5099
    %6262 = vmatprep.subr.bf16.mxu0 %v5092
    %6263 = vmatpush2.bf16.msra.mxu0 %v5091
    %6264 = vmatprep.subr.bf16.mxu0 %v5084
    %6265 = vmatpush2.bf16.msra.mxu0 %v5083
    %6266 = vmatprep.subr.bf16.mxu0 %v5076
    %6267 = vmatpush2.bf16.msra.mxu0 %v5075
    %6268 = vmatprep.subr.bf16.mxu0 %v5068
    %6269 = vmatpush2.bf16.msra.mxu0 %v5067
    %6270 = vmatprep.subr.bf16.mxu0 %v5060
    %6271 = vmatpush2.bf16.msra.mxu0 %v5059
    %6272 = vmatprep.subr.bf16.mxu0 %v5052
    %6273 = vmatpush2.bf16.msra.mxu0 %v5051
    %6274 = vmatprep.mubr.bf16.mxu0 %v6200
    %6275 = vmatmul.mubr.bf16.gmra.mxu0 %v6199
    %v6276 = vpop.f32.mrf.mxu0
    %v6277 = vadd.f32 0.0, %v6276
    %v6278 = vpop.f32.mrf.mxu0
    %v6279 = vadd.f32 0.0, %v6278
    %v6280 = vpop.f32.mrf.mxu0
    %v6281 = vpop.f32.mrf.mxu0
    %6282 = vdwg.mxu0
    %6283 = vmatprep.subr.bf16.mxu0 %v5046
    %6284 = vmatpush1.bf16.msra.mxu0 %v5045
    %6285 = vmatprep.subr.bf16.mxu0 %v5038
    %6286 = vmatpush1.bf16.msra.mxu0 %v5037
    %6287 = vmatprep.subr.bf16.mxu0 %v5030
    %6288 = vmatpush1.bf16.msra.mxu0 %v5029
    %6289 = vmatprep.subr.bf16.mxu0 %v5022
    %6290 = vmatpush1.bf16.msra.mxu0 %v5021
    %6291 = vmatprep.subr.bf16.mxu0 %v5014
    %6292 = vmatpush1.bf16.msra.mxu0 %v5013
    %6293 = vmatprep.subr.bf16.mxu0 %v5006
    %6294 = vmatpush1.bf16.msra.mxu0 %v5005
    %6295 = vmatprep.subr.bf16.mxu0 %v4998
    %6296 = vmatpush1.bf16.msra.mxu0 %v4997
    %6297 = vmatprep.subr.bf16.mxu0 %v4990
    %6298 = vmatpush1.bf16.msra.mxu0 %v4989
    %6299 = vmatprep.subr.bf16.mxu0 %v5110
    %6300 = vmatpush2.bf16.msra.mxu0 %v5109
    %6301 = vmatprep.subr.bf16.mxu0 %v5102
    %6302 = vmatpush2.bf16.msra.mxu0 %v5101
    %6303 = vmatprep.subr.bf16.mxu0 %v5094
    %6304 = vmatpush2.bf16.msra.mxu0 %v5093
    %6305 = vmatprep.subr.bf16.mxu0 %v5086
    %6306 = vmatpush2.bf16.msra.mxu0 %v5085
    %6307 = vmatprep.subr.bf16.mxu0 %v5078
    %6308 = vmatpush2.bf16.msra.mxu0 %v5077
    %6309 = vmatprep.subr.bf16.mxu0 %v5070
    %6310 = vmatpush2.bf16.msra.mxu0 %v5069
    %6311 = vmatprep.subr.bf16.mxu0 %v5062
    %6312 = vmatpush2.bf16.msra.mxu0 %v5061
    %6313 = vmatprep.subr.bf16.mxu0 %v5054
    %6314 = vmatpush2.bf16.msra.mxu0 %v5053
    %6315 = vmatprep.mubr.bf16.mxu0 %v6200
    %6316 = vmatmul.mubr.bf16.gmra.mxu0 %v6199
    %v6317 = vpop.f32.mrf.mxu0
    %v6318 = vadd.f32 0.0, %v6317
    %v6319 = vpop.f32.mrf.mxu0
    %v6320 = vadd.f32 0.0, %v6319
    %v6321 = vpop.f32.mrf.mxu0
    %v6322 = vpop.f32.mrf.mxu0
    %6323 = vdwg.mxu0
    %6324 = vmatprep.subr.bf16.mxu0 %v5048
    %6325 = vmatpush1.bf16.msra.mxu0 %v5047
    %6326 = vmatprep.subr.bf16.mxu0 %v5040
    %6327 = vmatpush1.bf16.msra.mxu0 %v5039
    %6328 = vmatprep.subr.bf16.mxu0 %v5032
    %6329 = vmatpush1.bf16.msra.mxu0 %v5031
    %6330 = vmatprep.subr.bf16.mxu0 %v5024
    %6331 = vmatpush1.bf16.msra.mxu0 %v5023
    %6332 = vmatprep.subr.bf16.mxu0 %v5016
    %6333 = vmatpush1.bf16.msra.mxu0 %v5015
    %6334 = vmatprep.subr.bf16.mxu0 %v5008
    %6335 = vmatpush1.bf16.msra.mxu0 %v5007
    %6336 = vmatprep.subr.bf16.mxu0 %v5000
    %6337 = vmatpush1.bf16.msra.mxu0 %v4999
    %6338 = vmatprep.subr.bf16.mxu0 %v4992
    %6339 = vmatpush1.bf16.msra.mxu0 %v4991
    %6340 = vmatprep.subr.bf16.mxu0 %v5112
    %6341 = vmatpush2.bf16.msra.mxu0 %v5111
    %6342 = vmatprep.subr.bf16.mxu0 %v5104
    %6343 = vmatpush2.bf16.msra.mxu0 %v5103
    %6344 = vmatprep.subr.bf16.mxu0 %v5096
    %6345 = vmatpush2.bf16.msra.mxu0 %v5095
    %6346 = vmatprep.subr.bf16.mxu0 %v5088
    %6347 = vmatpush2.bf16.msra.mxu0 %v5087
    %6348 = vmatprep.subr.bf16.mxu0 %v5080
    %6349 = vmatpush2.bf16.msra.mxu0 %v5079
    %6350 = vmatprep.subr.bf16.mxu0 %v5072
    %6351 = vmatpush2.bf16.msra.mxu0 %v5071
    %6352 = vmatprep.subr.bf16.mxu0 %v5064
    %6353 = vmatpush2.bf16.msra.mxu0 %v5063
    %6354 = vmatprep.subr.bf16.mxu0 %v5056
    %6355 = vmatpush2.bf16.msra.mxu0 %v5055
    %6356 = vmatprep.mubr.bf16.mxu0 %v6200
    %6357 = vmatmul.mubr.bf16.gmra.mxu0 %v6199
    %v6358 = vpop.f32.mrf.mxu0
    %v6359 = vadd.f32 0.0, %v6358
    %v6360 = vpop.f32.mrf.mxu0
    %v6361 = vadd.f32 0.0, %v6360
    %v6362 = vpop.f32.mrf.mxu0
    %v6363 = vpop.f32.mrf.mxu0
    %6364 = vdwg.mxu0
    %v6365 = vld [vmem:[#allocation5] sm:$0xff]
    %v6366 = vld [vmem:[#allocation5 + $0x8] sm:$0xff]
    %v6367 = vld [vmem:[#allocation2 + $0x100] sm:$0xff]
    %v6368 = vld [vmem:[#allocation2 + $0x108] sm:$0xff]
    %v6369 = vld [vmem:[#allocation2 + $0x110] sm:$0xff]
    %v6370 = vld [vmem:[#allocation2 + $0x118] sm:$0xff]
    %v6371 = vadd.f32 %v6367, %v6236
    %v6372 = vadd.f32 %v6368, %v6238
    %v6373 = vadd.f32 %v6369, %v6277
    %v6374 = vadd.f32 %v6370, %v6279
    %v6375 = vxor.u32 %v6371, 2147483648
    %v6376 = vmul.f32 %v6375, 1.442695
    %v6377 = vpow.pop %v6376
    %v6378 = vadd.f32 %v6377, 1.0
    %v6379 = vrcp.pop %v6378
    %v6380 = vmul.f32 1.0, %v6379
    %v6381 = vxor.u32 %v6372, 2147483648
    %v6382 = vmul.f32 %v6381, 1.442695
    %v6383 = vpow.pop %v6382
    %v6384 = vadd.f32 %v6383, 1.0
    %v6385 = vrcp.pop %v6384
    %v6386 = vmul.f32 1.0, %v6385
    %v6387 = vtanh.pop %v6373
    %v6388 = vxor.u32 %v6374, 2147483648
    %v6389 = vmul.f32 %v6388, 1.442695
    %v6390 = vpow.pop %v6389
    %v6391 = vadd.f32 %v6390, 1.0
    %v6392 = vrcp.pop %v6391
    %v6393 = vmul.f32 1.0, %v6392
    %v6394 = vmul.f32 %v6386, %v6365
    %v6395 = vmul.f32 %v6380, %v6387
    %v6396 = vadd.f32 %v6394, %v6395
    %v6397 = vtanh.pop %v6396
    %v6398 = vmul.f32 %v6393, %v6397
    %6399 = vst [vmem:[#allocation5] sm:$0xff] %v6396
    %6400 = vst [vmem:[#allocation4] sm:$0xff] %v6398
    %6401 = vst [vmem:[%s5 + $0x40] sm:$0xff] %v6398
    %v6402 = vld [vmem:[#allocation2 + $0xe0] sm:$0xff]
    %v6403 = vld [vmem:[#allocation2 + $0xe8] sm:$0xff]
    %v6404 = vld [vmem:[#allocation2 + $0xf0] sm:$0xff]
    %v6405 = vld [vmem:[#allocation2 + $0xf8] sm:$0xff]
    %v6406 = vadd.f32 %v6402, %v6318
    %v6407 = vadd.f32 %v6403, %v6320
    %v6408 = vadd.f32 %v6404, %v6359
    %v6409 = vadd.f32 %v6405, %v6361
    %v6410 = vxor.u32 %v6406, 2147483648
    %v6411 = vmul.f32 %v6410, 1.442695
    %v6412 = vpow.pop %v6411
    %v6413 = vadd.f32 %v6412, 1.0
    %v6414 = vrcp.pop %v6413
    %v6415 = vmul.f32 1.0, %v6414
    %v6416 = vxor.u32 %v6407, 2147483648
    %v6417 = vmul.f32 %v6416, 1.442695
    %v6418 = vpow.pop %v6417
    %v6419 = vadd.f32 %v6418, 1.0
    %v6420 = vrcp.pop %v6419
    %v6421 = vmul.f32 1.0, %v6420
    %v6422 = vtanh.pop %v6408
    %v6423 = vxor.u32 %v6409, 2147483648
    %v6424 = vmul.f32 %v6423, 1.442695
    %v6425 = vpow.pop %v6424
    %v6426 = vadd.f32 %v6425, 1.0
    %v6427 = vrcp.pop %v6426
    %v6428 = vmul.f32 1.0, %v6427
    %v6429 = vmul.f32 %v6421, %v6366
    %v6430 = vmul.f32 %v6415, %v6422
    %v6431 = vadd.f32 %v6429, %v6430
    %v6432 = vtanh.pop %v6431
    %v6433 = vmul.f32 %v6428, %v6432
    %6434 = vst [vmem:[#allocation5 + $0x8] sm:$0xff] %v6431
    %6435 = vst [vmem:[#allocation4 + $0x8] sm:$0xff] %v6433
    %6436 = vst [vmem:[%s5 + $0x38] sm:$0xff] %v6433
    %v6437 = vld [vmem:[#allocation4] sm:$0xff]
    %v6438 = vld [vmem:[#allocation4 + $0x8] sm:$0xff]
    %v6439 = vpack.c.bf16 %v6437, %v6437
    %v6440 = vpack.c.bf16 %v6438, %v6438
    %6441 = vmatprep.subr.bf16.mxu0 %v5042
    %6442 = vmatpush1.bf16.msra.mxu0 %v5041
    %6443 = vmatprep.subr.bf16.mxu0 %v5034
    %6444 = vmatpush1.bf16.msra.mxu0 %v5033
    %6445 = vmatprep.subr.bf16.mxu0 %v5026
    %6446 = vmatpush1.bf16.msra.mxu0 %v5025
    %6447 = vmatprep.subr.bf16.mxu0 %v5018
    %6448 = vmatpush1.bf16.msra.mxu0 %v5017
    %6449 = vmatprep.subr.bf16.mxu0 %v5010
    %6450 = vmatpush1.bf16.msra.mxu0 %v5009
    %6451 = vmatprep.subr.bf16.mxu0 %v5002
    %6452 = vmatpush1.bf16.msra.mxu0 %v5001
    %6453 = vmatprep.subr.bf16.mxu0 %v4994
    %6454 = vmatpush1.bf16.msra.mxu0 %v4993
    %6455 = vmatprep.subr.bf16.mxu0 %v4986
    %6456 = vmatpush1.bf16.msra.mxu0 %v4985
    %6457 = vmatprep.subr.bf16.mxu0 %v5106
    %6458 = vmatpush2.bf16.msra.mxu0 %v5105
    %6459 = vmatprep.subr.bf16.mxu0 %v5098
    %6460 = vmatpush2.bf16.msra.mxu0 %v5097
    %6461 = vmatprep.subr.bf16.mxu0 %v5090
    %6462 = vmatpush2.bf16.msra.mxu0 %v5089
    %6463 = vmatprep.subr.bf16.mxu0 %v5082
    %6464 = vmatpush2.bf16.msra.mxu0 %v5081
    %6465 = vmatprep.subr.bf16.mxu0 %v5074
    %6466 = vmatpush2.bf16.msra.mxu0 %v5073
    %6467 = vmatprep.subr.bf16.mxu0 %v5066
    %6468 = vmatpush2.bf16.msra.mxu0 %v5065
    %6469 = vmatprep.subr.bf16.mxu0 %v5058
    %6470 = vmatpush2.bf16.msra.mxu0 %v5057
    %6471 = vmatprep.subr.bf16.mxu0 %v5050
    %6472 = vmatpush2.bf16.msra.mxu0 %v5049
    %6473 = vmatprep.mubr.bf16.mxu0 %v6440
    %6474 = vmatmul.mubr.bf16.gmra.mxu0 %v6439
    %v6475 = vpop.f32.mrf.mxu0
    %v6476 = vadd.f32 0.0, %v6475
    %v6477 = vpop.f32.mrf.mxu0
    %v6478 = vadd.f32 0.0, %v6477
    %v6479 = vpop.f32.mrf.mxu0
    %v6480 = vpop.f32.mrf.mxu0
    %6481 = vdwg.mxu0
    %6482 = vmatprep.subr.bf16.mxu0 %v5044
    %6483 = vmatpush1.bf16.msra.mxu0 %v5043
    %6484 = vmatprep.subr.bf16.mxu0 %v5036
    %6485 = vmatpush1.bf16.msra.mxu0 %v5035
    %6486 = vmatprep.subr.bf16.mxu0 %v5028
    %6487 = vmatpush1.bf16.msra.mxu0 %v5027
    %6488 = vmatprep.subr.bf16.mxu0 %v5020
    %6489 = vmatpush1.bf16.msra.mxu0 %v5019
    %6490 = vmatprep.subr.bf16.mxu0 %v5012
    %6491 = vmatpush1.bf16.msra.mxu0 %v5011
    %6492 = vmatprep.subr.bf16.mxu0 %v5004
    %6493 = vmatpush1.bf16.msra.mxu0 %v5003
    %6494 = vmatprep.subr.bf16.mxu0 %v4996
    %6495 = vmatpush1.bf16.msra.mxu0 %v4995
    %6496 = vmatprep.subr.bf16.mxu0 %v4988
    %6497 = vmatpush1.bf16.msra.mxu0 %v4987
    %6498 = vmatprep.subr.bf16.mxu0 %v5108
    %6499 = vmatpush2.bf16.msra.mxu0 %v5107
    %6500 = vmatprep.subr.bf16.mxu0 %v5100
    %6501 = vmatpush2.bf16.msra.mxu0 %v5099
    %6502 = vmatprep.subr.bf16.mxu0 %v5092
    %6503 = vmatpush2.bf16.msra.mxu0 %v5091
    %6504 = vmatprep.subr.bf16.mxu0 %v5084
    %6505 = vmatpush2.bf16.msra.mxu0 %v5083
    %6506 = vmatprep.subr.bf16.mxu0 %v5076
    %6507 = vmatpush2.bf16.msra.mxu0 %v5075
    %6508 = vmatprep.subr.bf16.mxu0 %v5068
    %6509 = vmatpush2.bf16.msra.mxu0 %v5067
    %6510 = vmatprep.subr.bf16.mxu0 %v5060
    %6511 = vmatpush2.bf16.msra.mxu0 %v5059
    %6512 = vmatprep.subr.bf16.mxu0 %v5052
    %6513 = vmatpush2.bf16.msra.mxu0 %v5051
    %6514 = vmatprep.mubr.bf16.mxu0 %v6440
    %6515 = vmatmul.mubr.bf16.gmra.mxu0 %v6439
    %v6516 = vpop.f32.mrf.mxu0
    %v6517 = vadd.f32 0.0, %v6516
    %v6518 = vpop.f32.mrf.mxu0
    %v6519 = vadd.f32 0.0, %v6518
    %v6520 = vpop.f32.mrf.mxu0
    %v6521 = vpop.f32.mrf.mxu0
    %6522 = vdwg.mxu0
    %6523 = vmatprep.subr.bf16.mxu0 %v5046
    %6524 = vmatpush1.bf16.msra.mxu0 %v5045
    %6525 = vmatprep.subr.bf16.mxu0 %v5038
    %6526 = vmatpush1.bf16.msra.mxu0 %v5037
    %6527 = vmatprep.subr.bf16.mxu0 %v5030
    %6528 = vmatpush1.bf16.msra.mxu0 %v5029
    %6529 = vmatprep.subr.bf16.mxu0 %v5022
    %6530 = vmatpush1.bf16.msra.mxu0 %v5021
    %6531 = vmatprep.subr.bf16.mxu0 %v5014
    %6532 = vmatpush1.bf16.msra.mxu0 %v5013
    %6533 = vmatprep.subr.bf16.mxu0 %v5006
    %6534 = vmatpush1.bf16.msra.mxu0 %v5005
    %6535 = vmatprep.subr.bf16.mxu0 %v4998
    %6536 = vmatpush1.bf16.msra.mxu0 %v4997
    %6537 = vmatprep.subr.bf16.mxu0 %v4990
    %6538 = vmatpush1.bf16.msra.mxu0 %v4989
    %6539 = vmatprep.subr.bf16.mxu0 %v5110
    %6540 = vmatpush2.bf16.msra.mxu0 %v5109
    %6541 = vmatprep.subr.bf16.mxu0 %v5102
    %6542 = vmatpush2.bf16.msra.mxu0 %v5101
    %6543 = vmatprep.subr.bf16.mxu0 %v5094
    %6544 = vmatpush2.bf16.msra.mxu0 %v5093
    %6545 = vmatprep.subr.bf16.mxu0 %v5086
    %6546 = vmatpush2.bf16.msra.mxu0 %v5085
    %6547 = vmatprep.subr.bf16.mxu0 %v5078
    %6548 = vmatpush2.bf16.msra.mxu0 %v5077
    %6549 = vmatprep.subr.bf16.mxu0 %v5070
    %6550 = vmatpush2.bf16.msra.mxu0 %v5069
    %6551 = vmatprep.subr.bf16.mxu0 %v5062
    %6552 = vmatpush2.bf16.msra.mxu0 %v5061
    %6553 = vmatprep.subr.bf16.mxu0 %v5054
    %6554 = vmatpush2.bf16.msra.mxu0 %v5053
    %6555 = vmatprep.mubr.bf16.mxu0 %v6440
    %6556 = vmatmul.mubr.bf16.gmra.mxu0 %v6439
    %v6557 = vpop.f32.mrf.mxu0
    %v6558 = vadd.f32 0.0, %v6557
    %v6559 = vpop.f32.mrf.mxu0
    %v6560 = vadd.f32 0.0, %v6559
    %v6561 = vpop.f32.mrf.mxu0
    %v6562 = vpop.f32.mrf.mxu0
    %6563 = vdwg.mxu0
    %6564 = vmatprep.subr.bf16.mxu0 %v5048
    %6565 = vmatpush1.bf16.msra.mxu0 %v5047
    %6566 = vmatprep.subr.bf16.mxu0 %v5040
    %6567 = vmatpush1.bf16.msra.mxu0 %v5039
    %6568 = vmatprep.subr.bf16.mxu0 %v5032
    %6569 = vmatpush1.bf16.msra.mxu0 %v5031
    %6570 = vmatprep.subr.bf16.mxu0 %v5024
    %6571 = vmatpush1.bf16.msra.mxu0 %v5023
    %6572 = vmatprep.subr.bf16.mxu0 %v5016
    %6573 = vmatpush1.bf16.msra.mxu0 %v5015
    %6574 = vmatprep.subr.bf16.mxu0 %v5008
    %6575 = vmatpush1.bf16.msra.mxu0 %v5007
    %6576 = vmatprep.subr.bf16.mxu0 %v5000
    %6577 = vmatpush1.bf16.msra.mxu0 %v4999
    %6578 = vmatprep.subr.bf16.mxu0 %v4992
    %6579 = vmatpush1.bf16.msra.mxu0 %v4991
    %6580 = vmatprep.subr.bf16.mxu0 %v5112
    %6581 = vmatpush2.bf16.msra.mxu0 %v5111
    %6582 = vmatprep.subr.bf16.mxu0 %v5104
    %6583 = vmatpush2.bf16.msra.mxu0 %v5103
    %6584 = vmatprep.subr.bf16.mxu0 %v5096
    %6585 = vmatpush2.bf16.msra.mxu0 %v5095
    %6586 = vmatprep.subr.bf16.mxu0 %v5088
    %6587 = vmatpush2.bf16.msra.mxu0 %v5087
    %6588 = vmatprep.subr.bf16.mxu0 %v5080
    %6589 = vmatpush2.bf16.msra.mxu0 %v5079
    %6590 = vmatprep.subr.bf16.mxu0 %v5072
    %6591 = vmatpush2.bf16.msra.mxu0 %v5071
    %6592 = vmatprep.subr.bf16.mxu0 %v5064
    %6593 = vmatpush2.bf16.msra.mxu0 %v5063
    %6594 = vmatprep.subr.bf16.mxu0 %v5056
    %6595 = vmatpush2.bf16.msra.mxu0 %v5055
    %6596 = vmatprep.mubr.bf16.mxu0 %v6440
    %6597 = vmatmul.mubr.bf16.gmra.mxu0 %v6439
    %v6598 = vpop.f32.mrf.mxu0
    %v6599 = vadd.f32 0.0, %v6598
    %v6600 = vpop.f32.mrf.mxu0
    %v6601 = vadd.f32 0.0, %v6600
    %v6602 = vpop.f32.mrf.mxu0
    %v6603 = vpop.f32.mrf.mxu0
    %6604 = vdwg.mxu0
    %v6605 = vld [vmem:[#allocation5] sm:$0xff]
    %v6606 = vld [vmem:[#allocation5 + $0x8] sm:$0xff]
    %v6607 = vld [vmem:[#allocation2 + $0x140] sm:$0xff]
    %v6608 = vld [vmem:[#allocation2 + $0x148] sm:$0xff]
    %v6609 = vld [vmem:[#allocation2 + $0x150] sm:$0xff]
    %v6610 = vld [vmem:[#allocation2 + $0x158] sm:$0xff]
    %v6611 = vadd.f32 %v6607, %v6476
    %v6612 = vadd.f32 %v6608, %v6478
    %v6613 = vadd.f32 %v6609, %v6517
    %v6614 = vadd.f32 %v6610, %v6519
    %v6615 = vxor.u32 %v6611, 2147483648
    %v6616 = vmul.f32 %v6615, 1.442695
    %v6617 = vpow.pop %v6616
    %v6618 = vadd.f32 %v6617, 1.0
    %v6619 = vrcp.pop %v6618
    %v6620 = vmul.f32 1.0, %v6619
    %v6621 = vxor.u32 %v6612, 2147483648
    %v6622 = vmul.f32 %v6621, 1.442695
    %v6623 = vpow.pop %v6622
    %v6624 = vadd.f32 %v6623, 1.0
    %v6625 = vrcp.pop %v6624
    %v6626 = vmul.f32 1.0, %v6625
    %v6627 = vtanh.pop %v6613
    %v6628 = vxor.u32 %v6614, 2147483648
    %v6629 = vmul.f32 %v6628, 1.442695
    %v6630 = vpow.pop %v6629
    %v6631 = vadd.f32 %v6630, 1.0
    %v6632 = vrcp.pop %v6631
    %v6633 = vmul.f32 1.0, %v6632
    %v6634 = vmul.f32 %v6626, %v6605
    %v6635 = vmul.f32 %v6620, %v6627
    %v6636 = vadd.f32 %v6634, %v6635
    %v6637 = vtanh.pop %v6636
    %v6638 = vmul.f32 %v6633, %v6637
    %6639 = vst [vmem:[#allocation5] sm:$0xff] %v6636
    %6640 = vst [vmem:[#allocation4] sm:$0xff] %v6638
    %6641 = vst [vmem:[%s5 + $0x50] sm:$0xff] %v6638
    %v6642 = vld [vmem:[#allocation2 + $0xa0] sm:$0xff]
    %v6643 = vld [vmem:[#allocation2 + $0xa8] sm:$0xff]
    %v6644 = vld [vmem:[#allocation2 + $0xb0] sm:$0xff]
    %v6645 = vld [vmem:[#allocation2 + $0xb8] sm:$0xff]
    %v6646 = vadd.f32 %v6642, %v6558
    %v6647 = vadd.f32 %v6643, %v6560
    %v6648 = vadd.f32 %v6644, %v6599
    %v6649 = vadd.f32 %v6645, %v6601
    %v6650 = vxor.u32 %v6646, 2147483648
    %v6651 = vmul.f32 %v6650, 1.442695
    %v6652 = vpow.pop %v6651
    %v6653 = vadd.f32 %v6652, 1.0
    %v6654 = vrcp.pop %v6653
    %v6655 = vmul.f32 1.0, %v6654
    %v6656 = vxor.u32 %v6647, 2147483648
    %v6657 = vmul.f32 %v6656, 1.442695
    %v6658 = vpow.pop %v6657
    %v6659 = vadd.f32 %v6658, 1.0
    %v6660 = vrcp.pop %v6659
    %v6661 = vmul.f32 1.0, %v6660
    %v6662 = vtanh.pop %v6648
    %v6663 = vxor.u32 %v6649, 2147483648
    %v6664 = vmul.f32 %v6663, 1.442695
    %v6665 = vpow.pop %v6664
    %v6666 = vadd.f32 %v6665, 1.0
    %v6667 = vrcp.pop %v6666
    %v6668 = vmul.f32 1.0, %v6667
    %v6669 = vmul.f32 %v6661, %v6606
    %v6670 = vmul.f32 %v6655, %v6662
    %v6671 = vadd.f32 %v6669, %v6670
    %v6672 = vtanh.pop %v6671
    %v6673 = vmul.f32 %v6668, %v6672
    %6674 = vst [vmem:[#allocation5 + $0x8] sm:$0xff] %v6671
    %6675 = vst [vmem:[#allocation4 + $0x8] sm:$0xff] %v6673
    %6676 = vst [vmem:[%s5 + $0x28] sm:$0xff] %v6673
    %v6677 = vld [vmem:[#allocation4] sm:$0xff]
    %v6678 = vld [vmem:[#allocation4 + $0x8] sm:$0xff]
    %v6679 = vpack.c.bf16 %v6677, %v6677
    %v6680 = vpack.c.bf16 %v6678, %v6678
    %6681 = vmatprep.subr.bf16.mxu0 %v5042
    %6682 = vmatpush1.bf16.msra.mxu0 %v5041
    %6683 = vmatprep.subr.bf16.mxu0 %v5034
    %6684 = vmatpush1.bf16.msra.mxu0 %v5033
    %6685 = vmatprep.subr.bf16.mxu0 %v5026
    %6686 = vmatpush1.bf16.msra.mxu0 %v5025
    %6687 = vmatprep.subr.bf16.mxu0 %v5018
    %6688 = vmatpush1.bf16.msra.mxu0 %v5017
    %6689 = vmatprep.subr.bf16.mxu0 %v5010
    %6690 = vmatpush1.bf16.msra.mxu0 %v5009
    %6691 = vmatprep.subr.bf16.mxu0 %v5002
    %6692 = vmatpush1.bf16.msra.mxu0 %v5001
    %6693 = vmatprep.subr.bf16.mxu0 %v4994
    %6694 = vmatpush1.bf16.msra.mxu0 %v4993
    %6695 = vmatprep.subr.bf16.mxu0 %v4986
    %6696 = vmatpush1.bf16.msra.mxu0 %v4985
    %6697 = vmatprep.subr.bf16.mxu0 %v5106
    %6698 = vmatpush2.bf16.msra.mxu0 %v5105
    %6699 = vmatprep.subr.bf16.mxu0 %v5098
    %6700 = vmatpush2.bf16.msra.mxu0 %v5097
    %6701 = vmatprep.subr.bf16.mxu0 %v5090
    %6702 = vmatpush2.bf16.msra.mxu0 %v5089
    %6703 = vmatprep.subr.bf16.mxu0 %v5082
    %6704 = vmatpush2.bf16.msra.mxu0 %v5081
    %6705 = vmatprep.subr.bf16.mxu0 %v5074
    %6706 = vmatpush2.bf16.msra.mxu0 %v5073
    %6707 = vmatprep.subr.bf16.mxu0 %v5066
    %6708 = vmatpush2.bf16.msra.mxu0 %v5065
    %6709 = vmatprep.subr.bf16.mxu0 %v5058
    %6710 = vmatpush2.bf16.msra.mxu0 %v5057
    %6711 = vmatprep.subr.bf16.mxu0 %v5050
    %6712 = vmatpush2.bf16.msra.mxu0 %v5049
    %6713 = vmatprep.mubr.bf16.mxu0 %v6680
    %6714 = vmatmul.mubr.bf16.gmra.mxu0 %v6679
    %v6715 = vpop.f32.mrf.mxu0
    %v6716 = vadd.f32 0.0, %v6715
    %v6717 = vpop.f32.mrf.mxu0
    %v6718 = vadd.f32 0.0, %v6717
    %v6719 = vpop.f32.mrf.mxu0
    %v6720 = vpop.f32.mrf.mxu0
    %6721 = vdwg.mxu0
    %6722 = vmatprep.subr.bf16.mxu0 %v5044
    %6723 = vmatpush1.bf16.msra.mxu0 %v5043
    %6724 = vmatprep.subr.bf16.mxu0 %v5036
    %6725 = vmatpush1.bf16.msra.mxu0 %v5035
    %6726 = vmatprep.subr.bf16.mxu0 %v5028
    %6727 = vmatpush1.bf16.msra.mxu0 %v5027
    %6728 = vmatprep.subr.bf16.mxu0 %v5020
    %6729 = vmatpush1.bf16.msra.mxu0 %v5019
    %6730 = vmatprep.subr.bf16.mxu0 %v5012
    %6731 = vmatpush1.bf16.msra.mxu0 %v5011
    %6732 = vmatprep.subr.bf16.mxu0 %v5004
    %6733 = vmatpush1.bf16.msra.mxu0 %v5003
    %6734 = vmatprep.subr.bf16.mxu0 %v4996
    %6735 = vmatpush1.bf16.msra.mxu0 %v4995
    %6736 = vmatprep.subr.bf16.mxu0 %v4988
    %6737 = vmatpush1.bf16.msra.mxu0 %v4987
    %6738 = vmatprep.subr.bf16.mxu0 %v5108
    %6739 = vmatpush2.bf16.msra.mxu0 %v5107
    %6740 = vmatprep.subr.bf16.mxu0 %v5100
    %6741 = vmatpush2.bf16.msra.mxu0 %v5099
    %6742 = vmatprep.subr.bf16.mxu0 %v5092
    %6743 = vmatpush2.bf16.msra.mxu0 %v5091
    %6744 = vmatprep.subr.bf16.mxu0 %v5084
    %6745 = vmatpush2.bf16.msra.mxu0 %v5083
    %6746 = vmatprep.subr.bf16.mxu0 %v5076
    %6747 = vmatpush2.bf16.msra.mxu0 %v5075
    %6748 = vmatprep.subr.bf16.mxu0 %v5068
    %6749 = vmatpush2.bf16.msra.mxu0 %v5067
    %6750 = vmatprep.subr.bf16.mxu0 %v5060
    %6751 = vmatpush2.bf16.msra.mxu0 %v5059
    %6752 = vmatprep.subr.bf16.mxu0 %v5052
    %6753 = vmatpush2.bf16.msra.mxu0 %v5051
    %6754 = vmatprep.mubr.bf16.mxu0 %v6680
    %6755 = vmatmul.mubr.bf16.gmra.mxu0 %v6679
    %v6756 = vpop.f32.mrf.mxu0
    %v6757 = vadd.f32 0.0, %v6756
    %v6758 = vpop.f32.mrf.mxu0
    %v6759 = vadd.f32 0.0, %v6758
    %v6760 = vpop.f32.mrf.mxu0
    %v6761 = vpop.f32.mrf.mxu0
    %6762 = vdwg.mxu0
    %6763 = vmatprep.subr.bf16.mxu0 %v5046
    %6764 = vmatpush1.bf16.msra.mxu0 %v5045
    %6765 = vmatprep.subr.bf16.mxu0 %v5038
    %6766 = vmatpush1.bf16.msra.mxu0 %v5037
    %6767 = vmatprep.subr.bf16.mxu0 %v5030
    %6768 = vmatpush1.bf16.msra.mxu0 %v5029
    %6769 = vmatprep.subr.bf16.mxu0 %v5022
    %6770 = vmatpush1.bf16.msra.mxu0 %v5021
    %6771 = vmatprep.subr.bf16.mxu0 %v5014
    %6772 = vmatpush1.bf16.msra.mxu0 %v5013
    %6773 = vmatprep.subr.bf16.mxu0 %v5006
    %6774 = vmatpush1.bf16.msra.mxu0 %v5005
    %6775 = vmatprep.subr.bf16.mxu0 %v4998
    %6776 = vmatpush1.bf16.msra.mxu0 %v4997
    %6777 = vmatprep.subr.bf16.mxu0 %v4990
    %6778 = vmatpush1.bf16.msra.mxu0 %v4989
    %6779 = vmatprep.subr.bf16.mxu0 %v5110
    %6780 = vmatpush2.bf16.msra.mxu0 %v5109
    %6781 = vmatprep.subr.bf16.mxu0 %v5102
    %6782 = vmatpush2.bf16.msra.mxu0 %v5101
    %6783 = vmatprep.subr.bf16.mxu0 %v5094
    %6784 = vmatpush2.bf16.msra.mxu0 %v5093
    %6785 = vmatprep.subr.bf16.mxu0 %v5086
    %6786 = vmatpush2.bf16.msra.mxu0 %v5085
    %6787 = vmatprep.subr.bf16.mxu0 %v5078
    %6788 = vmatpush2.bf16.msra.mxu0 %v5077
    %6789 = vmatprep.subr.bf16.mxu0 %v5070
    %6790 = vmatpush2.bf16.msra.mxu0 %v5069
    %6791 = vmatprep.subr.bf16.mxu0 %v5062
    %6792 = vmatpush2.bf16.msra.mxu0 %v5061
    %6793 = vmatprep.subr.bf16.mxu0 %v5054
    %6794 = vmatpush2.bf16.msra.mxu0 %v5053
    %6795 = vmatprep.mubr.bf16.mxu0 %v6680
    %6796 = vmatmul.mubr.bf16.gmra.mxu0 %v6679
    %v6797 = vpop.f32.mrf.mxu0
    %v6798 = vadd.f32 0.0, %v6797
    %v6799 = vpop.f32.mrf.mxu0
    %v6800 = vadd.f32 0.0, %v6799
    %v6801 = vpop.f32.mrf.mxu0
    %v6802 = vpop.f32.mrf.mxu0
    %6803 = vdwg.mxu0
    %6804 = vmatprep.subr.bf16.mxu0 %v5048
    %6805 = vmatpush1.bf16.msra.mxu0 %v5047
    %6806 = vmatprep.subr.bf16.mxu0 %v5040
    %6807 = vmatpush1.bf16.msra.mxu0 %v5039
    %6808 = vmatprep.subr.bf16.mxu0 %v5032
    %6809 = vmatpush1.bf16.msra.mxu0 %v5031
    %6810 = vmatprep.subr.bf16.mxu0 %v5024
    %6811 = vmatpush1.bf16.msra.mxu0 %v5023
    %6812 = vmatprep.subr.bf16.mxu0 %v5016
    %6813 = vmatpush1.bf16.msra.mxu0 %v5015
    %6814 = vmatprep.subr.bf16.mxu0 %v5008
    %6815 = vmatpush1.bf16.msra.mxu0 %v5007
    %6816 = vmatprep.subr.bf16.mxu0 %v5000
    %6817 = vmatpush1.bf16.msra.mxu0 %v4999
    %6818 = vmatprep.subr.bf16.mxu0 %v4992
    %6819 = vmatpush1.bf16.msra.mxu0 %v4991
    %6820 = vmatprep.subr.bf16.mxu0 %v5112
    %6821 = vmatpush2.bf16.msra.mxu0 %v5111
    %6822 = vmatprep.subr.bf16.mxu0 %v5104
    %6823 = vmatpush2.bf16.msra.mxu0 %v5103
    %6824 = vmatprep.subr.bf16.mxu0 %v5096
    %6825 = vmatpush2.bf16.msra.mxu0 %v5095
    %6826 = vmatprep.subr.bf16.mxu0 %v5088
    %6827 = vmatpush2.bf16.msra.mxu0 %v5087
    %6828 = vmatprep.subr.bf16.mxu0 %v5080
    %6829 = vmatpush2.bf16.msra.mxu0 %v5079
    %6830 = vmatprep.subr.bf16.mxu0 %v5072
    %6831 = vmatpush2.bf16.msra.mxu0 %v5071
    %6832 = vmatprep.subr.bf16.mxu0 %v5064
    %6833 = vmatpush2.bf16.msra.mxu0 %v5063
    %6834 = vmatprep.subr.bf16.mxu0 %v5056
    %6835 = vmatpush2.bf16.msra.mxu0 %v5055
    %6836 = vmatprep.mubr.bf16.mxu0 %v6680
    %6837 = vmatmul.mubr.bf16.gmra.mxu0 %v6679
    %v6838 = vpop.f32.mrf.mxu0
    %v6839 = vadd.f32 0.0, %v6838
    %v6840 = vpop.f32.mrf.mxu0
    %v6841 = vadd.f32 0.0, %v6840
    %v6842 = vpop.f32.mrf.mxu0
    %v6843 = vpop.f32.mrf.mxu0
    %6844 = vdwg.mxu0
    %v6845 = vld [vmem:[#allocation5] sm:$0xff]
    %v6846 = vld [vmem:[#allocation5 + $0x8] sm:$0xff]
    %v6847 = vld [vmem:[#allocation2 + $0x180] sm:$0xff]
    %v6848 = vld [vmem:[#allocation2 + $0x188] sm:$0xff]
    %v6849 = vld [vmem:[#allocation2 + $0x190] sm:$0xff]
    %v6850 = vld [vmem:[#allocation2 + $0x198] sm:$0xff]
    %v6851 = vadd.f32 %v6847, %v6716
    %v6852 = vadd.f32 %v6848, %v6718
    %v6853 = vadd.f32 %v6849, %v6757
    %v6854 = vadd.f32 %v6850, %v6759
    %v6855 = vxor.u32 %v6851, 2147483648
    %v6856 = vmul.f32 %v6855, 1.442695
    %v6857 = vpow.pop %v6856
    %v6858 = vadd.f32 %v6857, 1.0
    %v6859 = vrcp.pop %v6858
    %v6860 = vmul.f32 1.0, %v6859
    %v6861 = vxor.u32 %v6852, 2147483648
    %v6862 = vmul.f32 %v6861, 1.442695
    %v6863 = vpow.pop %v6862
    %v6864 = vadd.f32 %v6863, 1.0
    %v6865 = vrcp.pop %v6864
    %v6866 = vmul.f32 1.0, %v6865
    %v6867 = vtanh.pop %v6853
    %v6868 = vxor.u32 %v6854, 2147483648
    %v6869 = vmul.f32 %v6868, 1.442695
    %v6870 = vpow.pop %v6869
    %v6871 = vadd.f32 %v6870, 1.0
    %v6872 = vrcp.pop %v6871
    %v6873 = vmul.f32 1.0, %v6872
    %v6874 = vmul.f32 %v6866, %v6845
    %v6875 = vmul.f32 %v6860, %v6867
    %v6876 = vadd.f32 %v6874, %v6875
    %v6877 = vtanh.pop %v6876
    %v6878 = vmul.f32 %v6873, %v6877
    %6879 = vst [vmem:[#allocation5] sm:$0xff] %v6876
    %6880 = vst [vmem:[#allocation4] sm:$0xff] %v6878
    %6881 = vst [vmem:[%s5 + $0x60] sm:$0xff] %v6878
    %v6882 = vld [vmem:[#allocation2 + $0x60] sm:$0xff]
    %v6883 = vld [vmem:[#allocation2 + $0x68] sm:$0xff]
    %v6884 = vld [vmem:[#allocation2 + $0x70] sm:$0xff]
    %v6885 = vld [vmem:[#allocation2 + $0x78] sm:$0xff]
    %v6886 = vadd.f32 %v6882, %v6798
    %v6887 = vadd.f32 %v6883, %v6800
    %v6888 = vadd.f32 %v6884, %v6839
    %v6889 = vadd.f32 %v6885, %v6841
    %v6890 = vxor.u32 %v6886, 2147483648
    %v6891 = vmul.f32 %v6890, 1.442695
    %v6892 = vpow.pop %v6891
    %v6893 = vadd.f32 %v6892, 1.0
    %v6894 = vrcp.pop %v6893
    %v6895 = vmul.f32 1.0, %v6894
    %v6896 = vxor.u32 %v6887, 2147483648
    %v6897 = vmul.f32 %v6896, 1.442695
    %v6898 = vpow.pop %v6897
    %v6899 = vadd.f32 %v6898, 1.0
    %v6900 = vrcp.pop %v6899
    %v6901 = vmul.f32 1.0, %v6900
    %v6902 = vtanh.pop %v6888
    %v6903 = vxor.u32 %v6889, 2147483648
    %v6904 = vmul.f32 %v6903, 1.442695
    %v6905 = vpow.pop %v6904
    %v6906 = vadd.f32 %v6905, 1.0
    %v6907 = vrcp.pop %v6906
    %v6908 = vmul.f32 1.0, %v6907
    %v6909 = vmul.f32 %v6901, %v6846
    %v6910 = vmul.f32 %v6895, %v6902
    %v6911 = vadd.f32 %v6909, %v6910
    %v6912 = vtanh.pop %v6911
    %v6913 = vmul.f32 %v6908, %v6912
    %6914 = vst [vmem:[#allocation5 + $0x8] sm:$0xff] %v6911
    %6915 = vst [vmem:[#allocation4 + $0x8] sm:$0xff] %v6913
    %6916 = vst [vmem:[%s5 + $0x18] sm:$0xff] %v6913
    %v6917 = vld [vmem:[#allocation4] sm:$0xff]
    %v6918 = vld [vmem:[#allocation4 + $0x8] sm:$0xff]
    %v6919 = vpack.c.bf16 %v6917, %v6917
    %v6920 = vpack.c.bf16 %v6918, %v6918
    %6921 = vmatprep.subr.bf16.mxu0 %v5042
    %6922 = vmatpush1.bf16.msra.mxu0 %v5041
    %6923 = vmatprep.subr.bf16.mxu0 %v5034
    %6924 = vmatpush1.bf16.msra.mxu0 %v5033
    %6925 = vmatprep.subr.bf16.mxu0 %v5026
    %6926 = vmatpush1.bf16.msra.mxu0 %v5025
    %6927 = vmatprep.subr.bf16.mxu0 %v5018
    %6928 = vmatpush1.bf16.msra.mxu0 %v5017
    %6929 = vmatprep.subr.bf16.mxu0 %v5010
    %6930 = vmatpush1.bf16.msra.mxu0 %v5009
    %6931 = vmatprep.subr.bf16.mxu0 %v5002
    %6932 = vmatpush1.bf16.msra.mxu0 %v5001
    %6933 = vmatprep.subr.bf16.mxu0 %v4994
    %6934 = vmatpush1.bf16.msra.mxu0 %v4993
    %6935 = vmatprep.subr.bf16.mxu0 %v4986
    %6936 = vmatpush1.bf16.msra.mxu0 %v4985
    %6937 = vmatprep.subr.bf16.mxu0 %v5106
    %6938 = vmatpush2.bf16.msra.mxu0 %v5105
    %6939 = vmatprep.subr.bf16.mxu0 %v5098
    %6940 = vmatpush2.bf16.msra.mxu0 %v5097
    %6941 = vmatprep.subr.bf16.mxu0 %v5090
    %6942 = vmatpush2.bf16.msra.mxu0 %v5089
    %6943 = vmatprep.subr.bf16.mxu0 %v5082
    %6944 = vmatpush2.bf16.msra.mxu0 %v5081
    %6945 = vmatprep.subr.bf16.mxu0 %v5074
    %6946 = vmatpush2.bf16.msra.mxu0 %v5073
    %6947 = vmatprep.subr.bf16.mxu0 %v5066
    %6948 = vmatpush2.bf16.msra.mxu0 %v5065
    %6949 = vmatprep.subr.bf16.mxu0 %v5058
    %6950 = vmatpush2.bf16.msra.mxu0 %v5057
    %6951 = vmatprep.subr.bf16.mxu0 %v5050
    %6952 = vmatpush2.bf16.msra.mxu0 %v5049
    %6953 = vmatprep.mubr.bf16.mxu0 %v6920
    %6954 = vmatmul.mubr.bf16.gmra.mxu0 %v6919
    %v6955 = vpop.f32.mrf.mxu0
    %v6956 = vadd.f32 0.0, %v6955
    %v6957 = vpop.f32.mrf.mxu0
    %v6958 = vadd.f32 0.0, %v6957
    %v6959 = vpop.f32.mrf.mxu0
    %v6960 = vpop.f32.mrf.mxu0
    %6961 = vdwg.mxu0
    %6962 = vmatprep.subr.bf16.mxu0 %v5044
    %6963 = vmatpush1.bf16.msra.mxu0 %v5043
    %6964 = vmatprep.subr.bf16.mxu0 %v5036
    %6965 = vmatpush1.bf16.msra.mxu0 %v5035
    %6966 = vmatprep.subr.bf16.mxu0 %v5028
    %6967 = vmatpush1.bf16.msra.mxu0 %v5027
    %6968 = vmatprep.subr.bf16.mxu0 %v5020
    %6969 = vmatpush1.bf16.msra.mxu0 %v5019
    %6970 = vmatprep.subr.bf16.mxu0 %v5012
    %6971 = vmatpush1.bf16.msra.mxu0 %v5011
    %6972 = vmatprep.subr.bf16.mxu0 %v5004
    %6973 = vmatpush1.bf16.msra.mxu0 %v5003
    %6974 = vmatprep.subr.bf16.mxu0 %v4996
    %6975 = vmatpush1.bf16.msra.mxu0 %v4995
    %6976 = vmatprep.subr.bf16.mxu0 %v4988
    %6977 = vmatpush1.bf16.msra.mxu0 %v4987
    %6978 = vmatprep.subr.bf16.mxu0 %v5108
    %6979 = vmatpush2.bf16.msra.mxu0 %v5107
    %6980 = vmatprep.subr.bf16.mxu0 %v5100
    %6981 = vmatpush2.bf16.msra.mxu0 %v5099
    %6982 = vmatprep.subr.bf16.mxu0 %v5092
    %6983 = vmatpush2.bf16.msra.mxu0 %v5091
    %6984 = vmatprep.subr.bf16.mxu0 %v5084
    %6985 = vmatpush2.bf16.msra.mxu0 %v5083
    %6986 = vmatprep.subr.bf16.mxu0 %v5076
    %6987 = vmatpush2.bf16.msra.mxu0 %v5075
    %6988 = vmatprep.subr.bf16.mxu0 %v5068
    %6989 = vmatpush2.bf16.msra.mxu0 %v5067
    %6990 = vmatprep.subr.bf16.mxu0 %v5060
    %6991 = vmatpush2.bf16.msra.mxu0 %v5059
    %6992 = vmatprep.subr.bf16.mxu0 %v5052
    %6993 = vmatpush2.bf16.msra.mxu0 %v5051
    %6994 = vmatprep.mubr.bf16.mxu0 %v6920
    %6995 = vmatmul.mubr.bf16.gmra.mxu0 %v6919
    %v6996 = vpop.f32.mrf.mxu0
    %v6997 = vadd.f32 0.0, %v6996
    %v6998 = vpop.f32.mrf.mxu0
    %v6999 = vadd.f32 0.0, %v6998
    %v7000 = vpop.f32.mrf.mxu0
    %v7001 = vpop.f32.mrf.mxu0
    %7002 = vdwg.mxu0
    %7003 = vmatprep.subr.bf16.mxu0 %v5046
    %7004 = vmatpush1.bf16.msra.mxu0 %v5045
    %7005 = vmatprep.subr.bf16.mxu0 %v5038
    %7006 = vmatpush1.bf16.msra.mxu0 %v5037
    %7007 = vmatprep.subr.bf16.mxu0 %v5030
    %7008 = vmatpush1.bf16.msra.mxu0 %v5029
    %7009 = vmatprep.subr.bf16.mxu0 %v5022
    %7010 = vmatpush1.bf16.msra.mxu0 %v5021
    %7011 = vmatprep.subr.bf16.mxu0 %v5014
    %7012 = vmatpush1.bf16.msra.mxu0 %v5013
    %7013 = vmatprep.subr.bf16.mxu0 %v5006
    %7014 = vmatpush1.bf16.msra.mxu0 %v5005
    %7015 = vmatprep.subr.bf16.mxu0 %v4998
    %7016 = vmatpush1.bf16.msra.mxu0 %v4997
    %7017 = vmatprep.subr.bf16.mxu0 %v4990
    %7018 = vmatpush1.bf16.msra.mxu0 %v4989
    %7019 = vmatprep.subr.bf16.mxu0 %v5110
    %7020 = vmatpush2.bf16.msra.mxu0 %v5109
    %7021 = vmatprep.subr.bf16.mxu0 %v5102
    %7022 = vmatpush2.bf16.msra.mxu0 %v5101
    %7023 = vmatprep.subr.bf16.mxu0 %v5094
    %7024 = vmatpush2.bf16.msra.mxu0 %v5093
    %7025 = vmatprep.subr.bf16.mxu0 %v5086
    %7026 = vmatpush2.bf16.msra.mxu0 %v5085
    %7027 = vmatprep.subr.bf16.mxu0 %v5078
    %7028 = vmatpush2.bf16.msra.mxu0 %v5077
    %7029 = vmatprep.subr.bf16.mxu0 %v5070
    %7030 = vmatpush2.bf16.msra.mxu0 %v5069
    %7031 = vmatprep.subr.bf16.mxu0 %v5062
    %7032 = vmatpush2.bf16.msra.mxu0 %v5061
    %7033 = vmatprep.subr.bf16.mxu0 %v5054
    %7034 = vmatpush2.bf16.msra.mxu0 %v5053
    %7035 = vmatprep.mubr.bf16.mxu0 %v6920
    %7036 = vmatmul.mubr.bf16.gmra.mxu0 %v6919
    %v7037 = vpop.f32.mrf.mxu0
    %v7038 = vadd.f32 0.0, %v7037
    %v7039 = vpop.f32.mrf.mxu0
    %v7040 = vadd.f32 0.0, %v7039
    %v7041 = vpop.f32.mrf.mxu0
    %v7042 = vpop.f32.mrf.mxu0
    %7043 = vdwg.mxu0
    %7044 = vmatprep.subr.bf16.mxu0 %v5048
    %7045 = vmatpush1.bf16.msra.mxu0 %v5047
    %7046 = vmatprep.subr.bf16.mxu0 %v5040
    %7047 = vmatpush1.bf16.msra.mxu0 %v5039
    %7048 = vmatprep.subr.bf16.mxu0 %v5032
    %7049 = vmatpush1.bf16.msra.mxu0 %v5031
    %7050 = vmatprep.subr.bf16.mxu0 %v5024
    %7051 = vmatpush1.bf16.msra.mxu0 %v5023
    %7052 = vmatprep.subr.bf16.mxu0 %v5016
    %7053 = vmatpush1.bf16.msra.mxu0 %v5015
    %7054 = vmatprep.subr.bf16.mxu0 %v5008
    %7055 = vmatpush1.bf16.msra.mxu0 %v5007
    %7056 = vmatprep.subr.bf16.mxu0 %v5000
    %7057 = vmatpush1.bf16.msra.mxu0 %v4999
    %7058 = vmatprep.subr.bf16.mxu0 %v4992
    %7059 = vmatpush1.bf16.msra.mxu0 %v4991
    %7060 = vmatprep.subr.bf16.mxu0 %v5112
    %7061 = vmatpush2.bf16.msra.mxu0 %v5111
    %7062 = vmatprep.subr.bf16.mxu0 %v5104
    %7063 = vmatpush2.bf16.msra.mxu0 %v5103
    %7064 = vmatprep.subr.bf16.mxu0 %v5096
    %7065 = vmatpush2.bf16.msra.mxu0 %v5095
    %7066 = vmatprep.subr.bf16.mxu0 %v5088
    %7067 = vmatpush2.bf16.msra.mxu0 %v5087
    %7068 = vmatprep.subr.bf16.mxu0 %v5080
    %7069 = vmatpush2.bf16.msra.mxu0 %v5079
    %7070 = vmatprep.subr.bf16.mxu0 %v5072
    %7071 = vmatpush2.bf16.msra.mxu0 %v5071
    %7072 = vmatprep.subr.bf16.mxu0 %v5064
    %7073 = vmatpush2.bf16.msra.mxu0 %v5063
    %7074 = vmatprep.subr.bf16.mxu0 %v5056
    %7075 = vmatpush2.bf16.msra.mxu0 %v5055
    %7076 = vmatprep.mubr.bf16.mxu0 %v6920
    %7077 = vmatmul.mubr.bf16.gmra.mxu0 %v6919
    %v7078 = vpop.f32.mrf.mxu0
    %v7079 = vadd.f32 0.0, %v7078
    %v7080 = vpop.f32.mrf.mxu0
    %v7081 = vadd.f32 0.0, %v7080
    %v7082 = vpop.f32.mrf.mxu0
    %v7083 = vpop.f32.mrf.mxu0
    %7084 = vdwg.mxu0
    %v7085 = vld [vmem:[#allocation5] sm:$0xff]
    %v7086 = vld [vmem:[#allocation5 + $0x8] sm:$0xff]
    %v7087 = vld [vmem:[#allocation2 + $0x1c0] sm:$0xff]
    %v7088 = vld [vmem:[#allocation2 + $0x1c8] sm:$0xff]
    %v7089 = vld [vmem:[#allocation2 + $0x1d0] sm:$0xff]
    %v7090 = vld [vmem:[#allocation2 + $0x1d8] sm:$0xff]
    %v7091 = vadd.f32 %v7087, %v6956
    %v7092 = vadd.f32 %v7088, %v6958
    %v7093 = vadd.f32 %v7089, %v6997
    %v7094 = vadd.f32 %v7090, %v6999
    %v7095 = vxor.u32 %v7091, 2147483648
    %v7096 = vmul.f32 %v7095, 1.442695
    %v7097 = vpow.pop %v7096
    %v7098 = vadd.f32 %v7097, 1.0
    %v7099 = vrcp.pop %v7098
    %v7100 = vmul.f32 1.0, %v7099
    %v7101 = vxor.u32 %v7092, 2147483648
    %v7102 = vmul.f32 %v7101, 1.442695
    %v7103 = vpow.pop %v7102
    %v7104 = vadd.f32 %v7103, 1.0
    %v7105 = vrcp.pop %v7104
    %v7106 = vmul.f32 1.0, %v7105
    %v7107 = vtanh.pop %v7093
    %v7108 = vxor.u32 %v7094, 2147483648
    %v7109 = vmul.f32 %v7108, 1.442695
    %v7110 = vpow.pop %v7109
    %v7111 = vadd.f32 %v7110, 1.0
    %v7112 = vrcp.pop %v7111
    %v7113 = vmul.f32 1.0, %v7112
    %v7114 = vmul.f32 %v7106, %v7085
    %v7115 = vmul.f32 %v7100, %v7107
    %v7116 = vadd.f32 %v7114, %v7115
    %v7117 = vtanh.pop %v7116
    %v7118 = vmul.f32 %v7113, %v7117
    %7119 = vst [vmem:[#allocation5] sm:$0xff] %v7116
    %7120 = vst [vmem:[#allocation4] sm:$0xff] %v7118
    %7121 = vst [vmem:[%s5 + $0x70] sm:$0xff] %v7118
    %v7122 = vld [vmem:[#allocation2 + $0x20] sm:$0xff]
    %v7123 = vld [vmem:[#allocation2 + $0x28] sm:$0xff]
    %v7124 = vld [vmem:[#allocation2 + $0x30] sm:$0xff]
    %v7125 = vld [vmem:[#allocation2 + $0x38] sm:$0xff]
    %v7126 = vadd.f32 %v7122, %v7038
    %v7127 = vadd.f32 %v7123, %v7040
    %v7128 = vadd.f32 %v7124, %v7079
    %v7129 = vadd.f32 %v7125, %v7081
    %v7130 = vxor.u32 %v7126, 2147483648
    %v7131 = vmul.f32 %v7130, 1.442695
    %v7132 = vpow.pop %v7131
    %v7133 = vadd.f32 %v7132, 1.0
    %v7134 = vrcp.pop %v7133
    %v7135 = vmul.f32 1.0, %v7134
    %v7136 = vxor.u32 %v7127, 2147483648
    %v7137 = vmul.f32 %v7136, 1.442695
    %v7138 = vpow.pop %v7137
    %v7139 = vadd.f32 %v7138, 1.0
    %v7140 = vrcp.pop %v7139
    %v7141 = vmul.f32 1.0, %v7140
    %v7142 = vtanh.pop %v7128
    %v7143 = vxor.u32 %v7129, 2147483648
    %v7144 = vmul.f32 %v7143, 1.442695
    %v7145 = vpow.pop %v7144
    %v7146 = vadd.f32 %v7145, 1.0
    %v7147 = vrcp.pop %v7146
    %v7148 = vmul.f32 1.0, %v7147
    %v7149 = vmul.f32 %v7141, %v7086
    %v7150 = vmul.f32 %v7135, %v7142
    %v7151 = vadd.f32 %v7149, %v7150
    %v7152 = vtanh.pop %v7151
    %v7153 = vmul.f32 %v7148, %v7152
    %7154 = vst [vmem:[#allocation5 + $0x8] sm:$0xff] %v7151
    %7155 = vst [vmem:[#allocation4 + $0x8] sm:$0xff] %v7153
    %7156 = vst [vmem:[%s5 + $0x8] sm:$0xff] %v7153
    // Predicated region
    $region34: #{lstm_forward.1} parent=1 // pred_check
      _
    $region35: #{lstm_forward.1} parent=1 // pred_check_branch
      %7158 = sbr.rel (0) target = $region37
    $region36: #{lstm_forward.1} parent=1 // pred_region
      _
    $region37: #{lstm_forward.1} parent=1 // pred_fallthru
      _
    // Predicated region
    $region38: #{lstm_forward.1} parent=1 // pred_check
      _
    $region39: #{lstm_forward.1} parent=1 // pred_check_branch
      %7160 = sbr.rel (0) target = $region41
    $region40: #{lstm_forward.1} parent=1 // pred_region
      _
    $region41: #{lstm_forward.1} parent=1 // pred_fallthru
      _
    %7161 = vsyncpa [#allocation7], 1
    %7162 = vsyncpa [#allocation9], 1

</llo_original>
